<compile_context>
chip_gen: v6e
topology: v6e:2x2x1
jax: 0.10.0
libtpu: 0.0.40
codegen_flags: <defaults>
</compile_context>

<pallas_src>
import functools

import numpy as np
import jax
import jax.numpy as jnp
from jax.experimental import pallas as pl
from jax.experimental.pallas import tpu as pltpu


# --------------------------------------------------------------------------
# VMEM limit: ~3/4 of physical VMEM, capped at 100 MiB (v6e: ~96 MiB,
# v7x: ~48 MiB), conservative fallback if hardware query is unavailable.
# --------------------------------------------------------------------------
def _vmem_limit_bytes():
    cap = 64 * 1024 * 1024
    try:
        info = pltpu.get_tpu_info()
        cap = int(getattr(info, "vmem_capacity_bytes", cap))
    except Exception:
        cap = 64 * 1024 * 1024
    return int(min(cap * 3 // 4, 100 * 1024 * 1024))


_VMEM_LIMIT = _vmem_limit_bytes()


def _cparams():
    return pltpu.CompilerParams(
        dimension_semantics=("arbitrary",),
        vmem_limit_bytes=_VMEM_LIMIT,
    )


def _rep_spec(shape):
    n = len(shape)
    return pl.BlockSpec(shape, lambda i, _n=n: (0,) * _n)


def _blk3_spec(shape):
    return pl.BlockSpec((None,) + tuple(shape[1:]), lambda i: (i, 0, 0))


# --------------------------------------------------------------------------
# In-kernel building blocks
# --------------------------------------------------------------------------
def _ln(x, eps):
    mu = jnp.mean(x, axis=-1, keepdims=True)
    var = jnp.mean(jnp.square(x - mu), axis=-1, keepdims=True)
    return (x - mu) * jax.lax.rsqrt(var + eps)


def _bdot(a_f32, w_bf16):
    """bf16-operand matmul with f32 accumulation."""
    return jnp.dot(a_f32.astype(jnp.bfloat16), w_bf16,
                   preferred_element_type=jnp.float32)


def _mha(q, k, v, num_heads):
    """Multi-head attention, per-head dh-wide static lane slices.

    q: (Lq, D) f32 already scaled by 1/sqrt(dh).  k, v: (Lk, D) f32.
    Per-head contraction is dh (not D), matmul operands bf16, f32 accum.
    Returns (Lq, D) f32 (pre output-projection).
    """
    D = q.shape[-1]
    dh = D // num_heads
    outs = []
    for hidx in range(num_heads):
        lo = hidx * dh
        qh = q[:, lo:lo + dh].astype(jnp.bfloat16)
        kh = k[:, lo:lo + dh].astype(jnp.bfloat16)
        vh = v[:, lo:lo + dh].astype(jnp.bfloat16)
        s = jax.lax.dot_general(qh, kh, (((1,), (1,)), ((), ())),
                                preferred_element_type=jnp.float32)
        s = s - jnp.max(s, axis=-1, keepdims=True)
        p = jnp.exp(s)
        p = p * pl.reciprocal(jnp.sum(p, axis=-1, keepdims=True), approx=True)
        outs.append(jnp.dot(p.astype(jnp.bfloat16), vh,
                            preferred_element_type=jnp.float32))
    return jnp.concatenate(outs, axis=-1)


# --------------------------------------------------------------------------
# Kernel 1: conditioner + per-block adaLN modulation precompute (grid=depth)
# --------------------------------------------------------------------------
def _cond_mod_kernel(emb_ref, w1_ref, b1_ref, w2_ref, b2_ref, modw_ref, modb_ref,
                     c_ref, mod_ref, c_scr):
    D = c_scr.shape[-1]
    i = pl.program_id(0)

    @pl.when(i == 0)
    def _():
        h = jax.nn.silu(_bdot(emb_ref[...], w1_ref[...]) + b1_ref[...])
        cond = _bdot(h, w2_ref[...]) + b2_ref[...]
        c = jax.nn.silu(cond)          # downstream consumers only use silu(cond)
        c_scr[...] = c
        c_ref[...] = c

    mod = _bdot(c_scr[...], modw_ref[...]) + modb_ref[...]        # (1, 18D)
    # Lay out as (8, 6D): row m = modality m's [shift_a,scale_a,gate_a,
    # shift_m,scale_m,gate_m]; rows 3..7 zero-padded (contraction alignment).
    mod_ref[0:1, :] = mod[:, 0:6 * D]
    mod_ref[1:2, :] = mod[:, 6 * D:12 * D]
    mod_ref[2:3, :] = mod[:, 12 * D:18 * D]
    mod_ref[3:8, :] = jnp.zeros((5, 6 * D), jnp.float32)


def cond_and_mod_fwd(p_cond, mod_p, inlet_velocity, dim, depth):
    emb = continuous_sincos_embed(inlet_velocity.reshape(1, 1), dim)
    return pl.pallas_call(
        _cond_mod_kernel,
        grid=(depth,),
        in_specs=[_rep_spec(emb.shape),
                  _rep_spec(p_cond["l1"]["w"].shape), _rep_spec(p_cond["l1"]["b"].shape),
                  _rep_spec(p_cond["l2"]["w"].shape), _rep_spec(p_cond["l2"]["b"].shape),
                  _blk3_spec(mod_p["w"].shape), _blk3_spec(mod_p["b"].shape)],
        out_specs=(pl.BlockSpec((1, dim), lambda i: (0, 0)),
                   pl.BlockSpec((None, 8, 6 * dim), lambda i: (i, 0, 0))),
        out_shape=(jax.ShapeDtypeStruct((1, dim), jnp.float32),
                   jax.ShapeDtypeStruct((depth, 8, 6 * dim), jnp.float32)),
        scratch_shapes=[pltpu.VMEM((1, dim), jnp.float32)],
        compiler_params=_cparams(),
    )(emb, p_cond["l1"]["w"], p_cond["l1"]["b"],
      p_cond["l2"]["w"], p_cond["l2"]["b"], mod_p["w"], mod_p["b"])


# --------------------------------------------------------------------------
# Kernel 2: supernode pooling (+ to_particle_token), tiled over points N
# --------------------------------------------------------------------------
def _supernode_kernel(feat_ref, pe_ref, sp_ref, posT_ref,
                      wi_ref, bi_ref, m1w_ref, m1b_ref, m2w_ref, m2b_ref,
                      wo_ref, bo_ref, wt_ref, bt_ref,
                      o_ref, sum_scr, cnt_scr, *, radius_sq):
    i = pl.program_id(0)

    @pl.when(i == 0)
    def _():
        sum_scr[...] = jnp.zeros_like(sum_scr)
        cnt_scr[...] = jnp.zeros_like(cnt_scr)

    # Per-point message MLP for this point chunk.
    x = _bdot(feat_ref[...], wi_ref[...]) + bi_ref[...] + pe_ref[...]
    h = jax.nn.gelu(_bdot(x, m1w_ref[...]) + m1b_ref[...])
    msg = _bdot(h, m2w_ref[...]) + m2b_ref[...]                     # (Tn, D)

    # Radius mask supernodes x chunk-points (coords padded 3->8; padded points
    # carry huge coords so they are always excluded).
    sp = sp_ref[...]
    pos_t = posT_ref[...]
    dot = jnp.dot(sp, pos_t, preferred_element_type=jnp.float32)    # (S, Tn)
    sp2 = jnp.sum(sp * sp, axis=1, keepdims=True)
    pos2 = jnp.sum(pos_t * pos_t, axis=0, keepdims=True)
    d2 = jnp.maximum(sp2 + pos2 - 2.0 * dot, 0.0)
    mask = (d2 <= radius_sq).astype(jnp.float32)

    cnt_scr[...] += jnp.sum(mask, axis=-1, keepdims=True)
    sum_scr[...] += _bdot(mask, msg.astype(jnp.bfloat16))

    @pl.when(i == pl.num_programs(0) - 1)
    def _():
        cnt = jnp.maximum(cnt_scr[...], 1.0)
        pooled = sum_scr[...] / cnt                                  # exact divide
        out = _bdot(pooled, wo_ref[...]) + bo_ref[...]
        o_ref[...] = _bdot(out, wt_ref[...]) + bt_ref[...]


def supernode_tokens_fwd(p_pool, p_tok, feat, pos, supernode_idx, dim, radius, tn=128):
    n = pos.shape[0]
    s = supernode_idx.shape[0]
    n_pad = max(tn, ((n + tn - 1) // tn) * tn)
    # Pad points with far-away coordinates (excluded by the radius mask).
    pos_pad = jnp.pad(pos, ((0, n_pad - n), (0, 0)), constant_values=1e8)
    feat_pad = jnp.pad(feat, ((0, n_pad - n), (0, 8 - feat.shape[1])))
    pe = continuous_sincos_embed(pos_pad, dim)
    sp = pos[supernode_idx]
    sp_pad = jnp.pad(sp, ((0, 0), (0, 8 - sp.shape[1])))
    posT_pad = jnp.pad(pos_pad.T, ((0, 8 - pos.shape[1]), (0, 0)))
    wi_pad = jnp.pad(p_pool["input_proj"]["w"],
                     ((0, 8 - p_pool["input_proj"]["w"].shape[0]), (0, 0)))

    kern = functools.partial(_supernode_kernel, radius_sq=float(radius) ** 2)
    return pl.pallas_call(
        kern,
        grid=(n_pad // tn,),
        in_specs=[pl.BlockSpec((tn, 8), lambda i: (i, 0)),
                  pl.BlockSpec((tn, dim), lambda i: (i, 0)),
                  _rep_spec(sp_pad.shape),
                  pl.BlockSpec((8, tn), lambda i: (0, i)),
                  _rep_spec(wi_pad.shape), _rep_spec(p_pool["input_proj"]["b"].shape),
                  _rep_spec(p_pool["message"]["fc1"]["w"].shape),
                  _rep_spec(p_pool["message"]["fc1"]["b"].shape),
                  _rep_spec(p_pool["message"]["fc2"]["w"].shape),
                  _rep_spec(p_pool["message"]["fc2"]["b"].shape),
                  _rep_spec(p_pool["output_proj"]["w"].shape),
                  _rep_spec(p_pool["output_proj"]["b"].shape),
                  _rep_spec(p_tok["w"].shape), _rep_spec(p_tok["b"].shape)],
        out_specs=_rep_spec((s, dim)),
        out_shape=jax.ShapeDtypeStruct((s, dim), jnp.float32),
        scratch_shapes=[pltpu.VMEM((s, dim), jnp.float32),
                        pltpu.VMEM((s, 1), jnp.float32)],
        compiler_params=_cparams(),
    )(feat_pad, pe, sp_pad, posT_pad,
      wi_pad, p_pool["input_proj"]["b"],
      p_pool["message"]["fc1"]["w"], p_pool["message"]["fc1"]["b"],
      p_pool["message"]["fc2"]["w"], p_pool["message"]["fc2"]["b"],
      p_pool["output_proj"]["w"], p_pool["output_proj"]["b"],
      p_tok["w"], p_tok["b"])


# --------------------------------------------------------------------------
# Kernel 3: DiT trunk.  grid=(depth,), token stream resident in VMEM scratch,
# token embed/concat fused into step 0, adaLN modulation precomputed.
# --------------------------------------------------------------------------
def _dit_trunk_kernel(ptok_ref, fin_ref, fpe_ref, mcon_ref, mpe_ref, onehot_ref,
                      wf_ref, bf_ref, wm_ref, bm_ref,
                      mod_ref, qkvw_ref, qkvb_ref, projw_ref, projb_ref,
                      fc1w_ref, fc1b_ref, fc2w_ref, fc2b_ref,
                      o_ref, acc_ref, *, lens, num_heads, eps):
    i = pl.program_id(0)
    L, D = acc_ref.shape
    S, nf, nm = lens
    dh = D // num_heads
    scale = 1.0 / float(dh) ** 0.5

    # Step 0: build the token stream (particle / fluid / mixing embeds fused).
    @pl.when(i == 0)
    def _():
        acc_ref[0:S, :] = ptok_ref[...]
        acc_ref[S:S + nf, :] = (_bdot(fin_ref[...], wf_ref[...])
                                + bf_ref[...] + fpe_ref[...])
        acc_ref[S + nf:S + nf + nm, :] = (_bdot(mcon_ref[...], wm_ref[...])
                                          + bm_ref[...] + mpe_ref[...])

    # Pre-block LayerNorm at blocks 4 and 8 (reference: F.layer_norm eps=1e-6).
    @pl.when(jnp.logical_or(i == 4, i == 8))
    def _():
        acc_ref[...] = _ln(acc_ref[...], eps)

    x = acc_ref[...]

    # Per-token adaLN modulation: (L,8) one-hot modality @ (8,6D) precomputed.
    modt = jnp.dot(onehot_ref[...], mod_ref[...],
                   preferred_element_type=jnp.float32)               # (L, 6D)
    shift_a = modt[:, 0:D]
    scale_a = modt[:, D:2 * D]
    gate_a = modt[:, 2 * D:3 * D]
    shift_m = modt[:, 3 * D:4 * D]
    scale_m = modt[:, 4 * D:5 * D]
    gate_m = modt[:, 5 * D:6 * D]

    # Attention branch.
    h = _ln(x, eps) * (1.0 + scale_a) + shift_a
    qkv = _bdot(h, qkvw_ref[...]) + qkvb_ref[...]
    q = qkv[:, 0:D] * scale
    k = qkv[:, D:2 * D]
    v = qkv[:, 2 * D:3 * D]
    # TODO(synk): MultimodalDitBlock main/aux attention masking not provided;
    #             joint self-attention over all modalities is used.
    attn = _mha(q, k, v, num_heads)
    attn = _bdot(attn, projw_ref[...]) + projb_ref[...]
    x = x + gate_a * attn

    # MLP branch.
    h2 = _ln(x, eps) * (1.0 + scale_m) + shift_m
    hh = jax.nn.gelu(_bdot(h2, fc1w_ref[...]) + fc1b_ref[...])
    x = x + gate_m * (_bdot(hh, fc2w_ref[...]) + fc2b_ref[...])

    acc_ref[...] = x

    @pl.when(i == pl.num_programs(0) - 1)
    def _():
        o_ref[...] = x.astype(o_ref.dtype)


def dit_trunk_fwd(bp, p_fluid_tok, p_mix_tok, ptok, fluid_in, fluid_pe,
                  mix_con, mix_pe, mod_pre, lens, num_heads, eps=1e-6):
    depth = bp["qkv"]["w"].shape[0]
    S, nf, nm = (int(v) for v in lens)
    L = S + nf + nm
    D = ptok.shape[1]

    oh = np.zeros((L, 8), np.float32)
    oh[:S, 0] = 1.0
    oh[S:S + nf, 1] = 1.0
    oh[S + nf:, 2] = 1.0
    onehot = jnp.asarray(oh)

    kern = functools.partial(_dit_trunk_kernel, lens=(S, nf, nm),
                             num_heads=num_heads, eps=eps)
    return pl.pallas_call(
        kern,
        grid=(depth,),
        in_specs=[_rep_spec(ptok.shape), _rep_spec(fluid_in.shape),
                  _rep_spec(fluid_pe.shape), _rep_spec(mix_con.shape),
                  _rep_spec(mix_pe.shape), _rep_spec(onehot.shape),
                  _rep_spec(p_fluid_tok["w"].shape), _rep_spec(p_fluid_tok["b"].shape),
                  _rep_spec(p_mix_tok["w"].shape), _rep_spec(p_mix_tok["b"].shape),
                  _blk3_spec(mod_pre.shape),
                  _blk3_spec(bp["qkv"]["w"].shape), _blk3_spec(bp["qkv"]["b"].shape),
                  _blk3_spec(bp["proj"]["w"].shape), _blk3_spec(bp["proj"]["b"].shape),
                  _blk3_spec(bp["fc1"]["w"].shape), _blk3_spec(bp["fc1"]["b"].shape),
                  _blk3_spec(bp["fc2"]["w"].shape), _blk3_spec(bp["fc2"]["b"].shape)],
        out_specs=_rep_spec((L, D)),
        out_shape=jax.ShapeDtypeStruct((L, D), jnp.float32),
        scratch_shapes=[pltpu.VMEM((L, D), jnp.float32)],
        compiler_params=_cparams(),
    )(ptok, fluid_in, fluid_pe, mix_con, mix_pe, onehot,
      p_fluid_tok["w"], p_fluid_tok["b"], p_mix_tok["w"], p_mix_tok["b"],
      mod_pre, bp["qkv"]["w"], bp["qkv"]["b"], bp["proj"]["w"], bp["proj"]["b"],
      bp["fc1"]["w"], bp["fc1"]["b"], bp["fc2"]["w"], bp["fc2"]["b"])


# --------------------------------------------------------------------------
# Kernel 4/5/6: DitPerceiverDecoder, tiled over query rows, kv resident,
# lane-dense (128-padded) output projection.
# --------------------------------------------------------------------------
def _decoder_kernel(pe_ref, tok_ref, c_ref,
                    qryw_ref, qryb_ref, modw_ref, modb_ref,
                    qw_ref, qb_ref, kvw_ref, kvb_ref, pw_ref, pb_ref,
                    f1w_ref, f1b_ref, f2w_ref, f2b_ref, ow_ref, ob_ref,
                    o_ref, kv_scr, *, num_heads, eps):
    i = pl.program_id(0)
    D = tok_ref.shape[-1]
    dh = D // num_heads
    scale = 1.0 / float(dh) ** 0.5

    # kv projection of the token stream computed once, reused by all tiles.
    @pl.when(i == 0)
    def _():
        kv_scr[...] = _bdot(tok_ref[...], kvw_ref[...]) + kvb_ref[...]

    mod = _bdot(c_ref[...], modw_ref[...]) + modb_ref[...]
    shift_a = mod[:, 0:D]
    scale_a = mod[:, D:2 * D]
    gate_a = mod[:, 2 * D:3 * D]
    shift_m = mod[:, 3 * D:4 * D]
    scale_m = mod[:, 4 * D:5 * D]
    gate_m = mod[:, 5 * D:6 * D]

    query = _bdot(pe_ref[...], qryw_ref[...]) + qryb_ref[...]

    h = _ln(query, eps) * (1.0 + scale_a) + shift_a
    q = (_bdot(h, qw_ref[...]) + qb_ref[...]) * scale
    kv = kv_scr[...]
    k = kv[:, 0:D]
    v = kv[:, D:2 * D]
    attn = _mha(q, k, v, num_heads)
    attn = _bdot(attn, pw_ref[...]) + pb_ref[...]
    query = query + gate_a * attn

    h2 = _ln(query, eps) * (1.0 + scale_m) + shift_m
    hh = jax.nn.gelu(_bdot(h2, f1w_ref[...]) + f1b_ref[...])
    query = query + gate_m * (_bdot(hh, f2w_ref[...]) + f2b_ref[...])

    o_ref[...] = _bdot(_ln(query, eps), ow_ref[...]) + ob_ref[...]


def perceiver_decoder_fwd(p, tokens, pos, c, dim, num_heads, tq=128):
    nq = pos.shape[0]
    pe = continuous_sincos_embed(pos, dim)
    nq_pad = max(tq, ((nq + tq - 1) // tq) * tq)
    pe = jnp.pad(pe, ((0, nq_pad - nq), (0, 0)))

    out_dim = p["out"]["w"].shape[1]
    o_pad = ((out_dim + 127) // 128) * 128
    ow = jnp.pad(p["out"]["w"], ((0, 0), (0, o_pad - out_dim)))
    ob = jnp.pad(p["out"]["b"], ((0, 0), (0, o_pad - out_dim)))
    lk = tokens.shape[0]

    kern = functools.partial(_decoder_kernel, num_heads=num_heads, eps=1e-6)
    out = pl.pallas_call(
        kern,
        grid=(nq_pad // tq,),
        in_specs=[pl.BlockSpec((tq, dim), lambda i: (i, 0)),
                  _rep_spec(tokens.shape), _rep_spec(c.shape),
                  _rep_spec(p["query"]["w"].shape), _rep_spec(p["query"]["b"].shape),
                  _rep_spec(p["mod"]["w"].shape), _rep_spec(p["mod"]["b"].shape),
                  _rep_spec(p["q"]["w"].shape), _rep_spec(p["q"]["b"].shape),
                  _rep_spec(p["kv"]["w"].shape), _rep_spec(p["kv"]["b"].shape),
                  _rep_spec(p["proj"]["w"].shape), _rep_spec(p["proj"]["b"].shape),
                  _rep_spec(p["fc1"]["w"].shape), _rep_spec(p["fc1"]["b"].shape),
                  _rep_spec(p["fc2"]["w"].shape), _rep_spec(p["fc2"]["b"].shape),
                  _rep_spec(ow.shape), _rep_spec(ob.shape)],
        out_specs=pl.BlockSpec((tq, o_pad), lambda i: (i, 0)),
        out_shape=jax.ShapeDtypeStruct((nq_pad, o_pad), jnp.float32),
        scratch_shapes=[pltpu.VMEM((lk, 2 * dim), jnp.float32)],
        compiler_params=_cparams(),
    )(pe, tokens, c,
      p["query"]["w"], p["query"]["b"], p["mod"]["w"], p["mod"]["b"],
      p["q"]["w"], p["q"]["b"], p["kv"]["w"], p["kv"]["b"],
      p["proj"]["w"], p["proj"]["b"], p["fc1"]["w"], p["fc1"]["b"],
      p["fc2"]["w"], p["fc2"]["b"], ow, ob)
    return out[:nq, :out_dim]


# --------------------------------------------------------------------------
# Plain-JAX glue (embeddings, depatchify, sampling)
# --------------------------------------------------------------------------
def continuous_sincos_embed(coords, dim, max_wavelength=10000.0):
    ndim = coords.shape[-1]
    ndim_padding = dim % ndim
    dim_per_ndim = (dim - ndim_padding) // ndim
    sincos_padding = dim_per_ndim % 2
    padding = ndim_padding + sincos_padding * ndim
    eff = (dim - padding) // ndim
    omega = 1.0 / max_wavelength ** (np.arange(0, eff, 2) / eff)
    omega = jnp.asarray(omega, jnp.float32)
    out = coords[..., None].astype(jnp.float32) * omega
    emb = jnp.concatenate([jnp.sin(out), jnp.cos(out)], axis=-1)
    emb = emb.reshape(*coords.shape[:-1], ndim * emb.shape[-1])
    if padding > 0:
        emb = jnp.concatenate(
            [emb, jnp.zeros((*emb.shape[:-1], padding), emb.dtype)], axis=-1)
    return emb


def depatchify(volume, patch_size, resolution):
    px, py, pz = patch_size
    X, Y, Z = resolution
    nx, ny, nz = X // px, Y // py, Z // pz
    v = volume.reshape(nx, ny, nz, px, py, pz)
    v = v.transpose(0, 3, 1, 4, 2, 5)
    return v.reshape(X, Y, Z)


def sample_particles_from_solidfraction(solid, num_particles, bbox, sampling_bbox,
                                        volume_shape, key):
    # TODO(synk): reference uses torch.multinomial-style sampling; deterministic
    #             JAX categorical sampling (with replacement) is used instead.
    X, Y, Z = volume_shape
    probs = jnp.clip(solid, 0.0, 1.0).reshape(-1)
    logits = jnp.log(probs + 1e-12)
    k1, k2 = jax.random.split(key)
    idx = jax.random.categorical(k1, logits, shape=(num_particles,))
    iz = idx % Z
    iy = (idx // Z) % Y
    ix = idx // (Z * Y)
    voxel = jnp.stack([ix, iy, iz], axis=-1).astype(jnp.float32)
    extent = bbox[1] - bbox[0]
    vol = jnp.asarray([X, Y, Z], jnp.float32)
    jitter = jax.random.uniform(k2, (num_particles, 3))
    coords = bbox[0] + (voxel + jitter) / vol * extent
    return jnp.clip(coords, sampling_bbox[0], sampling_bbox[1])


# --------------------------------------------------------------------------
# Full forward pass
# --------------------------------------------------------------------------
def fbed_forward(params, inputs, sample_key, cfg):
    dim, H, depth = cfg["dim"], cfg["num_heads"], cfg["depth"]
    pp = int(np.prod(cfg["patch_size"]))

    # Conditioner + precomputed per-block adaLN modulation (hoisted from trunk).
    c, mod_pre = cond_and_mod_fwd(params["conditioner"], params["blocks"]["mod"],
                                  inputs["inlet_velocity"], dim, depth)

    particle_tokens = supernode_tokens_fwd(
        params["supernode_pooling"], params["to_particle_token"],
        inputs["input_particle_displacement"], inputs["input_particle_coords"],
        inputs["supernode_idx"], dim, cfg["radius"])

    fluid_in = jnp.concatenate(
        [inputs["input_fluid_velocity"], inputs["input_fluid_voidfraction"]], axis=-1)
    fluid_pe = continuous_sincos_embed(inputs["input_fluid_coords"], dim)
    mix_pe = continuous_sincos_embed(inputs["input_mixing_coords"], dim)

    S = particle_tokens.shape[0]
    nf = fluid_in.shape[0]
    nm = inputs["input_mixing_concentration"].shape[0]

    x = dit_trunk_fwd(params["blocks"], params["to_fluid_token"],
                      params["to_mixing_token"], particle_tokens, fluid_in,
                      fluid_pe, inputs["input_mixing_concentration"], mix_pe,
                      mod_pre, (S, nf, nm), H)

    particle_tokens = x[:S]
    fluid_tokens = x[S:S + nf]
    mixing_tokens = x[S + nf:]

    fluid_output = perceiver_decoder_fwd(params["fluid_decoder"], fluid_tokens,
                                         inputs["output_fluid_coords"], c, dim, H)
    mixing_output = perceiver_decoder_fwd(params["mixing_decoder"], mixing_tokens,
                                          inputs["output_mixing_coords"], c, dim, H)

    voidfraction = fluid_output[:, pp * 3:]
    solidfraction = jnp.clip(1.0 - voidfraction, 0.0, 1.0)
    solidfraction = solidfraction / (1.0 - inputs["fluid_voidfraction_min"])
    solid_vol = depatchify(solidfraction, cfg["patch_size"], cfg["resolution"])

    out_particle_coords = sample_particles_from_solidfraction(
        solid_vol, cfg["num_output_particles"],
        params["domain_boundary"], params["padded_domain_boundary"],
        cfg["resolution"], sample_key)

    particle_displacement = perceiver_decoder_fwd(
        params["particle_decoder"], particle_tokens, out_particle_coords, c, dim, H)

    return dict(
        particle_displacement=particle_displacement[None],
        particle_coords=out_particle_coords[None],
        fluid=fluid_output,
        mixing=mixing_output,
    )


# --------------------------------------------------------------------------
# Deterministic parameter init.  Weights bf16 (matmul operands), biases f32,
# modulation layers zero-init, block weights stacked along depth.
# --------------------------------------------------------------------------
def init_params(key, cfg):
    dim = cfg["dim"]
    depth = cfg["depth"]
    pp = int(np.prod(cfg["patch_size"]))
    keys = iter(jax.random.split(key, 512))

    def w_init(shape, zero=False):
        if zero:
            return jnp.zeros(shape, jnp.bfloat16)
        w = 0.02 * jax.random.truncated_normal(next(keys), -2.0, 2.0, shape, jnp.float32)
        return w.astype(jnp.bfloat16)

    def lin(i, o, zero=False):
        return {"w": w_init((i, o), zero), "b": jnp.zeros((1, o), jnp.float32)}

    def slin(i, o, zero=False):
        return {"w": w_init((depth, i, o), zero),
                "b": jnp.zeros((depth, 1, o), jnp.float32)}

    def decoder_p(out_dim):
        return {
            "query": lin(dim, dim),
            "mod": lin(dim, 6 * dim, zero=True),
            "q": lin(dim, dim),
            "kv": lin(dim, 2 * dim),
            "proj": lin(dim, dim),
            "fc1": lin(dim, 4 * dim),
            "fc2": lin(4 * dim, dim),
            "out": lin(dim, out_dim),
        }

    dmin = jnp.asarray(cfg["normalized_domain_min"], jnp.float32)
    dmax = jnp.asarray(cfg["normalized_domain_max"], jnp.float32)
    r = cfg["normalized_particle_radius"]

    return {
        "conditioner": {"l1": lin(dim, dim), "l2": lin(dim, dim)},
        "supernode_pooling": {
            "input_proj": lin(3, dim),
            "message": {"fc1": lin(dim, dim), "fc2": lin(dim, dim)},
            "output_proj": lin(dim, dim),
        },
        "to_particle_token": lin(dim, dim),
        "to_fluid_token": lin(pp * 4, dim),
        "to_mixing_token": lin(pp, dim),
        "blocks": {
            "mod": slin(dim, 18 * dim, zero=True),   # 3 modalities x 6*dim, zero-init
            "qkv": slin(dim, 3 * dim),
            "proj": slin(dim, dim),
            "fc1": slin(dim, 4 * dim),
            "fc2": slin(4 * dim, dim),
        },
        "particle_decoder": decoder_p(3),
        "fluid_decoder": decoder_p(pp * 4),
        "mixing_decoder": decoder_p(pp),
        "domain_boundary": jnp.stack([dmin, dmax]),
        "padded_domain_boundary": jnp.stack([dmin + r, dmax - r]),
    }


# --------------------------------------------------------------------------
if __name__ == "__main__":
    cfg = dict(
        dim=32, num_heads=4, radius=400.0,
        patch_size=(2, 2, 2), resolution=(4, 4, 8), depth=5,
        normalized_domain_min=(0.0, 0.0, 0.0),
        normalized_domain_max=(1000.0, 1000.0, 2500.0),
        normalized_particle_radius=6.25,
        num_output_particles=32,      # TODO(synk): static int (torch passes a tensor)
    )
    pp = int(np.prod(cfg["patch_size"]))
    n_patches = int(np.prod([cfg["resolution"][i] // cfg["patch_size"][i] for i in range(3)]))

    key = jax.random.PRNGKey(0)
    kp, kd = jax.random.split(key)
    params = init_params(kp, cfg)
    ks = jax.random.split(kd, 16)

    dmin = jnp.asarray(cfg["normalized_domain_min"], jnp.float32)
    dmax = jnp.asarray(cfg["normalized_domain_max"], jnp.float32)

    N_part, S = 64, 16
    inputs = dict(
        inlet_velocity=jax.random.uniform(ks[0], (1,), minval=0.5, maxval=1.5),
        input_particle_coords=jax.random.uniform(ks[1], (N_part, 3)) * (dmax - dmin) + dmin,
        input_particle_displacement=0.1 * jax.random.normal(ks[2], (N_part, 3)),
        supernode_idx=jax.random.permutation(ks[3], N_part)[:S],
        input_fluid_coords=jax.random.uniform(ks[4], (n_patches, 3)) * (dmax - dmin) + dmin,
        input_fluid_velocity=jax.random.normal(ks[5], (n_patches, pp * 3)),
        input_fluid_voidfraction=jax.random.uniform(ks[6], (n_patches, pp),
                                                    minval=0.4, maxval=1.0),
        input_mixing_coords=jax.random.uniform(ks[7], (n_patches, 3)) * (dmax - dmin) + dmin,
        input_mixing_concentration=jax.random.uniform(ks[8], (n_patches, pp)),
        output_fluid_coords=jax.random.uniform(ks[9], (n_patches, 3)) * (dmax - dmin) + dmin,
        output_mixing_coords=jax.random.uniform(ks[10], (n_patches, 3)) * (dmax - dmin) + dmin,
        fluid_voidfraction_min=jnp.float32(0.4),
    )

    fwd = jax.jit(functools.partial(fbed_forward, cfg=cfg))
    out = fwd(params, inputs, ks[11])
    out = jax.block_until_ready(out)

    assert out["particle_displacement"].shape == (1, cfg["num_output_particles"], 3)
    assert out["particle_coords"].shape == (1, cfg["num_output_particles"], 3)
    assert out["fluid"].shape == (n_patches, pp * 4)
    assert out["mixing"].shape == (n_patches, pp)
    assert all(bool(jnp.all(jnp.isfinite(v))) for v in jax.tree_util.tree_leaves(out))
    print("KERNEL_OK")
</pallas_src>

<mosaic_0001>
module attributes {stable_mosaic.version = 11 : i64} {
  func.func @_cond_mod_kernel(%arg0: i32, %arg1: memref<1x32xf32, #tpu.memory_space<vmem>>, %arg2: memref<32x32xbf16, #tpu.memory_space<vmem>>, %arg3: memref<1x32xf32, #tpu.memory_space<vmem>>, %arg4: memref<32x32xbf16, #tpu.memory_space<vmem>>, %arg5: memref<1x32xf32, #tpu.memory_space<vmem>>, %arg6: memref<1x32x576xbf16, #tpu.memory_space<vmem>>, %arg7: memref<1x1x576xf32, #tpu.memory_space<vmem>>, %arg8: memref<1x32xf32, #tpu.memory_space<vmem>>, %arg9: memref<1x8x192xf32, #tpu.memory_space<vmem>>, %arg10: memref<1x32xf32, #tpu.memory_space<vmem>>) attributes {dimension_semantics = [#tpu.dimension_semantics<arbitrary>], iteration_bounds = array<i64: 5>, scalar_prefetch = 0 : i64, scratch_operands = 1 : i64, tpu.core_type = #tpu.core_type<tc>, window_params = [{pipeline_mode = #tpu.pipeline_mode<synchronous>, transform_indices = @transform_0, window_bounds = array<i64: 1, 32>}, {pipeline_mode = #tpu.pipeline_mode<synchronous>, transform_indices = @transform_1, window_bounds = array<i64: 32, 32>}, {pipeline_mode = #tpu.pipeline_mode<synchronous>, transform_indices = @transform_2, window_bounds = array<i64: 1, 32>}, {pipeline_mode = #tpu.pipeline_mode<synchronous>, transform_indices = @transform_3, window_bounds = array<i64: 32, 32>}, {pipeline_mode = #tpu.pipeline_mode<synchronous>, transform_indices = @transform_4, window_bounds = array<i64: 1, 32>}, {transform_indices = @transform_5, window_bounds = array<i64: 1, 32, 576>}, {transform_indices = @transform_6, window_bounds = array<i64: 1, 1, 576>}, {pipeline_mode = #tpu.pipeline_mode<synchronous>, transform_indices = @transform_7, window_bounds = array<i64: 1, 32>}, {transform_indices = @transform_8, window_bounds = array<i64: 1, 8, 192>}]} {
    %c0_i32 = arith.constant 0 : i32
    %0 = arith.cmpi eq, %arg0, %c0_i32 : i32
    %1 = arith.extui %0 : i1 to i32
    %c0_i32_0 = arith.constant 0 : i32
    %2 = arith.cmpi ne, %1, %c0_i32_0 : i32
    scf.if %2 {
      %c0_18 = arith.constant 0 : index
      %c0_19 = arith.constant 0 : index
      %27 = vector.load %arg1[%c0_18, %c0_19] : memref<1x32xf32, #tpu.memory_space<vmem>>, vector<1x32xf32>
      %c0_20 = arith.constant 0 : index
      %c0_21 = arith.constant 0 : index
      %28 = vector.load %arg2[%c0_20, %c0_21] : memref<32x32xbf16, #tpu.memory_space<vmem>>, vector<32x32xbf16>
      %29 = arith.truncf %27 : vector<1x32xf32> to vector<1x32xbf16>
      %cst_22 = arith.constant dense<0.000000e+00> : vector<1x32xf32>
      %30 = tpu.matmul %29, %28, %cst_22 {dimension_numbers = #tpu.dot_dimension_numbers<[1], [0], [0], [1], [0, 0, 1, 1], [], []>} : vector<1x32xbf16>, vector<32x32xbf16>, vector<1x32xf32> -> vector<1x32xf32>
      %c0_23 = arith.constant 0 : index
      %c0_24 = arith.constant 0 : index
      %31 = vector.load %arg3[%c0_23, %c0_24] : memref<1x32xf32, #tpu.memory_space<vmem>>, vector<1x32xf32>
      %32 = arith.addf %30, %31 : vector<1x32xf32>
      %33 = arith.negf %32 : vector<1x32xf32>
      %34 = math.exp %33 : vector<1x32xf32>
      %cst_25 = arith.constant 1.000000e+00 : f32
      %35 = vector.broadcast %cst_25 : f32 to vector<1x32xf32>
      %36 = arith.addf %35, %34 : vector<1x32xf32>
      %37 = arith.divf %35, %36 : vector<1x32xf32>
      %38 = arith.mulf %32, %37 : vector<1x32xf32>
      %c0_26 = arith.constant 0 : index
      %c0_27 = arith.constant 0 : index
      %39 = vector.load %arg4[%c0_26, %c0_27] : memref<32x32xbf16, #tpu.memory_space<vmem>>, vector<32x32xbf16>
      %40 = arith.truncf %38 : vector<1x32xf32> to vector<1x32xbf16>
      %cst_28 = arith.constant dense<0.000000e+00> : vector<1x32xf32>
      %41 = tpu.matmul %40, %39, %cst_28 {dimension_numbers = #tpu.dot_dimension_numbers<[1], [0], [0], [1], [0, 0, 1, 1], [], []>} : vector<1x32xbf16>, vector<32x32xbf16>, vector<1x32xf32> -> vector<1x32xf32>
      %c0_29 = arith.constant 0 : index
      %c0_30 = arith.constant 0 : index
      %42 = vector.load %arg5[%c0_29, %c0_30] : memref<1x32xf32, #tpu.memory_space<vmem>>, vector<1x32xf32>
      %43 = arith.addf %41, %42 : vector<1x32xf32>
      %44 = arith.negf %43 : vector<1x32xf32>
      %45 = math.exp %44 : vector<1x32xf32>
      %cst_31 = arith.constant 1.000000e+00 : f32
      %46 = vector.broadcast %cst_31 : f32 to vector<1x32xf32>
      %47 = arith.addf %46, %45 : vector<1x32xf32>
      %48 = arith.divf %46, %47 : vector<1x32xf32>
      %49 = arith.mulf %43, %48 : vector<1x32xf32>
      %c0_32 = arith.constant 0 : index
      %c0_33 = arith.constant 0 : index
      %50 = vector.load %arg10[%c0_32, %c0_33] : memref<1x32xf32, #tpu.memory_space<vmem>>, vector<1x32xf32>
      tpu.vector_store %arg10[%c0_32, %c0_33], %49 {strides = array<i32>} : memref<1x32xf32, #tpu.memory_space<vmem>>, vector<1x32xf32>,
      %c0_34 = arith.constant 0 : index
      %c0_35 = arith.constant 0 : index
      %51 = vector.load %arg8[%c0_34, %c0_35] : memref<1x32xf32, #tpu.memory_space<vmem>>, vector<1x32xf32>
      tpu.vector_store %arg8[%c0_34, %c0_35], %49 {strides = array<i32>} : memref<1x32xf32, #tpu.memory_space<vmem>>, vector<1x32xf32>,
    } else {
    }
    %c0 = arith.constant 0 : index
    %c0_1 = arith.constant 0 : index
    %3 = vector.load %arg10[%c0, %c0_1] : memref<1x32xf32, #tpu.memory_space<vmem>>, vector<1x32xf32>
    %c0_2 = arith.constant 0 : index
    %c0_3 = arith.constant 0 : index
    %c0_4 = arith.constant 0 : index
    %4 = vector.load %arg6[%c0_2, %c0_3, %c0_4] : memref<1x32x576xbf16, #tpu.memory_space<vmem>>, vector<1x32x576xbf16>
    %5 = vector.shape_cast %4 : vector<1x32x576xbf16> to vector<32x576xbf16>
    %6 = arith.truncf %3 : vector<1x32xf32> to vector<1x32xbf16>
    %cst = arith.constant dense<0.000000e+00> : vector<1x576xf32>
    %7 = tpu.matmul %6, %5, %cst {dimension_numbers = #tpu.dot_dimension_numbers<[1], [0], [0], [1], [0, 0, 1, 1], [], []>} : vector<1x32xbf16>, vector<32x576xbf16>, vector<1x576xf32> -> vector<1x576xf32>
    %c0_5 = arith.constant 0 : index
    %c0_6 = arith.constant 0 : index
    %c0_7 = arith.constant 0 : index
    %8 = vector.load %arg7[%c0_5, %c0_6, %c0_7] : memref<1x1x576xf32, #tpu.memory_space<vmem>>, vector<1x1x576xf32>
    %9 = vector.shape_cast %8 : vector<1x1x576xf32> to vector<1x576xf32>
    %10 = arith.addf %7, %9 : vector<1x576xf32>
    %11 = vector.extract_strided_slice %10 {offsets = [0, 0], sizes = [1, 192], strides = [1, 1]} : vector<1x576xf32> to vector<1x192xf32>
    %c0_8 = arith.constant 0 : index
    %c0_9 = arith.constant 0 : index
    %c0_10 = arith.constant 0 : index
    %12 = vector.load %arg9[%c0_8, %c0_9, %c0_10] : memref<1x8x192xf32, #tpu.memory_space<vmem>>, vector<1x1x192xf32>
    %13 = vector.shape_cast %12 : vector<1x1x192xf32> to vector<1x192xf32>
    %14 = vector.shape_cast %11 : vector<1x192xf32> to vector<1x1x192xf32>
    tpu.vector_store %arg9[%c0_8, %c0_9, %c0_10], %14 {strides = array<i32>} : memref<1x8x192xf32, #tpu.memory_space<vmem>>, vector<1x1x192xf32>,
    %15 = vector.extract_strided_slice %10 {offsets = [0, 192], sizes = [1, 192], strides = [1, 1]} : vector<1x576xf32> to vector<1x192xf32>
    %c0_11 = arith.constant 0 : index
    %c1 = arith.constant 1 : index
    %c0_12 = arith.constant 0 : index
    %16 = vector.load %arg9[%c0_11, %c1, %c0_12] : memref<1x8x192xf32, #tpu.memory_space<vmem>>, vector<1x1x192xf32>
    %17 = vector.shape_cast %16 : vector<1x1x192xf32> to vector<1x192xf32>
    %18 = vector.shape_cast %15 : vector<1x192xf32> to vector<1x1x192xf32>
    tpu.vector_store %arg9[%c0_11, %c1, %c0_12], %18 {strides = array<i32>} : memref<1x8x192xf32, #tpu.memory_space<vmem>>, vector<1x1x192xf32>,
    %19 = vector.extract_strided_slice %10 {offsets = [0, 384], sizes = [1, 192], strides = [1, 1]} : vector<1x576xf32> to vector<1x192xf32>
    %c0_13 = arith.constant 0 : index
    %c2 = arith.constant 2 : index
    %c0_14 = arith.constant 0 : index
    %20 = vector.load %arg9[%c0_13, %c2, %c0_14] : memref<1x8x192xf32, #tpu.memory_space<vmem>>, vector<1x1x192xf32>
    %21 = vector.shape_cast %20 : vector<1x1x192xf32> to vector<1x192xf32>
    %22 = vector.shape_cast %19 : vector<1x192xf32> to vector<1x1x192xf32>
    tpu.vector_store %arg9[%c0_13, %c2, %c0_14], %22 {strides = array<i32>} : memref<1x8x192xf32, #tpu.memory_space<vmem>>, vector<1x1x192xf32>,
    %cst_15 = arith.constant 0.000000e+00 : f32
    %23 = vector.broadcast %cst_15 : f32 to vector<5x192xf32>
    %c0_16 = arith.constant 0 : index
    %c3 = arith.constant 3 : index
    %c0_17 = arith.constant 0 : index
    %24 = vector.load %arg9[%c0_16, %c3, %c0_17] : memref<1x8x192xf32, #tpu.memory_space<vmem>>, vector<1x5x192xf32>
    %25 = vector.shape_cast %24 : vector<1x5x192xf32> to vector<5x192xf32>
    %26 = vector.shape_cast %23 : vector<5x192xf32> to vector<1x5x192xf32>
    tpu.vector_store %arg9[%c0_16, %c3, %c0_17], %26 {strides = array<i32>} : memref<1x8x192xf32, #tpu.memory_space<vmem>>, vector<1x5x192xf32>,
    return
  }
  func.func @transform_0(%arg0: i32) -> (i32, i32) {
    %c0_i32 = arith.constant 0 : i32
    %c0_i32_0 = arith.constant 0 : i32
    %c0_i32_1 = arith.constant 0 : i32
    return %c0_i32, %c0_i32_0 : i32, i32
  }
  func.func @transform_1(%arg0: i32) -> (i32, i32) {
    %c0_i32 = arith.constant 0 : i32
    %c0_i32_0 = arith.constant 0 : i32
    %c0_i32_1 = arith.constant 0 : i32
    return %c0_i32, %c0_i32_0 : i32, i32
  }
  func.func @transform_2(%arg0: i32) -> (i32, i32) {
    %c0_i32 = arith.constant 0 : i32
    %c0_i32_0 = arith.constant 0 : i32
    %c0_i32_1 = arith.constant 0 : i32
    return %c0_i32, %c0_i32_0 : i32, i32
  }
  func.func @transform_3(%arg0: i32) -> (i32, i32) {
    %c0_i32 = arith.constant 0 : i32
    %c0_i32_0 = arith.constant 0 : i32
    %c0_i32_1 = arith.constant 0 : i32
    return %c0_i32, %c0_i32_0 : i32, i32
  }
  func.func @transform_4(%arg0: i32) -> (i32, i32) {
    %c0_i32 = arith.constant 0 : i32
    %c0_i32_0 = arith.constant 0 : i32
    %c0_i32_1 = arith.constant 0 : i32
    return %c0_i32, %c0_i32_0 : i32, i32
  }
  func.func @transform_5(%arg0: i32) -> (i32, i32, i32) {
    %c0_i32 = arith.constant 0 : i32
    %c0_i32_0 = arith.constant 0 : i32
    %c0_i32_1 = arith.constant 0 : i32
    return %arg0, %c0_i32, %c0_i32_0 : i32, i32, i32
  }
  func.func @transform_6(%arg0: i32) -> (i32, i32, i32) {
    %c0_i32 = arith.constant 0 : i32
    %c0_i32_0 = arith.constant 0 : i32
    %c0_i32_1 = arith.constant 0 : i32
    return %arg0, %c0_i32, %c0_i32_0 : i32, i32, i32
  }
  func.func @transform_7(%arg0: i32) -> (i32, i32) {
    %c0_i32 = arith.constant 0 : i32
    %c0_i32_0 = arith.constant 0 : i32
    %c0_i32_1 = arith.constant 0 : i32
    return %c0_i32, %c0_i32_0 : i32, i32
  }
  func.func @transform_8(%arg0: i32) -> (i32, i32, i32) {
    %c0_i32 = arith.constant 0 : i32
    %c0_i32_0 = arith.constant 0 : i32
    %c0_i32_1 = arith.constant 0 : i32
    return %arg0, %c0_i32, %c0_i32_0 : i32, i32, i32
  }
}

module attributes {stable_mosaic.version = 11 : i64} {
  func.func @_supernode_kernel(%arg0: i32, %arg1: memref<128x8xf32, #tpu.memory_space<vmem>>, %arg2: memref<128x32xf32, #tpu.memory_space<vmem>>, %arg3: memref<16x8xf32, #tpu.memory_space<vmem>>, %arg4: memref<8x128xf32, #tpu.memory_space<vmem>>, %arg5: memref<8x32xbf16, #tpu.memory_space<vmem>>, %arg6: memref<1x32xf32, #tpu.memory_space<vmem>>, %arg7: memref<32x32xbf16, #tpu.memory_space<vmem>>, %arg8: memref<1x32xf32, #tpu.memory_space<vmem>>, %arg9: memref<32x32xbf16, #tpu.memory_space<vmem>>, %arg10: memref<1x32xf32, #tpu.memory_space<vmem>>, %arg11: memref<32x32xbf16, #tpu.memory_space<vmem>>, %arg12: memref<1x32xf32, #tpu.memory_space<vmem>>, %arg13: memref<32x32xbf16, #tpu.memory_space<vmem>>, %arg14: memref<1x32xf32, #tpu.memory_space<vmem>>, %arg15: memref<16x32xf32, #tpu.memory_space<vmem>>, %arg16: memref<16x32xf32, #tpu.memory_space<vmem>>, %arg17: memref<16x1xf32, #tpu.memory_space<vmem>>) attributes {dimension_semantics = [#tpu.dimension_semantics<arbitrary>], iteration_bounds = array<i64: 1>, scalar_prefetch = 0 : i64, scratch_operands = 2 : i64, tpu.core_type = #tpu.core_type<tc>, window_params = [{transform_indices = @transform_0, window_bounds = array<i64: 128, 8>}, {transform_indices = @transform_1, window_bounds = array<i64: 128, 32>}, {pipeline_mode = #tpu.pipeline_mode<synchronous>, transform_indices = @transform_2, window_bounds = array<i64: 16, 8>}, {transform_indices = @transform_3, window_bounds = array<i64: 8, 128>}, {pipeline_mode = #tpu.pipeline_mode<synchronous>, transform_indices = @transform_4, window_bounds = array<i64: 8, 32>}, {pipeline_mode = #tpu.pipeline_mode<synchronous>, transform_indices = @transform_5, window_bounds = array<i64: 1, 32>}, {pipeline_mode = #tpu.pipeline_mode<synchronous>, transform_indices = @transform_6, window_bounds = array<i64: 32, 32>}, {pipeline_mode = #tpu.pipeline_mode<synchronous>, transform_indices = @transform_7, window_bounds = array<i64: 1, 32>}, {pipeline_mode = #tpu.pipeline_mode<synchronous>, transform_indices = @transform_8, window_bounds = array<i64: 32, 32>}, {pipeline_mode = #tpu.pipeline_mode<synchronous>, transform_indices = @transform_9, window_bounds = array<i64: 1, 32>}, {pipeline_mode = #tpu.pipeline_mode<synchronous>, transform_indices = @transform_10, window_bounds = array<i64: 32, 32>}, {pipeline_mode = #tpu.pipeline_mode<synchronous>, transform_indices = @transform_11, window_bounds = array<i64: 1, 32>}, {pipeline_mode = #tpu.pipeline_mode<synchronous>, transform_indices = @transform_12, window_bounds = array<i64: 32, 32>}, {pipeline_mode = #tpu.pipeline_mode<synchronous>, transform_indices = @transform_13, window_bounds = array<i64: 1, 32>}, {pipeline_mode = #tpu.pipeline_mode<synchronous>, transform_indices = @transform_14, window_bounds = array<i64: 16, 32>}]} {
    %c0_i32 = arith.constant 0 : i32
    %0 = arith.cmpi eq, %arg0, %c0_i32 : i32
    %1 = arith.extui %0 : i1 to i32
    %c0_i32_0 = arith.constant 0 : i32
    %2 = arith.cmpi ne, %1, %c0_i32_0 : i32
    scf.if %2 {
      %cst_44 = arith.constant 0.000000e+00 : f32
      %72 = vector.broadcast %cst_44 : f32 to vector<16x32xf32>
      %c0_45 = arith.constant 0 : index
      %c0_46 = arith.constant 0 : index
      %73 = vector.load %arg16[%c0_45, %c0_46] : memref<16x32xf32, #tpu.memory_space<vmem>>, vector<16x32xf32>
      tpu.vector_store %arg16[%c0_45, %c0_46], %72 {strides = array<i32>} : memref<16x32xf32, #tpu.memory_space<vmem>>, vector<16x32xf32>,
      %cst_47 = arith.constant 0.000000e+00 : f32
      %74 = vector.broadcast %cst_47 : f32 to vector<16x1xf32>
      %c0_48 = arith.constant 0 : index
      %c0_49 = arith.constant 0 : index
      %75 = vector.load %arg17[%c0_48, %c0_49] : memref<16x1xf32, #tpu.memory_space<vmem>>, vector<16x1xf32>
      tpu.vector_store %arg17[%c0_48, %c0_49], %74 {strides = array<i32>} : memref<16x1xf32, #tpu.memory_space<vmem>>, vector<16x1xf32>,
    } else {
    }
    %c0 = arith.constant 0 : index
    %c0_1 = arith.constant 0 : index
    %3 = vector.load %arg1[%c0, %c0_1] : memref<128x8xf32, #tpu.memory_space<vmem>>, vector<128x8xf32>
    %c0_2 = arith.constant 0 : index
    %c0_3 = arith.constant 0 : index
    %4 = vector.load %arg5[%c0_2, %c0_3] : memref<8x32xbf16, #tpu.memory_space<vmem>>, vector<8x32xbf16>
    %5 = arith.truncf %3 : vector<128x8xf32> to vector<128x8xbf16>
    %cst = arith.constant dense<0.000000e+00> : vector<128x32xf32>
    %6 = tpu.matmul %5, %4, %cst {dimension_numbers = #tpu.dot_dimension_numbers<[1], [0], [0], [1], [0, 0, 1, 1], [], []>} : vector<128x8xbf16>, vector<8x32xbf16>, vector<128x32xf32> -> vector<128x32xf32>
    %c0_4 = arith.constant 0 : index
    %c0_5 = arith.constant 0 : index
    %7 = vector.load %arg6[%c0_4, %c0_5] : memref<1x32xf32, #tpu.memory_space<vmem>>, vector<1x32xf32>
    %8 = vector.broadcast %7 : vector<1x32xf32> to vector<128x32xf32>
    %9 = arith.addf %6, %8 : vector<128x32xf32>
    %c0_6 = arith.constant 0 : index
    %c0_7 = arith.constant 0 : index
    %10 = vector.load %arg2[%c0_6, %c0_7] : memref<128x32xf32, #tpu.memory_space<vmem>>, vector<128x32xf32>
    %11 = arith.addf %9, %10 : vector<128x32xf32>
    %c0_8 = arith.constant 0 : index
    %c0_9 = arith.constant 0 : index
    %12 = vector.load %arg7[%c0_8, %c0_9] : memref<32x32xbf16, #tpu.memory_space<vmem>>, vector<32x32xbf16>
    %13 = arith.truncf %11 : vector<128x32xf32> to vector<128x32xbf16>
    %cst_10 = arith.constant dense<0.000000e+00> : vector<128x32xf32>
    %14 = tpu.matmul %13, %12, %cst_10 {dimension_numbers = #tpu.dot_dimension_numbers<[1], [0], [0], [1], [0, 0, 1, 1], [], []>} : vector<128x32xbf16>, vector<32x32xbf16>, vector<128x32xf32> -> vector<128x32xf32>
    %c0_11 = arith.constant 0 : index
    %c0_12 = arith.constant 0 : index
    %15 = vector.load %arg8[%c0_11, %c0_12] : memref<1x32xf32, #tpu.memory_space<vmem>>, vector<1x32xf32>
    %16 = vector.broadcast %15 : vector<1x32xf32> to vector<128x32xf32>
    %17 = arith.addf %14, %16 : vector<128x32xf32>
    %18 = arith.mulf %17, %17 : vector<128x32xf32>
    %19 = arith.mulf %17, %18 : vector<128x32xf32>
    %cst_13 = arith.constant 4.471500e-02 : f32
    %20 = vector.broadcast %cst_13 : f32 to vector<128x32xf32>
    %21 = arith.mulf %20, %19 : vector<128x32xf32>
    %22 = arith.addf %17, %21 : vector<128x32xf32>
    %cst_14 = arith.constant 0.797884583 : f32
    %23 = vector.broadcast %cst_14 : f32 to vector<128x32xf32>
    %24 = arith.mulf %23, %22 : vector<128x32xf32>
    %25 = math.tanh %24 : vector<128x32xf32>
    %cst_15 = arith.constant 1.000000e+00 : f32
    %26 = vector.broadcast %cst_15 : f32 to vector<128x32xf32>
    %27 = arith.addf %26, %25 : vector<128x32xf32>
    %cst_16 = arith.constant 5.000000e-01 : f32
    %28 = vector.broadcast %cst_16 : f32 to vector<128x32xf32>
    %29 = arith.mulf %28, %27 : vector<128x32xf32>
    %30 = arith.mulf %17, %29 : vector<128x32xf32>
    %c0_17 = arith.constant 0 : index
    %c0_18 = arith.constant 0 : index
    %31 = vector.load %arg9[%c0_17, %c0_18] : memref<32x32xbf16, #tpu.memory_space<vmem>>, vector<32x32xbf16>
    %32 = arith.truncf %30 : vector<128x32xf32> to vector<128x32xbf16>
    %cst_19 = arith.constant dense<0.000000e+00> : vector<128x32xf32>
    %33 = tpu.matmul %32, %31, %cst_19 {dimension_numbers = #tpu.dot_dimension_numbers<[1], [0], [0], [1], [0, 0, 1, 1], [], []>} : vector<128x32xbf16>, vector<32x32xbf16>, vector<128x32xf32> -> vector<128x32xf32>
    %c0_20 = arith.constant 0 : index
    %c0_21 = arith.constant 0 : index
    %34 = vector.load %arg10[%c0_20, %c0_21] : memref<1x32xf32, #tpu.memory_space<vmem>>, vector<1x32xf32>
    %35 = vector.broadcast %34 : vector<1x32xf32> to vector<128x32xf32>
    %36 = arith.addf %33, %35 : vector<128x32xf32>
    %c0_22 = arith.constant 0 : index
    %c0_23 = arith.constant 0 : index
    %37 = vector.load %arg3[%c0_22, %c0_23] : memref<16x8xf32, #tpu.memory_space<vmem>>, vector<16x8xf32>
    %c0_24 = arith.constant 0 : index
    %c0_25 = arith.constant 0 : index
    %38 = vector.load %arg4[%c0_24, %c0_25] : memref<8x128xf32, #tpu.memory_space<vmem>>, vector<8x128xf32>
    %cst_26 = arith.constant dense<0.000000e+00> : vector<16x128xf32>
    %39 = tpu.matmul %37, %38, %cst_26 {dimension_numbers = #tpu.dot_dimension_numbers<[1], [0], [0], [1], [0, 0, 1, 1], [], []>} : vector<16x8xf32>, vector<8x128xf32>, vector<16x128xf32> -> vector<16x128xf32>
    %40 = arith.mulf %37, %37 : vector<16x8xf32>
    %cst_27 = arith.constant dense<0.000000e+00> : vector<16xf32>
    %41 = vector.multi_reduction <add>, %40, %cst_27 [1] : vector<16x8xf32> to vector<16xf32>
    %42 = vector.shape_cast %41 : vector<16xf32> to vector<16x1xf32>
    %43 = arith.mulf %38, %38 : vector<8x128xf32>
    %cst_28 = arith.constant dense<0.000000e+00> : vector<128xf32>
    %44 = vector.multi_reduction <add>, %43, %cst_28 [0] : vector<8x128xf32> to vector<128xf32>
    %45 = vector.shape_cast %44 : vector<128xf32> to vector<1x128xf32>
    %46 = vector.broadcast %42 : vector<16x1xf32> to vector<16x128xf32>
    %47 = vector.broadcast %45 : vector<1x128xf32> to vector<16x128xf32>
    %48 = arith.addf %46, %47 : vector<16x128xf32>
    %cst_29 = arith.constant 2.000000e+00 : f32
    %49 = vector.broadcast %cst_29 : f32 to vector<16x128xf32>
    %50 = arith.mulf %49, %39 : vector<16x128xf32>
    %51 = arith.subf %48, %50 : vector<16x128xf32>
    %cst_30 = arith.constant 0.000000e+00 : f32
    %52 = vector.broadcast %cst_30 : f32 to vector<16x128xf32>
    %53 = arith.maximumf %51, %52 : vector<16x128xf32>
    %cst_31 = arith.constant 1.600000e+05 : f32
    %54 = vector.broadcast %cst_31 : f32 to vector<16x128xf32>
    %55 = arith.cmpf ole, %53, %54 : vector<16x128xf32>
    %56 = arith.extui %55 : vector<16x128xi1> to vector<16x128xi32>
    %57 = arith.sitofp %56 : vector<16x128xi32> to vector<16x128xf32>
    %c0_32 = arith.constant 0 : index
    %c0_33 = arith.constant 0 : index
    %58 = vector.load %arg17[%c0_32, %c0_33] : memref<16x1xf32, #tpu.memory_space<vmem>>, vector<16x1xf32>
    %cst_34 = arith.constant dense<0.000000e+00> : vector<16xf32>
    %59 = vector.multi_reduction <add>, %57, %cst_34 [1] : vector<16x128xf32> to vector<16xf32>
    %60 = vector.shape_cast %59 : vector<16xf32> to vector<16x1xf32>
    %61 = arith.addf %58, %60 : vector<16x1xf32>
    %c0_35 = arith.constant 0 : index
    %c0_36 = arith.constant 0 : index
    %62 = vector.load %arg17[%c0_35, %c0_36] : memref<16x1xf32, #tpu.memory_space<vmem>>, vector<16x1xf32>
    tpu.vector_store %arg17[%c0_35, %c0_36], %61 {strides = array<i32>} : memref<16x1xf32, #tpu.memory_space<vmem>>, vector<16x1xf32>,
    %c0_37 = arith.constant 0 : index
    %c0_38 = arith.constant 0 : index
    %63 = vector.load %arg16[%c0_37, %c0_38] : memref<16x32xf32, #tpu.memory_space<vmem>>, vector<16x32xf32>
    %64 = arith.truncf %36 : vector<128x32xf32> to vector<128x32xbf16>
    %65 = arith.truncf %57 : vector<16x128xf32> to vector<16x128xbf16>
    %cst_39 = arith.constant dense<0.000000e+00> : vector<16x32xf32>
    %66 = tpu.matmul %65, %64, %cst_39 {dimension_numbers = #tpu.dot_dimension_numbers<[1], [0], [0], [1], [0, 0, 1, 1], [], []>} : vector<16x128xbf16>, vector<128x32xbf16>, vector<16x32xf32> -> vector<16x32xf32>
    %67 = arith.addf %63, %66 : vector<16x32xf32>
    %c0_40 = arith.constant 0 : index
    %c0_41 = arith.constant 0 : index
    %68 = vector.load %arg16[%c0_40, %c0_41] : memref<16x32xf32, #tpu.memory_space<vmem>>, vector<16x32xf32>
    tpu.vector_store %arg16[%c0_40, %c0_41], %67 {strides = array<i32>} : memref<16x32xf32, #tpu.memory_space<vmem>>, vector<16x32xf32>,
    %c0_i32_42 = arith.constant 0 : i32
    %69 = arith.cmpi eq, %arg0, %c0_i32_42 : i32
    %70 = arith.extui %69 : i1 to i32
    %c0_i32_43 = arith.constant 0 : i32
    %71 = arith.cmpi ne, %70, %c0_i32_43 : i32
    scf.if %71 {
      %c0_44 = arith.constant 0 : index
      %c0_45 = arith.constant 0 : index
      %72 = vector.load %arg17[%c0_44, %c0_45] : memref<16x1xf32, #tpu.memory_space<vmem>>, vector<16x1xf32>
      %cst_46 = arith.constant 1.000000e+00 : f32
      %73 = vector.broadcast %cst_46 : f32 to vector<16x1xf32>
      %74 = arith.maximumf %72, %73 : vector<16x1xf32>
      %c0_47 = arith.constant 0 : index
      %c0_48 = arith.constant 0 : index
      %75 = vector.load %arg16[%c0_47, %c0_48] : memref<16x32xf32, #tpu.memory_space<vmem>>, vector<16x32xf32>
      %76 = vector.broadcast %74 : vector<16x1xf32> to vector<16x32xf32>
      %77 = arith.divf %75, %76 : vector<16x32xf32>
      %c0_49 = arith.constant 0 : index
      %c0_50 = arith.constant 0 : index
      %78 = vector.load %arg11[%c0_49, %c0_50] : memref<32x32xbf16, #tpu.memory_space<vmem>>, vector<32x32xbf16>
      %79 = arith.truncf %77 : vector<16x32xf32> to vector<16x32xbf16>
      %cst_51 = arith.constant dense<0.000000e+00> : vector<16x32xf32>
      %80 = tpu.matmul %79, %78, %cst_51 {dimension_numbers = #tpu.dot_dimension_numbers<[1], [0], [0], [1], [0, 0, 1, 1], [], []>} : vector<16x32xbf16>, vector<32x32xbf16>, vector<16x32xf32> -> vector<16x32xf32>
      %c0_52 = arith.constant 0 : index
      %c0_53 = arith.constant 0 : index
      %81 = vector.load %arg12[%c0_52, %c0_53] : memref<1x32xf32, #tpu.memory_space<vmem>>, vector<1x32xf32>
      %82 = vector.broadcast %81 : vector<1x32xf32> to vector<16x32xf32>
      %83 = arith.addf %80, %82 : vector<16x32xf32>
      %c0_54 = arith.constant 0 : index
      %c0_55 = arith.constant 0 : index
      %84 = vector.load %arg13[%c0_54, %c0_55] : memref<32x32xbf16, #tpu.memory_space<vmem>>, vector<32x32xbf16>
      %85 = arith.truncf %83 : vector<16x32xf32> to vector<16x32xbf16>
      %cst_56 = arith.constant dense<0.000000e+00> : vector<16x32xf32>
      %86 = tpu.matmul %85, %84, %cst_56 {dimension_numbers = #tpu.dot_dimension_numbers<[1], [0], [0], [1], [0, 0, 1, 1], [], []>} : vector<16x32xbf16>, vector<32x32xbf16>, vector<16x32xf32> -> vector<16x32xf32>
      %c0_57 = arith.constant 0 : index
      %c0_58 = arith.constant 0 : index
      %87 = vector.load %arg14[%c0_57, %c0_58] : memref<1x32xf32, #tpu.memory_space<vmem>>, vector<1x32xf32>
      %88 = vector.broadcast %87 : vector<1x32xf32> to vector<16x32xf32>
      %89 = arith.addf %86, %88 : vector<16x32xf32>
      %c0_59 = arith.constant 0 : index
      %c0_60 = arith.constant 0 : index
      %90 = vector.load %arg15[%c0_59, %c0_60] : memref<16x32xf32, #tpu.memory_space<vmem>>, vector<16x32xf32>
      tpu.vector_store %arg15[%c0_59, %c0_60], %89 {strides = array<i32>} : memref<16x32xf32, #tpu.memory_space<vmem>>, vector<16x32xf32>,
    } else {
    }
    return
  }
  func.func @transform_0(%arg0: i32) -> (i32, i32) {
    %c0_i32 = arith.constant 0 : i32
    %c0_i32_0 = arith.constant 0 : i32
    return %arg0, %c0_i32 : i32, i32
  }
  func.func @transform_1(%arg0: i32) -> (i32, i32) {
    %c0_i32 = arith.constant 0 : i32
    %c0_i32_0 = arith.constant 0 : i32
    return %arg0, %c0_i32 : i32, i32
  }
  func.func @transform_2(%arg0: i32) -> (i32, i32) {
    %c0_i32 = arith.constant 0 : i32
    %c0_i32_0 = arith.constant 0 : i32
    %c0_i32_1 = arith.constant 0 : i32
    return %c0_i32, %c0_i32_0 : i32, i32
  }
  func.func @transform_3(%arg0: i32) -> (i32, i32) {
    %c0_i32 = arith.constant 0 : i32
    %c0_i32_0 = arith.constant 0 : i32
    return %c0_i32, %arg0 : i32, i32
  }
  func.func @transform_4(%arg0: i32) -> (i32, i32) {
    %c0_i32 = arith.constant 0 : i32
    %c0_i32_0 = arith.constant 0 : i32
    %c0_i32_1 = arith.constant 0 : i32
    return %c0_i32, %c0_i32_0 : i32, i32
  }
  func.func @transform_5(%arg0: i32) -> (i32, i32) {
    %c0_i32 = arith.constant 0 : i32
    %c0_i32_0 = arith.constant 0 : i32
    %c0_i32_1 = arith.constant 0 : i32
    return %c0_i32, %c0_i32_0 : i32, i32
  }
  func.func @transform_6(%arg0: i32) -> (i32, i32) {
    %c0_i32 = arith.constant 0 : i32
    %c0_i32_0 = arith.constant 0 : i32
    %c0_i32_1 = arith.constant 0 : i32
    return %c0_i32, %c0_i32_0 : i32, i32
  }
  func.func @transform_7(%arg0: i32) -> (i32, i32) {
    %c0_i32 = arith.constant 0 : i32
    %c0_i32_0 = arith.constant 0 : i32
    %c0_i32_1 = arith.constant 0 : i32
    return %c0_i32, %c0_i32_0 : i32, i32
  }
  func.func @transform_8(%arg0: i32) -> (i32, i32) {
    %c0_i32 = arith.constant 0 : i32
    %c0_i32_0 = arith.constant 0 : i32
    %c0_i32_1 = arith.constant 0 : i32
    return %c0_i32, %c0_i32_0 : i32, i32
  }
  func.func @transform_9(%arg0: i32) -> (i32, i32) {
    %c0_i32 = arith.constant 0 : i32
    %c0_i32_0 = arith.constant 0 : i32
    %c0_i32_1 = arith.constant 0 : i32
    return %c0_i32, %c0_i32_0 : i32, i32
  }
  func.func @transform_10(%arg0: i32) -> (i32, i32) {
    %c0_i32 = arith.constant 0 : i32
    %c0_i32_0 = arith.constant 0 : i32
    %c0_i32_1 = arith.constant 0 : i32
    return %c0_i32, %c0_i32_0 : i32, i32
  }
  func.func @transform_11(%arg0: i32) -> (i32, i32) {
    %c0_i32 = arith.constant 0 : i32
    %c0_i32_0 = arith.constant 0 : i32
    %c0_i32_1 = arith.constant 0 : i32
    return %c0_i32, %c0_i32_0 : i32, i32
  }
  func.func @transform_12(%arg0: i32) -> (i32, i32) {
    %c0_i32 = arith.constant 0 : i32
    %c0_i32_0 = arith.constant 0 : i32
    %c0_i32_1 = arith.constant 0 : i32
    return %c0_i32, %c0_i32_0 : i32, i32
  }
  func.func @transform_13(%arg0: i32) -> (i32, i32) {
    %c0_i32 = arith.constant 0 : i32
    %c0_i32_0 = arith.constant 0 : i32
    %c0_i32_1 = arith.constant 0 : i32
    return %c0_i32, %c0_i32_0 : i32, i32
  }
  func.func @transform_14(%arg0: i32) -> (i32, i32) {
    %c0_i32 = arith.constant 0 : i32
    %c0_i32_0 = arith.constant 0 : i32
    %c0_i32_1 = arith.constant 0 : i32
    return %c0_i32, %c0_i32_0 : i32, i32
  }
}

module attributes {stable_mosaic.version = 11 : i64} {
  func.func @_dit_trunk_kernel(%arg0: i32, %arg1: memref<16x32xf32, #tpu.memory_space<vmem>>, %arg2: memref<16x32xf32, #tpu.memory_space<vmem>>, %arg3: memref<16x32xf32, #tpu.memory_space<vmem>>, %arg4: memref<16x8xf32, #tpu.memory_space<vmem>>, %arg5: memref<16x32xf32, #tpu.memory_space<vmem>>, %arg6: memref<48x8xf32, #tpu.memory_space<vmem>>, %arg7: memref<32x32xbf16, #tpu.memory_space<vmem>>, %arg8: memref<1x32xf32, #tpu.memory_space<vmem>>, %arg9: memref<8x32xbf16, #tpu.memory_space<vmem>>, %arg10: memref<1x32xf32, #tpu.memory_space<vmem>>, %arg11: memref<1x8x192xf32, #tpu.memory_space<vmem>>, %arg12: memref<1x32x96xbf16, #tpu.memory_space<vmem>>, %arg13: memref<1x1x96xf32, #tpu.memory_space<vmem>>, %arg14: memref<1x32x32xbf16, #tpu.memory_space<vmem>>, %arg15: memref<1x1x32xf32, #tpu.memory_space<vmem>>, %arg16: memref<1x32x128xbf16, #tpu.memory_space<vmem>>, %arg17: memref<1x1x128xf32, #tpu.memory_space<vmem>>, %arg18: memref<1x128x32xbf16, #tpu.memory_space<vmem>>, %arg19: memref<1x1x32xf32, #tpu.memory_space<vmem>>, %arg20: memref<48x32xf32, #tpu.memory_space<vmem>>, %arg21: memref<48x32xf32, #tpu.memory_space<vmem>>) attributes {dimension_semantics = [#tpu.dimension_semantics<arbitrary>], iteration_bounds = array<i64: 5>, scalar_prefetch = 0 : i64, scratch_operands = 1 : i64, tpu.core_type = #tpu.core_type<tc>, window_params = [{pipeline_mode = #tpu.pipeline_mode<synchronous>, transform_indices = @transform_0, window_bounds = array<i64: 16, 32>}, {pipeline_mode = #tpu.pipeline_mode<synchronous>, transform_indices = @transform_1, window_bounds = array<i64: 16, 32>}, {pipeline_mode = #tpu.pipeline_mode<synchronous>, transform_indices = @transform_2, window_bounds = array<i64: 16, 32>}, {pipeline_mode = #tpu.pipeline_mode<synchronous>, transform_indices = @transform_3, window_bounds = array<i64: 16, 8>}, {pipeline_mode = #tpu.pipeline_mode<synchronous>, transform_indices = @transform_4, window_bounds = array<i64: 16, 32>}, {pipeline_mode = #tpu.pipeline_mode<synchronous>, transform_indices = @transform_5, window_bounds = array<i64: 48, 8>}, {pipeline_mode = #tpu.pipeline_mode<synchronous>, transform_indices = @transform_6, window_bounds = array<i64: 32, 32>}, {pipeline_mode = #tpu.pipeline_mode<synchronous>, transform_indices = @transform_7, window_bounds = array<i64: 1, 32>}, {pipeline_mode = #tpu.pipeline_mode<synchronous>, transform_indices = @transform_8, window_bounds = array<i64: 8, 32>}, {pipeline_mode = #tpu.pipeline_mode<synchronous>, transform_indices = @transform_9, window_bounds = array<i64: 1, 32>}, {transform_indices = @transform_10, window_bounds = array<i64: 1, 8, 192>}, {transform_indices = @transform_11, window_bounds = array<i64: 1, 32, 96>}, {transform_indices = @transform_12, window_bounds = array<i64: 1, 1, 96>}, {transform_indices = @transform_13, window_bounds = array<i64: 1, 32, 32>}, {transform_indices = @transform_14, window_bounds = array<i64: 1, 1, 32>}, {transform_indices = @transform_15, window_bounds = array<i64: 1, 32, 128>}, {transform_indices = @transform_16, window_bounds = array<i64: 1, 1, 128>}, {transform_indices = @transform_17, window_bounds = array<i64: 1, 128, 32>}, {transform_indices = @transform_18, window_bounds = array<i64: 1, 1, 32>}, {pipeline_mode = #tpu.pipeline_mode<synchronous>, transform_indices = @transform_19, window_bounds = array<i64: 48, 32>}]} {
    %c0_i32 = arith.constant 0 : i32
    %0 = arith.cmpi eq, %arg0, %c0_i32 : i32
    %1 = arith.extui %0 : i1 to i32
    %c0_i32_0 = arith.constant 0 : i32
    %2 = arith.cmpi ne, %1, %c0_i32_0 : i32
    scf.if %2 {
      %c0_73 = arith.constant 0 : index
      %c0_74 = arith.constant 0 : index
      %198 = vector.load %arg1[%c0_73, %c0_74] : memref<16x32xf32, #tpu.memory_space<vmem>>, vector<16x32xf32>
      %c0_75 = arith.constant 0 : index
      %c0_76 = arith.constant 0 : index
      %199 = vector.load %arg21[%c0_75, %c0_76] : memref<48x32xf32, #tpu.memory_space<vmem>>, vector<16x32xf32>
      tpu.vector_store %arg21[%c0_75, %c0_76], %198 {strides = array<i32>} : memref<48x32xf32, #tpu.memory_space<vmem>>, vector<16x32xf32>,
      %c0_77 = arith.constant 0 : index
      %c0_78 = arith.constant 0 : index
      %200 = vector.load %arg2[%c0_77, %c0_78] : memref<16x32xf32, #tpu.memory_space<vmem>>, vector<16x32xf32>
      %c0_79 = arith.constant 0 : index
      %c0_80 = arith.constant 0 : index
      %201 = vector.load %arg7[%c0_79, %c0_80] : memref<32x32xbf16, #tpu.memory_space<vmem>>, vector<32x32xbf16>
      %202 = arith.truncf %200 : vector<16x32xf32> to vector<16x32xbf16>
      %cst_81 = arith.constant dense<0.000000e+00> : vector<16x32xf32>
      %203 = tpu.matmul %202, %201, %cst_81 {dimension_numbers = #tpu.dot_dimension_numbers<[1], [0], [0], [1], [0, 0, 1, 1], [], []>} : vector<16x32xbf16>, vector<32x32xbf16>, vector<16x32xf32> -> vector<16x32xf32>
      %c0_82 = arith.constant 0 : index
      %c0_83 = arith.constant 0 : index
      %204 = vector.load %arg8[%c0_82, %c0_83] : memref<1x32xf32, #tpu.memory_space<vmem>>, vector<1x32xf32>
      %205 = vector.broadcast %204 : vector<1x32xf32> to vector<16x32xf32>
      %206 = arith.addf %203, %205 : vector<16x32xf32>
      %c0_84 = arith.constant 0 : index
      %c0_85 = arith.constant 0 : index
      %207 = vector.load %arg3[%c0_84, %c0_85] : memref<16x32xf32, #tpu.memory_space<vmem>>, vector<16x32xf32>
      %208 = arith.addf %206, %207 : vector<16x32xf32>
      %c16 = arith.constant 16 : index
      %c0_86 = arith.constant 0 : index
      %209 = vector.load %arg21[%c16, %c0_86] : memref<48x32xf32, #tpu.memory_space<vmem>>, vector<16x32xf32>
      tpu.vector_store %arg21[%c16, %c0_86], %208 {strides = array<i32>} : memref<48x32xf32, #tpu.memory_space<vmem>>, vector<16x32xf32>,
      %c0_87 = arith.constant 0 : index
      %c0_88 = arith.constant 0 : index
      %210 = vector.load %arg4[%c0_87, %c0_88] : memref<16x8xf32, #tpu.memory_space<vmem>>, vector<16x8xf32>
      %c0_89 = arith.constant 0 : index
      %c0_90 = arith.constant 0 : index
      %211 = vector.load %arg9[%c0_89, %c0_90] : memref<8x32xbf16, #tpu.memory_space<vmem>>, vector<8x32xbf16>
      %212 = arith.truncf %210 : vector<16x8xf32> to vector<16x8xbf16>
      %cst_91 = arith.constant dense<0.000000e+00> : vector<16x32xf32>
      %213 = tpu.matmul %212, %211, %cst_91 {dimension_numbers = #tpu.dot_dimension_numbers<[1], [0], [0], [1], [0, 0, 1, 1], [], []>} : vector<16x8xbf16>, vector<8x32xbf16>, vector<16x32xf32> -> vector<16x32xf32>
      %c0_92 = arith.constant 0 : index
      %c0_93 = arith.constant 0 : index
      %214 = vector.load %arg10[%c0_92, %c0_93] : memref<1x32xf32, #tpu.memory_space<vmem>>, vector<1x32xf32>
      %215 = vector.broadcast %214 : vector<1x32xf32> to vector<16x32xf32>
      %216 = arith.addf %213, %215 : vector<16x32xf32>
      %c0_94 = arith.constant 0 : index
      %c0_95 = arith.constant 0 : index
      %217 = vector.load %arg5[%c0_94, %c0_95] : memref<16x32xf32, #tpu.memory_space<vmem>>, vector<16x32xf32>
      %218 = arith.addf %216, %217 : vector<16x32xf32>
      %c32 = arith.constant 32 : index
      %c0_96 = arith.constant 0 : index
      %219 = vector.load %arg21[%c32, %c0_96] : memref<48x32xf32, #tpu.memory_space<vmem>>, vector<16x32xf32>
      tpu.vector_store %arg21[%c32, %c0_96], %218 {strides = array<i32>} : memref<48x32xf32, #tpu.memory_space<vmem>>, vector<16x32xf32>,
    } else {
    }
    %c4_i32 = arith.constant 4 : i32
    %3 = arith.cmpi eq, %arg0, %c4_i32 : i32
    %c8_i32 = arith.constant 8 : i32
    %4 = arith.cmpi eq, %arg0, %c8_i32 : i32
    %5 = arith.ori %3, %4 : i1
    %6 = arith.extui %5 : i1 to i32
    %c0_i32_1 = arith.constant 0 : i32
    %7 = arith.cmpi ne, %6, %c0_i32_1 : i32
    scf.if %7 {
      %c0_73 = arith.constant 0 : index
      %c0_74 = arith.constant 0 : index
      %198 = vector.load %arg21[%c0_73, %c0_74] : memref<48x32xf32, #tpu.memory_space<vmem>>, vector<48x32xf32>
      %cst_75 = arith.constant dense<0.000000e+00> : vector<48xf32>
      %199 = vector.multi_reduction <add>, %198, %cst_75 [1] : vector<48x32xf32> to vector<48xf32>
      %200 = vector.shape_cast %199 : vector<48xf32> to vector<48x1xf32>
      %cst_76 = arith.constant 3.200000e+01 : f32
      %201 = vector.broadcast %cst_76 : f32 to vector<48x1xf32>
      %202 = arith.divf %200, %201 : vector<48x1xf32>
      %203 = vector.broadcast %202 : vector<48x1xf32> to vector<48x32xf32>
      %204 = arith.subf %198, %203 : vector<48x32xf32>
      %205 = arith.mulf %204, %204 : vector<48x32xf32>
      %cst_77 = arith.constant dense<0.000000e+00> : vector<48xf32>
      %206 = vector.multi_reduction <add>, %205, %cst_77 [1] : vector<48x32xf32> to vector<48xf32>
      %207 = vector.shape_cast %206 : vector<48xf32> to vector<48x1xf32>
      %cst_78 = arith.constant 3.200000e+01 : f32
      %208 = vector.broadcast %cst_78 : f32 to vector<48x1xf32>
      %209 = arith.divf %207, %208 : vector<48x1xf32>
      %210 = vector.broadcast %202 : vector<48x1xf32> to vector<48x32xf32>
      %211 = arith.subf %198, %210 : vector<48x32xf32>
      %cst_79 = arith.constant 9.99999997E-7 : f32
      %212 = vector.broadcast %cst_79 : f32 to vector<48x1xf32>
      %213 = arith.addf %209, %212 : vector<48x1xf32>
      %214 = math.rsqrt %213 : vector<48x1xf32>
      %215 = vector.broadcast %214 : vector<48x1xf32> to vector<48x32xf32>
      %216 = arith.mulf %211, %215 : vector<48x32xf32>
      %c0_80 = arith.constant 0 : index
      %c0_81 = arith.constant 0 : index
      %217 = vector.load %arg21[%c0_80, %c0_81] : memref<48x32xf32, #tpu.memory_space<vmem>>, vector<48x32xf32>
      tpu.vector_store %arg21[%c0_80, %c0_81], %216 {strides = array<i32>} : memref<48x32xf32, #tpu.memory_space<vmem>>, vector<48x32xf32>,
    } else {
    }
    %c0 = arith.constant 0 : index
    %c0_2 = arith.constant 0 : index
    %8 = vector.load %arg21[%c0, %c0_2] : memref<48x32xf32, #tpu.memory_space<vmem>>, vector<48x32xf32>
    %c0_3 = arith.constant 0 : index
    %c0_4 = arith.constant 0 : index
    %9 = vector.load %arg6[%c0_3, %c0_4] : memref<48x8xf32, #tpu.memory_space<vmem>>, vector<48x8xf32>
    %c0_5 = arith.constant 0 : index
    %c0_6 = arith.constant 0 : index
    %c0_7 = arith.constant 0 : index
    %10 = vector.load %arg11[%c0_5, %c0_6, %c0_7] : memref<1x8x192xf32, #tpu.memory_space<vmem>>, vector<1x8x192xf32>
    %11 = vector.shape_cast %10 : vector<1x8x192xf32> to vector<8x192xf32>
    %cst = arith.constant dense<0.000000e+00> : vector<48x192xf32>
    %12 = tpu.matmul %9, %11, %cst {dimension_numbers = #tpu.dot_dimension_numbers<[1], [0], [0], [1], [0, 0, 1, 1], [], []>} : vector<48x8xf32>, vector<8x192xf32>, vector<48x192xf32> -> vector<48x192xf32>
    %13 = vector.extract_strided_slice %12 {offsets = [0, 0], sizes = [48, 32], strides = [1, 1]} : vector<48x192xf32> to vector<48x32xf32>
    %14 = vector.extract_strided_slice %12 {offsets = [0, 32], sizes = [48, 32], strides = [1, 1]} : vector<48x192xf32> to vector<48x32xf32>
    %15 = vector.extract_strided_slice %12 {offsets = [0, 64], sizes = [48, 32], strides = [1, 1]} : vector<48x192xf32> to vector<48x32xf32>
    %16 = vector.extract_strided_slice %12 {offsets = [0, 96], sizes = [48, 32], strides = [1, 1]} : vector<48x192xf32> to vector<48x32xf32>
    %17 = vector.extract_strided_slice %12 {offsets = [0, 128], sizes = [48, 32], strides = [1, 1]} : vector<48x192xf32> to vector<48x32xf32>
    %18 = vector.extract_strided_slice %12 {offsets = [0, 160], sizes = [48, 32], strides = [1, 1]} : vector<48x192xf32> to vector<48x32xf32>
    %cst_8 = arith.constant dense<0.000000e+00> : vector<48xf32>
    %19 = vector.multi_reduction <add>, %8, %cst_8 [1] : vector<48x32xf32> to vector<48xf32>
    %20 = vector.shape_cast %19 : vector<48xf32> to vector<48x1xf32>
    %cst_9 = arith.constant 3.200000e+01 : f32
    %21 = vector.broadcast %cst_9 : f32 to vector<48x1xf32>
    %22 = arith.divf %20, %21 : vector<48x1xf32>
    %23 = vector.broadcast %22 : vector<48x1xf32> to vector<48x32xf32>
    %24 = arith.subf %8, %23 : vector<48x32xf32>
    %25 = arith.mulf %24, %24 : vector<48x32xf32>
    %cst_10 = arith.constant dense<0.000000e+00> : vector<48xf32>
    %26 = vector.multi_reduction <add>, %25, %cst_10 [1] : vector<48x32xf32> to vector<48xf32>
    %27 = vector.shape_cast %26 : vector<48xf32> to vector<48x1xf32>
    %cst_11 = arith.constant 3.200000e+01 : f32
    %28 = vector.broadcast %cst_11 : f32 to vector<48x1xf32>
    %29 = arith.divf %27, %28 : vector<48x1xf32>
    %30 = vector.broadcast %22 : vector<48x1xf32> to vector<48x32xf32>
    %31 = arith.subf %8, %30 : vector<48x32xf32>
    %cst_12 = arith.constant 9.99999997E-7 : f32
    %32 = vector.broadcast %cst_12 : f32 to vector<48x1xf32>
    %33 = arith.addf %29, %32 : vector<48x1xf32>
    %34 = math.rsqrt %33 : vector<48x1xf32>
    %35 = vector.broadcast %34 : vector<48x1xf32> to vector<48x32xf32>
    %36 = arith.mulf %31, %35 : vector<48x32xf32>
    %cst_13 = arith.constant 1.000000e+00 : f32
    %37 = vector.broadcast %cst_13 : f32 to vector<48x32xf32>
    %38 = arith.addf %37, %14 : vector<48x32xf32>
    %39 = arith.mulf %36, %38 : vector<48x32xf32>
    %40 = arith.addf %39, %13 : vector<48x32xf32>
    %c0_14 = arith.constant 0 : index
    %c0_15 = arith.constant 0 : index
    %c0_16 = arith.constant 0 : index
    %41 = vector.load %arg12[%c0_14, %c0_15, %c0_16] : memref<1x32x96xbf16, #tpu.memory_space<vmem>>, vector<1x32x96xbf16>
    %42 = vector.shape_cast %41 : vector<1x32x96xbf16> to vector<32x96xbf16>
    %43 = arith.truncf %40 : vector<48x32xf32> to vector<48x32xbf16>
    %cst_17 = arith.constant dense<0.000000e+00> : vector<48x96xf32>
    %44 = tpu.matmul %43, %42, %cst_17 {dimension_numbers = #tpu.dot_dimension_numbers<[1], [0], [0], [1], [0, 0, 1, 1], [], []>} : vector<48x32xbf16>, vector<32x96xbf16>, vector<48x96xf32> -> vector<48x96xf32>
    %c0_18 = arith.constant 0 : index
    %c0_19 = arith.constant 0 : index
    %c0_20 = arith.constant 0 : index
    %45 = vector.load %arg13[%c0_18, %c0_19, %c0_20] : memref<1x1x96xf32, #tpu.memory_space<vmem>>, vector<1x1x96xf32>
    %46 = vector.shape_cast %45 : vector<1x1x96xf32> to vector<1x96xf32>
    %47 = vector.broadcast %46 : vector<1x96xf32> to vector<48x96xf32>
    %48 = arith.addf %44, %47 : vector<48x96xf32>
    %49 = vector.extract_strided_slice %48 {offsets = [0, 0], sizes = [48, 32], strides = [1, 1]} : vector<48x96xf32> to vector<48x32xf32>
    %cst_21 = arith.constant 0.353553385 : f32
    %50 = vector.broadcast %cst_21 : f32 to vector<48x32xf32>
    %51 = arith.mulf %49, %50 : vector<48x32xf32>
    %52 = vector.extract_strided_slice %48 {offsets = [0, 32], sizes = [48, 32], strides = [1, 1]} : vector<48x96xf32> to vector<48x32xf32>
    %53 = vector.extract_strided_slice %48 {offsets = [0, 64], sizes = [48, 32], strides = [1, 1]} : vector<48x96xf32> to vector<48x32xf32>
    %54 = vector.extract_strided_slice %51 {offsets = [0, 0], sizes = [48, 8], strides = [1, 1]} : vector<48x32xf32> to vector<48x8xf32>
    %55 = arith.truncf %54 : vector<48x8xf32> to vector<48x8xbf16>
    %56 = vector.extract_strided_slice %52 {offsets = [0, 0], sizes = [48, 8], strides = [1, 1]} : vector<48x32xf32> to vector<48x8xf32>
    %57 = arith.truncf %56 : vector<48x8xf32> to vector<48x8xbf16>
    %58 = vector.extract_strided_slice %53 {offsets = [0, 0], sizes = [48, 8], strides = [1, 1]} : vector<48x32xf32> to vector<48x8xf32>
    %59 = arith.truncf %58 : vector<48x8xf32> to vector<48x8xbf16>
    %cst_22 = arith.constant dense<0.000000e+00> : vector<48x48xf32>
    %60 = tpu.matmul %55, %57, %cst_22 {dimension_numbers = #tpu.dot_dimension_numbers<[1], [1], [0], [0], [0, 0, 1, 0], [], []>} : vector<48x8xbf16>, vector<48x8xbf16>, vector<48x48xf32> -> vector<48x48xf32>
    %cst_23 = arith.constant dense<0xFF800000> : vector<48xf32>
    %61 = vector.multi_reduction <maximumf>, %60, %cst_23 [1] : vector<48x48xf32> to vector<48xf32>
    %62 = vector.shape_cast %61 : vector<48xf32> to vector<48x1xf32>
    %63 = vector.broadcast %62 : vector<48x1xf32> to vector<48x48xf32>
    %64 = arith.subf %60, %63 : vector<48x48xf32>
    %65 = math.exp %64 : vector<48x48xf32>
    %cst_24 = arith.constant dense<0.000000e+00> : vector<48xf32>
    %66 = vector.multi_reduction <add>, %65, %cst_24 [1] : vector<48x48xf32> to vector<48xf32>
    %67 = vector.shape_cast %66 : vector<48xf32> to vector<48x1xf32>
    %68 = tpu.reciprocal %67 {approx = true} : vector<48x1xf32> -> vector<48x1xf32>
    %69 = vector.broadcast %68 : vector<48x1xf32> to vector<48x48xf32>
    %70 = arith.mulf %65, %69 : vector<48x48xf32>
    %71 = arith.truncf %70 : vector<48x48xf32> to vector<48x48xbf16>
    %cst_25 = arith.constant dense<0.000000e+00> : vector<48x8xf32>
    %72 = tpu.matmul %71, %59, %cst_25 {dimension_numbers = #tpu.dot_dimension_numbers<[1], [0], [0], [1], [0, 0, 1, 1], [], []>} : vector<48x48xbf16>, vector<48x8xbf16>, vector<48x8xf32> -> vector<48x8xf32>
    %73 = vector.extract_strided_slice %51 {offsets = [0, 8], sizes = [48, 8], strides = [1, 1]} : vector<48x32xf32> to vector<48x8xf32>
    %74 = arith.truncf %73 : vector<48x8xf32> to vector<48x8xbf16>
    %75 = vector.extract_strided_slice %52 {offsets = [0, 8], sizes = [48, 8], strides = [1, 1]} : vector<48x32xf32> to vector<48x8xf32>
    %76 = arith.truncf %75 : vector<48x8xf32> to vector<48x8xbf16>
    %77 = vector.extract_strided_slice %53 {offsets = [0, 8], sizes = [48, 8], strides = [1, 1]} : vector<48x32xf32> to vector<48x8xf32>
    %78 = arith.truncf %77 : vector<48x8xf32> to vector<48x8xbf16>
    %cst_26 = arith.constant dense<0.000000e+00> : vector<48x48xf32>
    %79 = tpu.matmul %74, %76, %cst_26 {dimension_numbers = #tpu.dot_dimension_numbers<[1], [1], [0], [0], [0, 0, 1, 0], [], []>} : vector<48x8xbf16>, vector<48x8xbf16>, vector<48x48xf32> -> vector<48x48xf32>
    %cst_27 = arith.constant dense<0xFF800000> : vector<48xf32>
    %80 = vector.multi_reduction <maximumf>, %79, %cst_27 [1] : vector<48x48xf32> to vector<48xf32>
    %81 = vector.shape_cast %80 : vector<48xf32> to vector<48x1xf32>
    %82 = vector.broadcast %81 : vector<48x1xf32> to vector<48x48xf32>
    %83 = arith.subf %79, %82 : vector<48x48xf32>
    %84 = math.exp %83 : vector<48x48xf32>
    %cst_28 = arith.constant dense<0.000000e+00> : vector<48xf32>
    %85 = vector.multi_reduction <add>, %84, %cst_28 [1] : vector<48x48xf32> to vector<48xf32>
    %86 = vector.shape_cast %85 : vector<48xf32> to vector<48x1xf32>
    %87 = tpu.reciprocal %86 {approx = true} : vector<48x1xf32> -> vector<48x1xf32>
    %88 = vector.broadcast %87 : vector<48x1xf32> to vector<48x48xf32>
    %89 = arith.mulf %84, %88 : vector<48x48xf32>
    %90 = arith.truncf %89 : vector<48x48xf32> to vector<48x48xbf16>
    %cst_29 = arith.constant dense<0.000000e+00> : vector<48x8xf32>
    %91 = tpu.matmul %90, %78, %cst_29 {dimension_numbers = #tpu.dot_dimension_numbers<[1], [0], [0], [1], [0, 0, 1, 1], [], []>} : vector<48x48xbf16>, vector<48x8xbf16>, vector<48x8xf32> -> vector<48x8xf32>
    %92 = vector.extract_strided_slice %51 {offsets = [0, 16], sizes = [48, 8], strides = [1, 1]} : vector<48x32xf32> to vector<48x8xf32>
    %93 = arith.truncf %92 : vector<48x8xf32> to vector<48x8xbf16>
    %94 = vector.extract_strided_slice %52 {offsets = [0, 16], sizes = [48, 8], strides = [1, 1]} : vector<48x32xf32> to vector<48x8xf32>
    %95 = arith.truncf %94 : vector<48x8xf32> to vector<48x8xbf16>
    %96 = vector.extract_strided_slice %53 {offsets = [0, 16], sizes = [48, 8], strides = [1, 1]} : vector<48x32xf32> to vector<48x8xf32>
    %97 = arith.truncf %96 : vector<48x8xf32> to vector<48x8xbf16>
    %cst_30 = arith.constant dense<0.000000e+00> : vector<48x48xf32>
    %98 = tpu.matmul %93, %95, %cst_30 {dimension_numbers = #tpu.dot_dimension_numbers<[1], [1], [0], [0], [0, 0, 1, 0], [], []>} : vector<48x8xbf16>, vector<48x8xbf16>, vector<48x48xf32> -> vector<48x48xf32>
    %cst_31 = arith.constant dense<0xFF800000> : vector<48xf32>
    %99 = vector.multi_reduction <maximumf>, %98, %cst_31 [1] : vector<48x48xf32> to vector<48xf32>
    %100 = vector.shape_cast %99 : vector<48xf32> to vector<48x1xf32>
    %101 = vector.broadcast %100 : vector<48x1xf32> to vector<48x48xf32>
    %102 = arith.subf %98, %101 : vector<48x48xf32>
    %103 = math.exp %102 : vector<48x48xf32>
    %cst_32 = arith.constant dense<0.000000e+00> : vector<48xf32>
    %104 = vector.multi_reduction <add>, %103, %cst_32 [1] : vector<48x48xf32> to vector<48xf32>
    %105 = vector.shape_cast %104 : vector<48xf32> to vector<48x1xf32>
    %106 = tpu.reciprocal %105 {approx = true} : vector<48x1xf32> -> vector<48x1xf32>
    %107 = vector.broadcast %106 : vector<48x1xf32> to vector<48x48xf32>
    %108 = arith.mulf %103, %107 : vector<48x48xf32>
    %109 = arith.truncf %108 : vector<48x48xf32> to vector<48x48xbf16>
    %cst_33 = arith.constant dense<0.000000e+00> : vector<48x8xf32>
    %110 = tpu.matmul %109, %97, %cst_33 {dimension_numbers = #tpu.dot_dimension_numbers<[1], [0], [0], [1], [0, 0, 1, 1], [], []>} : vector<48x48xbf16>, vector<48x8xbf16>, vector<48x8xf32> -> vector<48x8xf32>
    %111 = vector.extract_strided_slice %51 {offsets = [0, 24], sizes = [48, 8], strides = [1, 1]} : vector<48x32xf32> to vector<48x8xf32>
    %112 = arith.truncf %111 : vector<48x8xf32> to vector<48x8xbf16>
    %113 = vector.extract_strided_slice %52 {offsets = [0, 24], sizes = [48, 8], strides = [1, 1]} : vector<48x32xf32> to vector<48x8xf32>
    %114 = arith.truncf %113 : vector<48x8xf32> to vector<48x8xbf16>
    %115 = vector.extract_strided_slice %53 {offsets = [0, 24], sizes = [48, 8], strides = [1, 1]} : vector<48x32xf32> to vector<48x8xf32>
    %116 = arith.truncf %115 : vector<48x8xf32> to vector<48x8xbf16>
    %cst_34 = arith.constant dense<0.000000e+00> : vector<48x48xf32>
    %117 = tpu.matmul %112, %114, %cst_34 {dimension_numbers = #tpu.dot_dimension_numbers<[1], [1], [0], [0], [0, 0, 1, 0], [], []>} : vector<48x8xbf16>, vector<48x8xbf16>, vector<48x48xf32> -> vector<48x48xf32>
    %cst_35 = arith.constant dense<0xFF800000> : vector<48xf32>
    %118 = vector.multi_reduction <maximumf>, %117, %cst_35 [1] : vector<48x48xf32> to vector<48xf32>
    %119 = vector.shape_cast %118 : vector<48xf32> to vector<48x1xf32>
    %120 = vector.broadcast %119 : vector<48x1xf32> to vector<48x48xf32>
    %121 = arith.subf %117, %120 : vector<48x48xf32>
    %122 = math.exp %121 : vector<48x48xf32>
    %cst_36 = arith.constant dense<0.000000e+00> : vector<48xf32>
    %123 = vector.multi_reduction <add>, %122, %cst_36 [1] : vector<48x48xf32> to vector<48xf32>
    %124 = vector.shape_cast %123 : vector<48xf32> to vector<48x1xf32>
    %125 = tpu.reciprocal %124 {approx = true} : vector<48x1xf32> -> vector<48x1xf32>
    %126 = vector.broadcast %125 : vector<48x1xf32> to vector<48x48xf32>
    %127 = arith.mulf %122, %126 : vector<48x48xf32>
    %128 = arith.truncf %127 : vector<48x48xf32> to vector<48x48xbf16>
    %cst_37 = arith.constant dense<0.000000e+00> : vector<48x8xf32>
    %129 = tpu.matmul %128, %116, %cst_37 {dimension_numbers = #tpu.dot_dimension_numbers<[1], [0], [0], [1], [0, 0, 1, 1], [], []>} : vector<48x48xbf16>, vector<48x8xbf16>, vector<48x8xf32> -> vector<48x8xf32>
    %130 = tpu.concatenate %72, %91, %110, %129 in 1 : vector<48x8xf32>, vector<48x8xf32>, vector<48x8xf32>, vector<48x8xf32> -> vector<48x32xf32>
    %c0_38 = arith.constant 0 : index
    %c0_39 = arith.constant 0 : index
    %c0_40 = arith.constant 0 : index
    %131 = vector.load %arg14[%c0_38, %c0_39, %c0_40] : memref<1x32x32xbf16, #tpu.memory_space<vmem>>, vector<1x32x32xbf16>
    %132 = vector.shape_cast %131 : vector<1x32x32xbf16> to vector<32x32xbf16>
    %133 = arith.truncf %130 : vector<48x32xf32> to vector<48x32xbf16>
    %cst_41 = arith.constant dense<0.000000e+00> : vector<48x32xf32>
    %134 = tpu.matmul %133, %132, %cst_41 {dimension_numbers = #tpu.dot_dimension_numbers<[1], [0], [0], [1], [0, 0, 1, 1], [], []>} : vector<48x32xbf16>, vector<32x32xbf16>, vector<48x32xf32> -> vector<48x32xf32>
    %c0_42 = arith.constant 0 : index
    %c0_43 = arith.constant 0 : index
    %c0_44 = arith.constant 0 : index
    %135 = vector.load %arg15[%c0_42, %c0_43, %c0_44] : memref<1x1x32xf32, #tpu.memory_space<vmem>>, vector<1x1x32xf32>
    %136 = vector.shape_cast %135 : vector<1x1x32xf32> to vector<1x32xf32>
    %137 = vector.broadcast %136 : vector<1x32xf32> to vector<48x32xf32>
    %138 = arith.addf %134, %137 : vector<48x32xf32>
    %139 = arith.mulf %15, %138 : vector<48x32xf32>
    %140 = arith.addf %8, %139 : vector<48x32xf32>
    %cst_45 = arith.constant dense<0.000000e+00> : vector<48xf32>
    %141 = vector.multi_reduction <add>, %140, %cst_45 [1] : vector<48x32xf32> to vector<48xf32>
    %142 = vector.shape_cast %141 : vector<48xf32> to vector<48x1xf32>
    %cst_46 = arith.constant 3.200000e+01 : f32
    %143 = vector.broadcast %cst_46 : f32 to vector<48x1xf32>
    %144 = arith.divf %142, %143 : vector<48x1xf32>
    %145 = vector.broadcast %144 : vector<48x1xf32> to vector<48x32xf32>
    %146 = arith.subf %140, %145 : vector<48x32xf32>
    %147 = arith.mulf %146, %146 : vector<48x32xf32>
    %cst_47 = arith.constant dense<0.000000e+00> : vector<48xf32>
    %148 = vector.multi_reduction <add>, %147, %cst_47 [1] : vector<48x32xf32> to vector<48xf32>
    %149 = vector.shape_cast %148 : vector<48xf32> to vector<48x1xf32>
    %cst_48 = arith.constant 3.200000e+01 : f32
    %150 = vector.broadcast %cst_48 : f32 to vector<48x1xf32>
    %151 = arith.divf %149, %150 : vector<48x1xf32>
    %152 = vector.broadcast %144 : vector<48x1xf32> to vector<48x32xf32>
    %153 = arith.subf %140, %152 : vector<48x32xf32>
    %cst_49 = arith.constant 9.99999997E-7 : f32
    %154 = vector.broadcast %cst_49 : f32 to vector<48x1xf32>
    %155 = arith.addf %151, %154 : vector<48x1xf32>
    %156 = math.rsqrt %155 : vector<48x1xf32>
    %157 = vector.broadcast %156 : vector<48x1xf32> to vector<48x32xf32>
    %158 = arith.mulf %153, %157 : vector<48x32xf32>
    %cst_50 = arith.constant 1.000000e+00 : f32
    %159 = vector.broadcast %cst_50 : f32 to vector<48x32xf32>
    %160 = arith.addf %159, %17 : vector<48x32xf32>
    %161 = arith.mulf %158, %160 : vector<48x32xf32>
    %162 = arith.addf %161, %16 : vector<48x32xf32>
    %c0_51 = arith.constant 0 : index
    %c0_52 = arith.constant 0 : index
    %c0_53 = arith.constant 0 : index
    %163 = vector.load %arg16[%c0_51, %c0_52, %c0_53] : memref<1x32x128xbf16, #tpu.memory_space<vmem>>, vector<1x32x128xbf16>
    %164 = vector.shape_cast %163 : vector<1x32x128xbf16> to vector<32x128xbf16>
    %165 = arith.truncf %162 : vector<48x32xf32> to vector<48x32xbf16>
    %cst_54 = arith.constant dense<0.000000e+00> : vector<48x128xf32>
    %166 = tpu.matmul %165, %164, %cst_54 {dimension_numbers = #tpu.dot_dimension_numbers<[1], [0], [0], [1], [0, 0, 1, 1], [], []>} : vector<48x32xbf16>, vector<32x128xbf16>, vector<48x128xf32> -> vector<48x128xf32>
    %c0_55 = arith.constant 0 : index
    %c0_56 = arith.constant 0 : index
    %c0_57 = arith.constant 0 : index
    %167 = vector.load %arg17[%c0_55, %c0_56, %c0_57] : memref<1x1x128xf32, #tpu.memory_space<vmem>>, vector<1x1x128xf32>
    %168 = vector.shape_cast %167 : vector<1x1x128xf32> to vector<1x128xf32>
    %169 = vector.broadcast %168 : vector<1x128xf32> to vector<48x128xf32>
    %170 = arith.addf %166, %169 : vector<48x128xf32>
    %171 = arith.mulf %170, %170 : vector<48x128xf32>
    %172 = arith.mulf %170, %171 : vector<48x128xf32>
    %cst_58 = arith.constant 4.471500e-02 : f32
    %173 = vector.broadcast %cst_58 : f32 to vector<48x128xf32>
    %174 = arith.mulf %173, %172 : vector<48x128xf32>
    %175 = arith.addf %170, %174 : vector<48x128xf32>
    %cst_59 = arith.constant 0.797884583 : f32
    %176 = vector.broadcast %cst_59 : f32 to vector<48x128xf32>
    %177 = arith.mulf %176, %175 : vector<48x128xf32>
    %178 = math.tanh %177 : vector<48x128xf32>
    %cst_60 = arith.constant 1.000000e+00 : f32
    %179 = vector.broadcast %cst_60 : f32 to vector<48x128xf32>
    %180 = arith.addf %179, %178 : vector<48x128xf32>
    %cst_61 = arith.constant 5.000000e-01 : f32
    %181 = vector.broadcast %cst_61 : f32 to vector<48x128xf32>
    %182 = arith.mulf %181, %180 : vector<48x128xf32>
    %183 = arith.mulf %170, %182 : vector<48x128xf32>
    %c0_62 = arith.constant 0 : index
    %c0_63 = arith.constant 0 : index
    %c0_64 = arith.constant 0 : index
    %184 = vector.load %arg18[%c0_62, %c0_63, %c0_64] : memref<1x128x32xbf16, #tpu.memory_space<vmem>>, vector<1x128x32xbf16>
    %185 = vector.shape_cast %184 : vector<1x128x32xbf16> to vector<128x32xbf16>
    %186 = arith.truncf %183 : vector<48x128xf32> to vector<48x128xbf16>
    %cst_65 = arith.constant dense<0.000000e+00> : vector<48x32xf32>
    %187 = tpu.matmul %186, %185, %cst_65 {dimension_numbers = #tpu.dot_dimension_numbers<[1], [0], [0], [1], [0, 0, 1, 1], [], []>} : vector<48x128xbf16>, vector<128x32xbf16>, vector<48x32xf32> -> vector<48x32xf32>
    %c0_66 = arith.constant 0 : index
    %c0_67 = arith.constant 0 : index
    %c0_68 = arith.constant 0 : index
    %188 = vector.load %arg19[%c0_66, %c0_67, %c0_68] : memref<1x1x32xf32, #tpu.memory_space<vmem>>, vector<1x1x32xf32>
    %189 = vector.shape_cast %188 : vector<1x1x32xf32> to vector<1x32xf32>
    %190 = vector.broadcast %189 : vector<1x32xf32> to vector<48x32xf32>
    %191 = arith.addf %187, %190 : vector<48x32xf32>
    %192 = arith.mulf %18, %191 : vector<48x32xf32>
    %193 = arith.addf %140, %192 : vector<48x32xf32>
    %c0_69 = arith.constant 0 : index
    %c0_70 = arith.constant 0 : index
    %194 = vector.load %arg21[%c0_69, %c0_70] : memref<48x32xf32, #tpu.memory_space<vmem>>, vector<48x32xf32>
    tpu.vector_store %arg21[%c0_69, %c0_70], %193 {strides = array<i32>} : memref<48x32xf32, #tpu.memory_space<vmem>>, vector<48x32xf32>,
    %c4_i32_71 = arith.constant 4 : i32
    %195 = arith.cmpi eq, %arg0, %c4_i32_71 : i32
    %196 = arith.extui %195 : i1 to i32
    %c0_i32_72 = arith.constant 0 : i32
    %197 = arith.cmpi ne, %196, %c0_i32_72 : i32
    scf.if %197 {
      %c0_73 = arith.constant 0 : index
      %c0_74 = arith.constant 0 : index
      %198 = vector.load %arg20[%c0_73, %c0_74] : memref<48x32xf32, #tpu.memory_space<vmem>>, vector<48x32xf32>
      tpu.vector_store %arg20[%c0_73, %c0_74], %193 {strides = array<i32>} : memref<48x32xf32, #tpu.memory_space<vmem>>, vector<48x32xf32>,
    } else {
    }
    return
  }
  func.func @transform_0(%arg0: i32) -> (i32, i32) {
    %c0_i32 = arith.constant 0 : i32
    %c0_i32_0 = arith.constant 0 : i32
    %c0_i32_1 = arith.constant 0 : i32
    return %c0_i32, %c0_i32_0 : i32, i32
  }
  func.func @transform_1(%arg0: i32) -> (i32, i32) {
    %c0_i32 = arith.constant 0 : i32
    %c0_i32_0 = arith.constant 0 : i32
    %c0_i32_1 = arith.constant 0 : i32
    return %c0_i32, %c0_i32_0 : i32, i32
  }
  func.func @transform_2(%arg0: i32) -> (i32, i32) {
    %c0_i32 = arith.constant 0 : i32
    %c0_i32_0 = arith.constant 0 : i32
    %c0_i32_1 = arith.constant 0 : i32
    return %c0_i32, %c0_i32_0 : i32, i32
  }
  func.func @transform_3(%arg0: i32) -> (i32, i32) {
    %c0_i32 = arith.constant 0 : i32
    %c0_i32_0 = arith.constant 0 : i32
    %c0_i32_1 = arith.constant 0 : i32
    return %c0_i32, %c0_i32_0 : i32, i32
  }
  func.func @transform_4(%arg0: i32) -> (i32, i32) {
    %c0_i32 = arith.constant 0 : i32
    %c0_i32_0 = arith.constant 0 : i32
    %c0_i32_1 = arith.constant 0 : i32
    return %c0_i32, %c0_i32_0 : i32, i32
  }
  func.func @transform_5(%arg0: i32) -> (i32, i32) {
    %c0_i32 = arith.constant 0 : i32
    %c0_i32_0 = arith.constant 0 : i32
    %c0_i32_1 = arith.constant 0 : i32
    return %c0_i32, %c0_i32_0 : i32, i32
  }
  func.func @transform_6(%arg0: i32) -> (i32, i32) {
    %c0_i32 = arith.constant 0 : i32
    %c0_i32_0 = arith.constant 0 : i32
    %c0_i32_1 = arith.constant 0 : i32
    return %c0_i32, %c0_i32_0 : i32, i32
  }
  func.func @transform_7(%arg0: i32) -> (i32, i32) {
    %c0_i32 = arith.constant 0 : i32
    %c0_i32_0 = arith.constant 0 : i32
    %c0_i32_1 = arith.constant 0 : i32
    return %c0_i32, %c0_i32_0 : i32, i32
  }
  func.func @transform_8(%arg0: i32) -> (i32, i32) {
    %c0_i32 = arith.constant 0 : i32
    %c0_i32_0 = arith.constant 0 : i32
    %c0_i32_1 = arith.constant 0 : i32
    return %c0_i32, %c0_i32_0 : i32, i32
  }
  func.func @transform_9(%arg0: i32) -> (i32, i32) {
    %c0_i32 = arith.constant 0 : i32
    %c0_i32_0 = arith.constant 0 : i32
    %c0_i32_1 = arith.constant 0 : i32
    return %c0_i32, %c0_i32_0 : i32, i32
  }
  func.func @transform_10(%arg0: i32) -> (i32, i32, i32) {
    %c0_i32 = arith.constant 0 : i32
    %c0_i32_0 = arith.constant 0 : i32
    %c0_i32_1 = arith.constant 0 : i32
    return %arg0, %c0_i32, %c0_i32_0 : i32, i32, i32
  }
  func.func @transform_11(%arg0: i32) -> (i32, i32, i32) {
    %c0_i32 = arith.constant 0 : i32
    %c0_i32_0 = arith.constant 0 : i32
    %c0_i32_1 = arith.constant 0 : i32
    return %arg0, %c0_i32, %c0_i32_0 : i32, i32, i32
  }
  func.func @transform_12(%arg0: i32) -> (i32, i32, i32) {
    %c0_i32 = arith.constant 0 : i32
    %c0_i32_0 = arith.constant 0 : i32
    %c0_i32_1 = arith.constant 0 : i32
    return %arg0, %c0_i32, %c0_i32_0 : i32, i32, i32
  }
  func.func @transform_13(%arg0: i32) -> (i32, i32, i32) {
    %c0_i32 = arith.constant 0 : i32
    %c0_i32_0 = arith.constant 0 : i32
    %c0_i32_1 = arith.constant 0 : i32
    return %arg0, %c0_i32, %c0_i32_0 : i32, i32, i32
  }
  func.func @transform_14(%arg0: i32) -> (i32, i32, i32) {
    %c0_i32 = arith.constant 0 : i32
    %c0_i32_0 = arith.constant 0 : i32
    %c0_i32_1 = arith.constant 0 : i32
    return %arg0, %c0_i32, %c0_i32_0 : i32, i32, i32
  }
  func.func @transform_15(%arg0: i32) -> (i32, i32, i32) {
    %c0_i32 = arith.constant 0 : i32
    %c0_i32_0 = arith.constant 0 : i32
    %c0_i32_1 = arith.constant 0 : i32
    return %arg0, %c0_i32, %c0_i32_0 : i32, i32, i32
  }
  func.func @transform_16(%arg0: i32) -> (i32, i32, i32) {
    %c0_i32 = arith.constant 0 : i32
    %c0_i32_0 = arith.constant 0 : i32
    %c0_i32_1 = arith.constant 0 : i32
    return %arg0, %c0_i32, %c0_i32_0 : i32, i32, i32
  }
  func.func @transform_17(%arg0: i32) -> (i32, i32, i32) {
    %c0_i32 = arith.constant 0 : i32
    %c0_i32_0 = arith.constant 0 : i32
    %c0_i32_1 = arith.constant 0 : i32
    return %arg0, %c0_i32, %c0_i32_0 : i32, i32, i32
  }
  func.func @transform_18(%arg0: i32) -> (i32, i32, i32) {
    %c0_i32 = arith.constant 0 : i32
    %c0_i32_0 = arith.constant 0 : i32
    %c0_i32_1 = arith.constant 0 : i32
    return %arg0, %c0_i32, %c0_i32_0 : i32, i32, i32
  }
  func.func @transform_19(%arg0: i32) -> (i32, i32) {
    %c0_i32 = arith.constant 0 : i32
    %c0_i32_0 = arith.constant 0 : i32
    %c0_i32_1 = arith.constant 0 : i32
    return %c0_i32, %c0_i32_0 : i32, i32
  }
}

module attributes {stable_mosaic.version = 11 : i64} {
  func.func @_decoder_kernel(%arg0: i32, %arg1: memref<128x32xf32, #tpu.memory_space<vmem>>, %arg2: memref<16x32xf32, #tpu.memory_space<vmem>>, %arg3: memref<1x32xf32, #tpu.memory_space<vmem>>, %arg4: memref<32x32xbf16, #tpu.memory_space<vmem>>, %arg5: memref<1x32xf32, #tpu.memory_space<vmem>>, %arg6: memref<32x192xbf16, #tpu.memory_space<vmem>>, %arg7: memref<1x192xf32, #tpu.memory_space<vmem>>, %arg8: memref<32x32xbf16, #tpu.memory_space<vmem>>, %arg9: memref<1x32xf32, #tpu.memory_space<vmem>>, %arg10: memref<32x64xbf16, #tpu.memory_space<vmem>>, %arg11: memref<1x64xf32, #tpu.memory_space<vmem>>, %arg12: memref<32x32xbf16, #tpu.memory_space<vmem>>, %arg13: memref<1x32xf32, #tpu.memory_space<vmem>>, %arg14: memref<32x128xbf16, #tpu.memory_space<vmem>>, %arg15: memref<1x128xf32, #tpu.memory_space<vmem>>, %arg16: memref<128x32xbf16, #tpu.memory_space<vmem>>, %arg17: memref<1x32xf32, #tpu.memory_space<vmem>>, %arg18: memref<32x128xbf16, #tpu.memory_space<vmem>>, %arg19: memref<1x128xf32, #tpu.memory_space<vmem>>, %arg20: memref<128x128xf32, #tpu.memory_space<vmem>>, %arg21: memref<16x64xf32, #tpu.memory_space<vmem>>) attributes {dimension_semantics = [#tpu.dimension_semantics<arbitrary>], iteration_bounds = array<i64: 1>, scalar_prefetch = 0 : i64, scratch_operands = 1 : i64, tpu.core_type = #tpu.core_type<tc>, window_params = [{transform_indices = @transform_0, window_bounds = array<i64: 128, 32>}, {pipeline_mode = #tpu.pipeline_mode<synchronous>, transform_indices = @transform_1, window_bounds = array<i64: 16, 32>}, {pipeline_mode = #tpu.pipeline_mode<synchronous>, transform_indices = @transform_2, window_bounds = array<i64: 1, 32>}, {pipeline_mode = #tpu.pipeline_mode<synchronous>, transform_indices = @transform_3, window_bounds = array<i64: 32, 32>}, {pipeline_mode = #tpu.pipeline_mode<synchronous>, transform_indices = @transform_4, window_bounds = array<i64: 1, 32>}, {pipeline_mode = #tpu.pipeline_mode<synchronous>, transform_indices = @transform_5, window_bounds = array<i64: 32, 192>}, {pipeline_mode = #tpu.pipeline_mode<synchronous>, transform_indices = @transform_6, window_bounds = array<i64: 1, 192>}, {pipeline_mode = #tpu.pipeline_mode<synchronous>, transform_indices = @transform_7, window_bounds = array<i64: 32, 32>}, {pipeline_mode = #tpu.pipeline_mode<synchronous>, transform_indices = @transform_8, window_bounds = array<i64: 1, 32>}, {pipeline_mode = #tpu.pipeline_mode<synchronous>, transform_indices = @transform_9, window_bounds = array<i64: 32, 64>}, {pipeline_mode = #tpu.pipeline_mode<synchronous>, transform_indices = @transform_10, window_bounds = array<i64: 1, 64>}, {pipeline_mode = #tpu.pipeline_mode<synchronous>, transform_indices = @transform_11, window_bounds = array<i64: 32, 32>}, {pipeline_mode = #tpu.pipeline_mode<synchronous>, transform_indices = @transform_12, window_bounds = array<i64: 1, 32>}, {pipeline_mode = #tpu.pipeline_mode<synchronous>, transform_indices = @transform_13, window_bounds = array<i64: 32, 128>}, {pipeline_mode = #tpu.pipeline_mode<synchronous>, transform_indices = @transform_14, window_bounds = array<i64: 1, 128>}, {pipeline_mode = #tpu.pipeline_mode<synchronous>, transform_indices = @transform_15, window_bounds = array<i64: 128, 32>}, {pipeline_mode = #tpu.pipeline_mode<synchronous>, transform_indices = @transform_16, window_bounds = array<i64: 1, 32>}, {pipeline_mode = #tpu.pipeline_mode<synchronous>, transform_indices = @transform_17, window_bounds = array<i64: 32, 128>}, {pipeline_mode = #tpu.pipeline_mode<synchronous>, transform_indices = @transform_18, window_bounds = array<i64: 1, 128>}, {transform_indices = @transform_19, window_bounds = array<i64: 128, 128>}]} {
    %c0_i32 = arith.constant 0 : i32
    %0 = arith.cmpi eq, %arg0, %c0_i32 : i32
    %1 = arith.extui %0 : i1 to i32
    %c0_i32_0 = arith.constant 0 : i32
    %2 = arith.cmpi ne, %1, %c0_i32_0 : i32
    scf.if %2 {
      %c0_80 = arith.constant 0 : index
      %c0_81 = arith.constant 0 : index
      %220 = vector.load %arg2[%c0_80, %c0_81] : memref<16x32xf32, #tpu.memory_space<vmem>>, vector<16x32xf32>
      %c0_82 = arith.constant 0 : index
      %c0_83 = arith.constant 0 : index
      %221 = vector.load %arg10[%c0_82, %c0_83] : memref<32x64xbf16, #tpu.memory_space<vmem>>, vector<32x64xbf16>
      %222 = arith.truncf %220 : vector<16x32xf32> to vector<16x32xbf16>
      %cst_84 = arith.constant dense<0.000000e+00> : vector<16x64xf32>
      %223 = tpu.matmul %222, %221, %cst_84 {dimension_numbers = #tpu.dot_dimension_numbers<[1], [0], [0], [1], [0, 0, 1, 1], [], []>} : vector<16x32xbf16>, vector<32x64xbf16>, vector<16x64xf32> -> vector<16x64xf32>
      %c0_85 = arith.constant 0 : index
      %c0_86 = arith.constant 0 : index
      %224 = vector.load %arg11[%c0_85, %c0_86] : memref<1x64xf32, #tpu.memory_space<vmem>>, vector<1x64xf32>
      %225 = vector.broadcast %224 : vector<1x64xf32> to vector<16x64xf32>
      %226 = arith.addf %223, %225 : vector<16x64xf32>
      %c0_87 = arith.constant 0 : index
      %c0_88 = arith.constant 0 : index
      %227 = vector.load %arg21[%c0_87, %c0_88] : memref<16x64xf32, #tpu.memory_space<vmem>>, vector<16x64xf32>
      tpu.vector_store %arg21[%c0_87, %c0_88], %226 {strides = array<i32>} : memref<16x64xf32, #tpu.memory_space<vmem>>, vector<16x64xf32>,
    } else {
    }
    %c0 = arith.constant 0 : index
    %c0_1 = arith.constant 0 : index
    %3 = vector.load %arg3[%c0, %c0_1] : memref<1x32xf32, #tpu.memory_space<vmem>>, vector<1x32xf32>
    %c0_2 = arith.constant 0 : index
    %c0_3 = arith.constant 0 : index
    %4 = vector.load %arg6[%c0_2, %c0_3] : memref<32x192xbf16, #tpu.memory_space<vmem>>, vector<32x192xbf16>
    %5 = arith.truncf %3 : vector<1x32xf32> to vector<1x32xbf16>
    %cst = arith.constant dense<0.000000e+00> : vector<1x192xf32>
    %6 = tpu.matmul %5, %4, %cst {dimension_numbers = #tpu.dot_dimension_numbers<[1], [0], [0], [1], [0, 0, 1, 1], [], []>} : vector<1x32xbf16>, vector<32x192xbf16>, vector<1x192xf32> -> vector<1x192xf32>
    %c0_4 = arith.constant 0 : index
    %c0_5 = arith.constant 0 : index
    %7 = vector.load %arg7[%c0_4, %c0_5] : memref<1x192xf32, #tpu.memory_space<vmem>>, vector<1x192xf32>
    %8 = arith.addf %6, %7 : vector<1x192xf32>
    %9 = vector.extract_strided_slice %8 {offsets = [0, 0], sizes = [1, 32], strides = [1, 1]} : vector<1x192xf32> to vector<1x32xf32>
    %10 = vector.extract_strided_slice %8 {offsets = [0, 32], sizes = [1, 32], strides = [1, 1]} : vector<1x192xf32> to vector<1x32xf32>
    %11 = vector.extract_strided_slice %8 {offsets = [0, 64], sizes = [1, 32], strides = [1, 1]} : vector<1x192xf32> to vector<1x32xf32>
    %12 = vector.extract_strided_slice %8 {offsets = [0, 96], sizes = [1, 32], strides = [1, 1]} : vector<1x192xf32> to vector<1x32xf32>
    %13 = vector.extract_strided_slice %8 {offsets = [0, 128], sizes = [1, 32], strides = [1, 1]} : vector<1x192xf32> to vector<1x32xf32>
    %14 = vector.extract_strided_slice %8 {offsets = [0, 160], sizes = [1, 32], strides = [1, 1]} : vector<1x192xf32> to vector<1x32xf32>
    %c0_6 = arith.constant 0 : index
    %c0_7 = arith.constant 0 : index
    %15 = vector.load %arg1[%c0_6, %c0_7] : memref<128x32xf32, #tpu.memory_space<vmem>>, vector<128x32xf32>
    %c0_8 = arith.constant 0 : index
    %c0_9 = arith.constant 0 : index
    %16 = vector.load %arg4[%c0_8, %c0_9] : memref<32x32xbf16, #tpu.memory_space<vmem>>, vector<32x32xbf16>
    %17 = arith.truncf %15 : vector<128x32xf32> to vector<128x32xbf16>
    %cst_10 = arith.constant dense<0.000000e+00> : vector<128x32xf32>
    %18 = tpu.matmul %17, %16, %cst_10 {dimension_numbers = #tpu.dot_dimension_numbers<[1], [0], [0], [1], [0, 0, 1, 1], [], []>} : vector<128x32xbf16>, vector<32x32xbf16>, vector<128x32xf32> -> vector<128x32xf32>
    %c0_11 = arith.constant 0 : index
    %c0_12 = arith.constant 0 : index
    %19 = vector.load %arg5[%c0_11, %c0_12] : memref<1x32xf32, #tpu.memory_space<vmem>>, vector<1x32xf32>
    %20 = vector.broadcast %19 : vector<1x32xf32> to vector<128x32xf32>
    %21 = arith.addf %18, %20 : vector<128x32xf32>
    %cst_13 = arith.constant dense<0.000000e+00> : vector<128xf32>
    %22 = vector.multi_reduction <add>, %21, %cst_13 [1] : vector<128x32xf32> to vector<128xf32>
    %23 = vector.shape_cast %22 : vector<128xf32> to vector<128x1xf32>
    %cst_14 = arith.constant 3.200000e+01 : f32
    %24 = vector.broadcast %cst_14 : f32 to vector<128x1xf32>
    %25 = arith.divf %23, %24 : vector<128x1xf32>
    %26 = vector.broadcast %25 : vector<128x1xf32> to vector<128x32xf32>
    %27 = arith.subf %21, %26 : vector<128x32xf32>
    %28 = arith.mulf %27, %27 : vector<128x32xf32>
    %cst_15 = arith.constant dense<0.000000e+00> : vector<128xf32>
    %29 = vector.multi_reduction <add>, %28, %cst_15 [1] : vector<128x32xf32> to vector<128xf32>
    %30 = vector.shape_cast %29 : vector<128xf32> to vector<128x1xf32>
    %cst_16 = arith.constant 3.200000e+01 : f32
    %31 = vector.broadcast %cst_16 : f32 to vector<128x1xf32>
    %32 = arith.divf %30, %31 : vector<128x1xf32>
    %33 = vector.broadcast %25 : vector<128x1xf32> to vector<128x32xf32>
    %34 = arith.subf %21, %33 : vector<128x32xf32>
    %cst_17 = arith.constant 9.99999997E-7 : f32
    %35 = vector.broadcast %cst_17 : f32 to vector<128x1xf32>
    %36 = arith.addf %32, %35 : vector<128x1xf32>
    %37 = math.rsqrt %36 : vector<128x1xf32>
    %38 = vector.broadcast %37 : vector<128x1xf32> to vector<128x32xf32>
    %39 = arith.mulf %34, %38 : vector<128x32xf32>
    %cst_18 = arith.constant 1.000000e+00 : f32
    %40 = vector.broadcast %cst_18 : f32 to vector<1x32xf32>
    %41 = arith.addf %40, %10 : vector<1x32xf32>
    %42 = vector.broadcast %41 : vector<1x32xf32> to vector<128x32xf32>
    %43 = arith.mulf %39, %42 : vector<128x32xf32>
    %44 = vector.broadcast %9 : vector<1x32xf32> to vector<128x32xf32>
    %45 = arith.addf %43, %44 : vector<128x32xf32>
    %c0_19 = arith.constant 0 : index
    %c0_20 = arith.constant 0 : index
    %46 = vector.load %arg8[%c0_19, %c0_20] : memref<32x32xbf16, #tpu.memory_space<vmem>>, vector<32x32xbf16>
    %47 = arith.truncf %45 : vector<128x32xf32> to vector<128x32xbf16>
    %cst_21 = arith.constant dense<0.000000e+00> : vector<128x32xf32>
    %48 = tpu.matmul %47, %46, %cst_21 {dimension_numbers = #tpu.dot_dimension_numbers<[1], [0], [0], [1], [0, 0, 1, 1], [], []>} : vector<128x32xbf16>, vector<32x32xbf16>, vector<128x32xf32> -> vector<128x32xf32>
    %c0_22 = arith.constant 0 : index
    %c0_23 = arith.constant 0 : index
    %49 = vector.load %arg9[%c0_22, %c0_23] : memref<1x32xf32, #tpu.memory_space<vmem>>, vector<1x32xf32>
    %50 = vector.broadcast %49 : vector<1x32xf32> to vector<128x32xf32>
    %51 = arith.addf %48, %50 : vector<128x32xf32>
    %cst_24 = arith.constant 0.353553385 : f32
    %52 = vector.broadcast %cst_24 : f32 to vector<128x32xf32>
    %53 = arith.mulf %51, %52 : vector<128x32xf32>
    %c0_25 = arith.constant 0 : index
    %c0_26 = arith.constant 0 : index
    %54 = vector.load %arg21[%c0_25, %c0_26] : memref<16x64xf32, #tpu.memory_space<vmem>>, vector<16x64xf32>
    %55 = vector.extract_strided_slice %54 {offsets = [0, 0], sizes = [16, 32], strides = [1, 1]} : vector<16x64xf32> to vector<16x32xf32>
    %56 = vector.extract_strided_slice %54 {offsets = [0, 32], sizes = [16, 32], strides = [1, 1]} : vector<16x64xf32> to vector<16x32xf32>
    %57 = vector.extract_strided_slice %53 {offsets = [0, 0], sizes = [128, 8], strides = [1, 1]} : vector<128x32xf32> to vector<128x8xf32>
    %58 = arith.truncf %57 : vector<128x8xf32> to vector<128x8xbf16>
    %59 = vector.extract_strided_slice %55 {offsets = [0, 0], sizes = [16, 8], strides = [1, 1]} : vector<16x32xf32> to vector<16x8xf32>
    %60 = arith.truncf %59 : vector<16x8xf32> to vector<16x8xbf16>
    %61 = vector.extract_strided_slice %56 {offsets = [0, 0], sizes = [16, 8], strides = [1, 1]} : vector<16x32xf32> to vector<16x8xf32>
    %62 = arith.truncf %61 : vector<16x8xf32> to vector<16x8xbf16>
    %cst_27 = arith.constant dense<0.000000e+00> : vector<128x16xf32>
    %63 = tpu.matmul %58, %60, %cst_27 {dimension_numbers = #tpu.dot_dimension_numbers<[1], [1], [0], [0], [0, 0, 1, 0], [], []>} : vector<128x8xbf16>, vector<16x8xbf16>, vector<128x16xf32> -> vector<128x16xf32>
    %cst_28 = arith.constant dense<0xFF800000> : vector<128xf32>
    %64 = vector.multi_reduction <maximumf>, %63, %cst_28 [1] : vector<128x16xf32> to vector<128xf32>
    %65 = vector.shape_cast %64 : vector<128xf32> to vector<128x1xf32>
    %66 = vector.broadcast %65 : vector<128x1xf32> to vector<128x16xf32>
    %67 = arith.subf %63, %66 : vector<128x16xf32>
    %68 = math.exp %67 : vector<128x16xf32>
    %cst_29 = arith.constant dense<0.000000e+00> : vector<128xf32>
    %69 = vector.multi_reduction <add>, %68, %cst_29 [1] : vector<128x16xf32> to vector<128xf32>
    %70 = vector.shape_cast %69 : vector<128xf32> to vector<128x1xf32>
    %71 = tpu.reciprocal %70 {approx = true} : vector<128x1xf32> -> vector<128x1xf32>
    %72 = vector.broadcast %71 : vector<128x1xf32> to vector<128x16xf32>
    %73 = arith.mulf %68, %72 : vector<128x16xf32>
    %74 = arith.truncf %73 : vector<128x16xf32> to vector<128x16xbf16>
    %cst_30 = arith.constant dense<0.000000e+00> : vector<128x8xf32>
    %75 = tpu.matmul %74, %62, %cst_30 {dimension_numbers = #tpu.dot_dimension_numbers<[1], [0], [0], [1], [0, 0, 1, 1], [], []>} : vector<128x16xbf16>, vector<16x8xbf16>, vector<128x8xf32> -> vector<128x8xf32>
    %76 = vector.extract_strided_slice %53 {offsets = [0, 8], sizes = [128, 8], strides = [1, 1]} : vector<128x32xf32> to vector<128x8xf32>
    %77 = arith.truncf %76 : vector<128x8xf32> to vector<128x8xbf16>
    %78 = vector.extract_strided_slice %55 {offsets = [0, 8], sizes = [16, 8], strides = [1, 1]} : vector<16x32xf32> to vector<16x8xf32>
    %79 = arith.truncf %78 : vector<16x8xf32> to vector<16x8xbf16>
    %80 = vector.extract_strided_slice %56 {offsets = [0, 8], sizes = [16, 8], strides = [1, 1]} : vector<16x32xf32> to vector<16x8xf32>
    %81 = arith.truncf %80 : vector<16x8xf32> to vector<16x8xbf16>
    %cst_31 = arith.constant dense<0.000000e+00> : vector<128x16xf32>
    %82 = tpu.matmul %77, %79, %cst_31 {dimension_numbers = #tpu.dot_dimension_numbers<[1], [1], [0], [0], [0, 0, 1, 0], [], []>} : vector<128x8xbf16>, vector<16x8xbf16>, vector<128x16xf32> -> vector<128x16xf32>
    %cst_32 = arith.constant dense<0xFF800000> : vector<128xf32>
    %83 = vector.multi_reduction <maximumf>, %82, %cst_32 [1] : vector<128x16xf32> to vector<128xf32>
    %84 = vector.shape_cast %83 : vector<128xf32> to vector<128x1xf32>
    %85 = vector.broadcast %84 : vector<128x1xf32> to vector<128x16xf32>
    %86 = arith.subf %82, %85 : vector<128x16xf32>
    %87 = math.exp %86 : vector<128x16xf32>
    %cst_33 = arith.constant dense<0.000000e+00> : vector<128xf32>
    %88 = vector.multi_reduction <add>, %87, %cst_33 [1] : vector<128x16xf32> to vector<128xf32>
    %89 = vector.shape_cast %88 : vector<128xf32> to vector<128x1xf32>
    %90 = tpu.reciprocal %89 {approx = true} : vector<128x1xf32> -> vector<128x1xf32>
    %91 = vector.broadcast %90 : vector<128x1xf32> to vector<128x16xf32>
    %92 = arith.mulf %87, %91 : vector<128x16xf32>
    %93 = arith.truncf %92 : vector<128x16xf32> to vector<128x16xbf16>
    %cst_34 = arith.constant dense<0.000000e+00> : vector<128x8xf32>
    %94 = tpu.matmul %93, %81, %cst_34 {dimension_numbers = #tpu.dot_dimension_numbers<[1], [0], [0], [1], [0, 0, 1, 1], [], []>} : vector<128x16xbf16>, vector<16x8xbf16>, vector<128x8xf32> -> vector<128x8xf32>
    %95 = vector.extract_strided_slice %53 {offsets = [0, 16], sizes = [128, 8], strides = [1, 1]} : vector<128x32xf32> to vector<128x8xf32>
    %96 = arith.truncf %95 : vector<128x8xf32> to vector<128x8xbf16>
    %97 = vector.extract_strided_slice %55 {offsets = [0, 16], sizes = [16, 8], strides = [1, 1]} : vector<16x32xf32> to vector<16x8xf32>
    %98 = arith.truncf %97 : vector<16x8xf32> to vector<16x8xbf16>
    %99 = vector.extract_strided_slice %56 {offsets = [0, 16], sizes = [16, 8], strides = [1, 1]} : vector<16x32xf32> to vector<16x8xf32>
    %100 = arith.truncf %99 : vector<16x8xf32> to vector<16x8xbf16>
    %cst_35 = arith.constant dense<0.000000e+00> : vector<128x16xf32>
    %101 = tpu.matmul %96, %98, %cst_35 {dimension_numbers = #tpu.dot_dimension_numbers<[1], [1], [0], [0], [0, 0, 1, 0], [], []>} : vector<128x8xbf16>, vector<16x8xbf16>, vector<128x16xf32> -> vector<128x16xf32>
    %cst_36 = arith.constant dense<0xFF800000> : vector<128xf32>
    %102 = vector.multi_reduction <maximumf>, %101, %cst_36 [1] : vector<128x16xf32> to vector<128xf32>
    %103 = vector.shape_cast %102 : vector<128xf32> to vector<128x1xf32>
    %104 = vector.broadcast %103 : vector<128x1xf32> to vector<128x16xf32>
    %105 = arith.subf %101, %104 : vector<128x16xf32>
    %106 = math.exp %105 : vector<128x16xf32>
    %cst_37 = arith.constant dense<0.000000e+00> : vector<128xf32>
    %107 = vector.multi_reduction <add>, %106, %cst_37 [1] : vector<128x16xf32> to vector<128xf32>
    %108 = vector.shape_cast %107 : vector<128xf32> to vector<128x1xf32>
    %109 = tpu.reciprocal %108 {approx = true} : vector<128x1xf32> -> vector<128x1xf32>
    %110 = vector.broadcast %109 : vector<128x1xf32> to vector<128x16xf32>
    %111 = arith.mulf %106, %110 : vector<128x16xf32>
    %112 = arith.truncf %111 : vector<128x16xf32> to vector<128x16xbf16>
    %cst_38 = arith.constant dense<0.000000e+00> : vector<128x8xf32>
    %113 = tpu.matmul %112, %100, %cst_38 {dimension_numbers = #tpu.dot_dimension_numbers<[1], [0], [0], [1], [0, 0, 1, 1], [], []>} : vector<128x16xbf16>, vector<16x8xbf16>, vector<128x8xf32> -> vector<128x8xf32>
    %114 = vector.extract_strided_slice %53 {offsets = [0, 24], sizes = [128, 8], strides = [1, 1]} : vector<128x32xf32> to vector<128x8xf32>
    %115 = arith.truncf %114 : vector<128x8xf32> to vector<128x8xbf16>
    %116 = vector.extract_strided_slice %55 {offsets = [0, 24], sizes = [16, 8], strides = [1, 1]} : vector<16x32xf32> to vector<16x8xf32>
    %117 = arith.truncf %116 : vector<16x8xf32> to vector<16x8xbf16>
    %118 = vector.extract_strided_slice %56 {offsets = [0, 24], sizes = [16, 8], strides = [1, 1]} : vector<16x32xf32> to vector<16x8xf32>
    %119 = arith.truncf %118 : vector<16x8xf32> to vector<16x8xbf16>
    %cst_39 = arith.constant dense<0.000000e+00> : vector<128x16xf32>
    %120 = tpu.matmul %115, %117, %cst_39 {dimension_numbers = #tpu.dot_dimension_numbers<[1], [1], [0], [0], [0, 0, 1, 0], [], []>} : vector<128x8xbf16>, vector<16x8xbf16>, vector<128x16xf32> -> vector<128x16xf32>
    %cst_40 = arith.constant dense<0xFF800000> : vector<128xf32>
    %121 = vector.multi_reduction <maximumf>, %120, %cst_40 [1] : vector<128x16xf32> to vector<128xf32>
    %122 = vector.shape_cast %121 : vector<128xf32> to vector<128x1xf32>
    %123 = vector.broadcast %122 : vector<128x1xf32> to vector<128x16xf32>
    %124 = arith.subf %120, %123 : vector<128x16xf32>
    %125 = math.exp %124 : vector<128x16xf32>
    %cst_41 = arith.constant dense<0.000000e+00> : vector<128xf32>
    %126 = vector.multi_reduction <add>, %125, %cst_41 [1] : vector<128x16xf32> to vector<128xf32>
    %127 = vector.shape_cast %126 : vector<128xf32> to vector<128x1xf32>
    %128 = tpu.reciprocal %127 {approx = true} : vector<128x1xf32> -> vector<128x1xf32>
    %129 = vector.broadcast %128 : vector<128x1xf32> to vector<128x16xf32>
    %130 = arith.mulf %125, %129 : vector<128x16xf32>
    %131 = arith.truncf %130 : vector<128x16xf32> to vector<128x16xbf16>
    %cst_42 = arith.constant dense<0.000000e+00> : vector<128x8xf32>
    %132 = tpu.matmul %131, %119, %cst_42 {dimension_numbers = #tpu.dot_dimension_numbers<[1], [0], [0], [1], [0, 0, 1, 1], [], []>} : vector<128x16xbf16>, vector<16x8xbf16>, vector<128x8xf32> -> vector<128x8xf32>
    %133 = tpu.concatenate %75, %94, %113, %132 in 1 : vector<128x8xf32>, vector<128x8xf32>, vector<128x8xf32>, vector<128x8xf32> -> vector<128x32xf32>
    %c0_43 = arith.constant 0 : index
    %c0_44 = arith.constant 0 : index
    %134 = vector.load %arg12[%c0_43, %c0_44] : memref<32x32xbf16, #tpu.memory_space<vmem>>, vector<32x32xbf16>
    %135 = arith.truncf %133 : vector<128x32xf32> to vector<128x32xbf16>
    %cst_45 = arith.constant dense<0.000000e+00> : vector<128x32xf32>
    %136 = tpu.matmul %135, %134, %cst_45 {dimension_numbers = #tpu.dot_dimension_numbers<[1], [0], [0], [1], [0, 0, 1, 1], [], []>} : vector<128x32xbf16>, vector<32x32xbf16>, vector<128x32xf32> -> vector<128x32xf32>
    %c0_46 = arith.constant 0 : index
    %c0_47 = arith.constant 0 : index
    %137 = vector.load %arg13[%c0_46, %c0_47] : memref<1x32xf32, #tpu.memory_space<vmem>>, vector<1x32xf32>
    %138 = vector.broadcast %137 : vector<1x32xf32> to vector<128x32xf32>
    %139 = arith.addf %136, %138 : vector<128x32xf32>
    %140 = vector.broadcast %11 : vector<1x32xf32> to vector<128x32xf32>
    %141 = arith.mulf %140, %139 : vector<128x32xf32>
    %142 = arith.addf %21, %141 : vector<128x32xf32>
    %cst_48 = arith.constant dense<0.000000e+00> : vector<128xf32>
    %143 = vector.multi_reduction <add>, %142, %cst_48 [1] : vector<128x32xf32> to vector<128xf32>
    %144 = vector.shape_cast %143 : vector<128xf32> to vector<128x1xf32>
    %cst_49 = arith.constant 3.200000e+01 : f32
    %145 = vector.broadcast %cst_49 : f32 to vector<128x1xf32>
    %146 = arith.divf %144, %145 : vector<128x1xf32>
    %147 = vector.broadcast %146 : vector<128x1xf32> to vector<128x32xf32>
    %148 = arith.subf %142, %147 : vector<128x32xf32>
    %149 = arith.mulf %148, %148 : vector<128x32xf32>
    %cst_50 = arith.constant dense<0.000000e+00> : vector<128xf32>
    %150 = vector.multi_reduction <add>, %149, %cst_50 [1] : vector<128x32xf32> to vector<128xf32>
    %151 = vector.shape_cast %150 : vector<128xf32> to vector<128x1xf32>
    %cst_51 = arith.constant 3.200000e+01 : f32
    %152 = vector.broadcast %cst_51 : f32 to vector<128x1xf32>
    %153 = arith.divf %151, %152 : vector<128x1xf32>
    %154 = vector.broadcast %146 : vector<128x1xf32> to vector<128x32xf32>
    %155 = arith.subf %142, %154 : vector<128x32xf32>
    %cst_52 = arith.constant 9.99999997E-7 : f32
    %156 = vector.broadcast %cst_52 : f32 to vector<128x1xf32>
    %157 = arith.addf %153, %156 : vector<128x1xf32>
    %158 = math.rsqrt %157 : vector<128x1xf32>
    %159 = vector.broadcast %158 : vector<128x1xf32> to vector<128x32xf32>
    %160 = arith.mulf %155, %159 : vector<128x32xf32>
    %cst_53 = arith.constant 1.000000e+00 : f32
    %161 = vector.broadcast %cst_53 : f32 to vector<1x32xf32>
    %162 = arith.addf %161, %13 : vector<1x32xf32>
    %163 = vector.broadcast %162 : vector<1x32xf32> to vector<128x32xf32>
    %164 = arith.mulf %160, %163 : vector<128x32xf32>
    %165 = vector.broadcast %12 : vector<1x32xf32> to vector<128x32xf32>
    %166 = arith.addf %164, %165 : vector<128x32xf32>
    %c0_54 = arith.constant 0 : index
    %c0_55 = arith.constant 0 : index
    %167 = vector.load %arg14[%c0_54, %c0_55] : memref<32x128xbf16, #tpu.memory_space<vmem>>, vector<32x128xbf16>
    %168 = arith.truncf %166 : vector<128x32xf32> to vector<128x32xbf16>
    %cst_56 = arith.constant dense<0.000000e+00> : vector<128x128xf32>
    %169 = tpu.matmul %168, %167, %cst_56 {dimension_numbers = #tpu.dot_dimension_numbers<[1], [0], [0], [1], [0, 0, 1, 1], [], []>} : vector<128x32xbf16>, vector<32x128xbf16>, vector<128x128xf32> -> vector<128x128xf32>
    %c0_57 = arith.constant 0 : index
    %c0_58 = arith.constant 0 : index
    %170 = vector.load %arg15[%c0_57, %c0_58] : memref<1x128xf32, #tpu.memory_space<vmem>>, vector<1x128xf32>
    %171 = vector.broadcast %170 : vector<1x128xf32> to vector<128x128xf32>
    %172 = arith.addf %169, %171 : vector<128x128xf32>
    %173 = arith.mulf %172, %172 : vector<128x128xf32>
    %174 = arith.mulf %172, %173 : vector<128x128xf32>
    %cst_59 = arith.constant 4.471500e-02 : f32
    %175 = vector.broadcast %cst_59 : f32 to vector<128x128xf32>
    %176 = arith.mulf %175, %174 : vector<128x128xf32>
    %177 = arith.addf %172, %176 : vector<128x128xf32>
    %cst_60 = arith.constant 0.797884583 : f32
    %178 = vector.broadcast %cst_60 : f32 to vector<128x128xf32>
    %179 = arith.mulf %178, %177 : vector<128x128xf32>
    %180 = math.tanh %179 : vector<128x128xf32>
    %cst_61 = arith.constant 1.000000e+00 : f32
    %181 = vector.broadcast %cst_61 : f32 to vector<128x128xf32>
    %182 = arith.addf %181, %180 : vector<128x128xf32>
    %cst_62 = arith.constant 5.000000e-01 : f32
    %183 = vector.broadcast %cst_62 : f32 to vector<128x128xf32>
    %184 = arith.mulf %183, %182 : vector<128x128xf32>
    %185 = arith.mulf %172, %184 : vector<128x128xf32>
    %c0_63 = arith.constant 0 : index
    %c0_64 = arith.constant 0 : index
    %186 = vector.load %arg16[%c0_63, %c0_64] : memref<128x32xbf16, #tpu.memory_space<vmem>>, vector<128x32xbf16>
    %187 = arith.truncf %185 : vector<128x128xf32> to vector<128x128xbf16>
    %cst_65 = arith.constant dense<0.000000e+00> : vector<128x32xf32>
    %188 = tpu.matmul %187, %186, %cst_65 {dimension_numbers = #tpu.dot_dimension_numbers<[1], [0], [0], [1], [0, 0, 1, 1], [], []>} : vector<128x128xbf16>, vector<128x32xbf16>, vector<128x32xf32> -> vector<128x32xf32>
    %c0_66 = arith.constant 0 : index
    %c0_67 = arith.constant 0 : index
    %189 = vector.load %arg17[%c0_66, %c0_67] : memref<1x32xf32, #tpu.memory_space<vmem>>, vector<1x32xf32>
    %190 = vector.broadcast %189 : vector<1x32xf32> to vector<128x32xf32>
    %191 = arith.addf %188, %190 : vector<128x32xf32>
    %192 = vector.broadcast %14 : vector<1x32xf32> to vector<128x32xf32>
    %193 = arith.mulf %192, %191 : vector<128x32xf32>
    %194 = arith.addf %142, %193 : vector<128x32xf32>
    %cst_68 = arith.constant dense<0.000000e+00> : vector<128xf32>
    %195 = vector.multi_reduction <add>, %194, %cst_68 [1] : vector<128x32xf32> to vector<128xf32>
    %196 = vector.shape_cast %195 : vector<128xf32> to vector<128x1xf32>
    %cst_69 = arith.constant 3.200000e+01 : f32
    %197 = vector.broadcast %cst_69 : f32 to vector<128x1xf32>
    %198 = arith.divf %196, %197 : vector<128x1xf32>
    %199 = vector.broadcast %198 : vector<128x1xf32> to vector<128x32xf32>
    %200 = arith.subf %194, %199 : vector<128x32xf32>
    %201 = arith.mulf %200, %200 : vector<128x32xf32>
    %cst_70 = arith.constant dense<0.000000e+00> : vector<128xf32>
    %202 = vector.multi_reduction <add>, %201, %cst_70 [1] : vector<128x32xf32> to vector<128xf32>
    %203 = vector.shape_cast %202 : vector<128xf32> to vector<128x1xf32>
    %cst_71 = arith.constant 3.200000e+01 : f32
    %204 = vector.broadcast %cst_71 : f32 to vector<128x1xf32>
    %205 = arith.divf %203, %204 : vector<128x1xf32>
    %206 = vector.broadcast %198 : vector<128x1xf32> to vector<128x32xf32>
    %207 = arith.subf %194, %206 : vector<128x32xf32>
    %cst_72 = arith.constant 9.99999997E-7 : f32
    %208 = vector.broadcast %cst_72 : f32 to vector<128x1xf32>
    %209 = arith.addf %205, %208 : vector<128x1xf32>
    %210 = math.rsqrt %209 : vector<128x1xf32>
    %211 = vector.broadcast %210 : vector<128x1xf32> to vector<128x32xf32>
    %212 = arith.mulf %207, %211 : vector<128x32xf32>
    %c0_73 = arith.constant 0 : index
    %c0_74 = arith.constant 0 : index
    %213 = vector.load %arg18[%c0_73, %c0_74] : memref<32x128xbf16, #tpu.memory_space<vmem>>, vector<32x128xbf16>
    %214 = arith.truncf %212 : vector<128x32xf32> to vector<128x32xbf16>
    %cst_75 = arith.constant dense<0.000000e+00> : vector<128x128xf32>
    %215 = tpu.matmul %214, %213, %cst_75 {dimension_numbers = #tpu.dot_dimension_numbers<[1], [0], [0], [1], [0, 0, 1, 1], [], []>} : vector<128x32xbf16>, vector<32x128xbf16>, vector<128x128xf32> -> vector<128x128xf32>
    %c0_76 = arith.constant 0 : index
    %c0_77 = arith.constant 0 : index
    %216 = vector.load %arg19[%c0_76, %c0_77] : memref<1x128xf32, #tpu.memory_space<vmem>>, vector<1x128xf32>
    %217 = vector.broadcast %216 : vector<1x128xf32> to vector<128x128xf32>
    %218 = arith.addf %215, %217 : vector<128x128xf32>
    %c0_78 = arith.constant 0 : index
    %c0_79 = arith.constant 0 : index
    %219 = vector.load %arg20[%c0_78, %c0_79] : memref<128x128xf32, #tpu.memory_space<vmem>>, vector<128x128xf32>
    tpu.vector_store %arg20[%c0_78, %c0_79], %218 {strides = array<i32>} : memref<128x128xf32, #tpu.memory_space<vmem>>, vector<128x128xf32>,
    return
  }
  func.func @transform_0(%arg0: i32) -> (i32, i32) {
    %c0_i32 = arith.constant 0 : i32
    %c0_i32_0 = arith.constant 0 : i32
    return %arg0, %c0_i32 : i32, i32
  }
  func.func @transform_1(%arg0: i32) -> (i32, i32) {
    %c0_i32 = arith.constant 0 : i32
    %c0_i32_0 = arith.constant 0 : i32
    %c0_i32_1 = arith.constant 0 : i32
    return %c0_i32, %c0_i32_0 : i32, i32
  }
  func.func @transform_2(%arg0: i32) -> (i32, i32) {
    %c0_i32 = arith.constant 0 : i32
    %c0_i32_0 = arith.constant 0 : i32
    %c0_i32_1 = arith.constant 0 : i32
    return %c0_i32, %c0_i32_0 : i32, i32
  }
  func.func @transform_3(%arg0: i32) -> (i32, i32) {
    %c0_i32 = arith.constant 0 : i32
    %c0_i32_0 = arith.constant 0 : i32
    %c0_i32_1 = arith.constant 0 : i32
    return %c0_i32, %c0_i32_0 : i32, i32
  }
  func.func @transform_4(%arg0: i32) -> (i32, i32) {
    %c0_i32 = arith.constant 0 : i32
    %c0_i32_0 = arith.constant 0 : i32
    %c0_i32_1 = arith.constant 0 : i32
    return %c0_i32, %c0_i32_0 : i32, i32
  }
  func.func @transform_5(%arg0: i32) -> (i32, i32) {
    %c0_i32 = arith.constant 0 : i32
    %c0_i32_0 = arith.constant 0 : i32
    %c0_i32_1 = arith.constant 0 : i32
    return %c0_i32, %c0_i32_0 : i32, i32
  }
  func.func @transform_6(%arg0: i32) -> (i32, i32) {
    %c0_i32 = arith.constant 0 : i32
    %c0_i32_0 = arith.constant 0 : i32
    %c0_i32_1 = arith.constant 0 : i32
    return %c0_i32, %c0_i32_0 : i32, i32
  }
  func.func @transform_7(%arg0: i32) -> (i32, i32) {
    %c0_i32 = arith.constant 0 : i32
    %c0_i32_0 = arith.constant 0 : i32
    %c0_i32_1 = arith.constant 0 : i32
    return %c0_i32, %c0_i32_0 : i32, i32
  }
  func.func @transform_8(%arg0: i32) -> (i32, i32) {
    %c0_i32 = arith.constant 0 : i32
    %c0_i32_0 = arith.constant 0 : i32
    %c0_i32_1 = arith.constant 0 : i32
    return %c0_i32, %c0_i32_0 : i32, i32
  }
  func.func @transform_9(%arg0: i32) -> (i32, i32) {
    %c0_i32 = arith.constant 0 : i32
    %c0_i32_0 = arith.constant 0 : i32
    %c0_i32_1 = arith.constant 0 : i32
    return %c0_i32, %c0_i32_0 : i32, i32
  }
  func.func @transform_10(%arg0: i32) -> (i32, i32) {
    %c0_i32 = arith.constant 0 : i32
    %c0_i32_0 = arith.constant 0 : i32
    %c0_i32_1 = arith.constant 0 : i32
    return %c0_i32, %c0_i32_0 : i32, i32
  }
  func.func @transform_11(%arg0: i32) -> (i32, i32) {
    %c0_i32 = arith.constant 0 : i32
    %c0_i32_0 = arith.constant 0 : i32
    %c0_i32_1 = arith.constant 0 : i32
    return %c0_i32, %c0_i32_0 : i32, i32
  }
  func.func @transform_12(%arg0: i32) -> (i32, i32) {
    %c0_i32 = arith.constant 0 : i32
    %c0_i32_0 = arith.constant 0 : i32
    %c0_i32_1 = arith.constant 0 : i32
    return %c0_i32, %c0_i32_0 : i32, i32
  }
  func.func @transform_13(%arg0: i32) -> (i32, i32) {
    %c0_i32 = arith.constant 0 : i32
    %c0_i32_0 = arith.constant 0 : i32
    %c0_i32_1 = arith.constant 0 : i32
    return %c0_i32, %c0_i32_0 : i32, i32
  }
  func.func @transform_14(%arg0: i32) -> (i32, i32) {
    %c0_i32 = arith.constant 0 : i32
    %c0_i32_0 = arith.constant 0 : i32
    %c0_i32_1 = arith.constant 0 : i32
    return %c0_i32, %c0_i32_0 : i32, i32
  }
  func.func @transform_15(%arg0: i32) -> (i32, i32) {
    %c0_i32 = arith.constant 0 : i32
    %c0_i32_0 = arith.constant 0 : i32
    %c0_i32_1 = arith.constant 0 : i32
    return %c0_i32, %c0_i32_0 : i32, i32
  }
  func.func @transform_16(%arg0: i32) -> (i32, i32) {
    %c0_i32 = arith.constant 0 : i32
    %c0_i32_0 = arith.constant 0 : i32
    %c0_i32_1 = arith.constant 0 : i32
    return %c0_i32, %c0_i32_0 : i32, i32
  }
  func.func @transform_17(%arg0: i32) -> (i32, i32) {
    %c0_i32 = arith.constant 0 : i32
    %c0_i32_0 = arith.constant 0 : i32
    %c0_i32_1 = arith.constant 0 : i32
    return %c0_i32, %c0_i32_0 : i32, i32
  }
  func.func @transform_18(%arg0: i32) -> (i32, i32) {
    %c0_i32 = arith.constant 0 : i32
    %c0_i32_0 = arith.constant 0 : i32
    %c0_i32_1 = arith.constant 0 : i32
    return %c0_i32, %c0_i32_0 : i32, i32
  }
  func.func @transform_19(%arg0: i32) -> (i32, i32) {
    %c0_i32 = arith.constant 0 : i32
    %c0_i32_0 = arith.constant 0 : i32
    return %arg0, %c0_i32 : i32, i32
  }
}

</mosaic_0001>

<llo_original>
// kernel: fbed_forward.7
$region0: #{fbed_forward.7}
  #allocation0 [shape = 'u32[]', space=smem, size = 0x4, offset = 0x4, fixed_abs, tag = 'smem constant byte address 0x4 - core index']
  #allocation1 [shape = 'u32[144,128]{1,0:T(1,128)}', space=vmem, size = 0x12000, scoped, tag = 'internal scratch']
  #allocation2 [shape = 'f32[1,32]{1,0:T(1,128)}', space=vmem, size = 0x200, scoped, tag = 'scratch operand']
  %s0 = inlined_call_operand.vmem [shape: f32[1,32], index: 0, kind: input, shape index: {}]
  %s1 = inlined_call_operand.vmem [shape: bf16[32,32], index: 1, kind: input, shape index: {}]
  %s2 = inlined_call_operand.vmem [shape: f32[1,32], index: 2, kind: input, shape index: {}]
  %s3 = inlined_call_operand.vmem [shape: bf16[32,32], index: 3, kind: input, shape index: {}]
  %s4 = inlined_call_operand.vmem [shape: f32[1,32], index: 4, kind: input, shape index: {}]
  %s5 = inlined_call_operand.vmem [shape: bf16[5,32,576], index: 5, kind: input, shape index: {}]
  %s6 = inlined_call_operand.vmem [shape: f32[5,1,576], index: 6, kind: input, shape index: {}]
  %s7 = inlined_call_operand.vmem [shape: f32[1,32], index: 7, kind: output, shape index: {0}]
  %s8 = inlined_call_operand.vmem [shape: f32[5,8,192], index: 8, kind: output, shape index: {1}]
  %9 = xla_tuple %s7, %s8
  %s10 = sld [smem:[#allocation0]]
  $region73: #{fbed_forward.7} parent=0
    _
  %s12 = ssub.s32 1, %s10
  %s13 = scalar_select 0, %s12, %s10
  loop: start=0, step=1, limit=7
  $region2: #{fbed_forward.7} parent=0 // loop_pre_header
    _
  $region3: #{fbed_forward.7} parent=0 // loop_header
    %s15 = sphi 0, %s19
    %p16 = scmp.ge.s32.totalorder %s15, 7
    %s23 = sphi 0, %s23
    %s25 = sphi 0, %s23
    %s26 = sphi 0, %s25
    %s40 = sphi 0, %s26
    %s44 = sphi 0, %s44
    %s46 = sphi 0, %s44
    %s47 = sphi 0, %s46
    %s61 = sphi 0, %s47
    %s65 = sphi 0, %s65
    %s67 = sphi 0, %s65
    %s68 = sphi 0, %s67
    %s82 = sphi 0, %s68
    %s86 = sphi 0, %s86
    %s88 = sphi 0, %s86
    %s89 = sphi 0, %s88
    %s103 = sphi 0, %s89
    %s107 = sphi 0, %s107
    %s109 = sphi 0, %s107
    %s110 = sphi 0, %s109
    %s124 = sphi 0, %s110
    %s130 = sphi 0, %s132
    %s133 = sphi 0, %s130
    %s134 = sphi 0, %s133
    %s150 = sphi 0, %s134
    %s156 = sphi 0, %s158
    %s159 = sphi 0, %s156
    %s160 = sphi 0, %s159
    %s176 = sphi 0, %s160
    %s180 = sphi 0, %s180
    %s182 = sphi 0, %s180
    %s183 = sphi 0, %s182
    %s197 = sphi 0, %s183
    %s203 = sphi 0, %s205
    %s206 = sphi 0, %s203
    %s207 = sphi 0, %s206
    %s223 = sphi 0, %s207
  $region4: #{fbed_forward.7} parent=0 // loop_header_branch
    %18 = sbr.rel (%p16) target = $region8
  $region5: #{fbed_forward.7} parent=0 // loop_body
    %s20 = ssub.s32 %s15, 1
    %s21 = ssub.s32 %s15, 2
    %s22 = sadd.s32 %s15, 1
    %s24 = sadd.s32 %s23, 1
    %p27 = scmp.eq.s32.totalorder %s15, 4
    %p28 = scmp.ne.s32.totalorder %s23, %s25
    %p29 = scmp.eq.s32.totalorder %s15, 0
    %p30 = por %p28, %p29
    %p31 = scmp.ne.s32.totalorder %s23, %s25
    %p32 = scmp.eq.s32.totalorder %s20, 4
    %p33 = por %p31, %p32
    %p34 = scmp.ne.s32.totalorder %s25, %s26
    %p35 = scmp.eq.s32.totalorder %s20, 0
    %p36 = por %p34, %p35
    %p37 = scmp.ne.s32.totalorder %s25, %s26
    %p38 = scmp.eq.s32.totalorder %s21, 4
    %p39 = por %p37, %p38
    %p41 = scmp.ne.s32.totalorder %s26, %s40
    %p42 = scmp.eq.s32.totalorder %s21, 0
    %p43 = por %p41, %p42
    %s45 = sadd.s32 %s44, 1
    %p48 = scmp.eq.s32.totalorder %s15, 4
    %p49 = scmp.ne.s32.totalorder %s44, %s46
    %p50 = scmp.eq.s32.totalorder %s15, 0
    %p51 = por %p49, %p50
    %p52 = scmp.ne.s32.totalorder %s44, %s46
    %p53 = scmp.eq.s32.totalorder %s20, 4
    %p54 = por %p52, %p53
    %p55 = scmp.ne.s32.totalorder %s46, %s47
    %p56 = scmp.eq.s32.totalorder %s20, 0
    %p57 = por %p55, %p56
    %p58 = scmp.ne.s32.totalorder %s46, %s47
    %p59 = scmp.eq.s32.totalorder %s21, 4
    %p60 = por %p58, %p59
    %p62 = scmp.ne.s32.totalorder %s47, %s61
    %p63 = scmp.eq.s32.totalorder %s21, 0
    %p64 = por %p62, %p63
    %s66 = sadd.s32 %s65, 1
    %p69 = scmp.eq.s32.totalorder %s15, 4
    %p70 = scmp.ne.s32.totalorder %s65, %s67
    %p71 = scmp.eq.s32.totalorder %s15, 0
    %p72 = por %p70, %p71
    %p73 = scmp.ne.s32.totalorder %s65, %s67
    %p74 = scmp.eq.s32.totalorder %s20, 4
    %p75 = por %p73, %p74
    %p76 = scmp.ne.s32.totalorder %s67, %s68
    %p77 = scmp.eq.s32.totalorder %s20, 0
    %p78 = por %p76, %p77
    %p79 = scmp.ne.s32.totalorder %s67, %s68
    %p80 = scmp.eq.s32.totalorder %s21, 4
    %p81 = por %p79, %p80
    %p83 = scmp.ne.s32.totalorder %s68, %s82
    %p84 = scmp.eq.s32.totalorder %s21, 0
    %p85 = por %p83, %p84
    %s87 = sadd.s32 %s86, 1
    %p90 = scmp.eq.s32.totalorder %s15, 4
    %p91 = scmp.ne.s32.totalorder %s86, %s88
    %p92 = scmp.eq.s32.totalorder %s15, 0
    %p93 = por %p91, %p92
    %p94 = scmp.ne.s32.totalorder %s86, %s88
    %p95 = scmp.eq.s32.totalorder %s20, 4
    %p96 = por %p94, %p95
    %p97 = scmp.ne.s32.totalorder %s88, %s89
    %p98 = scmp.eq.s32.totalorder %s20, 0
    %p99 = por %p97, %p98
    %p100 = scmp.ne.s32.totalorder %s88, %s89
    %p101 = scmp.eq.s32.totalorder %s21, 4
    %p102 = por %p100, %p101
    %p104 = scmp.ne.s32.totalorder %s89, %s103
    %p105 = scmp.eq.s32.totalorder %s21, 0
    %p106 = por %p104, %p105
    %s108 = sadd.s32 %s107, 1
    %p111 = scmp.eq.s32.totalorder %s15, 4
    %p112 = scmp.ne.s32.totalorder %s107, %s109
    %p113 = scmp.eq.s32.totalorder %s15, 0
    %p114 = por %p112, %p113
    %p115 = scmp.ne.s32.totalorder %s107, %s109
    %p116 = scmp.eq.s32.totalorder %s20, 4
    %p117 = por %p115, %p116
    %p118 = scmp.ne.s32.totalorder %s109, %s110
    %p119 = scmp.eq.s32.totalorder %s20, 0
    %p120 = por %p118, %p119
    %p121 = scmp.ne.s32.totalorder %s109, %s110
    %p122 = scmp.eq.s32.totalorder %s21, 4
    %p123 = por %p121, %p122
    %p125 = scmp.ne.s32.totalorder %s110, %s124
    %p126 = scmp.eq.s32.totalorder %s21, 0
    %p127 = por %p125, %p126
    %s128 = ssub.s32 %s15, %s22
    %p129 = scmp.eq.s32.totalorder %s128, 0
    %s131 = sadd.s32 %s130, 1
    %s132 = scalar_select %p129, %s130, %s131
    %p135 = pneg %p129
    %p136 = scmp.eq.s32.totalorder %s15, 4
    %p137 = por %p135, %p136
    %p138 = scmp.ne.s32.totalorder %s130, %s133
    %p139 = scmp.eq.s32.totalorder %s15, 0
    %p140 = por %p138, %p139
    %p141 = scmp.ne.s32.totalorder %s130, %s133
    %p142 = scmp.eq.s32.totalorder %s20, 4
    %p143 = por %p141, %p142
    %p144 = scmp.ne.s32.totalorder %s133, %s134
    %p145 = scmp.eq.s32.totalorder %s20, 0
    %p146 = por %p144, %p145
    %p147 = scmp.ne.s32.totalorder %s133, %s134
    %p148 = scmp.eq.s32.totalorder %s21, 4
    %p149 = por %p147, %p148
    %p151 = scmp.ne.s32.totalorder %s134, %s150
    %p152 = scmp.eq.s32.totalorder %s21, 0
    %p153 = por %p151, %p152
    %s154 = ssub.s32 %s15, %s22
    %p155 = scmp.eq.s32.totalorder %s154, 0
    %s157 = sadd.s32 %s156, 1
    %s158 = scalar_select %p155, %s156, %s157
    %p161 = pneg %p155
    %p162 = scmp.eq.s32.totalorder %s15, 4
    %p163 = por %p161, %p162
    %p164 = scmp.ne.s32.totalorder %s156, %s159
    %p165 = scmp.eq.s32.totalorder %s15, 0
    %p166 = por %p164, %p165
    %p167 = scmp.ne.s32.totalorder %s156, %s159
    %p168 = scmp.eq.s32.totalorder %s20, 4
    %p169 = por %p167, %p168
    %p170 = scmp.ne.s32.totalorder %s159, %s160
    %p171 = scmp.eq.s32.totalorder %s20, 0
    %p172 = por %p170, %p171
    %p173 = scmp.ne.s32.totalorder %s159, %s160
    %p174 = scmp.eq.s32.totalorder %s21, 4
    %p175 = por %p173, %p174
    %p177 = scmp.ne.s32.totalorder %s160, %s176
    %p178 = scmp.eq.s32.totalorder %s21, 0
    %p179 = por %p177, %p178
    %s181 = sadd.s32 %s180, 1
    %p184 = scmp.eq.s32.totalorder %s15, 4
    %p185 = scmp.ne.s32.totalorder %s180, %s182
    %p186 = scmp.eq.s32.totalorder %s15, 0
    %p187 = por %p185, %p186
    %p188 = scmp.ne.s32.totalorder %s180, %s182
    %p189 = scmp.eq.s32.totalorder %s20, 4
    %p190 = por %p188, %p189
    %p191 = scmp.ne.s32.totalorder %s182, %s183
    %p192 = scmp.eq.s32.totalorder %s20, 0
    %p193 = por %p191, %p192
    %p194 = scmp.ne.s32.totalorder %s182, %s183
    %p195 = scmp.eq.s32.totalorder %s21, 4
    %p196 = por %p194, %p195
    %p198 = scmp.ne.s32.totalorder %s183, %s197
    %p199 = scmp.eq.s32.totalorder %s21, 0
    %p200 = por %p198, %p199
    %s201 = ssub.s32 %s15, %s22
    %p202 = scmp.eq.s32.totalorder %s201, 0
    %s204 = sadd.s32 %s203, 1
    %s205 = scalar_select %p202, %s203, %s204
    %p208 = pneg %p202
    %p209 = scmp.eq.s32.totalorder %s15, 4
    %p210 = por %p208, %p209
    %p211 = scmp.ne.s32.totalorder %s203, %s206
    %p212 = scmp.eq.s32.totalorder %s15, 0
    %p213 = por %p211, %p212
    %p214 = scmp.ne.s32.totalorder %s203, %s206
    %p215 = scmp.eq.s32.totalorder %s20, 4
    %p216 = por %p214, %p215
    %p217 = scmp.ne.s32.totalorder %s206, %s207
    %p218 = scmp.eq.s32.totalorder %s20, 0
    %p219 = por %p217, %p218
    %p220 = scmp.ne.s32.totalorder %s206, %s207
    %p221 = scmp.eq.s32.totalorder %s21, 4
    %p222 = por %p220, %p221
    %p224 = scmp.ne.s32.totalorder %s207, %s223
    %p225 = scmp.eq.s32.totalorder %s21, 0
    %p226 = por %p224, %p225
    %p227 = scmp.le.s32.totalorder 1, %s15
    %p228 = scmp.lt.s32.totalorder %s15, 6
    %p229 = pnand %p227, %p228
    %p230 = pneg %p229
    // Predicated region
    $region9: #{fbed_forward.7} parent=5 // pred_check
      _
    $region10: #{fbed_forward.7} parent=5 // pred_check_branch
      %232 = sbr.rel (%p229) target = $region12
    $region11: #{fbed_forward.7} parent=5 // pred_region
      %s233 = ssub.s32 %s15, 1
      // Predicated region
      $region13: #{fbed_forward.7} parent=11 // pred_check
        %p234 = pneg %p36
      $region14: #{fbed_forward.7} parent=11 // pred_check_branch
        %236 = sbr.rel (%p234) target = $region16
      $region15: #{fbed_forward.7} parent=11 // pred_region
        _
      $region16: #{fbed_forward.7} parent=11 // pred_fallthru
        _
      // Predicated region
      $region17: #{fbed_forward.7} parent=11 // pred_check
        %p237 = pneg %p57
      $region18: #{fbed_forward.7} parent=11 // pred_check_branch
        %239 = sbr.rel (%p237) target = $region20
      $region19: #{fbed_forward.7} parent=11 // pred_region
        _
      $region20: #{fbed_forward.7} parent=11 // pred_fallthru
        _
      // Predicated region
      $region21: #{fbed_forward.7} parent=11 // pred_check
        %p240 = pneg %p78
      $region22: #{fbed_forward.7} parent=11 // pred_check_branch
        %242 = sbr.rel (%p240) target = $region24
      $region23: #{fbed_forward.7} parent=11 // pred_region
        _
      $region24: #{fbed_forward.7} parent=11 // pred_fallthru
        _
      // Predicated region
      $region25: #{fbed_forward.7} parent=11 // pred_check
        %p243 = pneg %p99
      $region26: #{fbed_forward.7} parent=11 // pred_check_branch
        %245 = sbr.rel (%p243) target = $region28
      $region27: #{fbed_forward.7} parent=11 // pred_region
        _
      $region28: #{fbed_forward.7} parent=11 // pred_fallthru
        _
      // Predicated region
      $region29: #{fbed_forward.7} parent=11 // pred_check
        %p246 = pneg %p120
      $region30: #{fbed_forward.7} parent=11 // pred_check_branch
        %248 = sbr.rel (%p246) target = $region32
      $region31: #{fbed_forward.7} parent=11 // pred_region
        _
      $region32: #{fbed_forward.7} parent=11 // pred_fallthru
        _
    $region12: #{fbed_forward.7} parent=5 // pred_fallthru
      _
    %p249 = scmp.lt.s32.totalorder %s15, 5
    // Predicated region
    $region33: #{fbed_forward.7} parent=5 // pred_check
      %p250 = pneg %p249
    $region34: #{fbed_forward.7} parent=5 // pred_check_branch
      %252 = sbr.rel (%p250) target = $region36
    $region35: #{fbed_forward.7} parent=5 // pred_region
      // Predicated region
      $region37: #{fbed_forward.7} parent=35 // pred_check
        %p253 = pneg %p140
      $region38: #{fbed_forward.7} parent=35 // pred_check_branch
        %255 = sbr.rel (%p253) target = $region40
      $region39: #{fbed_forward.7} parent=35 // pred_region
        %p256 = scmp.lt.s32.totalorder %s15, 4
        %s257 = scalar_select %p256, %s15, 4
        %s258 = smul.addr %s257, 20
        %s259 = smul.addr %s258, 4
        %s260 = scalar_lea.vmem %s5, %s259
      $region40: #{fbed_forward.7} parent=35 // pred_fallthru
        _
      // Predicated region
      $region41: #{fbed_forward.7} parent=35 // pred_check
        %p261 = pneg %p166
      $region42: #{fbed_forward.7} parent=35 // pred_check_branch
        %263 = sbr.rel (%p261) target = $region44
      $region43: #{fbed_forward.7} parent=35 // pred_region
        %p264 = scmp.lt.s32.totalorder %s15, 4
        %s265 = scalar_select %p264, %s15, 4
        %s266 = smul.addr %s265, 5
        %s267 = scalar_lea.vmem %s6, %s266
      $region44: #{fbed_forward.7} parent=35 // pred_fallthru
        _
    $region36: #{fbed_forward.7} parent=5 // pred_fallthru
      _
    %p268 = scmp.le.s32.totalorder 1, %s15
    %p269 = scmp.lt.s32.totalorder %s15, 6
    %p270 = pnand %p268, %p269
    %p271 = pneg %p270
    // Predicated region
    $region45: #{fbed_forward.7} parent=5 // pred_check
      _
    $region46: #{fbed_forward.7} parent=5 // pred_check_branch
      %273 = sbr.rel (%p270) target = $region48
    $region47: #{fbed_forward.7} parent=5 // pred_region
      %s274 = ssub.s32 %s15, 1
      %p275 = pneg %p36
      %p276 = pneg %p33
      %p277 = pneg %p57
      %p278 = pneg %p54
      %p279 = pneg %p78
      %p280 = pneg %p75
      %p281 = pneg %p99
      %p282 = pneg %p96
      %p283 = pneg %p120
      %p284 = pneg %p117
      %p285 = scmp.lt.s32.totalorder %s20, 4
      %s286 = scalar_select %p285, %s20, 4
      %s287 = smul.addr %s286, 20
      %s288 = smul.addr %s287, 4
      %s289 = scalar_lea.vmem %s5, %s288
      %p290 = pneg %p146
      %p291 = pneg %p143
      %p292 = scmp.lt.s32.totalorder %s20, 4
      %s293 = scalar_select %p292, %s20, 4
      %s294 = smul.addr %s293, 5
      %s295 = scalar_lea.vmem %s6, %s294
      %p296 = pneg %p172
      %p297 = pneg %p169
      %p298 = pneg %p193
      %p299 = pneg %p190
      %p300 = pneg %p219
      %p301 = pneg %p216
      %p302 = scmp.lt.s32.totalorder %s20, 4
      %s303 = scalar_select %p302, %s20, 4
      %s304 = smul.addr %s303, 2
      %s305 = smul.addr %s304, 8
      %s306 = scalar_lea.vmem %s8, %s305
      %p307 = scmp.lt.s32.totalorder %s20, 4
      %s308 = scalar_select %p307, %s20, 4
      %s309 = smul.addr %s308, 20
      %s310 = smul.addr %s309, 4
      %s311 = scalar_lea.vmem %s5, %s310
      %p312 = scmp.lt.s32.totalorder %s20, 4
      %s313 = scalar_select %p312, %s20, 4
      %s314 = smul.addr %s313, 5
      %s315 = scalar_lea.vmem %s6, %s314
      %p316 = scmp.lt.s32.totalorder %s20, 4
      %s317 = scalar_select %p316, %s20, 4
      %s318 = smul.addr %s317, 2
      %s319 = smul.addr %s318, 8
      %s320 = scalar_lea.vmem %s8, %s319
      %p322 = scmp.eq.s32.totalorder %s20, 0
      // Predicated region
      $region49: #{fbed_forward.7} parent=47 // pred_check
        %p323 = pneg %p322
      $region50: #{fbed_forward.7} parent=47 // pred_check_branch
        %325 = sbr.rel (%p323) target = $region52
      $region51: #{fbed_forward.7} parent=47 // pred_region
        %v326 = vld [vmem:[%s0] sm:$0x1]
        %v327 = vld [vmem:[%s1] sm:$0xf]
        %v328 = vld [vmem:[%s1 + $0x4] sm:$0xf]
        %v329 = vld [vmem:[%s1 + $0x8] sm:$0xf]
        %v330 = vld [vmem:[%s1 + $0xc] sm:$0xf]
        %v331 = vpack.c.bf16 %v326, %v326
        %v332 = vld [vmem:[%s2] sm:$0x1]
        %v337 = vunpack.c.l.b16 %v327
        %v338 = vunpack.c.l.b16 %v328
        %v339 = vunpack.c.l.b16 %v329
        %v340 = vunpack.c.l.b16 %v330
        %v341 = vpack.c.b16 %v338, %v337
        %v342 = vpack.c.b16 %v340, %v339
        %vm345 = vcmask 261120
        %v347 = vsel %vm345, %v331, 0
        %349 = vmatprep.subr.bf16.mxu0 0
        %350 = vmatpush1.bf16.msra.mxu0 0
        %351 = vmatprep.subr.bf16.mxu0 0
        %352 = vmatpush1.bf16.msra.mxu0 0
        %353 = vmatprep.subr.bf16.mxu0 0
        %354 = vmatpush1.bf16.msra.mxu0 0
        %355 = vmatprep.subr.bf16.mxu0 0
        %356 = vmatpush1.bf16.msra.mxu0 0
        %357 = vmatprep.subr.bf16.mxu0 0
        %358 = vmatpush1.bf16.msra.mxu0 0
        %359 = vmatprep.subr.bf16.mxu0 0
        %360 = vmatpush1.bf16.msra.mxu0 0
        %361 = vmatprep.subr.bf16.mxu0 0
        %362 = vmatpush1.bf16.msra.mxu0 %v342
        %363 = vmatprep.subr.bf16.mxu0 0
        %364 = vmatpush1.bf16.msra.mxu0 %v341
        %365 = vmatprep.subr.bf16.mxu0 0
        %366 = vmatpush2.bf16.msra.mxu0 0
        %367 = vmatprep.subr.bf16.mxu0 0
        %368 = vmatpush2.bf16.msra.mxu0 0
        %369 = vmatprep.subr.bf16.mxu0 0
        %370 = vmatpush2.bf16.msra.mxu0 0
        %371 = vmatprep.subr.bf16.mxu0 0
        %372 = vmatpush2.bf16.msra.mxu0 0
        %373 = vmatprep.subr.bf16.mxu0 0
        %374 = vmatpush2.bf16.msra.mxu0 0
        %375 = vmatprep.subr.bf16.mxu0 0
        %376 = vmatpush2.bf16.msra.mxu0 0
        %377 = vmatprep.subr.bf16.mxu0 0
        %378 = vmatpush2.bf16.msra.mxu0 0
        %379 = vmatprep.subr.bf16.mxu0 0
        %380 = vmatpush2.bf16.msra.mxu0 0
        %381 = vmatprep.mubr.bf16.mxu0 0
        %382 = vmatmul.mubr.bf16.gmra.mxu0 %v347
        %v383 = vpop.f32.mrf.mxu0
        %v384 = vadd.f32 %v332, %v383
        %v385 = vpop.f32.mrf.mxu0
        %v386 = vpop.f32.mrf.mxu0
        %v387 = vpop.f32.mrf.mxu0
        %388 = vdwg.mxu0
        %v389 = vxor.u32 %v384, 2147483648
        %v390 = vmul.f32 %v389, 1.442695
        %v391 = vpow.pop %v390
        %v392 = vadd.f32 %v391, 1.0
        %v393 = vrcp.pop %v392
        %v394 = vmul.f32 1.0, %v393
        %v395 = vmul.f32 %v384, %v394
        %v396 = vld [vmem:[%s3] sm:$0xf]
        %v397 = vld [vmem:[%s3 + $0x4] sm:$0xf]
        %v398 = vld [vmem:[%s3 + $0x8] sm:$0xf]
        %v399 = vld [vmem:[%s3 + $0xc] sm:$0xf]
        %v400 = vpack.c.bf16 %v395, %v395
        %v401 = vld [vmem:[%s4] sm:$0x1]
        %v406 = vunpack.c.l.b16 %v396
        %v407 = vunpack.c.l.b16 %v397
        %v408 = vunpack.c.l.b16 %v398
        %v409 = vunpack.c.l.b16 %v399
        %v410 = vpack.c.b16 %v407, %v406
        %v411 = vpack.c.b16 %v409, %v408
        %v415 = vsel %vm345, %v400, 0
        %417 = vmatprep.subr.bf16.mxu0 0
        %418 = vmatpush1.bf16.msra.mxu0 0
        %419 = vmatprep.subr.bf16.mxu0 0
        %420 = vmatpush1.bf16.msra.mxu0 0
        %421 = vmatprep.subr.bf16.mxu0 0
        %422 = vmatpush1.bf16.msra.mxu0 0
        %423 = vmatprep.subr.bf16.mxu0 0
        %424 = vmatpush1.bf16.msra.mxu0 0
        %425 = vmatprep.subr.bf16.mxu0 0
        %426 = vmatpush1.bf16.msra.mxu0 0
        %427 = vmatprep.subr.bf16.mxu0 0
        %428 = vmatpush1.bf16.msra.mxu0 0
        %429 = vmatprep.subr.bf16.mxu0 0
        %430 = vmatpush1.bf16.msra.mxu0 %v411
        %431 = vmatprep.subr.bf16.mxu0 0
        %432 = vmatpush1.bf16.msra.mxu0 %v410
        %433 = vmatprep.subr.bf16.mxu0 0
        %434 = vmatpush2.bf16.msra.mxu0 0
        %435 = vmatprep.subr.bf16.mxu0 0
        %436 = vmatpush2.bf16.msra.mxu0 0
        %437 = vmatprep.subr.bf16.mxu0 0
        %438 = vmatpush2.bf16.msra.mxu0 0
        %439 = vmatprep.subr.bf16.mxu0 0
        %440 = vmatpush2.bf16.msra.mxu0 0
        %441 = vmatprep.subr.bf16.mxu0 0
        %442 = vmatpush2.bf16.msra.mxu0 0
        %443 = vmatprep.subr.bf16.mxu0 0
        %444 = vmatpush2.bf16.msra.mxu0 0
        %445 = vmatprep.subr.bf16.mxu0 0
        %446 = vmatpush2.bf16.msra.mxu0 0
        %447 = vmatprep.subr.bf16.mxu0 0
        %448 = vmatpush2.bf16.msra.mxu0 0
        %449 = vmatprep.mubr.bf16.mxu0 0
        %450 = vmatmul.mubr.bf16.gmra.mxu0 %v415
        %v451 = vpop.f32.mrf.mxu0
        %v452 = vadd.f32 %v401, %v451
        %v453 = vpop.f32.mrf.mxu0
        %v454 = vpop.f32.mrf.mxu0
        %v455 = vpop.f32.mrf.mxu0
        %456 = vdwg.mxu0
        %v457 = vxor.u32 %v452, 2147483648
        %v458 = vmul.f32 %v457, 1.442695
        %v459 = vpow.pop %v458
        %v460 = vadd.f32 %v459, 1.0
        %v461 = vrcp.pop %v460
        %v462 = vmul.f32 1.0, %v461
        %v463 = vmul.f32 %v452, %v462
        %vm464 = vcmask 253952
        %465 = vst.msk [vmem:[#allocation2] sm:$0x1] %vm464, %v463
        %466 = vst.msk [vmem:[%s7] sm:$0x1] %vm464, %v463
      $region52: #{fbed_forward.7} parent=47 // pred_fallthru
        _
      %v467 = vld [vmem:[#allocation2] sm:$0x1]
      %v468 = vld [vmem:[%s311] sm:$0xff]
      %v469 = vld [vmem:[%s311 + $0x8] sm:$0xff]
      %v470 = vld [vmem:[%s311 + $0x10] sm:$0xf]
      %v471 = vld [vmem:[%s311 + $0x14] sm:$0xff]
      %v472 = vld [vmem:[%s311 + $0x1c] sm:$0xff]
      %v473 = vld [vmem:[%s311 + $0x24] sm:$0xf]
      %v474 = vld [vmem:[%s311 + $0x28] sm:$0xff]
      %v475 = vld [vmem:[%s311 + $0x30] sm:$0xff]
      %v476 = vld [vmem:[%s311 + $0x38] sm:$0xf]
      %v477 = vld [vmem:[%s311 + $0x3c] sm:$0xff]
      %v478 = vld [vmem:[%s311 + $0x44] sm:$0xff]
      %v479 = vld [vmem:[%s311 + $0x4c] sm:$0xf]
      %v480 = vpack.c.bf16 %v467, %v467
      %v481 = vld [vmem:[%s315] sm:$0x1f]
      %v494 = vunpack.c.l.b16 %v468
      %v495 = vunpack.c.h.b16 %v468
      %v496 = vunpack.c.l.b16 %v469
      %v497 = vunpack.c.h.b16 %v469
      %v498 = vunpack.c.l.b16 %v470
      %v499 = vunpack.c.l.b16 %v471
      %v500 = vunpack.c.h.b16 %v471
      %v501 = vunpack.c.l.b16 %v472
      %v502 = vunpack.c.h.b16 %v472
      %v503 = vunpack.c.l.b16 %v473
      %v504 = vunpack.c.l.b16 %v474
      %v505 = vunpack.c.h.b16 %v474
      %v506 = vunpack.c.l.b16 %v475
      %v507 = vunpack.c.h.b16 %v475
      %v508 = vunpack.c.l.b16 %v476
      %v509 = vunpack.c.l.b16 %v477
      %v510 = vunpack.c.h.b16 %v477
      %v511 = vunpack.c.l.b16 %v478
      %v512 = vunpack.c.h.b16 %v478
      %v513 = vunpack.c.l.b16 %v479
      %v514 = vpack.c.b16 %v499, %v494
      %v515 = vpack.c.b16 %v500, %v495
      %v516 = vpack.c.b16 %v501, %v496
      %v517 = vpack.c.b16 %v502, %v497
      %v518 = vpack.c.b16 %v503, %v498
      %v519 = vpack.c.b16 %v509, %v504
      %v520 = vpack.c.b16 %v510, %v505
      %v521 = vpack.c.b16 %v511, %v506
      %v522 = vpack.c.b16 %v512, %v507
      %v523 = vpack.c.b16 %v513, %v508
      %v535 = vlaneseq
      %v536 = vshrl.u32 %v535, 7
      %v537 = vsub.s32 0, %v536
      %v538 = vrot.slane %v481, %v537
      %v539 = vlaneseq
      %v540 = vshrl.u32 %v539, 7
      %v541 = vsub.s32 1, %v540
      %v542 = vrot.slane %v481, %v541
      %v543 = vlaneseq
      %v544 = vshrl.u32 %v543, 7
      %v545 = vsub.s32 2, %v544
      %v546 = vrot.slane %v481, %v545
      %v547 = vlaneseq
      %v548 = vshrl.u32 %v547, 7
      %v549 = vsub.s32 3, %v548
      %v550 = vrot.slane %v481, %v549
      %v551 = vlaneseq
      %v552 = vshrl.u32 %v551, 7
      %v553 = vsub.s32 4, %v552
      %v554 = vrot.slane %v481, %v553
      %vm560 = vcmask 261120
      %v562 = vsel %vm560, %v480, 0
      %564 = vmatprep.subr.bf16.mxu0 0
      %565 = vmatpush1.bf16.msra.mxu0 0
      %566 = vmatprep.subr.bf16.mxu0 0
      %567 = vmatpush1.bf16.msra.mxu0 0
      %568 = vmatprep.subr.bf16.mxu0 0
      %569 = vmatpush1.bf16.msra.mxu0 0
      %570 = vmatprep.subr.bf16.mxu0 0
      %571 = vmatpush1.bf16.msra.mxu0 0
      %572 = vmatprep.subr.bf16.mxu0 0
      %573 = vmatpush1.bf16.msra.mxu0 0
      %574 = vmatprep.subr.bf16.mxu0 0
      %575 = vmatpush1.bf16.msra.mxu0 0
      %576 = vmatprep.subr.bf16.mxu0 %v520
      %577 = vmatpush1.bf16.msra.mxu0 %v519
      %578 = vmatprep.subr.bf16.mxu0 %v515
      %579 = vmatpush1.bf16.msra.mxu0 %v514
      %580 = vmatprep.subr.bf16.mxu0 0
      %581 = vmatpush2.bf16.msra.mxu0 0
      %582 = vmatprep.subr.bf16.mxu0 0
      %583 = vmatpush2.bf16.msra.mxu0 0
      %584 = vmatprep.subr.bf16.mxu0 0
      %585 = vmatpush2.bf16.msra.mxu0 0
      %586 = vmatprep.subr.bf16.mxu0 0
      %587 = vmatpush2.bf16.msra.mxu0 0
      %588 = vmatprep.subr.bf16.mxu0 0
      %589 = vmatpush2.bf16.msra.mxu0 0
      %590 = vmatprep.subr.bf16.mxu0 0
      %591 = vmatpush2.bf16.msra.mxu0 0
      %592 = vmatprep.subr.bf16.mxu0 0
      %593 = vmatpush2.bf16.msra.mxu0 0
      %594 = vmatprep.subr.bf16.mxu0 0
      %595 = vmatpush2.bf16.msra.mxu0 0
      %596 = vmatprep.mubr.bf16.mxu0 0
      %597 = vmatmul.mubr.bf16.gmra.mxu0 %v562
      %v598 = vpop.f32.mrf.mxu0
      %v599 = vadd.f32 %v538, %v598
      %v600 = vpop.f32.mrf.mxu0
      %v601 = vadd.f32 %v542, %v600
      %v602 = vpop.f32.mrf.mxu0
      %v603 = vpop.f32.mrf.mxu0
      %604 = vdwg.mxu0
      %605 = vmatprep.subr.bf16.mxu0 0
      %606 = vmatpush1.bf16.msra.mxu0 0
      %607 = vmatprep.subr.bf16.mxu0 0
      %608 = vmatpush1.bf16.msra.mxu0 0
      %609 = vmatprep.subr.bf16.mxu0 0
      %610 = vmatpush1.bf16.msra.mxu0 0
      %611 = vmatprep.subr.bf16.mxu0 0
      %612 = vmatpush1.bf16.msra.mxu0 0
      %613 = vmatprep.subr.bf16.mxu0 0
      %614 = vmatpush1.bf16.msra.mxu0 0
      %615 = vmatprep.subr.bf16.mxu0 0
      %616 = vmatpush1.bf16.msra.mxu0 0
      %617 = vmatprep.subr.bf16.mxu0 %v522
      %618 = vmatpush1.bf16.msra.mxu0 %v521
      %619 = vmatprep.subr.bf16.mxu0 %v517
      %620 = vmatpush1.bf16.msra.mxu0 %v516
      %621 = vmatprep.subr.bf16.mxu0 0
      %622 = vmatpush2.bf16.msra.mxu0 0
      %623 = vmatprep.subr.bf16.mxu0 0
      %624 = vmatpush2.bf16.msra.mxu0 0
      %625 = vmatprep.subr.bf16.mxu0 0
      %626 = vmatpush2.bf16.msra.mxu0 0
      %627 = vmatprep.subr.bf16.mxu0 0
      %628 = vmatpush2.bf16.msra.mxu0 0
      %629 = vmatprep.subr.bf16.mxu0 0
      %630 = vmatpush2.bf16.msra.mxu0 0
      %631 = vmatprep.subr.bf16.mxu0 0
      %632 = vmatpush2.bf16.msra.mxu0 0
      %633 = vmatprep.subr.bf16.mxu0 0
      %634 = vmatpush2.bf16.msra.mxu0 0
      %635 = vmatprep.subr.bf16.mxu0 0
      %636 = vmatpush2.bf16.msra.mxu0 0
      %637 = vmatprep.mubr.bf16.mxu0 0
      %638 = vmatmul.mubr.bf16.gmra.mxu0 %v562
      %v639 = vpop.f32.mrf.mxu0
      %v640 = vadd.f32 %v546, %v639
      %v641 = vpop.f32.mrf.mxu0
      %v642 = vadd.f32 %v550, %v641
      %v643 = vpop.f32.mrf.mxu0
      %v644 = vpop.f32.mrf.mxu0
      %645 = vdwg.mxu0
      %646 = vmatprep.subr.bf16.mxu0 0
      %647 = vmatpush1.bf16.msra.mxu0 0
      %648 = vmatprep.subr.bf16.mxu0 0
      %649 = vmatpush1.bf16.msra.mxu0 0
      %650 = vmatprep.subr.bf16.mxu0 0
      %651 = vmatpush1.bf16.msra.mxu0 0
      %652 = vmatprep.subr.bf16.mxu0 0
      %653 = vmatpush1.bf16.msra.mxu0 0
      %654 = vmatprep.subr.bf16.mxu0 0
      %655 = vmatpush1.bf16.msra.mxu0 0
      %656 = vmatprep.subr.bf16.mxu0 0
      %657 = vmatpush1.bf16.msra.mxu0 0
      %658 = vmatprep.subr.bf16.mxu0 0
      %659 = vmatpush1.bf16.msra.mxu0 %v523
      %660 = vmatprep.subr.bf16.mxu0 0
      %661 = vmatpush1.bf16.msra.mxu0 %v518
      %662 = vmatprep.subr.bf16.mxu0 0
      %663 = vmatpush2.bf16.msra.mxu0 0
      %664 = vmatprep.subr.bf16.mxu0 0
      %665 = vmatpush2.bf16.msra.mxu0 0
      %666 = vmatprep.subr.bf16.mxu0 0
      %667 = vmatpush2.bf16.msra.mxu0 0
      %668 = vmatprep.subr.bf16.mxu0 0
      %669 = vmatpush2.bf16.msra.mxu0 0
      %670 = vmatprep.subr.bf16.mxu0 0
      %671 = vmatpush2.bf16.msra.mxu0 0
      %672 = vmatprep.subr.bf16.mxu0 0
      %673 = vmatpush2.bf16.msra.mxu0 0
      %674 = vmatprep.subr.bf16.mxu0 0
      %675 = vmatpush2.bf16.msra.mxu0 0
      %676 = vmatprep.subr.bf16.mxu0 0
      %677 = vmatpush2.bf16.msra.mxu0 0
      %678 = vmatprep.mubr.bf16.mxu0 0
      %679 = vmatmul.mubr.bf16.gmra.mxu0 %v562
      %v680 = vpop.f32.mrf.mxu0
      %v681 = vadd.f32 %v554, %v680
      %v682 = vpop.f32.mrf.mxu0
      %v683 = vpop.f32.mrf.mxu0
      %v684 = vpop.f32.mrf.mxu0
      %685 = vdwg.mxu0
      %v688 = vcombine.low %v599, %v601
      %v690 = vunpack.c.l.s4 1966171168
      %v691 = vunpack.c.0.s8 %v690
      %v692 = vlaneseq
      %v693 = vshrl.u32 %v692, 7
      %v694 = vsub.s32 %v691, %v693
      %v695 = vrot.slane %v688, %v694
      %v697 = vunpack.c.l.s4 1966171168
      %v698 = vunpack.c.0.s8 %v697
      %v699 = vlaneseq
      %v700 = vshrl.u32 %v699, 7
      %v701 = vsub.s32 %v698, %v700
      %v702 = vrot.slane %v695, %v701
      %v704 = vlaneseq
      %vm705 = vcmp.ge.s32.totalorder %v704, 0
      %vm706 = vcmp.lt.s32.totalorder %v704, 192
      %vm707 = vmand %vm705, %vm706
      %708 = vst.msk [vmem:[%s320] ss:$8 sm:$0x3] %vm707, %v702
      %709 = vst.msk [vmem:[%s320] ss:$8 sm:$0x0] %vm707, %v702
      %v711 = vcombine.low %v601, %v640
      %v713 = vunpack.c.l.s4 1966171168
      %v714 = vunpack.c.0.s8 %v713
      %v715 = vlaneseq
      %v716 = vshrl.u32 %v715, 7
      %v717 = vsub.s32 %v714, %v716
      %v718 = vrot.slane %v711, %v717
      %v720 = vunpack.c.l.s4 1966171168
      %v721 = vunpack.c.0.s8 %v720
      %v722 = vlaneseq
      %v723 = vshrl.u32 %v722, 7
      %v724 = vsub.s32 %v721, %v723
      %v725 = vrot.slane %v718, %v724
      %726 = vrot.lane.b32.xlu0 %v725, 64
      %v727 = vpop.permute.xlu0 %726
      %v728 = vrot.slane %v727, 1
      %vm729 = vcmask 523264
      %v730 = vsel %vm729, %v727, %v728
      %s732 = scalar_lea.vmem %s320, 1
      %733 = vst.msk [vmem:[%s732] ss:$8 sm:$0x3] %vm707, %v730
      %734 = vst.msk [vmem:[%s732] ss:$8 sm:$0x0] %vm707, %v730
      %v737 = vcombine.low %v642, %v681
      %v739 = vunpack.c.l.s4 1966171168
      %v740 = vunpack.c.0.s8 %v739
      %v741 = vlaneseq
      %v742 = vshrl.u32 %v741, 7
      %v743 = vsub.s32 %v740, %v742
      %v744 = vrot.slane %v737, %v743
      %v746 = vunpack.c.l.s4 1966171168
      %v747 = vunpack.c.0.s8 %v746
      %v748 = vlaneseq
      %v749 = vshrl.u32 %v748, 7
      %v750 = vsub.s32 %v747, %v749
      %v751 = vrot.slane %v744, %v750
      %s753 = scalar_lea.vmem %s320, 2
      %754 = vst.msk [vmem:[%s753] ss:$8 sm:$0x3] %vm707, %v751
      %755 = vst.msk [vmem:[%s753] ss:$8 sm:$0x0] %vm707, %v751
      %756 = vst [vmem:[%s320] sm:$0xf8] 0.0
      %vm757 = vcmask 523267
      %758 = vst.msk [vmem:[%s320 + $0x8] sm:$0xf8] %vm757, 0.0
      %p759 = scmp.lt.s32.totalorder %s20, 4
      %s760 = scalar_select %p759, %s20, 4
      %s761 = smul.addr %s760, 2
      %s762 = smul.addr %s761, 8
      %s763 = scalar_lea.vmem %s8, %s762
      // Predicated region
      $region53: #{fbed_forward.7} parent=47 // pred_check
        %p764 = pneg %p190
      $region54: #{fbed_forward.7} parent=47 // pred_check_branch
        %766 = sbr.rel (%p764) target = $region56
      $region55: #{fbed_forward.7} parent=47 // pred_region
        _
      $region56: #{fbed_forward.7} parent=47 // pred_fallthru
        _
      // Predicated region
      $region57: #{fbed_forward.7} parent=47 // pred_check
        %p767 = pneg %p216
      $region58: #{fbed_forward.7} parent=47 // pred_check_branch
        %769 = sbr.rel (%p767) target = $region60
      $region59: #{fbed_forward.7} parent=47 // pred_region
        _
      $region60: #{fbed_forward.7} parent=47 // pred_fallthru
        _
      // Predicated region
      $region61: #{fbed_forward.7} parent=47 // pred_check
        %p770 = pneg %p190
      $region62: #{fbed_forward.7} parent=47 // pred_check_branch
        %772 = sbr.rel (%p770) target = $region64
      $region63: #{fbed_forward.7} parent=47 // pred_region
        _
      $region64: #{fbed_forward.7} parent=47 // pred_fallthru
        _
    $region48: #{fbed_forward.7} parent=5 // pred_fallthru
      _
    %p773 = scmp.le.s32.totalorder 2, %s15
    // Predicated region
    $region65: #{fbed_forward.7} parent=5 // pred_check
      %p774 = pneg %p773
    $region66: #{fbed_forward.7} parent=5 // pred_check_branch
      %776 = sbr.rel (%p774) target = $region68
    $region67: #{fbed_forward.7} parent=5 // pred_region
      %s777 = ssub.s32 %s15, 2
      // Predicated region
      $region69: #{fbed_forward.7} parent=67 // pred_check
        %p778 = pneg %p222
      $region70: #{fbed_forward.7} parent=67 // pred_check_branch
        %780 = sbr.rel (%p778) target = $region72
      $region71: #{fbed_forward.7} parent=67 // pred_region
        %p781 = scmp.lt.s32.totalorder %s21, 4
        %s782 = scalar_select %p781, %s21, 4
        %s783 = smul.addr %s782, 2
        %s784 = smul.addr %s783, 8
        %s785 = scalar_lea.vmem %s8, %s784
      $region72: #{fbed_forward.7} parent=67 // pred_fallthru
        _
    $region68: #{fbed_forward.7} parent=5 // pred_fallthru
      _
  $region6: #{fbed_forward.7} parent=0 // loop_footer
    %s19 = sadd.s32 1, %s15
  $region7: #{fbed_forward.7} parent=0 // loop_footer_branch
    %14 = sbr.rel target = $region3
  $region8: #{fbed_forward.7} parent=0 // loop_exit
    _

// kernel: fbed_forward.6
$region0: #{fbed_forward.6}
  #allocation0 [shape = 'u32[]', space=smem, size = 0x4, offset = 0x4, fixed_abs, tag = 'smem constant byte address 0x4 - core index']
  #allocation1 [shape = 'u32[144,128]{1,0:T(1,128)}', space=vmem, size = 0x12000, scoped, tag = 'internal scratch']
  #allocation2 [shape = 'f32[16,32]{1,0:T(8,128)}', space=vmem, size = 0x2000, scoped, tag = 'scratch operand']
  #allocation3 [shape = 'f32[16,1]{1,0:T(8,128)}', space=vmem, size = 0x2000, scoped, tag = 'scratch operand']
  %s0 = inlined_call_operand.vmem [shape: f32[128,8], index: 0, kind: input, shape index: {}]
  %s1 = inlined_call_operand.vmem [shape: f32[128,32], index: 1, kind: input, shape index: {}]
  %s2 = inlined_call_operand.vmem [shape: f32[16,8], index: 2, kind: input, shape index: {}]
  %s3 = inlined_call_operand.vmem [shape: f32[8,128], index: 3, kind: input, shape index: {}]
  %s4 = inlined_call_operand.vmem [shape: bf16[8,32], index: 4, kind: input, shape index: {}]
  %s5 = inlined_call_operand.vmem [shape: f32[1,32], index: 5, kind: input, shape index: {}]
  %s6 = inlined_call_operand.vmem [shape: bf16[32,32], index: 6, kind: input, shape index: {}]
  %s7 = inlined_call_operand.vmem [shape: f32[1,32], index: 7, kind: input, shape index: {}]
  %s8 = inlined_call_operand.vmem [shape: bf16[32,32], index: 8, kind: input, shape index: {}]
  %s9 = inlined_call_operand.vmem [shape: f32[1,32], index: 9, kind: input, shape index: {}]
  %s10 = inlined_call_operand.vmem [shape: bf16[32,32], index: 10, kind: input, shape index: {}]
  %s11 = inlined_call_operand.vmem [shape: f32[1,32], index: 11, kind: input, shape index: {}]
  %s12 = inlined_call_operand.vmem [shape: bf16[32,32], index: 12, kind: input, shape index: {}]
  %s13 = inlined_call_operand.vmem [shape: f32[1,32], index: 13, kind: input, shape index: {}]
  %s14 = inlined_call_operand.vmem [shape: f32[16,32], index: 14, kind: output, shape index: {}]
  %s15 = sld [smem:[#allocation0]]
  $region74: #{fbed_forward.6} parent=0
    _
  %s17 = ssub.s32 1, %s15
  %s18 = scalar_select 0, %s17, %s15
  // Predicated region
  $region2: #{fbed_forward.6} parent=0 // pred_check
    _
  $region3: #{fbed_forward.6} parent=0 // pred_check_branch
    %20 = sbr.rel (0) target = $region5
  $region4: #{fbed_forward.6} parent=0 // pred_region
    _
  $region5: #{fbed_forward.6} parent=0 // pred_fallthru
    _
  // Predicated region
  $region6: #{fbed_forward.6} parent=0 // pred_check
    _
  $region7: #{fbed_forward.6} parent=0 // pred_check_branch
    %22 = sbr.rel (0) target = $region9
  $region8: #{fbed_forward.6} parent=0 // pred_region
    _
  $region9: #{fbed_forward.6} parent=0 // pred_fallthru
    _
  // Predicated region
  $region10: #{fbed_forward.6} parent=0 // pred_check
    _
  $region11: #{fbed_forward.6} parent=0 // pred_check_branch
    %24 = sbr.rel (0) target = $region13
  $region12: #{fbed_forward.6} parent=0 // pred_region
    _
  $region13: #{fbed_forward.6} parent=0 // pred_fallthru
    _
  // Predicated region
  $region14: #{fbed_forward.6} parent=0 // pred_check
    _
  $region15: #{fbed_forward.6} parent=0 // pred_check_branch
    %26 = sbr.rel (0) target = $region17
  $region16: #{fbed_forward.6} parent=0 // pred_region
    _
  $region17: #{fbed_forward.6} parent=0 // pred_fallthru
    _
  // Predicated region
  $region18: #{fbed_forward.6} parent=0 // pred_check
    _
  $region19: #{fbed_forward.6} parent=0 // pred_check_branch
    %28 = sbr.rel (0) target = $region21
  $region20: #{fbed_forward.6} parent=0 // pred_region
    _
  $region21: #{fbed_forward.6} parent=0 // pred_fallthru
    _
  // Predicated region
  $region22: #{fbed_forward.6} parent=0 // pred_check
    _
  $region23: #{fbed_forward.6} parent=0 // pred_check_branch
    %30 = sbr.rel (0) target = $region25
  $region24: #{fbed_forward.6} parent=0 // pred_region
    _
  $region25: #{fbed_forward.6} parent=0 // pred_fallthru
    _
  // Predicated region
  $region26: #{fbed_forward.6} parent=0 // pred_check
    _
  $region27: #{fbed_forward.6} parent=0 // pred_check_branch
    %32 = sbr.rel (0) target = $region29
  $region28: #{fbed_forward.6} parent=0 // pred_region
    _
  $region29: #{fbed_forward.6} parent=0 // pred_fallthru
    _
  // Predicated region
  $region30: #{fbed_forward.6} parent=0 // pred_check
    _
  $region31: #{fbed_forward.6} parent=0 // pred_check_branch
    %34 = sbr.rel (0) target = $region33
  $region32: #{fbed_forward.6} parent=0 // pred_region
    _
  $region33: #{fbed_forward.6} parent=0 // pred_fallthru
    _
  // Predicated region
  $region34: #{fbed_forward.6} parent=0 // pred_check
    _
  $region35: #{fbed_forward.6} parent=0 // pred_check_branch
    %36 = sbr.rel (0) target = $region37
  $region36: #{fbed_forward.6} parent=0 // pred_region
    _
  $region37: #{fbed_forward.6} parent=0 // pred_fallthru
    _
  // Predicated region
  $region38: #{fbed_forward.6} parent=0 // pred_check
    _
  $region39: #{fbed_forward.6} parent=0 // pred_check_branch
    %38 = sbr.rel (0) target = $region41
  $region40: #{fbed_forward.6} parent=0 // pred_region
    _
  $region41: #{fbed_forward.6} parent=0 // pred_fallthru
    _
  // Predicated region
  $region42: #{fbed_forward.6} parent=0 // pred_check
    _
  $region43: #{fbed_forward.6} parent=0 // pred_check_branch
    %40 = sbr.rel (0) target = $region45
  $region44: #{fbed_forward.6} parent=0 // pred_region
    _
  $region45: #{fbed_forward.6} parent=0 // pred_fallthru
    _
  // Predicated region
  $region46: #{fbed_forward.6} parent=0 // pred_check
    _
  $region47: #{fbed_forward.6} parent=0 // pred_check_branch
    %42 = sbr.rel (0) target = $region49
  $region48: #{fbed_forward.6} parent=0 // pred_region
    _
  $region49: #{fbed_forward.6} parent=0 // pred_fallthru
    _
  // Predicated region
  $region50: #{fbed_forward.6} parent=0 // pred_check
    _
  $region51: #{fbed_forward.6} parent=0 // pred_check_branch
    %44 = sbr.rel (0) target = $region53
  $region52: #{fbed_forward.6} parent=0 // pred_region
    _
  $region53: #{fbed_forward.6} parent=0 // pred_fallthru
    _
  // Predicated region
  $region54: #{fbed_forward.6} parent=0 // pred_check
    _
  $region55: #{fbed_forward.6} parent=0 // pred_check_branch
    %46 = sbr.rel (0) target = $region57
  $region56: #{fbed_forward.6} parent=0 // pred_region
    _
  $region57: #{fbed_forward.6} parent=0 // pred_fallthru
    _
  %p48 = scmp.eq.s32.totalorder 0, 0
  // Predicated region
  $region58: #{fbed_forward.6} parent=0 // pred_check
    %p49 = pneg %p48
  $region59: #{fbed_forward.6} parent=0 // pred_check_branch
    %51 = sbr.rel (%p49) target = $region61
  $region60: #{fbed_forward.6} parent=0 // pred_region
    %vm52 = vcmask 261120
    %53 = vst.msk [vmem:[#allocation2] sm:$0xff] %vm52, 0.0
    %54 = vst.msk [vmem:[#allocation2 + $0x8] sm:$0xff] %vm52, 0.0
    %vm55 = vcmask 7168
    %56 = vst.msk [vmem:[#allocation3] sm:$0xff] %vm55, 0.0
    %57 = vst.msk [vmem:[#allocation3 + $0x8] sm:$0xff] %vm55, 0.0
  $region61: #{fbed_forward.6} parent=0 // pred_fallthru
    _
  %v58 = vld [vmem:[%s0] sm:$0xff]
  %v59 = vld [vmem:[%s0 + $0x8] sm:$0xff]
  %v60 = vld [vmem:[%s0 + $0x10] sm:$0xff]
  %v61 = vld [vmem:[%s0 + $0x18] sm:$0xff]
  %v62 = vld [vmem:[%s0 + $0x20] sm:$0xff]
  %v63 = vld [vmem:[%s0 + $0x28] sm:$0xff]
  %v64 = vld [vmem:[%s0 + $0x30] sm:$0xff]
  %v65 = vld [vmem:[%s0 + $0x38] sm:$0xff]
  %v66 = vld [vmem:[%s0 + $0x40] sm:$0xff]
  %v67 = vld [vmem:[%s0 + $0x48] sm:$0xff]
  %v68 = vld [vmem:[%s0 + $0x50] sm:$0xff]
  %v69 = vld [vmem:[%s0 + $0x58] sm:$0xff]
  %v70 = vld [vmem:[%s0 + $0x60] sm:$0xff]
  %v71 = vld [vmem:[%s0 + $0x68] sm:$0xff]
  %v72 = vld [vmem:[%s0 + $0x70] sm:$0xff]
  %v73 = vld [vmem:[%s0 + $0x78] sm:$0xff]
  %v74 = vld [vmem:[%s4] sm:$0xf]
  %v75 = vpack.c.bf16 %v59, %v58
  %v76 = vpack.c.bf16 %v61, %v60
  %v77 = vpack.c.bf16 %v63, %v62
  %v78 = vpack.c.bf16 %v65, %v64
  %v79 = vpack.c.bf16 %v67, %v66
  %v80 = vpack.c.bf16 %v69, %v68
  %v81 = vpack.c.bf16 %v71, %v70
  %v82 = vpack.c.bf16 %v73, %v72
  %v83 = vld [vmem:[%s5] sm:$0x1]
  %v85 = vlaneseq
  %v86 = vshrl.u32 %v85, 7
  %v87 = vsub.s32 0, %v86
  %v88 = vrot.slane %v83, %v87
  %vm90 = vcmask 64512
  %v92 = vsel %vm90, %v75, 0
  %v95 = vsel %vm90, %v76, 0
  %v98 = vsel %vm90, %v77, 0
  %v101 = vsel %vm90, %v78, 0
  %v104 = vsel %vm90, %v79, 0
  %v107 = vsel %vm90, %v80, 0
  %v110 = vsel %vm90, %v81, 0
  %v113 = vsel %vm90, %v82, 0
  %vm115 = vcmask 1043456
  %v117 = vsel %vm115, %v74, 0
  %119 = vmatprep.subr.bf16.mxu0 0
  %120 = vmatpush1.bf16.msra.mxu0 0
  %121 = vmatprep.subr.bf16.mxu0 0
  %122 = vmatpush1.bf16.msra.mxu0 0
  %123 = vmatprep.subr.bf16.mxu0 0
  %124 = vmatpush1.bf16.msra.mxu0 0
  %125 = vmatprep.subr.bf16.mxu0 0
  %126 = vmatpush1.bf16.msra.mxu0 0
  %127 = vmatprep.subr.bf16.mxu0 0
  %128 = vmatpush1.bf16.msra.mxu0 0
  %129 = vmatprep.subr.bf16.mxu0 0
  %130 = vmatpush1.bf16.msra.mxu0 0
  %131 = vmatprep.subr.bf16.mxu0 0
  %132 = vmatpush1.bf16.msra.mxu0 0
  %133 = vmatprep.subr.bf16.mxu0 0
  %134 = vmatpush1.bf16.msra.mxu0 %v117
  %135 = vmatprep.subr.bf16.mxu0 0
  %136 = vmatpush2.bf16.msra.mxu0 0
  %137 = vmatprep.subr.bf16.mxu0 0
  %138 = vmatpush2.bf16.msra.mxu0 0
  %139 = vmatprep.subr.bf16.mxu0 0
  %140 = vmatpush2.bf16.msra.mxu0 0
  %141 = vmatprep.subr.bf16.mxu0 0
  %142 = vmatpush2.bf16.msra.mxu0 0
  %143 = vmatprep.subr.bf16.mxu0 0
  %144 = vmatpush2.bf16.msra.mxu0 0
  %145 = vmatprep.subr.bf16.mxu0 0
  %146 = vmatpush2.bf16.msra.mxu0 0
  %147 = vmatprep.subr.bf16.mxu0 0
  %148 = vmatpush2.bf16.msra.mxu0 0
  %149 = vmatprep.subr.bf16.mxu0 0
  %150 = vmatpush2.bf16.msra.mxu0 0
  %151 = vmatprep.mubr.bf16.mxu0 0
  %152 = vmatmul.mubr.bf16.gmra.mxu0 %v92
  %v153 = vpop.f32.mrf.mxu0
  %v154 = vadd.f32 %v88, %v153
  %v155 = vpop.f32.mrf.mxu0
  %v156 = vpop.f32.mrf.mxu0
  %v157 = vadd.f32 %v88, %v156
  %v158 = vpop.f32.mrf.mxu0
  %159 = vmatprep.mubr.bf16.mxu0 0
  %160 = vmatmul.mubr.bf16.gmra.mxu0 %v95
  %v161 = vpop.f32.mrf.mxu0
  %v162 = vadd.f32 %v88, %v161
  %v163 = vpop.f32.mrf.mxu0
  %v164 = vpop.f32.mrf.mxu0
  %v165 = vadd.f32 %v88, %v164
  %v166 = vpop.f32.mrf.mxu0
  %167 = vmatprep.mubr.bf16.mxu0 0
  %168 = vmatmul.mubr.bf16.gmra.mxu0 %v98
  %v169 = vpop.f32.mrf.mxu0
  %v170 = vadd.f32 %v88, %v169
  %v171 = vpop.f32.mrf.mxu0
  %v172 = vpop.f32.mrf.mxu0
  %v173 = vadd.f32 %v88, %v172
  %v174 = vpop.f32.mrf.mxu0
  %175 = vmatprep.mubr.bf16.mxu0 0
  %176 = vmatmul.mubr.bf16.gmra.mxu0 %v101
  %v177 = vpop.f32.mrf.mxu0
  %v178 = vadd.f32 %v88, %v177
  %v179 = vpop.f32.mrf.mxu0
  %v180 = vpop.f32.mrf.mxu0
  %v181 = vadd.f32 %v88, %v180
  %v182 = vpop.f32.mrf.mxu0
  %183 = vmatprep.mubr.bf16.mxu0 0
  %184 = vmatmul.mubr.bf16.gmra.mxu0 %v104
  %v185 = vpop.f32.mrf.mxu0
  %v186 = vadd.f32 %v88, %v185
  %v187 = vpop.f32.mrf.mxu0
  %v188 = vpop.f32.mrf.mxu0
  %v189 = vadd.f32 %v88, %v188
  %v190 = vpop.f32.mrf.mxu0
  %191 = vmatprep.mubr.bf16.mxu0 0
  %192 = vmatmul.mubr.bf16.gmra.mxu0 %v107
  %v193 = vpop.f32.mrf.mxu0
  %v194 = vadd.f32 %v88, %v193
  %v195 = vpop.f32.mrf.mxu0
  %v196 = vpop.f32.mrf.mxu0
  %v197 = vadd.f32 %v88, %v196
  %v198 = vpop.f32.mrf.mxu0
  %199 = vmatprep.mubr.bf16.mxu0 0
  %200 = vmatmul.mubr.bf16.gmra.mxu0 %v110
  %v201 = vpop.f32.mrf.mxu0
  %v202 = vadd.f32 %v88, %v201
  %v203 = vpop.f32.mrf.mxu0
  %v204 = vpop.f32.mrf.mxu0
  %v205 = vadd.f32 %v88, %v204
  %v206 = vpop.f32.mrf.mxu0
  %207 = vmatprep.mubr.bf16.mxu0 0
  %208 = vmatmul.mubr.bf16.gmra.mxu0 %v113
  %v209 = vpop.f32.mrf.mxu0
  %v210 = vadd.f32 %v88, %v209
  %v211 = vpop.f32.mrf.mxu0
  %v212 = vpop.f32.mrf.mxu0
  %v213 = vadd.f32 %v88, %v212
  %v214 = vpop.f32.mrf.mxu0
  %215 = vdwg.mxu0
  %v216 = vld [vmem:[%s1] sm:$0xff]
  %v217 = vld [vmem:[%s1 + $0x8] sm:$0xff]
  %v218 = vld [vmem:[%s1 + $0x10] sm:$0xff]
  %v219 = vld [vmem:[%s1 + $0x18] sm:$0xff]
  %v220 = vld [vmem:[%s1 + $0x20] sm:$0xff]
  %v221 = vld [vmem:[%s1 + $0x28] sm:$0xff]
  %v222 = vld [vmem:[%s1 + $0x30] sm:$0xff]
  %v223 = vld [vmem:[%s1 + $0x38] sm:$0xff]
  %v224 = vld [vmem:[%s1 + $0x40] sm:$0xff]
  %v225 = vld [vmem:[%s1 + $0x48] sm:$0xff]
  %v226 = vld [vmem:[%s1 + $0x50] sm:$0xff]
  %v227 = vld [vmem:[%s1 + $0x58] sm:$0xff]
  %v228 = vld [vmem:[%s1 + $0x60] sm:$0xff]
  %v229 = vld [vmem:[%s1 + $0x68] sm:$0xff]
  %v230 = vld [vmem:[%s1 + $0x70] sm:$0xff]
  %v231 = vld [vmem:[%s1 + $0x78] sm:$0xff]
  %v232 = vadd.f32 %v154, %v216
  %v233 = vadd.f32 %v157, %v217
  %v234 = vadd.f32 %v162, %v218
  %v235 = vadd.f32 %v165, %v219
  %v236 = vadd.f32 %v170, %v220
  %v237 = vadd.f32 %v173, %v221
  %v238 = vadd.f32 %v178, %v222
  %v239 = vadd.f32 %v181, %v223
  %v240 = vadd.f32 %v186, %v224
  %v241 = vadd.f32 %v189, %v225
  %v242 = vadd.f32 %v194, %v226
  %v243 = vadd.f32 %v197, %v227
  %v244 = vadd.f32 %v202, %v228
  %v245 = vadd.f32 %v205, %v229
  %v246 = vadd.f32 %v210, %v230
  %v247 = vadd.f32 %v213, %v231
  %v248 = vld [vmem:[%s6] sm:$0xf]
  %v249 = vld [vmem:[%s6 + $0x4] sm:$0xf]
  %v250 = vld [vmem:[%s6 + $0x8] sm:$0xf]
  %v251 = vld [vmem:[%s6 + $0xc] sm:$0xf]
  %v252 = vpack.c.bf16 %v233, %v232
  %v253 = vpack.c.bf16 %v235, %v234
  %v254 = vpack.c.bf16 %v237, %v236
  %v255 = vpack.c.bf16 %v239, %v238
  %v256 = vpack.c.bf16 %v241, %v240
  %v257 = vpack.c.bf16 %v243, %v242
  %v258 = vpack.c.bf16 %v245, %v244
  %v259 = vpack.c.bf16 %v247, %v246
  %v260 = vld [vmem:[%s7] sm:$0x1]
  %v262 = vlaneseq
  %v263 = vshrl.u32 %v262, 7
  %v264 = vsub.s32 0, %v263
  %v265 = vrot.slane %v260, %v264
  %v271 = vunpack.c.l.b16 %v248
  %v272 = vunpack.c.l.b16 %v249
  %v273 = vunpack.c.l.b16 %v250
  %v274 = vunpack.c.l.b16 %v251
  %v275 = vpack.c.b16 %v272, %v271
  %v276 = vpack.c.b16 %v274, %v273
  %vm279 = vcmask 261120
  %v281 = vsel %vm279, %v252, 0
  %v284 = vsel %vm279, %v253, 0
  %v287 = vsel %vm279, %v254, 0
  %v290 = vsel %vm279, %v255, 0
  %v293 = vsel %vm279, %v256, 0
  %v296 = vsel %vm279, %v257, 0
  %v299 = vsel %vm279, %v258, 0
  %v302 = vsel %vm279, %v259, 0
  %304 = vmatprep.subr.bf16.mxu0 0
  %305 = vmatpush1.bf16.msra.mxu0 0
  %306 = vmatprep.subr.bf16.mxu0 0
  %307 = vmatpush1.bf16.msra.mxu0 0
  %308 = vmatprep.subr.bf16.mxu0 0
  %309 = vmatpush1.bf16.msra.mxu0 0
  %310 = vmatprep.subr.bf16.mxu0 0
  %311 = vmatpush1.bf16.msra.mxu0 0
  %312 = vmatprep.subr.bf16.mxu0 0
  %313 = vmatpush1.bf16.msra.mxu0 0
  %314 = vmatprep.subr.bf16.mxu0 0
  %315 = vmatpush1.bf16.msra.mxu0 0
  %316 = vmatprep.subr.bf16.mxu0 0
  %317 = vmatpush1.bf16.msra.mxu0 %v276
  %318 = vmatprep.subr.bf16.mxu0 0
  %319 = vmatpush1.bf16.msra.mxu0 %v275
  %320 = vmatprep.subr.bf16.mxu0 0
  %321 = vmatpush2.bf16.msra.mxu0 0
  %322 = vmatprep.subr.bf16.mxu0 0
  %323 = vmatpush2.bf16.msra.mxu0 0
  %324 = vmatprep.subr.bf16.mxu0 0
  %325 = vmatpush2.bf16.msra.mxu0 0
  %326 = vmatprep.subr.bf16.mxu0 0
  %327 = vmatpush2.bf16.msra.mxu0 0
  %328 = vmatprep.subr.bf16.mxu0 0
  %329 = vmatpush2.bf16.msra.mxu0 0
  %330 = vmatprep.subr.bf16.mxu0 0
  %331 = vmatpush2.bf16.msra.mxu0 0
  %332 = vmatprep.subr.bf16.mxu0 0
  %333 = vmatpush2.bf16.msra.mxu0 0
  %334 = vmatprep.subr.bf16.mxu0 0
  %335 = vmatpush2.bf16.msra.mxu0 0
  %336 = vmatprep.mubr.bf16.mxu0 0
  %337 = vmatmul.mubr.bf16.gmra.mxu0 %v281
  %v338 = vpop.f32.mrf.mxu0
  %v339 = vadd.f32 %v265, %v338
  %v340 = vpop.f32.mrf.mxu0
  %v341 = vpop.f32.mrf.mxu0
  %v342 = vadd.f32 %v265, %v341
  %v343 = vpop.f32.mrf.mxu0
  %344 = vmatprep.mubr.bf16.mxu0 0
  %345 = vmatmul.mubr.bf16.gmra.mxu0 %v284
  %v346 = vpop.f32.mrf.mxu0
  %v347 = vadd.f32 %v265, %v346
  %v348 = vpop.f32.mrf.mxu0
  %v349 = vpop.f32.mrf.mxu0
  %v350 = vadd.f32 %v265, %v349
  %v351 = vpop.f32.mrf.mxu0
  %352 = vmatprep.mubr.bf16.mxu0 0
  %353 = vmatmul.mubr.bf16.gmra.mxu0 %v287
  %v354 = vpop.f32.mrf.mxu0
  %v355 = vadd.f32 %v265, %v354
  %v356 = vpop.f32.mrf.mxu0
  %v357 = vpop.f32.mrf.mxu0
  %v358 = vadd.f32 %v265, %v357
  %v359 = vpop.f32.mrf.mxu0
  %360 = vmatprep.mubr.bf16.mxu0 0
  %361 = vmatmul.mubr.bf16.gmra.mxu0 %v290
  %v362 = vpop.f32.mrf.mxu0
  %v363 = vadd.f32 %v265, %v362
  %v364 = vpop.f32.mrf.mxu0
  %v365 = vpop.f32.mrf.mxu0
  %v366 = vadd.f32 %v265, %v365
  %v367 = vpop.f32.mrf.mxu0
  %368 = vmatprep.mubr.bf16.mxu0 0
  %369 = vmatmul.mubr.bf16.gmra.mxu0 %v293
  %v370 = vpop.f32.mrf.mxu0
  %v371 = vadd.f32 %v265, %v370
  %v372 = vpop.f32.mrf.mxu0
  %v373 = vpop.f32.mrf.mxu0
  %v374 = vadd.f32 %v265, %v373
  %v375 = vpop.f32.mrf.mxu0
  %376 = vmatprep.mubr.bf16.mxu0 0
  %377 = vmatmul.mubr.bf16.gmra.mxu0 %v296
  %v378 = vpop.f32.mrf.mxu0
  %v379 = vadd.f32 %v265, %v378
  %v380 = vpop.f32.mrf.mxu0
  %v381 = vpop.f32.mrf.mxu0
  %v382 = vadd.f32 %v265, %v381
  %v383 = vpop.f32.mrf.mxu0
  %384 = vmatprep.mubr.bf16.mxu0 0
  %385 = vmatmul.mubr.bf16.gmra.mxu0 %v299
  %v386 = vpop.f32.mrf.mxu0
  %v387 = vadd.f32 %v265, %v386
  %v388 = vpop.f32.mrf.mxu0
  %v389 = vpop.f32.mrf.mxu0
  %v390 = vadd.f32 %v265, %v389
  %v391 = vpop.f32.mrf.mxu0
  %392 = vmatprep.mubr.bf16.mxu0 0
  %393 = vmatmul.mubr.bf16.gmra.mxu0 %v302
  %v394 = vpop.f32.mrf.mxu0
  %v395 = vadd.f32 %v265, %v394
  %v396 = vpop.f32.mrf.mxu0
  %v397 = vpop.f32.mrf.mxu0
  %v398 = vadd.f32 %v265, %v397
  %v399 = vpop.f32.mrf.mxu0
  %400 = vdwg.mxu0
  %v401 = vmul.f32 %v339, %v339
  %v402 = vmul.f32 %v342, %v342
  %v403 = vmul.f32 %v347, %v347
  %v404 = vmul.f32 %v350, %v350
  %v405 = vmul.f32 %v355, %v355
  %v406 = vmul.f32 %v358, %v358
  %v407 = vmul.f32 %v363, %v363
  %v408 = vmul.f32 %v366, %v366
  %v409 = vmul.f32 %v371, %v371
  %v410 = vmul.f32 %v374, %v374
  %v411 = vmul.f32 %v379, %v379
  %v412 = vmul.f32 %v382, %v382
  %v413 = vmul.f32 %v387, %v387
  %v414 = vmul.f32 %v390, %v390
  %v415 = vmul.f32 %v395, %v395
  %v416 = vmul.f32 %v398, %v398
  %v417 = vmul.f32 %v339, %v401
  %v418 = vmul.f32 %v342, %v402
  %v419 = vmul.f32 %v347, %v403
  %v420 = vmul.f32 %v350, %v404
  %v421 = vmul.f32 %v355, %v405
  %v422 = vmul.f32 %v358, %v406
  %v423 = vmul.f32 %v363, %v407
  %v424 = vmul.f32 %v366, %v408
  %v425 = vmul.f32 %v371, %v409
  %v426 = vmul.f32 %v374, %v410
  %v427 = vmul.f32 %v379, %v411
  %v428 = vmul.f32 %v382, %v412
  %v429 = vmul.f32 %v387, %v413
  %v430 = vmul.f32 %v390, %v414
  %v431 = vmul.f32 %v395, %v415
  %v432 = vmul.f32 %v398, %v416
  %v433 = vmul.f32 %v417, 0.044715
  %v434 = vmul.f32 %v418, 0.044715
  %v435 = vmul.f32 %v419, 0.044715
  %v436 = vmul.f32 %v420, 0.044715
  %v437 = vmul.f32 %v421, 0.044715
  %v438 = vmul.f32 %v422, 0.044715
  %v439 = vmul.f32 %v423, 0.044715
  %v440 = vmul.f32 %v424, 0.044715
  %v441 = vmul.f32 %v425, 0.044715
  %v442 = vmul.f32 %v426, 0.044715
  %v443 = vmul.f32 %v427, 0.044715
  %v444 = vmul.f32 %v428, 0.044715
  %v445 = vmul.f32 %v429, 0.044715
  %v446 = vmul.f32 %v430, 0.044715
  %v447 = vmul.f32 %v431, 0.044715
  %v448 = vmul.f32 %v432, 0.044715
  %v449 = vadd.f32 %v339, %v433
  %v450 = vadd.f32 %v342, %v434
  %v451 = vadd.f32 %v347, %v435
  %v452 = vadd.f32 %v350, %v436
  %v453 = vadd.f32 %v355, %v437
  %v454 = vadd.f32 %v358, %v438
  %v455 = vadd.f32 %v363, %v439
  %v456 = vadd.f32 %v366, %v440
  %v457 = vadd.f32 %v371, %v441
  %v458 = vadd.f32 %v374, %v442
  %v459 = vadd.f32 %v379, %v443
  %v460 = vadd.f32 %v382, %v444
  %v461 = vadd.f32 %v387, %v445
  %v462 = vadd.f32 %v390, %v446
  %v463 = vadd.f32 %v395, %v447
  %v464 = vadd.f32 %v398, %v448
  %v465 = vmul.f32 %v449, 0.7978846
  %v466 = vmul.f32 %v450, 0.7978846
  %v467 = vmul.f32 %v451, 0.7978846
  %v468 = vmul.f32 %v452, 0.7978846
  %v469 = vmul.f32 %v453, 0.7978846
  %v470 = vmul.f32 %v454, 0.7978846
  %v471 = vmul.f32 %v455, 0.7978846
  %v472 = vmul.f32 %v456, 0.7978846
  %v473 = vmul.f32 %v457, 0.7978846
  %v474 = vmul.f32 %v458, 0.7978846
  %v475 = vmul.f32 %v459, 0.7978846
  %v476 = vmul.f32 %v460, 0.7978846
  %v477 = vmul.f32 %v461, 0.7978846
  %v478 = vmul.f32 %v462, 0.7978846
  %v479 = vmul.f32 %v463, 0.7978846
  %v480 = vmul.f32 %v464, 0.7978846
  %v481 = vtanh.pop %v465
  %v482 = vtanh.pop %v466
  %v483 = vtanh.pop %v467
  %v484 = vtanh.pop %v468
  %v485 = vtanh.pop %v469
  %v486 = vtanh.pop %v470
  %v487 = vtanh.pop %v471
  %v488 = vtanh.pop %v472
  %v489 = vtanh.pop %v473
  %v490 = vtanh.pop %v474
  %v491 = vtanh.pop %v475
  %v492 = vtanh.pop %v476
  %v493 = vtanh.pop %v477
  %v494 = vtanh.pop %v478
  %v495 = vtanh.pop %v479
  %v496 = vtanh.pop %v480
  %v497 = vadd.f32 %v481, 1.0
  %v498 = vadd.f32 %v482, 1.0
  %v499 = vadd.f32 %v483, 1.0
  %v500 = vadd.f32 %v484, 1.0
  %v501 = vadd.f32 %v485, 1.0
  %v502 = vadd.f32 %v486, 1.0
  %v503 = vadd.f32 %v487, 1.0
  %v504 = vadd.f32 %v488, 1.0
  %v505 = vadd.f32 %v489, 1.0
  %v506 = vadd.f32 %v490, 1.0
  %v507 = vadd.f32 %v491, 1.0
  %v508 = vadd.f32 %v492, 1.0
  %v509 = vadd.f32 %v493, 1.0
  %v510 = vadd.f32 %v494, 1.0
  %v511 = vadd.f32 %v495, 1.0
  %v512 = vadd.f32 %v496, 1.0
  %v513 = vmul.f32 %v497, 0.5
  %v514 = vmul.f32 %v498, 0.5
  %v515 = vmul.f32 %v499, 0.5
  %v516 = vmul.f32 %v500, 0.5
  %v517 = vmul.f32 %v501, 0.5
  %v518 = vmul.f32 %v502, 0.5
  %v519 = vmul.f32 %v503, 0.5
  %v520 = vmul.f32 %v504, 0.5
  %v521 = vmul.f32 %v505, 0.5
  %v522 = vmul.f32 %v506, 0.5
  %v523 = vmul.f32 %v507, 0.5
  %v524 = vmul.f32 %v508, 0.5
  %v525 = vmul.f32 %v509, 0.5
  %v526 = vmul.f32 %v510, 0.5
  %v527 = vmul.f32 %v511, 0.5
  %v528 = vmul.f32 %v512, 0.5
  %v529 = vmul.f32 %v339, %v513
  %v530 = vmul.f32 %v342, %v514
  %v531 = vmul.f32 %v347, %v515
  %v532 = vmul.f32 %v350, %v516
  %v533 = vmul.f32 %v355, %v517
  %v534 = vmul.f32 %v358, %v518
  %v535 = vmul.f32 %v363, %v519
  %v536 = vmul.f32 %v366, %v520
  %v537 = vmul.f32 %v371, %v521
  %v538 = vmul.f32 %v374, %v522
  %v539 = vmul.f32 %v379, %v523
  %v540 = vmul.f32 %v382, %v524
  %v541 = vmul.f32 %v387, %v525
  %v542 = vmul.f32 %v390, %v526
  %v543 = vmul.f32 %v395, %v527
  %v544 = vmul.f32 %v398, %v528
  %v545 = vld [vmem:[%s8] sm:$0xf]
  %v546 = vld [vmem:[%s8 + $0x4] sm:$0xf]
  %v547 = vld [vmem:[%s8 + $0x8] sm:$0xf]
  %v548 = vld [vmem:[%s8 + $0xc] sm:$0xf]
  %v549 = vpack.c.bf16 %v530, %v529
  %v550 = vpack.c.bf16 %v532, %v531
  %v551 = vpack.c.bf16 %v534, %v533
  %v552 = vpack.c.bf16 %v536, %v535
  %v553 = vpack.c.bf16 %v538, %v537
  %v554 = vpack.c.bf16 %v540, %v539
  %v555 = vpack.c.bf16 %v542, %v541
  %v556 = vpack.c.bf16 %v544, %v543
  %v557 = vld [vmem:[%s9] sm:$0x1]
  %v559 = vlaneseq
  %v560 = vshrl.u32 %v559, 7
  %v561 = vsub.s32 0, %v560
  %v562 = vrot.slane %v557, %v561
  %v568 = vunpack.c.l.b16 %v545
  %v569 = vunpack.c.l.b16 %v546
  %v570 = vunpack.c.l.b16 %v547
  %v571 = vunpack.c.l.b16 %v548
  %v572 = vpack.c.b16 %v569, %v568
  %v573 = vpack.c.b16 %v571, %v570
  %v577 = vsel %vm279, %v549, 0
  %v580 = vsel %vm279, %v550, 0
  %v583 = vsel %vm279, %v551, 0
  %v586 = vsel %vm279, %v552, 0
  %v589 = vsel %vm279, %v553, 0
  %v592 = vsel %vm279, %v554, 0
  %v595 = vsel %vm279, %v555, 0
  %v598 = vsel %vm279, %v556, 0
  %600 = vmatprep.subr.bf16.mxu0 0
  %601 = vmatpush1.bf16.msra.mxu0 0
  %602 = vmatprep.subr.bf16.mxu0 0
  %603 = vmatpush1.bf16.msra.mxu0 0
  %604 = vmatprep.subr.bf16.mxu0 0
  %605 = vmatpush1.bf16.msra.mxu0 0
  %606 = vmatprep.subr.bf16.mxu0 0
  %607 = vmatpush1.bf16.msra.mxu0 0
  %608 = vmatprep.subr.bf16.mxu0 0
  %609 = vmatpush1.bf16.msra.mxu0 0
  %610 = vmatprep.subr.bf16.mxu0 0
  %611 = vmatpush1.bf16.msra.mxu0 0
  %612 = vmatprep.subr.bf16.mxu0 0
  %613 = vmatpush1.bf16.msra.mxu0 %v573
  %614 = vmatprep.subr.bf16.mxu0 0
  %615 = vmatpush1.bf16.msra.mxu0 %v572
  %616 = vmatprep.subr.bf16.mxu0 0
  %617 = vmatpush2.bf16.msra.mxu0 0
  %618 = vmatprep.subr.bf16.mxu0 0
  %619 = vmatpush2.bf16.msra.mxu0 0
  %620 = vmatprep.subr.bf16.mxu0 0
  %621 = vmatpush2.bf16.msra.mxu0 0
  %622 = vmatprep.subr.bf16.mxu0 0
  %623 = vmatpush2.bf16.msra.mxu0 0
  %624 = vmatprep.subr.bf16.mxu0 0
  %625 = vmatpush2.bf16.msra.mxu0 0
  %626 = vmatprep.subr.bf16.mxu0 0
  %627 = vmatpush2.bf16.msra.mxu0 0
  %628 = vmatprep.subr.bf16.mxu0 0
  %629 = vmatpush2.bf16.msra.mxu0 0
  %630 = vmatprep.subr.bf16.mxu0 0
  %631 = vmatpush2.bf16.msra.mxu0 0
  %632 = vmatprep.mubr.bf16.mxu0 0
  %633 = vmatmul.mubr.bf16.gmra.mxu0 %v577
  %v634 = vpop.f32.mrf.mxu0
  %v635 = vadd.f32 %v562, %v634
  %v636 = vpop.f32.mrf.mxu0
  %v637 = vpop.f32.mrf.mxu0
  %v638 = vadd.f32 %v562, %v637
  %v639 = vpop.f32.mrf.mxu0
  %640 = vmatprep.mubr.bf16.mxu0 0
  %641 = vmatmul.mubr.bf16.gmra.mxu0 %v580
  %v642 = vpop.f32.mrf.mxu0
  %v643 = vadd.f32 %v562, %v642
  %v644 = vpop.f32.mrf.mxu0
  %v645 = vpop.f32.mrf.mxu0
  %v646 = vadd.f32 %v562, %v645
  %v647 = vpop.f32.mrf.mxu0
  %648 = vmatprep.mubr.bf16.mxu0 0
  %649 = vmatmul.mubr.bf16.gmra.mxu0 %v583
  %v650 = vpop.f32.mrf.mxu0
  %v651 = vadd.f32 %v562, %v650
  %v652 = vpop.f32.mrf.mxu0
  %v653 = vpop.f32.mrf.mxu0
  %v654 = vadd.f32 %v562, %v653
  %v655 = vpop.f32.mrf.mxu0
  %656 = vmatprep.mubr.bf16.mxu0 0
  %657 = vmatmul.mubr.bf16.gmra.mxu0 %v586
  %v658 = vpop.f32.mrf.mxu0
  %v659 = vadd.f32 %v562, %v658
  %v660 = vpop.f32.mrf.mxu0
  %v661 = vpop.f32.mrf.mxu0
  %v662 = vadd.f32 %v562, %v661
  %v663 = vpop.f32.mrf.mxu0
  %664 = vmatprep.mubr.bf16.mxu0 0
  %665 = vmatmul.mubr.bf16.gmra.mxu0 %v589
  %v666 = vpop.f32.mrf.mxu0
  %v667 = vadd.f32 %v562, %v666
  %v668 = vpop.f32.mrf.mxu0
  %v669 = vpop.f32.mrf.mxu0
  %v670 = vadd.f32 %v562, %v669
  %v671 = vpop.f32.mrf.mxu0
  %672 = vmatprep.mubr.bf16.mxu0 0
  %673 = vmatmul.mubr.bf16.gmra.mxu0 %v592
  %v674 = vpop.f32.mrf.mxu0
  %v675 = vadd.f32 %v562, %v674
  %v676 = vpop.f32.mrf.mxu0
  %v677 = vpop.f32.mrf.mxu0
  %v678 = vadd.f32 %v562, %v677
  %v679 = vpop.f32.mrf.mxu0
  %680 = vmatprep.mubr.bf16.mxu0 0
  %681 = vmatmul.mubr.bf16.gmra.mxu0 %v595
  %v682 = vpop.f32.mrf.mxu0
  %v683 = vadd.f32 %v562, %v682
  %v684 = vpop.f32.mrf.mxu0
  %v685 = vpop.f32.mrf.mxu0
  %v686 = vadd.f32 %v562, %v685
  %v687 = vpop.f32.mrf.mxu0
  %688 = vmatprep.mubr.bf16.mxu0 0
  %689 = vmatmul.mubr.bf16.gmra.mxu0 %v598
  %v690 = vpop.f32.mrf.mxu0
  %v691 = vadd.f32 %v562, %v690
  %v692 = vpop.f32.mrf.mxu0
  %v693 = vpop.f32.mrf.mxu0
  %v694 = vadd.f32 %v562, %v693
  %v695 = vpop.f32.mrf.mxu0
  %696 = vdwg.mxu0
  %v697 = vld [vmem:[%s2] sm:$0xff]
  %v698 = vld [vmem:[%s2 + $0x8] sm:$0xff]
  %v699 = vld [vmem:[%s3] sm:$0xff]
  %v701 = vsel %vm90, %v697, 0
  %v704 = vsel %vm90, %v698, 0
  %706 = vmatprep.subr.mxu0 0.0
  %707 = vmatpush1.msra.mxu0 0.0
  %708 = vmatprep.subr.mxu0 0.0
  %709 = vmatpush1.msra.mxu0 0.0
  %710 = vmatprep.subr.mxu0 0.0
  %711 = vmatpush1.msra.mxu0 0.0
  %712 = vmatprep.subr.mxu0 0.0
  %713 = vmatpush1.msra.mxu0 0.0
  %714 = vmatprep.subr.mxu0 0.0
  %715 = vmatpush1.msra.mxu0 0.0
  %716 = vmatprep.subr.mxu0 0.0
  %717 = vmatpush1.msra.mxu0 0.0
  %718 = vmatprep.subr.mxu0 0.0
  %719 = vmatpush1.msra.mxu0 0.0
  %720 = vmatprep.subr.mxu0 0.0
  %721 = vmatpush1.msra.mxu0 0.0
  %722 = vmatprep.subr.mxu0 0.0
  %723 = vmatpush1.msra.mxu0 0.0
  %724 = vmatprep.subr.mxu0 0.0
  %725 = vmatpush1.msra.mxu0 0.0
  %726 = vmatprep.subr.mxu0 0.0
  %727 = vmatpush1.msra.mxu0 0.0
  %728 = vmatprep.subr.mxu0 0.0
  %729 = vmatpush1.msra.mxu0 0.0
  %730 = vmatprep.subr.mxu0 0.0
  %731 = vmatpush1.msra.mxu0 0.0
  %732 = vmatprep.subr.mxu0 0.0
  %733 = vmatpush1.msra.mxu0 0.0
  %734 = vmatprep.subr.mxu0 0.0
  %735 = vmatpush1.msra.mxu0 0.0
  %736 = vmatprep.subr.mxu0 0.0
  %737 = vmatpush1.msra.mxu0 %v699
  %738 = vmatprep.subr.mxu0 0.0
  %739 = vmatpush2.msra.mxu0 0.0
  %740 = vmatprep.subr.mxu0 0.0
  %741 = vmatpush2.msra.mxu0 0.0
  %742 = vmatprep.subr.mxu0 0.0
  %743 = vmatpush2.msra.mxu0 0.0
  %744 = vmatprep.subr.mxu0 0.0
  %745 = vmatpush2.msra.mxu0 0.0
  %746 = vmatprep.subr.mxu0 0.0
  %747 = vmatpush2.msra.mxu0 0.0
  %748 = vmatprep.subr.mxu0 0.0
  %749 = vmatpush2.msra.mxu0 0.0
  %750 = vmatprep.subr.mxu0 0.0
  %751 = vmatpush2.msra.mxu0 0.0
  %752 = vmatprep.subr.mxu0 0.0
  %753 = vmatpush2.msra.mxu0 0.0
  %754 = vmatprep.subr.mxu0 0.0
  %755 = vmatpush2.msra.mxu0 0.0
  %756 = vmatprep.subr.mxu0 0.0
  %757 = vmatpush2.msra.mxu0 0.0
  %758 = vmatprep.subr.mxu0 0.0
  %759 = vmatpush2.msra.mxu0 0.0
  %760 = vmatprep.subr.mxu0 0.0
  %761 = vmatpush2.msra.mxu0 0.0
  %762 = vmatprep.subr.mxu0 0.0
  %763 = vmatpush2.msra.mxu0 0.0
  %764 = vmatprep.subr.mxu0 0.0
  %765 = vmatpush2.msra.mxu0 0.0
  %766 = vmatprep.subr.mxu0 0.0
  %767 = vmatpush2.msra.mxu0 0.0
  %768 = vmatprep.subr.mxu0 0.0
  %769 = vmatpush2.msra.mxu0 0.0
  %770 = vmatprep.mubr.f32.mxu0 0.0
  %771 = vmatmul.mubr.f32.gmra.mxu0 %v701
  %v772 = vpop.f32.mrf.mxu0
  %v773 = vadd.f32 0.0, %v772
  %v774 = vpop.f32.mrf.mxu0
  %775 = vmatprep.mubr.f32.mxu0 0.0
  %776 = vmatmul.mubr.f32.gmra.mxu0 %v704
  %v777 = vpop.f32.mrf.mxu0
  %v778 = vadd.f32 0.0, %v777
  %v779 = vpop.f32.mrf.mxu0
  %780 = vdwg.mxu0
  %v781 = vmul.f32 %v697, %v697
  %v782 = vmul.f32 %v698, %v698
  %v783 = vsel %vm90, %v781, 0.0
  %784 = vadd.xlane.f32.xlu0 %v783
  %v785 = vpop.xlane.xlu0 %784
  %v786 = vsel %vm90, %v782, 0.0
  %787 = vadd.xlane.f32.xlu0 %v786
  %v788 = vpop.xlane.xlu0 %787
  %v789 = vmul.f32 %v699, %v699
  %v790 = vrot.slane %v789, 4
  %v791 = vadd.f32 %v789, %v790
  %v792 = vrot.slane %v791, 2
  %v793 = vadd.f32 %v791, %v792
  %v794 = vrot.slane %v793, 1
  %v795 = vadd.f32 %v793, %v794
  %v796 = vadd.f32 %v785, %v795
  %v797 = vadd.f32 %v788, %v795
  %v798 = vmul.f32 %v773, 2.0
  %v799 = vmul.f32 %v778, 2.0
  %v800 = vsub.f32 %v796, %v798
  %v801 = vsub.f32 %v797, %v799
  %v802 = vmax.f32 %v800, 0.0
  %v803 = vmax.f32 %v801, 0.0
  %vm804 = vcmp.le.f32.partialorder %v802, 160000.0
  %vm805 = vcmp.le.f32.partialorder %v803, 160000.0
  %v806 = vsel %vm804, 1, 0
  %v807 = vsel %vm805, 1, 0
  %v808 = vcvt.s32.f32 %v806
  %v809 = vcvt.s32.f32 %v807
  %v810 = vld [vmem:[#allocation3] sm:$0xff]
  %v811 = vld [vmem:[#allocation3 + $0x8] sm:$0xff]
  %812 = vadd.xlane.f32.xlu0 %v808
  %v813 = vpop.xlane.xlu0 %812
  %814 = vadd.xlane.f32.xlu0 %v809
  %v815 = vpop.xlane.xlu0 %814
  %v816 = vadd.f32 %v810, %v813
  %v817 = vadd.f32 %v811, %v815
  %vm818 = vcmask 7168
  %819 = vst.msk [vmem:[#allocation3] sm:$0xff] %vm818, %v816
  %820 = vst.msk [vmem:[#allocation3 + $0x8] sm:$0xff] %vm818, %v817
  %v821 = vld [vmem:[#allocation2] sm:$0xff]
  %v822 = vld [vmem:[#allocation2 + $0x8] sm:$0xff]
  %v823 = vpack.c.bf16 %v638, %v635
  %v824 = vpack.c.bf16 %v646, %v643
  %v825 = vpack.c.bf16 %v654, %v651
  %v826 = vpack.c.bf16 %v662, %v659
  %v827 = vpack.c.bf16 %v670, %v667
  %v828 = vpack.c.bf16 %v678, %v675
  %v829 = vpack.c.bf16 %v686, %v683
  %v830 = vpack.c.bf16 %v694, %v691
  %v831 = vpack.c.bf16 %v809, %v808
  %832 = vmatprep.subr.bf16.mxu0 0
  %833 = vmatpush1.bf16.msra.mxu0 %v830
  %834 = vmatprep.subr.bf16.mxu0 0
  %835 = vmatpush1.bf16.msra.mxu0 %v829
  %836 = vmatprep.subr.bf16.mxu0 0
  %837 = vmatpush1.bf16.msra.mxu0 %v828
  %838 = vmatprep.subr.bf16.mxu0 0
  %839 = vmatpush1.bf16.msra.mxu0 %v827
  %840 = vmatprep.subr.bf16.mxu0 0
  %841 = vmatpush1.bf16.msra.mxu0 %v826
  %842 = vmatprep.subr.bf16.mxu0 0
  %843 = vmatpush1.bf16.msra.mxu0 %v825
  %844 = vmatprep.subr.bf16.mxu0 0
  %845 = vmatpush1.bf16.msra.mxu0 %v824
  %846 = vmatprep.subr.bf16.mxu0 0
  %847 = vmatpush1.bf16.msra.mxu0 %v823
  %848 = vmatprep.subr.bf16.mxu0 0
  %849 = vmatpush2.bf16.msra.mxu0 0
  %850 = vmatprep.subr.bf16.mxu0 0
  %851 = vmatpush2.bf16.msra.mxu0 0
  %852 = vmatprep.subr.bf16.mxu0 0
  %853 = vmatpush2.bf16.msra.mxu0 0
  %854 = vmatprep.subr.bf16.mxu0 0
  %855 = vmatpush2.bf16.msra.mxu0 0
  %856 = vmatprep.subr.bf16.mxu0 0
  %857 = vmatpush2.bf16.msra.mxu0 0
  %858 = vmatprep.subr.bf16.mxu0 0
  %859 = vmatpush2.bf16.msra.mxu0 0
  %860 = vmatprep.subr.bf16.mxu0 0
  %861 = vmatpush2.bf16.msra.mxu0 0
  %862 = vmatprep.subr.bf16.mxu0 0
  %863 = vmatpush2.bf16.msra.mxu0 0
  %864 = vmatprep.mubr.bf16.mxu0 0
  %865 = vmatmul.mubr.bf16.gmra.mxu0 %v831
  %v866 = vpop.f32.mrf.mxu0
  %v867 = vadd.f32 0.0, %v866
  %v868 = vpop.f32.mrf.mxu0
  %v869 = vpop.f32.mrf.mxu0
  %v870 = vadd.f32 0.0, %v869
  %v871 = vpop.f32.mrf.mxu0
  %872 = vdwg.mxu0
  %v873 = vadd.f32 %v821, %v867
  %v874 = vadd.f32 %v822, %v870
  %875 = vst.msk [vmem:[#allocation2] sm:$0xff] %vm279, %v873
  %876 = vst.msk [vmem:[#allocation2 + $0x8] sm:$0xff] %vm279, %v874
  // Predicated region
  $region62: #{fbed_forward.6} parent=0 // pred_check
    %p877 = pneg %p48
  $region63: #{fbed_forward.6} parent=0 // pred_check_branch
    %879 = sbr.rel (%p877) target = $region65
  $region64: #{fbed_forward.6} parent=0 // pred_region
    %v880 = vld [vmem:[#allocation3] sm:$0xff]
    %v881 = vld [vmem:[#allocation3 + $0x8] sm:$0xff]
    %v882 = vmax.f32 %v880, 1.0
    %v883 = vmax.f32 %v881, 1.0
    %v884 = vld [vmem:[#allocation2] sm:$0xff]
    %v885 = vld [vmem:[#allocation2 + $0x8] sm:$0xff]
    %887 = vset.pattern.permute.xlu0 0
    %888 = vperm.xlu0 %887, %v882
    %v889 = vpop.permute.xlu0 %888
    %892 = vset.pattern.permute.xlu0 0
    %893 = vperm.xlu0 %892, %v883
    %v894 = vpop.permute.xlu0 %893
    %v896 = vrcp.pop %v889
    %v897 = vmul.f32 %v884, %v896
    %v898 = vrcp.pop %v894
    %v899 = vmul.f32 %v885, %v898
    %v900 = vld [vmem:[%s10] sm:$0xf]
    %v901 = vld [vmem:[%s10 + $0x4] sm:$0xf]
    %v902 = vld [vmem:[%s10 + $0x8] sm:$0xf]
    %v903 = vld [vmem:[%s10 + $0xc] sm:$0xf]
    %v904 = vpack.c.bf16 %v899, %v897
    %v905 = vld [vmem:[%s11] sm:$0x1]
    %v907 = vlaneseq
    %v908 = vshrl.u32 %v907, 7
    %v909 = vsub.s32 0, %v908
    %v910 = vrot.slane %v905, %v909
    %v916 = vunpack.c.l.b16 %v900
    %v917 = vunpack.c.l.b16 %v901
    %v918 = vunpack.c.l.b16 %v902
    %v919 = vunpack.c.l.b16 %v903
    %v920 = vpack.c.b16 %v917, %v916
    %v921 = vpack.c.b16 %v919, %v918
    %v925 = vsel %vm279, %v904, 0
    %927 = vmatprep.subr.bf16.mxu0 0
    %928 = vmatpush1.bf16.msra.mxu0 0
    %929 = vmatprep.subr.bf16.mxu0 0
    %930 = vmatpush1.bf16.msra.mxu0 0
    %931 = vmatprep.subr.bf16.mxu0 0
    %932 = vmatpush1.bf16.msra.mxu0 0
    %933 = vmatprep.subr.bf16.mxu0 0
    %934 = vmatpush1.bf16.msra.mxu0 0
    %935 = vmatprep.subr.bf16.mxu0 0
    %936 = vmatpush1.bf16.msra.mxu0 0
    %937 = vmatprep.subr.bf16.mxu0 0
    %938 = vmatpush1.bf16.msra.mxu0 0
    %939 = vmatprep.subr.bf16.mxu0 0
    %940 = vmatpush1.bf16.msra.mxu0 %v921
    %941 = vmatprep.subr.bf16.mxu0 0
    %942 = vmatpush1.bf16.msra.mxu0 %v920
    %943 = vmatprep.subr.bf16.mxu0 0
    %944 = vmatpush2.bf16.msra.mxu0 0
    %945 = vmatprep.subr.bf16.mxu0 0
    %946 = vmatpush2.bf16.msra.mxu0 0
    %947 = vmatprep.subr.bf16.mxu0 0
    %948 = vmatpush2.bf16.msra.mxu0 0
    %949 = vmatprep.subr.bf16.mxu0 0
    %950 = vmatpush2.bf16.msra.mxu0 0
    %951 = vmatprep.subr.bf16.mxu0 0
    %952 = vmatpush2.bf16.msra.mxu0 0
    %953 = vmatprep.subr.bf16.mxu0 0
    %954 = vmatpush2.bf16.msra.mxu0 0
    %955 = vmatprep.subr.bf16.mxu0 0
    %956 = vmatpush2.bf16.msra.mxu0 0
    %957 = vmatprep.subr.bf16.mxu0 0
    %958 = vmatpush2.bf16.msra.mxu0 0
    %959 = vmatprep.mubr.bf16.mxu0 0
    %960 = vmatmul.mubr.bf16.gmra.mxu0 %v925
    %v961 = vpop.f32.mrf.mxu0
    %v962 = vadd.f32 %v910, %v961
    %v963 = vpop.f32.mrf.mxu0
    %v964 = vpop.f32.mrf.mxu0
    %v965 = vadd.f32 %v910, %v964
    %v966 = vpop.f32.mrf.mxu0
    %967 = vdwg.mxu0
    %v968 = vld [vmem:[%s12] sm:$0xf]
    %v969 = vld [vmem:[%s12 + $0x4] sm:$0xf]
    %v970 = vld [vmem:[%s12 + $0x8] sm:$0xf]
    %v971 = vld [vmem:[%s12 + $0xc] sm:$0xf]
    %v972 = vpack.c.bf16 %v965, %v962
    %v973 = vld [vmem:[%s13] sm:$0x1]
    %v975 = vlaneseq
    %v976 = vshrl.u32 %v975, 7
    %v977 = vsub.s32 0, %v976
    %v978 = vrot.slane %v973, %v977
    %v984 = vunpack.c.l.b16 %v968
    %v985 = vunpack.c.l.b16 %v969
    %v986 = vunpack.c.l.b16 %v970
    %v987 = vunpack.c.l.b16 %v971
    %v988 = vpack.c.b16 %v985, %v984
    %v989 = vpack.c.b16 %v987, %v986
    %v993 = vsel %vm279, %v972, 0
    %995 = vmatprep.subr.bf16.mxu0 0
    %996 = vmatpush1.bf16.msra.mxu0 0
    %997 = vmatprep.subr.bf16.mxu0 0
    %998 = vmatpush1.bf16.msra.mxu0 0
    %999 = vmatprep.subr.bf16.mxu0 0
    %1000 = vmatpush1.bf16.msra.mxu0 0
    %1001 = vmatprep.subr.bf16.mxu0 0
    %1002 = vmatpush1.bf16.msra.mxu0 0
    %1003 = vmatprep.subr.bf16.mxu0 0
    %1004 = vmatpush1.bf16.msra.mxu0 0
    %1005 = vmatprep.subr.bf16.mxu0 0
    %1006 = vmatpush1.bf16.msra.mxu0 0
    %1007 = vmatprep.subr.bf16.mxu0 0
    %1008 = vmatpush1.bf16.msra.mxu0 %v989
    %1009 = vmatprep.subr.bf16.mxu0 0
    %1010 = vmatpush1.bf16.msra.mxu0 %v988
    %1011 = vmatprep.subr.bf16.mxu0 0
    %1012 = vmatpush2.bf16.msra.mxu0 0
    %1013 = vmatprep.subr.bf16.mxu0 0
    %1014 = vmatpush2.bf16.msra.mxu0 0
    %1015 = vmatprep.subr.bf16.mxu0 0
    %1016 = vmatpush2.bf16.msra.mxu0 0
    %1017 = vmatprep.subr.bf16.mxu0 0
    %1018 = vmatpush2.bf16.msra.mxu0 0
    %1019 = vmatprep.subr.bf16.mxu0 0
    %1020 = vmatpush2.bf16.msra.mxu0 0
    %1021 = vmatprep.subr.bf16.mxu0 0
    %1022 = vmatpush2.bf16.msra.mxu0 0
    %1023 = vmatprep.subr.bf16.mxu0 0
    %1024 = vmatpush2.bf16.msra.mxu0 0
    %1025 = vmatprep.subr.bf16.mxu0 0
    %1026 = vmatpush2.bf16.msra.mxu0 0
    %1027 = vmatprep.mubr.bf16.mxu0 0
    %1028 = vmatmul.mubr.bf16.gmra.mxu0 %v993
    %v1029 = vpop.f32.mrf.mxu0
    %v1030 = vadd.f32 %v978, %v1029
    %v1031 = vpop.f32.mrf.mxu0
    %v1032 = vpop.f32.mrf.mxu0
    %v1033 = vadd.f32 %v978, %v1032
    %v1034 = vpop.f32.mrf.mxu0
    %1035 = vdwg.mxu0
    %1036 = vst.msk [vmem:[%s14] sm:$0xff] %vm279, %v1030
    %1037 = vst.msk [vmem:[%s14 + $0x8] sm:$0xff] %vm279, %v1033
  $region65: #{fbed_forward.6} parent=0 // pred_fallthru
    _
  // Predicated region
  $region66: #{fbed_forward.6} parent=0 // pred_check
    _
  $region67: #{fbed_forward.6} parent=0 // pred_check_branch
    %1039 = sbr.rel (0) target = $region69
  $region68: #{fbed_forward.6} parent=0 // pred_region
    _
  $region69: #{fbed_forward.6} parent=0 // pred_fallthru
    _
  // Predicated region
  $region70: #{fbed_forward.6} parent=0 // pred_check
    _
  $region71: #{fbed_forward.6} parent=0 // pred_check_branch
    %1041 = sbr.rel (0) target = $region73
  $region72: #{fbed_forward.6} parent=0 // pred_region
    _
  $region73: #{fbed_forward.6} parent=0 // pred_fallthru
    _

// kernel: fbed_forward.8
$region0: #{fbed_forward.8}
  #allocation0 [shape = 'u32[]', space=smem, size = 0x4, offset = 0x4, fixed_abs, tag = 'smem constant byte address 0x4 - core index']
  #allocation1 [shape = 'u32[144,128]{1,0:T(1,128)}', space=vmem, size = 0x12000, scoped, tag = 'internal scratch']
  #allocation2 [shape = 'f32[48,32]{1,0:T(8,128)}', space=vmem, size = 0x6000, scoped, tag = 'scratch operand']
  %s0 = inlined_call_operand.vmem [shape: f32[16,32], index: 0, kind: input, shape index: {}]
  %s1 = inlined_call_operand.vmem [shape: f32[16,32], index: 1, kind: input, shape index: {}]
  %s2 = inlined_call_operand.vmem [shape: f32[16,32], index: 2, kind: input, shape index: {}]
  %s3 = inlined_call_operand.vmem [shape: f32[16,8], index: 3, kind: input, shape index: {}]
  %s4 = inlined_call_operand.vmem [shape: f32[16,32], index: 4, kind: input, shape index: {}]
  %s5 = inlined_call_operand.vmem [shape: f32[48,8], index: 5, kind: input, shape index: {}]
  %s6 = inlined_call_operand.vmem [shape: bf16[32,32], index: 6, kind: input, shape index: {}]
  %s7 = inlined_call_operand.vmem [shape: f32[1,32], index: 7, kind: input, shape index: {}]
  %s8 = inlined_call_operand.vmem [shape: bf16[8,32], index: 8, kind: input, shape index: {}]
  %s9 = inlined_call_operand.vmem [shape: f32[1,32], index: 9, kind: input, shape index: {}]
  %s10 = inlined_call_operand.vmem [shape: f32[5,8,192], index: 10, kind: input, shape index: {}]
  %s11 = inlined_call_operand.vmem [shape: bf16[5,32,96], index: 11, kind: input, shape index: {}]
  %s12 = inlined_call_operand.vmem [shape: f32[5,1,96], index: 12, kind: input, shape index: {}]
  %s13 = inlined_call_operand.vmem [shape: bf16[5,32,32], index: 13, kind: input, shape index: {}]
  %s14 = inlined_call_operand.vmem [shape: f32[5,1,32], index: 14, kind: input, shape index: {}]
  %s15 = inlined_call_operand.vmem [shape: bf16[5,32,128], index: 15, kind: input, shape index: {}]
  %s16 = inlined_call_operand.vmem [shape: f32[5,1,128], index: 16, kind: input, shape index: {}]
  %s17 = inlined_call_operand.vmem [shape: bf16[5,128,32], index: 17, kind: input, shape index: {}]
  %s18 = inlined_call_operand.vmem [shape: f32[5,1,32], index: 18, kind: input, shape index: {}]
  %s19 = inlined_call_operand.vmem [shape: f32[48,32], index: 19, kind: output, shape index: {}]
  %s20 = sld [smem:[#allocation0]]
  $region121: #{fbed_forward.8} parent=0
    _
  %s22 = ssub.s32 1, %s20
  %s23 = scalar_select 0, %s22, %s20
  loop: start=0, step=1, limit=7
  $region2: #{fbed_forward.8} parent=0 // loop_pre_header
    _
  $region3: #{fbed_forward.8} parent=0 // loop_header
    %s25 = sphi 0, %s29
    %p26 = scmp.ge.s32.totalorder %s25, 7
    %s33 = sphi 0, %s33
    %s35 = sphi 0, %s33
    %s36 = sphi 0, %s35
    %s50 = sphi 0, %s36
    %s54 = sphi 0, %s54
    %s56 = sphi 0, %s54
    %s57 = sphi 0, %s56
    %s71 = sphi 0, %s57
    %s75 = sphi 0, %s75
    %s77 = sphi 0, %s75
    %s78 = sphi 0, %s77
    %s92 = sphi 0, %s78
    %s96 = sphi 0, %s96
    %s98 = sphi 0, %s96
    %s99 = sphi 0, %s98
    %s113 = sphi 0, %s99
    %s117 = sphi 0, %s117
    %s119 = sphi 0, %s117
    %s120 = sphi 0, %s119
    %s134 = sphi 0, %s120
    %s138 = sphi 0, %s138
    %s140 = sphi 0, %s138
    %s141 = sphi 0, %s140
    %s155 = sphi 0, %s141
    %s159 = sphi 0, %s159
    %s161 = sphi 0, %s159
    %s162 = sphi 0, %s161
    %s176 = sphi 0, %s162
    %s180 = sphi 0, %s180
    %s182 = sphi 0, %s180
    %s183 = sphi 0, %s182
    %s197 = sphi 0, %s183
    %s201 = sphi 0, %s201
    %s203 = sphi 0, %s201
    %s204 = sphi 0, %s203
    %s218 = sphi 0, %s204
    %s222 = sphi 0, %s222
    %s224 = sphi 0, %s222
    %s225 = sphi 0, %s224
    %s239 = sphi 0, %s225
    %s245 = sphi 0, %s247
    %s248 = sphi 0, %s245
    %s249 = sphi 0, %s248
    %s265 = sphi 0, %s249
    %s271 = sphi 0, %s273
    %s274 = sphi 0, %s271
    %s275 = sphi 0, %s274
    %s291 = sphi 0, %s275
    %s297 = sphi 0, %s299
    %s300 = sphi 0, %s297
    %s301 = sphi 0, %s300
    %s317 = sphi 0, %s301
    %s323 = sphi 0, %s325
    %s326 = sphi 0, %s323
    %s327 = sphi 0, %s326
    %s343 = sphi 0, %s327
    %s349 = sphi 0, %s351
    %s352 = sphi 0, %s349
    %s353 = sphi 0, %s352
    %s369 = sphi 0, %s353
    %s375 = sphi 0, %s377
    %s378 = sphi 0, %s375
    %s379 = sphi 0, %s378
    %s395 = sphi 0, %s379
    %s401 = sphi 0, %s403
    %s404 = sphi 0, %s401
    %s405 = sphi 0, %s404
    %s421 = sphi 0, %s405
    %s427 = sphi 0, %s429
    %s430 = sphi 0, %s427
    %s431 = sphi 0, %s430
    %s447 = sphi 0, %s431
    %s453 = sphi 0, %s455
    %s456 = sphi 0, %s453
    %s457 = sphi 0, %s456
    %s473 = sphi 0, %s457
    %s477 = sphi 0, %s477
    %s479 = sphi 0, %s477
    %s480 = sphi 0, %s479
    %s494 = sphi 0, %s480
  $region4: #{fbed_forward.8} parent=0 // loop_header_branch
    %28 = sbr.rel (%p26) target = $region8
  $region5: #{fbed_forward.8} parent=0 // loop_body
    %s30 = ssub.s32 %s25, 1
    %s31 = ssub.s32 %s25, 2
    %s32 = sadd.s32 %s25, 1
    %s34 = sadd.s32 %s33, 1
    %p37 = scmp.eq.s32.totalorder %s25, 4
    %p38 = scmp.ne.s32.totalorder %s33, %s35
    %p39 = scmp.eq.s32.totalorder %s25, 0
    %p40 = por %p38, %p39
    %p41 = scmp.ne.s32.totalorder %s33, %s35
    %p42 = scmp.eq.s32.totalorder %s30, 4
    %p43 = por %p41, %p42
    %p44 = scmp.ne.s32.totalorder %s35, %s36
    %p45 = scmp.eq.s32.totalorder %s30, 0
    %p46 = por %p44, %p45
    %p47 = scmp.ne.s32.totalorder %s35, %s36
    %p48 = scmp.eq.s32.totalorder %s31, 4
    %p49 = por %p47, %p48
    %p51 = scmp.ne.s32.totalorder %s36, %s50
    %p52 = scmp.eq.s32.totalorder %s31, 0
    %p53 = por %p51, %p52
    %s55 = sadd.s32 %s54, 1
    %p58 = scmp.eq.s32.totalorder %s25, 4
    %p59 = scmp.ne.s32.totalorder %s54, %s56
    %p60 = scmp.eq.s32.totalorder %s25, 0
    %p61 = por %p59, %p60
    %p62 = scmp.ne.s32.totalorder %s54, %s56
    %p63 = scmp.eq.s32.totalorder %s30, 4
    %p64 = por %p62, %p63
    %p65 = scmp.ne.s32.totalorder %s56, %s57
    %p66 = scmp.eq.s32.totalorder %s30, 0
    %p67 = por %p65, %p66
    %p68 = scmp.ne.s32.totalorder %s56, %s57
    %p69 = scmp.eq.s32.totalorder %s31, 4
    %p70 = por %p68, %p69
    %p72 = scmp.ne.s32.totalorder %s57, %s71
    %p73 = scmp.eq.s32.totalorder %s31, 0
    %p74 = por %p72, %p73
    %s76 = sadd.s32 %s75, 1
    %p79 = scmp.eq.s32.totalorder %s25, 4
    %p80 = scmp.ne.s32.totalorder %s75, %s77
    %p81 = scmp.eq.s32.totalorder %s25, 0
    %p82 = por %p80, %p81
    %p83 = scmp.ne.s32.totalorder %s75, %s77
    %p84 = scmp.eq.s32.totalorder %s30, 4
    %p85 = por %p83, %p84
    %p86 = scmp.ne.s32.totalorder %s77, %s78
    %p87 = scmp.eq.s32.totalorder %s30, 0
    %p88 = por %p86, %p87
    %p89 = scmp.ne.s32.totalorder %s77, %s78
    %p90 = scmp.eq.s32.totalorder %s31, 4
    %p91 = por %p89, %p90
    %p93 = scmp.ne.s32.totalorder %s78, %s92
    %p94 = scmp.eq.s32.totalorder %s31, 0
    %p95 = por %p93, %p94
    %s97 = sadd.s32 %s96, 1
    %p100 = scmp.eq.s32.totalorder %s25, 4
    %p101 = scmp.ne.s32.totalorder %s96, %s98
    %p102 = scmp.eq.s32.totalorder %s25, 0
    %p103 = por %p101, %p102
    %p104 = scmp.ne.s32.totalorder %s96, %s98
    %p105 = scmp.eq.s32.totalorder %s30, 4
    %p106 = por %p104, %p105
    %p107 = scmp.ne.s32.totalorder %s98, %s99
    %p108 = scmp.eq.s32.totalorder %s30, 0
    %p109 = por %p107, %p108
    %p110 = scmp.ne.s32.totalorder %s98, %s99
    %p111 = scmp.eq.s32.totalorder %s31, 4
    %p112 = por %p110, %p111
    %p114 = scmp.ne.s32.totalorder %s99, %s113
    %p115 = scmp.eq.s32.totalorder %s31, 0
    %p116 = por %p114, %p115
    %s118 = sadd.s32 %s117, 1
    %p121 = scmp.eq.s32.totalorder %s25, 4
    %p122 = scmp.ne.s32.totalorder %s117, %s119
    %p123 = scmp.eq.s32.totalorder %s25, 0
    %p124 = por %p122, %p123
    %p125 = scmp.ne.s32.totalorder %s117, %s119
    %p126 = scmp.eq.s32.totalorder %s30, 4
    %p127 = por %p125, %p126
    %p128 = scmp.ne.s32.totalorder %s119, %s120
    %p129 = scmp.eq.s32.totalorder %s30, 0
    %p130 = por %p128, %p129
    %p131 = scmp.ne.s32.totalorder %s119, %s120
    %p132 = scmp.eq.s32.totalorder %s31, 4
    %p133 = por %p131, %p132
    %p135 = scmp.ne.s32.totalorder %s120, %s134
    %p136 = scmp.eq.s32.totalorder %s31, 0
    %p137 = por %p135, %p136
    %s139 = sadd.s32 %s138, 1
    %p142 = scmp.eq.s32.totalorder %s25, 4
    %p143 = scmp.ne.s32.totalorder %s138, %s140
    %p144 = scmp.eq.s32.totalorder %s25, 0
    %p145 = por %p143, %p144
    %p146 = scmp.ne.s32.totalorder %s138, %s140
    %p147 = scmp.eq.s32.totalorder %s30, 4
    %p148 = por %p146, %p147
    %p149 = scmp.ne.s32.totalorder %s140, %s141
    %p150 = scmp.eq.s32.totalorder %s30, 0
    %p151 = por %p149, %p150
    %p152 = scmp.ne.s32.totalorder %s140, %s141
    %p153 = scmp.eq.s32.totalorder %s31, 4
    %p154 = por %p152, %p153
    %p156 = scmp.ne.s32.totalorder %s141, %s155
    %p157 = scmp.eq.s32.totalorder %s31, 0
    %p158 = por %p156, %p157
    %s160 = sadd.s32 %s159, 1
    %p163 = scmp.eq.s32.totalorder %s25, 4
    %p164 = scmp.ne.s32.totalorder %s159, %s161
    %p165 = scmp.eq.s32.totalorder %s25, 0
    %p166 = por %p164, %p165
    %p167 = scmp.ne.s32.totalorder %s159, %s161
    %p168 = scmp.eq.s32.totalorder %s30, 4
    %p169 = por %p167, %p168
    %p170 = scmp.ne.s32.totalorder %s161, %s162
    %p171 = scmp.eq.s32.totalorder %s30, 0
    %p172 = por %p170, %p171
    %p173 = scmp.ne.s32.totalorder %s161, %s162
    %p174 = scmp.eq.s32.totalorder %s31, 4
    %p175 = por %p173, %p174
    %p177 = scmp.ne.s32.totalorder %s162, %s176
    %p178 = scmp.eq.s32.totalorder %s31, 0
    %p179 = por %p177, %p178
    %s181 = sadd.s32 %s180, 1
    %p184 = scmp.eq.s32.totalorder %s25, 4
    %p185 = scmp.ne.s32.totalorder %s180, %s182
    %p186 = scmp.eq.s32.totalorder %s25, 0
    %p187 = por %p185, %p186
    %p188 = scmp.ne.s32.totalorder %s180, %s182
    %p189 = scmp.eq.s32.totalorder %s30, 4
    %p190 = por %p188, %p189
    %p191 = scmp.ne.s32.totalorder %s182, %s183
    %p192 = scmp.eq.s32.totalorder %s30, 0
    %p193 = por %p191, %p192
    %p194 = scmp.ne.s32.totalorder %s182, %s183
    %p195 = scmp.eq.s32.totalorder %s31, 4
    %p196 = por %p194, %p195
    %p198 = scmp.ne.s32.totalorder %s183, %s197
    %p199 = scmp.eq.s32.totalorder %s31, 0
    %p200 = por %p198, %p199
    %s202 = sadd.s32 %s201, 1
    %p205 = scmp.eq.s32.totalorder %s25, 4
    %p206 = scmp.ne.s32.totalorder %s201, %s203
    %p207 = scmp.eq.s32.totalorder %s25, 0
    %p208 = por %p206, %p207
    %p209 = scmp.ne.s32.totalorder %s201, %s203
    %p210 = scmp.eq.s32.totalorder %s30, 4
    %p211 = por %p209, %p210
    %p212 = scmp.ne.s32.totalorder %s203, %s204
    %p213 = scmp.eq.s32.totalorder %s30, 0
    %p214 = por %p212, %p213
    %p215 = scmp.ne.s32.totalorder %s203, %s204
    %p216 = scmp.eq.s32.totalorder %s31, 4
    %p217 = por %p215, %p216
    %p219 = scmp.ne.s32.totalorder %s204, %s218
    %p220 = scmp.eq.s32.totalorder %s31, 0
    %p221 = por %p219, %p220
    %s223 = sadd.s32 %s222, 1
    %p226 = scmp.eq.s32.totalorder %s25, 4
    %p227 = scmp.ne.s32.totalorder %s222, %s224
    %p228 = scmp.eq.s32.totalorder %s25, 0
    %p229 = por %p227, %p228
    %p230 = scmp.ne.s32.totalorder %s222, %s224
    %p231 = scmp.eq.s32.totalorder %s30, 4
    %p232 = por %p230, %p231
    %p233 = scmp.ne.s32.totalorder %s224, %s225
    %p234 = scmp.eq.s32.totalorder %s30, 0
    %p235 = por %p233, %p234
    %p236 = scmp.ne.s32.totalorder %s224, %s225
    %p237 = scmp.eq.s32.totalorder %s31, 4
    %p238 = por %p236, %p237
    %p240 = scmp.ne.s32.totalorder %s225, %s239
    %p241 = scmp.eq.s32.totalorder %s31, 0
    %p242 = por %p240, %p241
    %s243 = ssub.s32 %s25, %s32
    %p244 = scmp.eq.s32.totalorder %s243, 0
    %s246 = sadd.s32 %s245, 1
    %s247 = scalar_select %p244, %s245, %s246
    %p250 = pneg %p244
    %p251 = scmp.eq.s32.totalorder %s25, 4
    %p252 = por %p250, %p251
    %p253 = scmp.ne.s32.totalorder %s245, %s248
    %p254 = scmp.eq.s32.totalorder %s25, 0
    %p255 = por %p253, %p254
    %p256 = scmp.ne.s32.totalorder %s245, %s248
    %p257 = scmp.eq.s32.totalorder %s30, 4
    %p258 = por %p256, %p257
    %p259 = scmp.ne.s32.totalorder %s248, %s249
    %p260 = scmp.eq.s32.totalorder %s30, 0
    %p261 = por %p259, %p260
    %p262 = scmp.ne.s32.totalorder %s248, %s249
    %p263 = scmp.eq.s32.totalorder %s31, 4
    %p264 = por %p262, %p263
    %p266 = scmp.ne.s32.totalorder %s249, %s265
    %p267 = scmp.eq.s32.totalorder %s31, 0
    %p268 = por %p266, %p267
    %s269 = ssub.s32 %s25, %s32
    %p270 = scmp.eq.s32.totalorder %s269, 0
    %s272 = sadd.s32 %s271, 1
    %s273 = scalar_select %p270, %s271, %s272
    %p276 = pneg %p270
    %p277 = scmp.eq.s32.totalorder %s25, 4
    %p278 = por %p276, %p277
    %p279 = scmp.ne.s32.totalorder %s271, %s274
    %p280 = scmp.eq.s32.totalorder %s25, 0
    %p281 = por %p279, %p280
    %p282 = scmp.ne.s32.totalorder %s271, %s274
    %p283 = scmp.eq.s32.totalorder %s30, 4
    %p284 = por %p282, %p283
    %p285 = scmp.ne.s32.totalorder %s274, %s275
    %p286 = scmp.eq.s32.totalorder %s30, 0
    %p287 = por %p285, %p286
    %p288 = scmp.ne.s32.totalorder %s274, %s275
    %p289 = scmp.eq.s32.totalorder %s31, 4
    %p290 = por %p288, %p289
    %p292 = scmp.ne.s32.totalorder %s275, %s291
    %p293 = scmp.eq.s32.totalorder %s31, 0
    %p294 = por %p292, %p293
    %s295 = ssub.s32 %s25, %s32
    %p296 = scmp.eq.s32.totalorder %s295, 0
    %s298 = sadd.s32 %s297, 1
    %s299 = scalar_select %p296, %s297, %s298
    %p302 = pneg %p296
    %p303 = scmp.eq.s32.totalorder %s25, 4
    %p304 = por %p302, %p303
    %p305 = scmp.ne.s32.totalorder %s297, %s300
    %p306 = scmp.eq.s32.totalorder %s25, 0
    %p307 = por %p305, %p306
    %p308 = scmp.ne.s32.totalorder %s297, %s300
    %p309 = scmp.eq.s32.totalorder %s30, 4
    %p310 = por %p308, %p309
    %p311 = scmp.ne.s32.totalorder %s300, %s301
    %p312 = scmp.eq.s32.totalorder %s30, 0
    %p313 = por %p311, %p312
    %p314 = scmp.ne.s32.totalorder %s300, %s301
    %p315 = scmp.eq.s32.totalorder %s31, 4
    %p316 = por %p314, %p315
    %p318 = scmp.ne.s32.totalorder %s301, %s317
    %p319 = scmp.eq.s32.totalorder %s31, 0
    %p320 = por %p318, %p319
    %s321 = ssub.s32 %s25, %s32
    %p322 = scmp.eq.s32.totalorder %s321, 0
    %s324 = sadd.s32 %s323, 1
    %s325 = scalar_select %p322, %s323, %s324
    %p328 = pneg %p322
    %p329 = scmp.eq.s32.totalorder %s25, 4
    %p330 = por %p328, %p329
    %p331 = scmp.ne.s32.totalorder %s323, %s326
    %p332 = scmp.eq.s32.totalorder %s25, 0
    %p333 = por %p331, %p332
    %p334 = scmp.ne.s32.totalorder %s323, %s326
    %p335 = scmp.eq.s32.totalorder %s30, 4
    %p336 = por %p334, %p335
    %p337 = scmp.ne.s32.totalorder %s326, %s327
    %p338 = scmp.eq.s32.totalorder %s30, 0
    %p339 = por %p337, %p338
    %p340 = scmp.ne.s32.totalorder %s326, %s327
    %p341 = scmp.eq.s32.totalorder %s31, 4
    %p342 = por %p340, %p341
    %p344 = scmp.ne.s32.totalorder %s327, %s343
    %p345 = scmp.eq.s32.totalorder %s31, 0
    %p346 = por %p344, %p345
    %s347 = ssub.s32 %s25, %s32
    %p348 = scmp.eq.s32.totalorder %s347, 0
    %s350 = sadd.s32 %s349, 1
    %s351 = scalar_select %p348, %s349, %s350
    %p354 = pneg %p348
    %p355 = scmp.eq.s32.totalorder %s25, 4
    %p356 = por %p354, %p355
    %p357 = scmp.ne.s32.totalorder %s349, %s352
    %p358 = scmp.eq.s32.totalorder %s25, 0
    %p359 = por %p357, %p358
    %p360 = scmp.ne.s32.totalorder %s349, %s352
    %p361 = scmp.eq.s32.totalorder %s30, 4
    %p362 = por %p360, %p361
    %p363 = scmp.ne.s32.totalorder %s352, %s353
    %p364 = scmp.eq.s32.totalorder %s30, 0
    %p365 = por %p363, %p364
    %p366 = scmp.ne.s32.totalorder %s352, %s353
    %p367 = scmp.eq.s32.totalorder %s31, 4
    %p368 = por %p366, %p367
    %p370 = scmp.ne.s32.totalorder %s353, %s369
    %p371 = scmp.eq.s32.totalorder %s31, 0
    %p372 = por %p370, %p371
    %s373 = ssub.s32 %s25, %s32
    %p374 = scmp.eq.s32.totalorder %s373, 0
    %s376 = sadd.s32 %s375, 1
    %s377 = scalar_select %p374, %s375, %s376
    %p380 = pneg %p374
    %p381 = scmp.eq.s32.totalorder %s25, 4
    %p382 = por %p380, %p381
    %p383 = scmp.ne.s32.totalorder %s375, %s378
    %p384 = scmp.eq.s32.totalorder %s25, 0
    %p385 = por %p383, %p384
    %p386 = scmp.ne.s32.totalorder %s375, %s378
    %p387 = scmp.eq.s32.totalorder %s30, 4
    %p388 = por %p386, %p387
    %p389 = scmp.ne.s32.totalorder %s378, %s379
    %p390 = scmp.eq.s32.totalorder %s30, 0
    %p391 = por %p389, %p390
    %p392 = scmp.ne.s32.totalorder %s378, %s379
    %p393 = scmp.eq.s32.totalorder %s31, 4
    %p394 = por %p392, %p393
    %p396 = scmp.ne.s32.totalorder %s379, %s395
    %p397 = scmp.eq.s32.totalorder %s31, 0
    %p398 = por %p396, %p397
    %s399 = ssub.s32 %s25, %s32
    %p400 = scmp.eq.s32.totalorder %s399, 0
    %s402 = sadd.s32 %s401, 1
    %s403 = scalar_select %p400, %s401, %s402
    %p406 = pneg %p400
    %p407 = scmp.eq.s32.totalorder %s25, 4
    %p408 = por %p406, %p407
    %p409 = scmp.ne.s32.totalorder %s401, %s404
    %p410 = scmp.eq.s32.totalorder %s25, 0
    %p411 = por %p409, %p410
    %p412 = scmp.ne.s32.totalorder %s401, %s404
    %p413 = scmp.eq.s32.totalorder %s30, 4
    %p414 = por %p412, %p413
    %p415 = scmp.ne.s32.totalorder %s404, %s405
    %p416 = scmp.eq.s32.totalorder %s30, 0
    %p417 = por %p415, %p416
    %p418 = scmp.ne.s32.totalorder %s404, %s405
    %p419 = scmp.eq.s32.totalorder %s31, 4
    %p420 = por %p418, %p419
    %p422 = scmp.ne.s32.totalorder %s405, %s421
    %p423 = scmp.eq.s32.totalorder %s31, 0
    %p424 = por %p422, %p423
    %s425 = ssub.s32 %s25, %s32
    %p426 = scmp.eq.s32.totalorder %s425, 0
    %s428 = sadd.s32 %s427, 1
    %s429 = scalar_select %p426, %s427, %s428
    %p432 = pneg %p426
    %p433 = scmp.eq.s32.totalorder %s25, 4
    %p434 = por %p432, %p433
    %p435 = scmp.ne.s32.totalorder %s427, %s430
    %p436 = scmp.eq.s32.totalorder %s25, 0
    %p437 = por %p435, %p436
    %p438 = scmp.ne.s32.totalorder %s427, %s430
    %p439 = scmp.eq.s32.totalorder %s30, 4
    %p440 = por %p438, %p439
    %p441 = scmp.ne.s32.totalorder %s430, %s431
    %p442 = scmp.eq.s32.totalorder %s30, 0
    %p443 = por %p441, %p442
    %p444 = scmp.ne.s32.totalorder %s430, %s431
    %p445 = scmp.eq.s32.totalorder %s31, 4
    %p446 = por %p444, %p445
    %p448 = scmp.ne.s32.totalorder %s431, %s447
    %p449 = scmp.eq.s32.totalorder %s31, 0
    %p450 = por %p448, %p449
    %s451 = ssub.s32 %s25, %s32
    %p452 = scmp.eq.s32.totalorder %s451, 0
    %s454 = sadd.s32 %s453, 1
    %s455 = scalar_select %p452, %s453, %s454
    %p458 = pneg %p452
    %p459 = scmp.eq.s32.totalorder %s25, 4
    %p460 = por %p458, %p459
    %p461 = scmp.ne.s32.totalorder %s453, %s456
    %p462 = scmp.eq.s32.totalorder %s25, 0
    %p463 = por %p461, %p462
    %p464 = scmp.ne.s32.totalorder %s453, %s456
    %p465 = scmp.eq.s32.totalorder %s30, 4
    %p466 = por %p464, %p465
    %p467 = scmp.ne.s32.totalorder %s456, %s457
    %p468 = scmp.eq.s32.totalorder %s30, 0
    %p469 = por %p467, %p468
    %p470 = scmp.ne.s32.totalorder %s456, %s457
    %p471 = scmp.eq.s32.totalorder %s31, 4
    %p472 = por %p470, %p471
    %p474 = scmp.ne.s32.totalorder %s457, %s473
    %p475 = scmp.eq.s32.totalorder %s31, 0
    %p476 = por %p474, %p475
    %s478 = sadd.s32 %s477, 1
    %p481 = scmp.eq.s32.totalorder %s25, 4
    %p482 = scmp.ne.s32.totalorder %s477, %s479
    %p483 = scmp.eq.s32.totalorder %s25, 0
    %p484 = por %p482, %p483
    %p485 = scmp.ne.s32.totalorder %s477, %s479
    %p486 = scmp.eq.s32.totalorder %s30, 4
    %p487 = por %p485, %p486
    %p488 = scmp.ne.s32.totalorder %s479, %s480
    %p489 = scmp.eq.s32.totalorder %s30, 0
    %p490 = por %p488, %p489
    %p491 = scmp.ne.s32.totalorder %s479, %s480
    %p492 = scmp.eq.s32.totalorder %s31, 4
    %p493 = por %p491, %p492
    %p495 = scmp.ne.s32.totalorder %s480, %s494
    %p496 = scmp.eq.s32.totalorder %s31, 0
    %p497 = por %p495, %p496
    %p498 = scmp.le.s32.totalorder 1, %s25
    %p499 = scmp.lt.s32.totalorder %s25, 6
    %p500 = pnand %p498, %p499
    %p501 = pneg %p500
    // Predicated region
    $region9: #{fbed_forward.8} parent=5 // pred_check
      _
    $region10: #{fbed_forward.8} parent=5 // pred_check_branch
      %503 = sbr.rel (%p500) target = $region12
    $region11: #{fbed_forward.8} parent=5 // pred_region
      %s504 = ssub.s32 %s25, 1
      // Predicated region
      $region13: #{fbed_forward.8} parent=11 // pred_check
        %p505 = pneg %p46
      $region14: #{fbed_forward.8} parent=11 // pred_check_branch
        %507 = sbr.rel (%p505) target = $region16
      $region15: #{fbed_forward.8} parent=11 // pred_region
        _
      $region16: #{fbed_forward.8} parent=11 // pred_fallthru
        _
      // Predicated region
      $region17: #{fbed_forward.8} parent=11 // pred_check
        %p508 = pneg %p67
      $region18: #{fbed_forward.8} parent=11 // pred_check_branch
        %510 = sbr.rel (%p508) target = $region20
      $region19: #{fbed_forward.8} parent=11 // pred_region
        _
      $region20: #{fbed_forward.8} parent=11 // pred_fallthru
        _
      // Predicated region
      $region21: #{fbed_forward.8} parent=11 // pred_check
        %p511 = pneg %p88
      $region22: #{fbed_forward.8} parent=11 // pred_check_branch
        %513 = sbr.rel (%p511) target = $region24
      $region23: #{fbed_forward.8} parent=11 // pred_region
        _
      $region24: #{fbed_forward.8} parent=11 // pred_fallthru
        _
      // Predicated region
      $region25: #{fbed_forward.8} parent=11 // pred_check
        %p514 = pneg %p109
      $region26: #{fbed_forward.8} parent=11 // pred_check_branch
        %516 = sbr.rel (%p514) target = $region28
      $region27: #{fbed_forward.8} parent=11 // pred_region
        _
      $region28: #{fbed_forward.8} parent=11 // pred_fallthru
        _
      // Predicated region
      $region29: #{fbed_forward.8} parent=11 // pred_check
        %p517 = pneg %p130
      $region30: #{fbed_forward.8} parent=11 // pred_check_branch
        %519 = sbr.rel (%p517) target = $region32
      $region31: #{fbed_forward.8} parent=11 // pred_region
        _
      $region32: #{fbed_forward.8} parent=11 // pred_fallthru
        _
      // Predicated region
      $region33: #{fbed_forward.8} parent=11 // pred_check
        %p520 = pneg %p151
      $region34: #{fbed_forward.8} parent=11 // pred_check_branch
        %522 = sbr.rel (%p520) target = $region36
      $region35: #{fbed_forward.8} parent=11 // pred_region
        _
      $region36: #{fbed_forward.8} parent=11 // pred_fallthru
        _
      // Predicated region
      $region37: #{fbed_forward.8} parent=11 // pred_check
        %p523 = pneg %p172
      $region38: #{fbed_forward.8} parent=11 // pred_check_branch
        %525 = sbr.rel (%p523) target = $region40
      $region39: #{fbed_forward.8} parent=11 // pred_region
        _
      $region40: #{fbed_forward.8} parent=11 // pred_fallthru
        _
      // Predicated region
      $region41: #{fbed_forward.8} parent=11 // pred_check
        %p526 = pneg %p193
      $region42: #{fbed_forward.8} parent=11 // pred_check_branch
        %528 = sbr.rel (%p526) target = $region44
      $region43: #{fbed_forward.8} parent=11 // pred_region
        _
      $region44: #{fbed_forward.8} parent=11 // pred_fallthru
        _
      // Predicated region
      $region45: #{fbed_forward.8} parent=11 // pred_check
        %p529 = pneg %p214
      $region46: #{fbed_forward.8} parent=11 // pred_check_branch
        %531 = sbr.rel (%p529) target = $region48
      $region47: #{fbed_forward.8} parent=11 // pred_region
        _
      $region48: #{fbed_forward.8} parent=11 // pred_fallthru
        _
      // Predicated region
      $region49: #{fbed_forward.8} parent=11 // pred_check
        %p532 = pneg %p235
      $region50: #{fbed_forward.8} parent=11 // pred_check_branch
        %534 = sbr.rel (%p532) target = $region52
      $region51: #{fbed_forward.8} parent=11 // pred_region
        _
      $region52: #{fbed_forward.8} parent=11 // pred_fallthru
        _
    $region12: #{fbed_forward.8} parent=5 // pred_fallthru
      _
    %p535 = scmp.lt.s32.totalorder %s25, 5
    // Predicated region
    $region53: #{fbed_forward.8} parent=5 // pred_check
      %p536 = pneg %p535
    $region54: #{fbed_forward.8} parent=5 // pred_check_branch
      %538 = sbr.rel (%p536) target = $region56
    $region55: #{fbed_forward.8} parent=5 // pred_region
      // Predicated region
      $region57: #{fbed_forward.8} parent=55 // pred_check
        %p539 = pneg %p255
      $region58: #{fbed_forward.8} parent=55 // pred_check_branch
        %541 = sbr.rel (%p539) target = $region60
      $region59: #{fbed_forward.8} parent=55 // pred_region
        %p542 = scmp.lt.s32.totalorder %s25, 4
        %s543 = scalar_select %p542, %s25, 4
        %s544 = smul.addr %s543, 2
        %s545 = smul.addr %s544, 8
        %s546 = scalar_lea.vmem %s10, %s545
      $region60: #{fbed_forward.8} parent=55 // pred_fallthru
        _
      // Predicated region
      $region61: #{fbed_forward.8} parent=55 // pred_check
        %p547 = pneg %p281
      $region62: #{fbed_forward.8} parent=55 // pred_check_branch
        %549 = sbr.rel (%p547) target = $region64
      $region63: #{fbed_forward.8} parent=55 // pred_region
        %p550 = scmp.lt.s32.totalorder %s25, 4
        %s551 = scalar_select %p550, %s25, 4
        %s552 = smul.addr %s551, 4
        %s553 = smul.addr %s552, 4
        %s554 = scalar_lea.vmem %s11, %s553
      $region64: #{fbed_forward.8} parent=55 // pred_fallthru
        _
      // Predicated region
      $region65: #{fbed_forward.8} parent=55 // pred_check
        %p555 = pneg %p307
      $region66: #{fbed_forward.8} parent=55 // pred_check_branch
        %557 = sbr.rel (%p555) target = $region68
      $region67: #{fbed_forward.8} parent=55 // pred_region
        %p558 = scmp.lt.s32.totalorder %s25, 4
        %s559 = scalar_select %p558, %s25, 4
        %s560 = scalar_lea.vmem %s12, %s559
      $region68: #{fbed_forward.8} parent=55 // pred_fallthru
        _
      // Predicated region
      $region69: #{fbed_forward.8} parent=55 // pred_check
        %p561 = pneg %p333
      $region70: #{fbed_forward.8} parent=55 // pred_check_branch
        %563 = sbr.rel (%p561) target = $region72
      $region71: #{fbed_forward.8} parent=55 // pred_region
        %p564 = scmp.lt.s32.totalorder %s25, 4
        %s565 = scalar_select %p564, %s25, 4
        %s566 = smul.addr %s565, 4
        %s567 = smul.addr %s566, 4
        %s568 = scalar_lea.vmem %s13, %s567
      $region72: #{fbed_forward.8} parent=55 // pred_fallthru
        _
      // Predicated region
      $region73: #{fbed_forward.8} parent=55 // pred_check
        %p569 = pneg %p359
      $region74: #{fbed_forward.8} parent=55 // pred_check_branch
        %571 = sbr.rel (%p569) target = $region76
      $region75: #{fbed_forward.8} parent=55 // pred_region
        %p572 = scmp.lt.s32.totalorder %s25, 4
        %s573 = scalar_select %p572, %s25, 4
        %s574 = scalar_lea.vmem %s14, %s573
      $region76: #{fbed_forward.8} parent=55 // pred_fallthru
        _
      // Predicated region
      $region77: #{fbed_forward.8} parent=55 // pred_check
        %p575 = pneg %p385
      $region78: #{fbed_forward.8} parent=55 // pred_check_branch
        %577 = sbr.rel (%p575) target = $region80
      $region79: #{fbed_forward.8} parent=55 // pred_region
        %p578 = scmp.lt.s32.totalorder %s25, 4
        %s579 = scalar_select %p578, %s25, 4
        %s580 = smul.addr %s579, 4
        %s581 = smul.addr %s580, 4
        %s582 = scalar_lea.vmem %s15, %s581
      $region80: #{fbed_forward.8} parent=55 // pred_fallthru
        _
      // Predicated region
      $region81: #{fbed_forward.8} parent=55 // pred_check
        %p583 = pneg %p411
      $region82: #{fbed_forward.8} parent=55 // pred_check_branch
        %585 = sbr.rel (%p583) target = $region84
      $region83: #{fbed_forward.8} parent=55 // pred_region
        %p586 = scmp.lt.s32.totalorder %s25, 4
        %s587 = scalar_select %p586, %s25, 4
        %s588 = scalar_lea.vmem %s16, %s587
      $region84: #{fbed_forward.8} parent=55 // pred_fallthru
        _
      // Predicated region
      $region85: #{fbed_forward.8} parent=55 // pred_check
        %p589 = pneg %p437
      $region86: #{fbed_forward.8} parent=55 // pred_check_branch
        %591 = sbr.rel (%p589) target = $region88
      $region87: #{fbed_forward.8} parent=55 // pred_region
        %p592 = scmp.lt.s32.totalorder %s25, 4
        %s593 = scalar_select %p592, %s25, 4
        %s594 = smul.addr %s593, 16
        %s595 = smul.addr %s594, 4
        %s596 = scalar_lea.vmem %s17, %s595
      $region88: #{fbed_forward.8} parent=55 // pred_fallthru
        _
      // Predicated region
      $region89: #{fbed_forward.8} parent=55 // pred_check
        %p597 = pneg %p463
      $region90: #{fbed_forward.8} parent=55 // pred_check_branch
        %599 = sbr.rel (%p597) target = $region92
      $region91: #{fbed_forward.8} parent=55 // pred_region
        %p600 = scmp.lt.s32.totalorder %s25, 4
        %s601 = scalar_select %p600, %s25, 4
        %s602 = scalar_lea.vmem %s18, %s601
      $region92: #{fbed_forward.8} parent=55 // pred_fallthru
        _
    $region56: #{fbed_forward.8} parent=5 // pred_fallthru
      _
    %p603 = scmp.le.s32.totalorder 1, %s25
    %p604 = scmp.lt.s32.totalorder %s25, 6
    %p605 = pnand %p603, %p604
    %p606 = pneg %p605
    // Predicated region
    $region93: #{fbed_forward.8} parent=5 // pred_check
      _
    $region94: #{fbed_forward.8} parent=5 // pred_check_branch
      %608 = sbr.rel (%p605) target = $region96
    $region95: #{fbed_forward.8} parent=5 // pred_region
      %s609 = ssub.s32 %s25, 1
      %p610 = pneg %p46
      %p611 = pneg %p43
      %p612 = pneg %p67
      %p613 = pneg %p64
      %p614 = pneg %p88
      %p615 = pneg %p85
      %p616 = pneg %p109
      %p617 = pneg %p106
      %p618 = pneg %p130
      %p619 = pneg %p127
      %p620 = pneg %p151
      %p621 = pneg %p148
      %p622 = pneg %p172
      %p623 = pneg %p169
      %p624 = pneg %p193
      %p625 = pneg %p190
      %p626 = pneg %p214
      %p627 = pneg %p211
      %p628 = pneg %p235
      %p629 = pneg %p232
      %p630 = scmp.lt.s32.totalorder %s30, 4
      %s631 = scalar_select %p630, %s30, 4
      %s632 = smul.addr %s631, 2
      %s633 = smul.addr %s632, 8
      %s634 = scalar_lea.vmem %s10, %s633
      %p635 = pneg %p261
      %p636 = pneg %p258
      %p637 = scmp.lt.s32.totalorder %s30, 4
      %s638 = scalar_select %p637, %s30, 4
      %s639 = smul.addr %s638, 4
      %s640 = smul.addr %s639, 4
      %s641 = scalar_lea.vmem %s11, %s640
      %p642 = pneg %p287
      %p643 = pneg %p284
      %p644 = scmp.lt.s32.totalorder %s30, 4
      %s645 = scalar_select %p644, %s30, 4
      %s646 = scalar_lea.vmem %s12, %s645
      %p647 = pneg %p313
      %p648 = pneg %p310
      %p649 = scmp.lt.s32.totalorder %s30, 4
      %s650 = scalar_select %p649, %s30, 4
      %s651 = smul.addr %s650, 4
      %s652 = smul.addr %s651, 4
      %s653 = scalar_lea.vmem %s13, %s652
      %p654 = pneg %p339
      %p655 = pneg %p336
      %p656 = scmp.lt.s32.totalorder %s30, 4
      %s657 = scalar_select %p656, %s30, 4
      %s658 = scalar_lea.vmem %s14, %s657
      %p659 = pneg %p365
      %p660 = pneg %p362
      %p661 = scmp.lt.s32.totalorder %s30, 4
      %s662 = scalar_select %p661, %s30, 4
      %s663 = smul.addr %s662, 4
      %s664 = smul.addr %s663, 4
      %s665 = scalar_lea.vmem %s15, %s664
      %p666 = pneg %p391
      %p667 = pneg %p388
      %p668 = scmp.lt.s32.totalorder %s30, 4
      %s669 = scalar_select %p668, %s30, 4
      %s670 = scalar_lea.vmem %s16, %s669
      %p671 = pneg %p417
      %p672 = pneg %p414
      %p673 = scmp.lt.s32.totalorder %s30, 4
      %s674 = scalar_select %p673, %s30, 4
      %s675 = smul.addr %s674, 16
      %s676 = smul.addr %s675, 4
      %s677 = scalar_lea.vmem %s17, %s676
      %p678 = pneg %p443
      %p679 = pneg %p440
      %p680 = scmp.lt.s32.totalorder %s30, 4
      %s681 = scalar_select %p680, %s30, 4
      %s682 = scalar_lea.vmem %s18, %s681
      %p683 = pneg %p469
      %p684 = pneg %p466
      %p685 = pneg %p490
      %p686 = pneg %p487
      %p687 = scmp.lt.s32.totalorder %s30, 4
      %s688 = scalar_select %p687, %s30, 4
      %s689 = smul.addr %s688, 2
      %s690 = smul.addr %s689, 8
      %s691 = scalar_lea.vmem %s10, %s690
      %p692 = scmp.lt.s32.totalorder %s30, 4
      %s693 = scalar_select %p692, %s30, 4
      %s694 = smul.addr %s693, 4
      %s695 = smul.addr %s694, 4
      %s696 = scalar_lea.vmem %s11, %s695
      %p697 = scmp.lt.s32.totalorder %s30, 4
      %s698 = scalar_select %p697, %s30, 4
      %s699 = scalar_lea.vmem %s12, %s698
      %p700 = scmp.lt.s32.totalorder %s30, 4
      %s701 = scalar_select %p700, %s30, 4
      %s702 = smul.addr %s701, 4
      %s703 = smul.addr %s702, 4
      %s704 = scalar_lea.vmem %s13, %s703
      %p705 = scmp.lt.s32.totalorder %s30, 4
      %s706 = scalar_select %p705, %s30, 4
      %s707 = scalar_lea.vmem %s14, %s706
      %p708 = scmp.lt.s32.totalorder %s30, 4
      %s709 = scalar_select %p708, %s30, 4
      %s710 = smul.addr %s709, 4
      %s711 = smul.addr %s710, 4
      %s712 = scalar_lea.vmem %s15, %s711
      %p713 = scmp.lt.s32.totalorder %s30, 4
      %s714 = scalar_select %p713, %s30, 4
      %s715 = scalar_lea.vmem %s16, %s714
      %p716 = scmp.lt.s32.totalorder %s30, 4
      %s717 = scalar_select %p716, %s30, 4
      %s718 = smul.addr %s717, 16
      %s719 = smul.addr %s718, 4
      %s720 = scalar_lea.vmem %s17, %s719
      %p721 = scmp.lt.s32.totalorder %s30, 4
      %s722 = scalar_select %p721, %s30, 4
      %s723 = scalar_lea.vmem %s18, %s722
      %p725 = scmp.eq.s32.totalorder %s30, 0
      // Predicated region
      $region97: #{fbed_forward.8} parent=95 // pred_check
        %p726 = pneg %p725
      $region98: #{fbed_forward.8} parent=95 // pred_check_branch
        %728 = sbr.rel (%p726) target = $region100
      $region99: #{fbed_forward.8} parent=95 // pred_region
        %v729 = vld [vmem:[%s0] sm:$0xff]
        %v730 = vld [vmem:[%s0 + $0x8] sm:$0xff]
        %vm731 = vcmask 261120
        %732 = vst.msk [vmem:[#allocation2] sm:$0xff] %vm731, %v729
        %733 = vst.msk [vmem:[#allocation2 + $0x8] sm:$0xff] %vm731, %v730
        %v734 = vld [vmem:[%s1] sm:$0xff]
        %v735 = vld [vmem:[%s1 + $0x8] sm:$0xff]
        %v736 = vld [vmem:[%s6] sm:$0xf]
        %v737 = vld [vmem:[%s6 + $0x4] sm:$0xf]
        %v738 = vld [vmem:[%s6 + $0x8] sm:$0xf]
        %v739 = vld [vmem:[%s6 + $0xc] sm:$0xf]
        %v740 = vpack.c.bf16 %v735, %v734
        %v741 = vld [vmem:[%s7] sm:$0x1]
        %v743 = vlaneseq
        %v744 = vshrl.u32 %v743, 7
        %v745 = vsub.s32 0, %v744
        %v746 = vrot.slane %v741, %v745
        %v752 = vunpack.c.l.b16 %v736
        %v753 = vunpack.c.l.b16 %v737
        %v754 = vunpack.c.l.b16 %v738
        %v755 = vunpack.c.l.b16 %v739
        %v756 = vpack.c.b16 %v753, %v752
        %v757 = vpack.c.b16 %v755, %v754
        %v761 = vsel %vm731, %v740, 0
        %763 = vmatprep.subr.bf16.mxu0 0
        %764 = vmatpush1.bf16.msra.mxu0 0
        %765 = vmatprep.subr.bf16.mxu0 0
        %766 = vmatpush1.bf16.msra.mxu0 0
        %767 = vmatprep.subr.bf16.mxu0 0
        %768 = vmatpush1.bf16.msra.mxu0 0
        %769 = vmatprep.subr.bf16.mxu0 0
        %770 = vmatpush1.bf16.msra.mxu0 0
        %771 = vmatprep.subr.bf16.mxu0 0
        %772 = vmatpush1.bf16.msra.mxu0 0
        %773 = vmatprep.subr.bf16.mxu0 0
        %774 = vmatpush1.bf16.msra.mxu0 0
        %775 = vmatprep.subr.bf16.mxu0 0
        %776 = vmatpush1.bf16.msra.mxu0 %v757
        %777 = vmatprep.subr.bf16.mxu0 0
        %778 = vmatpush1.bf16.msra.mxu0 %v756
        %779 = vmatprep.subr.bf16.mxu0 0
        %780 = vmatpush2.bf16.msra.mxu0 0
        %781 = vmatprep.subr.bf16.mxu0 0
        %782 = vmatpush2.bf16.msra.mxu0 0
        %783 = vmatprep.subr.bf16.mxu0 0
        %784 = vmatpush2.bf16.msra.mxu0 0
        %785 = vmatprep.subr.bf16.mxu0 0
        %786 = vmatpush2.bf16.msra.mxu0 0
        %787 = vmatprep.subr.bf16.mxu0 0
        %788 = vmatpush2.bf16.msra.mxu0 0
        %789 = vmatprep.subr.bf16.mxu0 0
        %790 = vmatpush2.bf16.msra.mxu0 0
        %791 = vmatprep.subr.bf16.mxu0 0
        %792 = vmatpush2.bf16.msra.mxu0 0
        %793 = vmatprep.subr.bf16.mxu0 0
        %794 = vmatpush2.bf16.msra.mxu0 0
        %795 = vmatprep.mubr.bf16.mxu0 0
        %796 = vmatmul.mubr.bf16.gmra.mxu0 %v761
        %v797 = vpop.f32.mrf.mxu0
        %v798 = vadd.f32 %v746, %v797
        %v799 = vpop.f32.mrf.mxu0
        %v800 = vpop.f32.mrf.mxu0
        %v801 = vadd.f32 %v746, %v800
        %v802 = vpop.f32.mrf.mxu0
        %803 = vdwg.mxu0
        %v804 = vld [vmem:[%s2] sm:$0xff]
        %v805 = vld [vmem:[%s2 + $0x8] sm:$0xff]
        %v806 = vadd.f32 %v798, %v804
        %v807 = vadd.f32 %v801, %v805
        %808 = vst.msk [vmem:[#allocation2 + $0x10] sm:$0xff] %vm731, %v806
        %809 = vst.msk [vmem:[#allocation2 + $0x18] sm:$0xff] %vm731, %v807
        %v810 = vld [vmem:[%s3] sm:$0xff]
        %v811 = vld [vmem:[%s3 + $0x8] sm:$0xff]
        %v812 = vld [vmem:[%s8] sm:$0xf]
        %v813 = vpack.c.bf16 %v811, %v810
        %v814 = vld [vmem:[%s9] sm:$0x1]
        %v816 = vlaneseq
        %v817 = vshrl.u32 %v816, 7
        %v818 = vsub.s32 0, %v817
        %v819 = vrot.slane %v814, %v818
        %vm821 = vcmask 64512
        %v823 = vsel %vm821, %v813, 0
        %vm825 = vcmask 1043456
        %v827 = vsel %vm825, %v812, 0
        %829 = vmatprep.subr.bf16.mxu0 0
        %830 = vmatpush1.bf16.msra.mxu0 0
        %831 = vmatprep.subr.bf16.mxu0 0
        %832 = vmatpush1.bf16.msra.mxu0 0
        %833 = vmatprep.subr.bf16.mxu0 0
        %834 = vmatpush1.bf16.msra.mxu0 0
        %835 = vmatprep.subr.bf16.mxu0 0
        %836 = vmatpush1.bf16.msra.mxu0 0
        %837 = vmatprep.subr.bf16.mxu0 0
        %838 = vmatpush1.bf16.msra.mxu0 0
        %839 = vmatprep.subr.bf16.mxu0 0
        %840 = vmatpush1.bf16.msra.mxu0 0
        %841 = vmatprep.subr.bf16.mxu0 0
        %842 = vmatpush1.bf16.msra.mxu0 0
        %843 = vmatprep.subr.bf16.mxu0 0
        %844 = vmatpush1.bf16.msra.mxu0 %v827
        %845 = vmatprep.subr.bf16.mxu0 0
        %846 = vmatpush2.bf16.msra.mxu0 0
        %847 = vmatprep.subr.bf16.mxu0 0
        %848 = vmatpush2.bf16.msra.mxu0 0
        %849 = vmatprep.subr.bf16.mxu0 0
        %850 = vmatpush2.bf16.msra.mxu0 0
        %851 = vmatprep.subr.bf16.mxu0 0
        %852 = vmatpush2.bf16.msra.mxu0 0
        %853 = vmatprep.subr.bf16.mxu0 0
        %854 = vmatpush2.bf16.msra.mxu0 0
        %855 = vmatprep.subr.bf16.mxu0 0
        %856 = vmatpush2.bf16.msra.mxu0 0
        %857 = vmatprep.subr.bf16.mxu0 0
        %858 = vmatpush2.bf16.msra.mxu0 0
        %859 = vmatprep.subr.bf16.mxu0 0
        %860 = vmatpush2.bf16.msra.mxu0 0
        %861 = vmatprep.mubr.bf16.mxu0 0
        %862 = vmatmul.mubr.bf16.gmra.mxu0 %v823
        %v863 = vpop.f32.mrf.mxu0
        %v864 = vadd.f32 %v819, %v863
        %v865 = vpop.f32.mrf.mxu0
        %v866 = vpop.f32.mrf.mxu0
        %v867 = vadd.f32 %v819, %v866
        %v868 = vpop.f32.mrf.mxu0
        %869 = vdwg.mxu0
        %v870 = vld [vmem:[%s4] sm:$0xff]
        %v871 = vld [vmem:[%s4 + $0x8] sm:$0xff]
        %v872 = vadd.f32 %v864, %v870
        %v873 = vadd.f32 %v867, %v871
        %874 = vst.msk [vmem:[#allocation2 + $0x20] sm:$0xff] %vm731, %v872
        %875 = vst.msk [vmem:[#allocation2 + $0x28] sm:$0xff] %vm731, %v873
      $region100: #{fbed_forward.8} parent=95 // pred_fallthru
        _
      %p876 = scmp.eq.s32.totalorder %s30, 4
      %p877 = scmp.eq.s32.totalorder %s30, 8
      %p878 = por %p876, %p877
      // Predicated region
      $region101: #{fbed_forward.8} parent=95 // pred_check
        %p879 = pneg %p878
      $region102: #{fbed_forward.8} parent=95 // pred_check_branch
        %881 = sbr.rel (%p879) target = $region104
      $region103: #{fbed_forward.8} parent=95 // pred_region
        %v882 = vld [vmem:[#allocation2] sm:$0xff]
        %v883 = vld [vmem:[#allocation2 + $0x8] sm:$0xff]
        %v884 = vld [vmem:[#allocation2 + $0x10] sm:$0xff]
        %v885 = vld [vmem:[#allocation2 + $0x18] sm:$0xff]
        %v886 = vld [vmem:[#allocation2 + $0x20] sm:$0xff]
        %v887 = vld [vmem:[#allocation2 + $0x28] sm:$0xff]
        %vm888 = vcmask 261120
        %v889 = vsel %vm888, %v882, 0.0
        %890 = vadd.xlane.f32.xlu0 %v889
        %v891 = vpop.xlane.xlu0 %890
        %v892 = vsel %vm888, %v883, 0.0
        %893 = vadd.xlane.f32.xlu0 %v892
        %v894 = vpop.xlane.xlu0 %893
        %v895 = vsel %vm888, %v884, 0.0
        %896 = vadd.xlane.f32.xlu0 %v895
        %v897 = vpop.xlane.xlu0 %896
        %v898 = vsel %vm888, %v885, 0.0
        %899 = vadd.xlane.f32.xlu0 %v898
        %v900 = vpop.xlane.xlu0 %899
        %v901 = vsel %vm888, %v886, 0.0
        %902 = vadd.xlane.f32.xlu0 %v901
        %v903 = vpop.xlane.xlu0 %902
        %v904 = vsel %vm888, %v887, 0.0
        %905 = vadd.xlane.f32.xlu0 %v904
        %v906 = vpop.xlane.xlu0 %905
        %v907 = vrcp.pop 32.0
        %v908 = vmul.f32 %v891, %v907
        %v909 = vmul.f32 %v894, %v907
        %v910 = vmul.f32 %v897, %v907
        %v911 = vmul.f32 %v900, %v907
        %v912 = vmul.f32 %v903, %v907
        %v913 = vmul.f32 %v906, %v907
        %v914 = vsub.f32 %v882, %v908
        %v915 = vsub.f32 %v883, %v909
        %v916 = vsub.f32 %v884, %v910
        %v917 = vsub.f32 %v885, %v911
        %v918 = vsub.f32 %v886, %v912
        %v919 = vsub.f32 %v887, %v913
        %v920 = vmul.f32 %v914, %v914
        %v921 = vmul.f32 %v915, %v915
        %v922 = vmul.f32 %v916, %v916
        %v923 = vmul.f32 %v917, %v917
        %v924 = vmul.f32 %v918, %v918
        %v925 = vmul.f32 %v919, %v919
        %v926 = vsel %vm888, %v920, 0.0
        %927 = vadd.xlane.f32.xlu0 %v926
        %v928 = vpop.xlane.xlu0 %927
        %v929 = vsel %vm888, %v921, 0.0
        %930 = vadd.xlane.f32.xlu0 %v929
        %v931 = vpop.xlane.xlu0 %930
        %v932 = vsel %vm888, %v922, 0.0
        %933 = vadd.xlane.f32.xlu0 %v932
        %v934 = vpop.xlane.xlu0 %933
        %v935 = vsel %vm888, %v923, 0.0
        %936 = vadd.xlane.f32.xlu0 %v935
        %v937 = vpop.xlane.xlu0 %936
        %v938 = vsel %vm888, %v924, 0.0
        %939 = vadd.xlane.f32.xlu0 %v938
        %v940 = vpop.xlane.xlu0 %939
        %v941 = vsel %vm888, %v925, 0.0
        %942 = vadd.xlane.f32.xlu0 %v941
        %v943 = vpop.xlane.xlu0 %942
        %v944 = vmul.f32 %v928, %v907
        %v945 = vmul.f32 %v931, %v907
        %v946 = vmul.f32 %v934, %v907
        %v947 = vmul.f32 %v937, %v907
        %v948 = vmul.f32 %v940, %v907
        %v949 = vmul.f32 %v943, %v907
        %v950 = vadd.f32 %v944, 1e-06
        %v951 = vadd.f32 %v945, 1e-06
        %v952 = vadd.f32 %v946, 1e-06
        %v953 = vadd.f32 %v947, 1e-06
        %v954 = vadd.f32 %v948, 1e-06
        %v955 = vadd.f32 %v949, 1e-06
        %v956 = vrsqrt.pop %v950
        %v957 = vrsqrt.pop %v951
        %v958 = vrsqrt.pop %v952
        %v959 = vrsqrt.pop %v953
        %v960 = vrsqrt.pop %v954
        %v961 = vrsqrt.pop %v955
        %v962 = vmul.f32 %v914, %v956
        %v963 = vmul.f32 %v915, %v957
        %v964 = vmul.f32 %v916, %v958
        %v965 = vmul.f32 %v917, %v959
        %v966 = vmul.f32 %v918, %v960
        %v967 = vmul.f32 %v919, %v961
        %968 = vst.msk [vmem:[#allocation2] sm:$0xff] %vm888, %v962
        %969 = vst.msk [vmem:[#allocation2 + $0x8] sm:$0xff] %vm888, %v963
        %970 = vst.msk [vmem:[#allocation2 + $0x10] sm:$0xff] %vm888, %v964
        %971 = vst.msk [vmem:[#allocation2 + $0x18] sm:$0xff] %vm888, %v965
        %972 = vst.msk [vmem:[#allocation2 + $0x20] sm:$0xff] %vm888, %v966
        %973 = vst.msk [vmem:[#allocation2 + $0x28] sm:$0xff] %vm888, %v967
      $region104: #{fbed_forward.8} parent=95 // pred_fallthru
        _
      %v974 = vld [vmem:[#allocation2] sm:$0xff]
      %v975 = vld [vmem:[#allocation2 + $0x8] sm:$0xff]
      %v976 = vld [vmem:[#allocation2 + $0x10] sm:$0xff]
      %v977 = vld [vmem:[#allocation2 + $0x18] sm:$0xff]
      %v978 = vld [vmem:[#allocation2 + $0x20] sm:$0xff]
      %v979 = vld [vmem:[#allocation2 + $0x28] sm:$0xff]
      %v980 = vld [vmem:[%s5] sm:$0xff]
      %v981 = vld [vmem:[%s5 + $0x8] sm:$0xff]
      %v982 = vld [vmem:[%s5 + $0x10] sm:$0xff]
      %v983 = vld [vmem:[%s5 + $0x18] sm:$0xff]
      %v984 = vld [vmem:[%s5 + $0x20] sm:$0xff]
      %v985 = vld [vmem:[%s5 + $0x28] sm:$0xff]
      %v986 = vld [vmem:[%s691] sm:$0xff]
      %v987 = vld [vmem:[%s691 + $0x8] sm:$0xff]
      %vm988 = vcmask 64512
      %v990 = vsel %vm988, %v980, 0
      %v993 = vsel %vm988, %v981, 0
      %v996 = vsel %vm988, %v982, 0
      %v999 = vsel %vm988, %v983, 0
      %v1002 = vsel %vm988, %v984, 0
      %v1005 = vsel %vm988, %v985, 0
      %1007 = vmatprep.subr.mxu0 0.0
      %1008 = vmatpush1.msra.mxu0 0.0
      %1009 = vmatprep.subr.mxu0 0.0
      %1010 = vmatpush1.msra.mxu0 0.0
      %1011 = vmatprep.subr.mxu0 0.0
      %1012 = vmatpush1.msra.mxu0 0.0
      %1013 = vmatprep.subr.mxu0 0.0
      %1014 = vmatpush1.msra.mxu0 0.0
      %1015 = vmatprep.subr.mxu0 0.0
      %1016 = vmatpush1.msra.mxu0 0.0
      %1017 = vmatprep.subr.mxu0 0.0
      %1018 = vmatpush1.msra.mxu0 0.0
      %1019 = vmatprep.subr.mxu0 0.0
      %1020 = vmatpush1.msra.mxu0 0.0
      %1021 = vmatprep.subr.mxu0 0.0
      %1022 = vmatpush1.msra.mxu0 0.0
      %1023 = vmatprep.subr.mxu0 0.0
      %1024 = vmatpush1.msra.mxu0 0.0
      %1025 = vmatprep.subr.mxu0 0.0
      %1026 = vmatpush1.msra.mxu0 0.0
      %1027 = vmatprep.subr.mxu0 0.0
      %1028 = vmatpush1.msra.mxu0 0.0
      %1029 = vmatprep.subr.mxu0 0.0
      %1030 = vmatpush1.msra.mxu0 0.0
      %1031 = vmatprep.subr.mxu0 0.0
      %1032 = vmatpush1.msra.mxu0 0.0
      %1033 = vmatprep.subr.mxu0 0.0
      %1034 = vmatpush1.msra.mxu0 0.0
      %1035 = vmatprep.subr.mxu0 0.0
      %1036 = vmatpush1.msra.mxu0 0.0
      %1037 = vmatprep.subr.mxu0 %v987
      %1038 = vmatpush1.msra.mxu0 %v986
      %1039 = vmatprep.subr.mxu0 0.0
      %1040 = vmatpush2.msra.mxu0 0.0
      %1041 = vmatprep.subr.mxu0 0.0
      %1042 = vmatpush2.msra.mxu0 0.0
      %1043 = vmatprep.subr.mxu0 0.0
      %1044 = vmatpush2.msra.mxu0 0.0
      %1045 = vmatprep.subr.mxu0 0.0
      %1046 = vmatpush2.msra.mxu0 0.0
      %1047 = vmatprep.subr.mxu0 0.0
      %1048 = vmatpush2.msra.mxu0 0.0
      %1049 = vmatprep.subr.mxu0 0.0
      %1050 = vmatpush2.msra.mxu0 0.0
      %1051 = vmatprep.subr.mxu0 0.0
      %1052 = vmatpush2.msra.mxu0 0.0
      %1053 = vmatprep.subr.mxu0 0.0
      %1054 = vmatpush2.msra.mxu0 0.0
      %1055 = vmatprep.subr.mxu0 0.0
      %1056 = vmatpush2.msra.mxu0 0.0
      %1057 = vmatprep.subr.mxu0 0.0
      %1058 = vmatpush2.msra.mxu0 0.0
      %1059 = vmatprep.subr.mxu0 0.0
      %1060 = vmatpush2.msra.mxu0 0.0
      %1061 = vmatprep.subr.mxu0 0.0
      %1062 = vmatpush2.msra.mxu0 0.0
      %1063 = vmatprep.subr.mxu0 0.0
      %1064 = vmatpush2.msra.mxu0 0.0
      %1065 = vmatprep.subr.mxu0 0.0
      %1066 = vmatpush2.msra.mxu0 0.0
      %1067 = vmatprep.subr.mxu0 0.0
      %1068 = vmatpush2.msra.mxu0 0.0
      %1069 = vmatprep.subr.mxu0 0.0
      %1070 = vmatpush2.msra.mxu0 0.0
      %1071 = vmatprep.mubr.f32.mxu0 0.0
      %1072 = vmatmul.mubr.f32.gmra.mxu0 %v990
      %v1073 = vpop.f32.mrf.mxu0
      %v1074 = vadd.f32 0.0, %v1073
      %v1075 = vpop.f32.mrf.mxu0
      %v1076 = vadd.f32 0.0, %v1075
      %1077 = vmatprep.mubr.f32.mxu0 0.0
      %1078 = vmatmul.mubr.f32.gmra.mxu0 %v993
      %v1079 = vpop.f32.mrf.mxu0
      %v1080 = vadd.f32 0.0, %v1079
      %v1081 = vpop.f32.mrf.mxu0
      %v1082 = vadd.f32 0.0, %v1081
      %1083 = vmatprep.mubr.f32.mxu0 0.0
      %1084 = vmatmul.mubr.f32.gmra.mxu0 %v996
      %v1085 = vpop.f32.mrf.mxu0
      %v1086 = vadd.f32 0.0, %v1085
      %v1087 = vpop.f32.mrf.mxu0
      %v1088 = vadd.f32 0.0, %v1087
      %1089 = vmatprep.mubr.f32.mxu0 0.0
      %1090 = vmatmul.mubr.f32.gmra.mxu0 %v999
      %v1091 = vpop.f32.mrf.mxu0
      %v1092 = vadd.f32 0.0, %v1091
      %v1093 = vpop.f32.mrf.mxu0
      %v1094 = vadd.f32 0.0, %v1093
      %1095 = vmatprep.mubr.f32.mxu0 0.0
      %1096 = vmatmul.mubr.f32.gmra.mxu0 %v1002
      %v1097 = vpop.f32.mrf.mxu0
      %v1098 = vadd.f32 0.0, %v1097
      %v1099 = vpop.f32.mrf.mxu0
      %v1100 = vadd.f32 0.0, %v1099
      %1101 = vmatprep.mubr.f32.mxu0 0.0
      %1102 = vmatmul.mubr.f32.gmra.mxu0 %v1005
      %v1103 = vpop.f32.mrf.mxu0
      %v1104 = vadd.f32 0.0, %v1103
      %v1105 = vpop.f32.mrf.mxu0
      %v1106 = vadd.f32 0.0, %v1105
      %1107 = vdwg.mxu0
      %vm1108 = vcmask 261120
      %v1109 = vsel %vm1108, %v974, 0.0
      %1110 = vadd.xlane.f32.xlu0 %v1109
      %v1111 = vpop.xlane.xlu0 %1110
      %v1112 = vsel %vm1108, %v975, 0.0
      %1113 = vadd.xlane.f32.xlu0 %v1112
      %v1114 = vpop.xlane.xlu0 %1113
      %v1115 = vsel %vm1108, %v976, 0.0
      %1116 = vadd.xlane.f32.xlu0 %v1115
      %v1117 = vpop.xlane.xlu0 %1116
      %v1118 = vsel %vm1108, %v977, 0.0
      %1119 = vadd.xlane.f32.xlu0 %v1118
      %v1120 = vpop.xlane.xlu0 %1119
      %v1121 = vsel %vm1108, %v978, 0.0
      %1122 = vadd.xlane.f32.xlu0 %v1121
      %v1123 = vpop.xlane.xlu0 %1122
      %v1124 = vsel %vm1108, %v979, 0.0
      %1125 = vadd.xlane.f32.xlu0 %v1124
      %v1126 = vpop.xlane.xlu0 %1125
      %v1127 = vrcp.pop 32.0
      %v1128 = vmul.f32 %v1111, %v1127
      %v1129 = vmul.f32 %v1114, %v1127
      %v1130 = vmul.f32 %v1117, %v1127
      %v1131 = vmul.f32 %v1120, %v1127
      %v1132 = vmul.f32 %v1123, %v1127
      %v1133 = vmul.f32 %v1126, %v1127
      %v1134 = vsub.f32 %v974, %v1128
      %v1135 = vsub.f32 %v975, %v1129
      %v1136 = vsub.f32 %v976, %v1130
      %v1137 = vsub.f32 %v977, %v1131
      %v1138 = vsub.f32 %v978, %v1132
      %v1139 = vsub.f32 %v979, %v1133
      %v1140 = vmul.f32 %v1134, %v1134
      %v1141 = vmul.f32 %v1135, %v1135
      %v1142 = vmul.f32 %v1136, %v1136
      %v1143 = vmul.f32 %v1137, %v1137
      %v1144 = vmul.f32 %v1138, %v1138
      %v1145 = vmul.f32 %v1139, %v1139
      %v1146 = vsel %vm1108, %v1140, 0.0
      %1147 = vadd.xlane.f32.xlu0 %v1146
      %v1148 = vpop.xlane.xlu0 %1147
      %v1149 = vsel %vm1108, %v1141, 0.0
      %1150 = vadd.xlane.f32.xlu0 %v1149
      %v1151 = vpop.xlane.xlu0 %1150
      %v1152 = vsel %vm1108, %v1142, 0.0
      %1153 = vadd.xlane.f32.xlu0 %v1152
      %v1154 = vpop.xlane.xlu0 %1153
      %v1155 = vsel %vm1108, %v1143, 0.0
      %1156 = vadd.xlane.f32.xlu0 %v1155
      %v1157 = vpop.xlane.xlu0 %1156
      %v1158 = vsel %vm1108, %v1144, 0.0
      %1159 = vadd.xlane.f32.xlu0 %v1158
      %v1160 = vpop.xlane.xlu0 %1159
      %v1161 = vsel %vm1108, %v1145, 0.0
      %1162 = vadd.xlane.f32.xlu0 %v1161
      %v1163 = vpop.xlane.xlu0 %1162
      %v1164 = vmul.f32 %v1148, %v1127
      %v1165 = vmul.f32 %v1151, %v1127
      %v1166 = vmul.f32 %v1154, %v1127
      %v1167 = vmul.f32 %v1157, %v1127
      %v1168 = vmul.f32 %v1160, %v1127
      %v1169 = vmul.f32 %v1163, %v1127
      %v1170 = vadd.f32 %v1164, 1e-06
      %v1171 = vadd.f32 %v1165, 1e-06
      %v1172 = vadd.f32 %v1166, 1e-06
      %v1173 = vadd.f32 %v1167, 1e-06
      %v1174 = vadd.f32 %v1168, 1e-06
      %v1175 = vadd.f32 %v1169, 1e-06
      %v1176 = vrsqrt.pop %v1170
      %v1177 = vrsqrt.pop %v1171
      %v1178 = vrsqrt.pop %v1172
      %v1179 = vrsqrt.pop %v1173
      %v1180 = vrsqrt.pop %v1174
      %v1181 = vrsqrt.pop %v1175
      %v1182 = vmul.f32 %v1134, %v1176
      %v1183 = vmul.f32 %v1135, %v1177
      %v1184 = vmul.f32 %v1136, %v1178
      %v1185 = vmul.f32 %v1137, %v1179
      %v1186 = vmul.f32 %v1138, %v1180
      %v1187 = vmul.f32 %v1139, %v1181
      %v1188 = vadd.f32 %v1074, 1.0
      %v1189 = vadd.f32 %v1080, 1.0
      %v1190 = vadd.f32 %v1086, 1.0
      %v1191 = vadd.f32 %v1092, 1.0
      %v1192 = vadd.f32 %v1098, 1.0
      %v1193 = vadd.f32 %v1104, 1.0
      %1200 = vrot.lane.b32.xlu0 %v1188, 96
      %v1201 = vpop.permute.xlu0 %1200
      %1202 = vrot.lane.b32.xlu0 %v1189, 96
      %v1203 = vpop.permute.xlu0 %1202
      %1204 = vrot.lane.b32.xlu0 %v1190, 96
      %v1205 = vpop.permute.xlu0 %1204
      %1206 = vrot.lane.b32.xlu0 %v1191, 96
      %v1207 = vpop.permute.xlu0 %1206
      %1208 = vrot.lane.b32.xlu0 %v1192, 96
      %v1209 = vpop.permute.xlu0 %1208
      %1210 = vrot.lane.b32.xlu0 %v1193, 96
      %v1211 = vpop.permute.xlu0 %1210
      %v1218 = vmul.f32 %v1182, %v1201
      %v1219 = vmul.f32 %v1183, %v1203
      %v1220 = vmul.f32 %v1184, %v1205
      %v1221 = vmul.f32 %v1185, %v1207
      %v1222 = vmul.f32 %v1186, %v1209
      %v1223 = vmul.f32 %v1187, %v1211
      %v1224 = vadd.f32 %v1218, %v1074
      %v1225 = vadd.f32 %v1219, %v1080
      %v1226 = vadd.f32 %v1220, %v1086
      %v1227 = vadd.f32 %v1221, %v1092
      %v1228 = vadd.f32 %v1222, %v1098
      %v1229 = vadd.f32 %v1223, %v1104
      %v1230 = vld [vmem:[%s696] sm:$0xf]
      %v1231 = vld [vmem:[%s696 + $0x4] sm:$0xf]
      %v1232 = vld [vmem:[%s696 + $0x8] sm:$0xf]
      %v1233 = vld [vmem:[%s696 + $0xc] sm:$0xf]
      %v1234 = vpack.c.bf16 %v1225, %v1224
      %v1235 = vpack.c.bf16 %v1227, %v1226
      %v1236 = vpack.c.bf16 %v1229, %v1228
      %v1237 = vld [vmem:[%s699] sm:$0x1]
      %v1239 = vlaneseq
      %v1240 = vshrl.u32 %v1239, 7
      %v1241 = vsub.s32 0, %v1240
      %v1242 = vrot.slane %v1237, %v1241
      %v1248 = vunpack.c.l.b16 %v1230
      %v1249 = vunpack.c.l.b16 %v1231
      %v1250 = vunpack.c.l.b16 %v1232
      %v1251 = vunpack.c.l.b16 %v1233
      %v1252 = vpack.c.b16 %v1249, %v1248
      %v1253 = vpack.c.b16 %v1251, %v1250
      %v1257 = vsel %vm1108, %v1234, 0
      %v1260 = vsel %vm1108, %v1235, 0
      %v1263 = vsel %vm1108, %v1236, 0
      %1265 = vmatprep.subr.bf16.mxu0 0
      %1266 = vmatpush1.bf16.msra.mxu0 0
      %1267 = vmatprep.subr.bf16.mxu0 0
      %1268 = vmatpush1.bf16.msra.mxu0 0
      %1269 = vmatprep.subr.bf16.mxu0 0
      %1270 = vmatpush1.bf16.msra.mxu0 0
      %1271 = vmatprep.subr.bf16.mxu0 0
      %1272 = vmatpush1.bf16.msra.mxu0 0
      %1273 = vmatprep.subr.bf16.mxu0 0
      %1274 = vmatpush1.bf16.msra.mxu0 0
      %1275 = vmatprep.subr.bf16.mxu0 0
      %1276 = vmatpush1.bf16.msra.mxu0 0
      %1277 = vmatprep.subr.bf16.mxu0 0
      %1278 = vmatpush1.bf16.msra.mxu0 %v1253
      %1279 = vmatprep.subr.bf16.mxu0 0
      %1280 = vmatpush1.bf16.msra.mxu0 %v1252
      %1281 = vmatprep.subr.bf16.mxu0 0
      %1282 = vmatpush2.bf16.msra.mxu0 0
      %1283 = vmatprep.subr.bf16.mxu0 0
      %1284 = vmatpush2.bf16.msra.mxu0 0
      %1285 = vmatprep.subr.bf16.mxu0 0
      %1286 = vmatpush2.bf16.msra.mxu0 0
      %1287 = vmatprep.subr.bf16.mxu0 0
      %1288 = vmatpush2.bf16.msra.mxu0 0
      %1289 = vmatprep.subr.bf16.mxu0 0
      %1290 = vmatpush2.bf16.msra.mxu0 0
      %1291 = vmatprep.subr.bf16.mxu0 0
      %1292 = vmatpush2.bf16.msra.mxu0 0
      %1293 = vmatprep.subr.bf16.mxu0 0
      %1294 = vmatpush2.bf16.msra.mxu0 0
      %1295 = vmatprep.subr.bf16.mxu0 0
      %1296 = vmatpush2.bf16.msra.mxu0 0
      %1297 = vmatprep.mubr.bf16.mxu0 0
      %1298 = vmatmul.mubr.bf16.gmra.mxu0 %v1257
      %v1299 = vpop.f32.mrf.mxu0
      %v1300 = vadd.f32 %v1242, %v1299
      %v1301 = vpop.f32.mrf.mxu0
      %v1302 = vpop.f32.mrf.mxu0
      %v1303 = vadd.f32 %v1242, %v1302
      %v1304 = vpop.f32.mrf.mxu0
      %1305 = vmatprep.mubr.bf16.mxu0 0
      %1306 = vmatmul.mubr.bf16.gmra.mxu0 %v1260
      %v1307 = vpop.f32.mrf.mxu0
      %v1308 = vadd.f32 %v1242, %v1307
      %v1309 = vpop.f32.mrf.mxu0
      %v1310 = vpop.f32.mrf.mxu0
      %v1311 = vadd.f32 %v1242, %v1310
      %v1312 = vpop.f32.mrf.mxu0
      %1313 = vmatprep.mubr.bf16.mxu0 0
      %1314 = vmatmul.mubr.bf16.gmra.mxu0 %v1263
      %v1315 = vpop.f32.mrf.mxu0
      %v1316 = vadd.f32 %v1242, %v1315
      %v1317 = vpop.f32.mrf.mxu0
      %v1318 = vpop.f32.mrf.mxu0
      %v1319 = vadd.f32 %v1242, %v1318
      %v1320 = vpop.f32.mrf.mxu0
      %1321 = vdwg.mxu0
      %v1322 = vmul.f32 %v1300, 0.35355338
      %v1323 = vmul.f32 %v1303, 0.35355338
      %v1324 = vmul.f32 %v1308, 0.35355338
      %v1325 = vmul.f32 %v1311, 0.35355338
      %v1326 = vmul.f32 %v1316, 0.35355338
      %v1327 = vmul.f32 %v1319, 0.35355338
      %v1328 = vpack.c.bf16 %v1323, %v1322
      %v1329 = vpack.c.bf16 %v1325, %v1324
      %v1330 = vpack.c.bf16 %v1327, %v1326
      %v1331 = vpack.c.bf16 %v1303, %v1300
      %v1332 = vpack.c.bf16 %v1311, %v1308
      %v1333 = vpack.c.bf16 %v1319, %v1316
      %1337 = vrot.lane.b32.xlu0 %v1331, 96
      %v1338 = vpop.permute.xlu0 %1337
      %1339 = vrot.lane.b32.xlu0 %v1332, 96
      %v1340 = vpop.permute.xlu0 %1339
      %1341 = vrot.lane.b32.xlu0 %v1333, 96
      %v1342 = vpop.permute.xlu0 %1341
      %v1344 = vsel %vm988, %v1328, 0
      %v1347 = vsel %vm988, %v1329, 0
      %v1350 = vsel %vm988, %v1330, 0
      %v1353 = vsel %vm988, %v1338, 0
      %v1356 = vsel %vm988, %v1340, 0
      %v1359 = vsel %vm988, %v1342, 0
      %1361 = vmatprep.subr.bf16.mxu0 0
      %1362 = vmatpush1.bf16.xpose.msra.mxu0 0
      %1363 = vmatprep.subr.bf16.mxu0 0
      %1364 = vmatpush1.bf16.xpose.msra.mxu0 0
      %1365 = vmatprep.subr.bf16.mxu0 0
      %1366 = vmatpush1.bf16.xpose.msra.mxu0 0
      %1367 = vmatprep.subr.bf16.mxu0 0
      %1368 = vmatpush1.bf16.xpose.msra.mxu0 0
      %1369 = vmatprep.subr.bf16.mxu0 0
      %1370 = vmatpush1.bf16.xpose.msra.mxu0 0
      %1371 = vmatprep.subr.bf16.mxu0 0
      %1372 = vmatpush1.bf16.xpose.msra.mxu0 %v1359
      %1373 = vmatprep.subr.bf16.mxu0 0
      %1374 = vmatpush1.bf16.xpose.msra.mxu0 %v1356
      %1375 = vmatprep.subr.bf16.mxu0 0
      %1376 = vmatpush1.bf16.xpose.msra.mxu0 %v1353
      %1377 = vmatprep.subr.bf16.mxu0 0
      %1378 = vmatpush2.bf16.xpose.msra.mxu0 0
      %1379 = vmatprep.subr.bf16.mxu0 0
      %1380 = vmatpush2.bf16.xpose.msra.mxu0 0
      %1381 = vmatprep.subr.bf16.mxu0 0
      %1382 = vmatpush2.bf16.xpose.msra.mxu0 0
      %1383 = vmatprep.subr.bf16.mxu0 0
      %1384 = vmatpush2.bf16.xpose.msra.mxu0 0
      %1385 = vmatprep.subr.bf16.mxu0 0
      %1386 = vmatpush2.bf16.xpose.msra.mxu0 0
      %1387 = vmatprep.subr.bf16.mxu0 0
      %1388 = vmatpush2.bf16.xpose.msra.mxu0 0
      %1389 = vmatprep.subr.bf16.mxu0 0
      %1390 = vmatpush2.bf16.xpose.msra.mxu0 0
      %1391 = vmatprep.subr.bf16.mxu0 0
      %1392 = vmatpush2.bf16.xpose.msra.mxu0 0
      %1393 = vmatprep.mubr.bf16.mxu0 0
      %1394 = vmatmul.mubr.bf16.gmra.mxu0 %v1344
      %v1395 = vpop.f32.mrf.mxu0
      %v1396 = vadd.f32 0.0, %v1395
      %v1397 = vpop.f32.mrf.mxu0
      %v1398 = vpop.f32.mrf.mxu0
      %v1399 = vadd.f32 0.0, %v1398
      %v1400 = vpop.f32.mrf.mxu0
      %1401 = vmatprep.mubr.bf16.mxu0 0
      %1402 = vmatmul.mubr.bf16.gmra.mxu0 %v1347
      %v1403 = vpop.f32.mrf.mxu0
      %v1404 = vadd.f32 0.0, %v1403
      %v1405 = vpop.f32.mrf.mxu0
      %v1406 = vpop.f32.mrf.mxu0
      %v1407 = vadd.f32 0.0, %v1406
      %v1408 = vpop.f32.mrf.mxu0
      %1409 = vmatprep.mubr.bf16.mxu0 0
      %1410 = vmatmul.mubr.bf16.gmra.mxu0 %v1350
      %v1411 = vpop.f32.mrf.mxu0
      %v1412 = vadd.f32 0.0, %v1411
      %v1413 = vpop.f32.mrf.mxu0
      %v1414 = vpop.f32.mrf.mxu0
      %v1415 = vadd.f32 0.0, %v1414
      %v1416 = vpop.f32.mrf.mxu0
      %1417 = vdwg.mxu0
      %vm1418 = vcmask 392192
      %v1419 = vsel %vm1418, %v1396, -inf
      %1420 = vmax.xlane.f32.xlu0 %v1419
      %v1421 = vpop.xlane.xlu0 %1420
      %v1422 = vsel %vm1418, %v1399, -inf
      %1423 = vmax.xlane.f32.xlu0 %v1422
      %v1424 = vpop.xlane.xlu0 %1423
      %v1425 = vsel %vm1418, %v1404, -inf
      %1426 = vmax.xlane.f32.xlu0 %v1425
      %v1427 = vpop.xlane.xlu0 %1426
      %v1428 = vsel %vm1418, %v1407, -inf
      %1429 = vmax.xlane.f32.xlu0 %v1428
      %v1430 = vpop.xlane.xlu0 %1429
      %v1431 = vsel %vm1418, %v1412, -inf
      %1432 = vmax.xlane.f32.xlu0 %v1431
      %v1433 = vpop.xlane.xlu0 %1432
      %v1434 = vsel %vm1418, %v1415, -inf
      %1435 = vmax.xlane.f32.xlu0 %v1434
      %v1436 = vpop.xlane.xlu0 %1435
      %v1437 = vsub.f32 %v1396, %v1421
      %v1438 = vsub.f32 %v1399, %v1424
      %v1439 = vsub.f32 %v1404, %v1427
      %v1440 = vsub.f32 %v1407, %v1430
      %v1441 = vsub.f32 %v1412, %v1433
      %v1442 = vsub.f32 %v1415, %v1436
      %v1443 = vmul.f32 %v1437, 1.442695
      %v1444 = vpow.pop %v1443
      %v1445 = vmul.f32 %v1438, 1.442695
      %v1446 = vpow.pop %v1445
      %v1447 = vmul.f32 %v1439, 1.442695
      %v1448 = vpow.pop %v1447
      %v1449 = vmul.f32 %v1440, 1.442695
      %v1450 = vpow.pop %v1449
      %v1451 = vmul.f32 %v1441, 1.442695
      %v1452 = vpow.pop %v1451
      %v1453 = vmul.f32 %v1442, 1.442695
      %v1454 = vpow.pop %v1453
      %v1455 = vsel %vm1418, %v1444, 0.0
      %1456 = vadd.xlane.f32.xlu0 %v1455
      %v1457 = vpop.xlane.xlu0 %1456
      %v1458 = vsel %vm1418, %v1446, 0.0
      %1459 = vadd.xlane.f32.xlu0 %v1458
      %v1460 = vpop.xlane.xlu0 %1459
      %v1461 = vsel %vm1418, %v1448, 0.0
      %1462 = vadd.xlane.f32.xlu0 %v1461
      %v1463 = vpop.xlane.xlu0 %1462
      %v1464 = vsel %vm1418, %v1450, 0.0
      %1465 = vadd.xlane.f32.xlu0 %v1464
      %v1466 = vpop.xlane.xlu0 %1465
      %v1467 = vsel %vm1418, %v1452, 0.0
      %1468 = vadd.xlane.f32.xlu0 %v1467
      %v1469 = vpop.xlane.xlu0 %1468
      %v1470 = vsel %vm1418, %v1454, 0.0
      %1471 = vadd.xlane.f32.xlu0 %v1470
      %v1472 = vpop.xlane.xlu0 %1471
      %v1473 = vrcp.pop %v1457
      %v1474 = vrcp.pop %v1460
      %v1475 = vrcp.pop %v1463
      %v1476 = vrcp.pop %v1466
      %v1477 = vrcp.pop %v1469
      %v1478 = vrcp.pop %v1472
      %v1479 = vmul.f32 %v1444, %v1473
      %v1480 = vmul.f32 %v1446, %v1474
      %v1481 = vmul.f32 %v1448, %v1475
      %v1482 = vmul.f32 %v1450, %v1476
      %v1483 = vmul.f32 %v1452, %v1477
      %v1484 = vmul.f32 %v1454, %v1478
      %v1485 = vpack.c.bf16 %v1480, %v1479
      %v1486 = vpack.c.bf16 %v1482, %v1481
      %v1487 = vpack.c.bf16 %v1484, %v1483
      %1488 = vrot.lane.b32.xlu0 %v1331, 64
      %v1489 = vpop.permute.xlu0 %1488
      %1490 = vrot.lane.b32.xlu0 %v1332, 64
      %v1491 = vpop.permute.xlu0 %1490
      %1492 = vrot.lane.b32.xlu0 %v1333, 64
      %v1493 = vpop.permute.xlu0 %1492
      %v1498 = vsel %vm1418, %v1485, 0
      %v1501 = vsel %vm1418, %v1486, 0
      %v1504 = vsel %vm1418, %v1487, 0
      %1506 = vmatprep.subr.bf16.mxu0 0
      %1507 = vmatpush1.bf16.msra.mxu0 0
      %1508 = vmatprep.subr.bf16.mxu0 0
      %1509 = vmatpush1.bf16.msra.mxu0 0
      %1510 = vmatprep.subr.bf16.mxu0 0
      %1511 = vmatpush1.bf16.msra.mxu0 0
      %1512 = vmatprep.subr.bf16.mxu0 0
      %1513 = vmatpush1.bf16.msra.mxu0 0
      %1514 = vmatprep.subr.bf16.mxu0 0
      %1515 = vmatpush1.bf16.msra.mxu0 0
      %1516 = vmatprep.subr.bf16.mxu0 0
      %1517 = vmatpush1.bf16.msra.mxu0 %v1493
      %1518 = vmatprep.subr.bf16.mxu0 0
      %1519 = vmatpush1.bf16.msra.mxu0 %v1491
      %1520 = vmatprep.subr.bf16.mxu0 0
      %1521 = vmatpush1.bf16.msra.mxu0 %v1489
      %1522 = vmatprep.subr.bf16.mxu0 0
      %1523 = vmatpush2.bf16.msra.mxu0 0
      %1524 = vmatprep.subr.bf16.mxu0 0
      %1525 = vmatpush2.bf16.msra.mxu0 0
      %1526 = vmatprep.subr.bf16.mxu0 0
      %1527 = vmatpush2.bf16.msra.mxu0 0
      %1528 = vmatprep.subr.bf16.mxu0 0
      %1529 = vmatpush2.bf16.msra.mxu0 0
      %1530 = vmatprep.subr.bf16.mxu0 0
      %1531 = vmatpush2.bf16.msra.mxu0 0
      %1532 = vmatprep.subr.bf16.mxu0 0
      %1533 = vmatpush2.bf16.msra.mxu0 0
      %1534 = vmatprep.subr.bf16.mxu0 0
      %1535 = vmatpush2.bf16.msra.mxu0 0
      %1536 = vmatprep.subr.bf16.mxu0 0
      %1537 = vmatpush2.bf16.msra.mxu0 0
      %1538 = vmatprep.mubr.bf16.mxu0 0
      %1539 = vmatmul.mubr.bf16.gmra.mxu0 %v1498
      %v1540 = vpop.f32.mrf.mxu0
      %v1541 = vadd.f32 0.0, %v1540
      %v1542 = vpop.f32.mrf.mxu0
      %v1543 = vpop.f32.mrf.mxu0
      %v1544 = vadd.f32 0.0, %v1543
      %v1545 = vpop.f32.mrf.mxu0
      %1546 = vmatprep.mubr.bf16.mxu0 0
      %1547 = vmatmul.mubr.bf16.gmra.mxu0 %v1501
      %v1548 = vpop.f32.mrf.mxu0
      %v1549 = vadd.f32 0.0, %v1548
      %v1550 = vpop.f32.mrf.mxu0
      %v1551 = vpop.f32.mrf.mxu0
      %v1552 = vadd.f32 0.0, %v1551
      %v1553 = vpop.f32.mrf.mxu0
      %1554 = vmatprep.mubr.bf16.mxu0 0
      %1555 = vmatmul.mubr.bf16.gmra.mxu0 %v1504
      %v1556 = vpop.f32.mrf.mxu0
      %v1557 = vadd.f32 0.0, %v1556
      %v1558 = vpop.f32.mrf.mxu0
      %v1559 = vpop.f32.mrf.mxu0
      %v1560 = vadd.f32 0.0, %v1559
      %v1561 = vpop.f32.mrf.mxu0
      %1562 = vdwg.mxu0
      %1566 = vrot.lane.b32.xlu0 %v1328, 120
      %v1567 = vpop.permute.xlu0 %1566
      %1568 = vrot.lane.b32.xlu0 %v1329, 120
      %v1569 = vpop.permute.xlu0 %1568
      %1570 = vrot.lane.b32.xlu0 %v1330, 120
      %v1571 = vpop.permute.xlu0 %1570
      %1572 = vrot.lane.b32.xlu0 %v1331, 88
      %v1573 = vpop.permute.xlu0 %1572
      %1574 = vrot.lane.b32.xlu0 %v1332, 88
      %v1575 = vpop.permute.xlu0 %1574
      %1576 = vrot.lane.b32.xlu0 %v1333, 88
      %v1577 = vpop.permute.xlu0 %1576
      %v1579 = vsel %vm988, %v1567, 0
      %v1582 = vsel %vm988, %v1569, 0
      %v1585 = vsel %vm988, %v1571, 0
      %v1588 = vsel %vm988, %v1573, 0
      %v1591 = vsel %vm988, %v1575, 0
      %v1594 = vsel %vm988, %v1577, 0
      %1596 = vmatprep.subr.bf16.mxu0 0
      %1597 = vmatpush1.bf16.xpose.msra.mxu0 0
      %1598 = vmatprep.subr.bf16.mxu0 0
      %1599 = vmatpush1.bf16.xpose.msra.mxu0 0
      %1600 = vmatprep.subr.bf16.mxu0 0
      %1601 = vmatpush1.bf16.xpose.msra.mxu0 0
      %1602 = vmatprep.subr.bf16.mxu0 0
      %1603 = vmatpush1.bf16.xpose.msra.mxu0 0
      %1604 = vmatprep.subr.bf16.mxu0 0
      %1605 = vmatpush1.bf16.xpose.msra.mxu0 0
      %1606 = vmatprep.subr.bf16.mxu0 0
      %1607 = vmatpush1.bf16.xpose.msra.mxu0 %v1594
      %1608 = vmatprep.subr.bf16.mxu0 0
      %1609 = vmatpush1.bf16.xpose.msra.mxu0 %v1591
      %1610 = vmatprep.subr.bf16.mxu0 0
      %1611 = vmatpush1.bf16.xpose.msra.mxu0 %v1588
      %1612 = vmatprep.subr.bf16.mxu0 0
      %1613 = vmatpush2.bf16.xpose.msra.mxu0 0
      %1614 = vmatprep.subr.bf16.mxu0 0
      %1615 = vmatpush2.bf16.xpose.msra.mxu0 0
      %1616 = vmatprep.subr.bf16.mxu0 0
      %1617 = vmatpush2.bf16.xpose.msra.mxu0 0
      %1618 = vmatprep.subr.bf16.mxu0 0
      %1619 = vmatpush2.bf16.xpose.msra.mxu0 0
      %1620 = vmatprep.subr.bf16.mxu0 0
      %1621 = vmatpush2.bf16.xpose.msra.mxu0 0
      %1622 = vmatprep.subr.bf16.mxu0 0
      %1623 = vmatpush2.bf16.xpose.msra.mxu0 0
      %1624 = vmatprep.subr.bf16.mxu0 0
      %1625 = vmatpush2.bf16.xpose.msra.mxu0 0
      %1626 = vmatprep.subr.bf16.mxu0 0
      %1627 = vmatpush2.bf16.xpose.msra.mxu0 0
      %1628 = vmatprep.mubr.bf16.mxu0 0
      %1629 = vmatmul.mubr.bf16.gmra.mxu0 %v1579
      %v1630 = vpop.f32.mrf.mxu0
      %v1631 = vadd.f32 0.0, %v1630
      %v1632 = vpop.f32.mrf.mxu0
      %v1633 = vpop.f32.mrf.mxu0
      %v1634 = vadd.f32 0.0, %v1633
      %v1635 = vpop.f32.mrf.mxu0
      %1636 = vmatprep.mubr.bf16.mxu0 0
      %1637 = vmatmul.mubr.bf16.gmra.mxu0 %v1582
      %v1638 = vpop.f32.mrf.mxu0
      %v1639 = vadd.f32 0.0, %v1638
      %v1640 = vpop.f32.mrf.mxu0
      %v1641 = vpop.f32.mrf.mxu0
      %v1642 = vadd.f32 0.0, %v1641
      %v1643 = vpop.f32.mrf.mxu0
      %1644 = vmatprep.mubr.bf16.mxu0 0
      %1645 = vmatmul.mubr.bf16.gmra.mxu0 %v1585
      %v1646 = vpop.f32.mrf.mxu0
      %v1647 = vadd.f32 0.0, %v1646
      %v1648 = vpop.f32.mrf.mxu0
      %v1649 = vpop.f32.mrf.mxu0
      %v1650 = vadd.f32 0.0, %v1649
      %v1651 = vpop.f32.mrf.mxu0
      %1652 = vdwg.mxu0
      %v1653 = vsel %vm1418, %v1631, -inf
      %1654 = vmax.xlane.f32.xlu0 %v1653
      %v1655 = vpop.xlane.xlu0 %1654
      %v1656 = vsel %vm1418, %v1634, -inf
      %1657 = vmax.xlane.f32.xlu0 %v1656
      %v1658 = vpop.xlane.xlu0 %1657
      %v1659 = vsel %vm1418, %v1639, -inf
      %1660 = vmax.xlane.f32.xlu0 %v1659
      %v1661 = vpop.xlane.xlu0 %1660
      %v1662 = vsel %vm1418, %v1642, -inf
      %1663 = vmax.xlane.f32.xlu0 %v1662
      %v1664 = vpop.xlane.xlu0 %1663
      %v1665 = vsel %vm1418, %v1647, -inf
      %1666 = vmax.xlane.f32.xlu0 %v1665
      %v1667 = vpop.xlane.xlu0 %1666
      %v1668 = vsel %vm1418, %v1650, -inf
      %1669 = vmax.xlane.f32.xlu0 %v1668
      %v1670 = vpop.xlane.xlu0 %1669
      %v1671 = vsub.f32 %v1631, %v1655
      %v1672 = vsub.f32 %v1634, %v1658
      %v1673 = vsub.f32 %v1639, %v1661
      %v1674 = vsub.f32 %v1642, %v1664
      %v1675 = vsub.f32 %v1647, %v1667
      %v1676 = vsub.f32 %v1650, %v1670
      %v1677 = vmul.f32 %v1671, 1.442695
      %v1678 = vpow.pop %v1677
      %v1679 = vmul.f32 %v1672, 1.442695
      %v1680 = vpow.pop %v1679
      %v1681 = vmul.f32 %v1673, 1.442695
      %v1682 = vpow.pop %v1681
      %v1683 = vmul.f32 %v1674, 1.442695
      %v1684 = vpow.pop %v1683
      %v1685 = vmul.f32 %v1675, 1.442695
      %v1686 = vpow.pop %v1685
      %v1687 = vmul.f32 %v1676, 1.442695
      %v1688 = vpow.pop %v1687
      %v1689 = vsel %vm1418, %v1678, 0.0
      %1690 = vadd.xlane.f32.xlu0 %v1689
      %v1691 = vpop.xlane.xlu0 %1690
      %v1692 = vsel %vm1418, %v1680, 0.0
      %1693 = vadd.xlane.f32.xlu0 %v1692
      %v1694 = vpop.xlane.xlu0 %1693
      %v1695 = vsel %vm1418, %v1682, 0.0
      %1696 = vadd.xlane.f32.xlu0 %v1695
      %v1697 = vpop.xlane.xlu0 %1696
      %v1698 = vsel %vm1418, %v1684, 0.0
      %1699 = vadd.xlane.f32.xlu0 %v1698
      %v1700 = vpop.xlane.xlu0 %1699
      %v1701 = vsel %vm1418, %v1686, 0.0
      %1702 = vadd.xlane.f32.xlu0 %v1701
      %v1703 = vpop.xlane.xlu0 %1702
      %v1704 = vsel %vm1418, %v1688, 0.0
      %1705 = vadd.xlane.f32.xlu0 %v1704
      %v1706 = vpop.xlane.xlu0 %1705
      %v1707 = vrcp.pop %v1691
      %v1708 = vrcp.pop %v1694
      %v1709 = vrcp.pop %v1697
      %v1710 = vrcp.pop %v1700
      %v1711 = vrcp.pop %v1703
      %v1712 = vrcp.pop %v1706
      %v1713 = vmul.f32 %v1678, %v1707
      %v1714 = vmul.f32 %v1680, %v1708
      %v1715 = vmul.f32 %v1682, %v1709
      %v1716 = vmul.f32 %v1684, %v1710
      %v1717 = vmul.f32 %v1686, %v1711
      %v1718 = vmul.f32 %v1688, %v1712
      %v1719 = vpack.c.bf16 %v1714, %v1713
      %v1720 = vpack.c.bf16 %v1716, %v1715
      %v1721 = vpack.c.bf16 %v1718, %v1717
      %1722 = vrot.lane.b32.xlu0 %v1331, 56
      %v1723 = vpop.permute.xlu0 %1722
      %1724 = vrot.lane.b32.xlu0 %v1332, 56
      %v1725 = vpop.permute.xlu0 %1724
      %1726 = vrot.lane.b32.xlu0 %v1333, 56
      %v1727 = vpop.permute.xlu0 %1726
      %v1732 = vsel %vm1418, %v1719, 0
      %v1735 = vsel %vm1418, %v1720, 0
      %v1738 = vsel %vm1418, %v1721, 0
      %1740 = vmatprep.subr.bf16.mxu0 0
      %1741 = vmatpush1.bf16.msra.mxu0 0
      %1742 = vmatprep.subr.bf16.mxu0 0
      %1743 = vmatpush1.bf16.msra.mxu0 0
      %1744 = vmatprep.subr.bf16.mxu0 0
      %1745 = vmatpush1.bf16.msra.mxu0 0
      %1746 = vmatprep.subr.bf16.mxu0 0
      %1747 = vmatpush1.bf16.msra.mxu0 0
      %1748 = vmatprep.subr.bf16.mxu0 0
      %1749 = vmatpush1.bf16.msra.mxu0 0
      %1750 = vmatprep.subr.bf16.mxu0 0
      %1751 = vmatpush1.bf16.msra.mxu0 %v1727
      %1752 = vmatprep.subr.bf16.mxu0 0
      %1753 = vmatpush1.bf16.msra.mxu0 %v1725
      %1754 = vmatprep.subr.bf16.mxu0 0
      %1755 = vmatpush1.bf16.msra.mxu0 %v1723
      %1756 = vmatprep.subr.bf16.mxu0 0
      %1757 = vmatpush2.bf16.msra.mxu0 0
      %1758 = vmatprep.subr.bf16.mxu0 0
      %1759 = vmatpush2.bf16.msra.mxu0 0
      %1760 = vmatprep.subr.bf16.mxu0 0
      %1761 = vmatpush2.bf16.msra.mxu0 0
      %1762 = vmatprep.subr.bf16.mxu0 0
      %1763 = vmatpush2.bf16.msra.mxu0 0
      %1764 = vmatprep.subr.bf16.mxu0 0
      %1765 = vmatpush2.bf16.msra.mxu0 0
      %1766 = vmatprep.subr.bf16.mxu0 0
      %1767 = vmatpush2.bf16.msra.mxu0 0
      %1768 = vmatprep.subr.bf16.mxu0 0
      %1769 = vmatpush2.bf16.msra.mxu0 0
      %1770 = vmatprep.subr.bf16.mxu0 0
      %1771 = vmatpush2.bf16.msra.mxu0 0
      %1772 = vmatprep.mubr.bf16.mxu0 0
      %1773 = vmatmul.mubr.bf16.gmra.mxu0 %v1732
      %v1774 = vpop.f32.mrf.mxu0
      %v1775 = vadd.f32 0.0, %v1774
      %v1776 = vpop.f32.mrf.mxu0
      %v1777 = vpop.f32.mrf.mxu0
      %v1778 = vadd.f32 0.0, %v1777
      %v1779 = vpop.f32.mrf.mxu0
      %1780 = vmatprep.mubr.bf16.mxu0 0
      %1781 = vmatmul.mubr.bf16.gmra.mxu0 %v1735
      %v1782 = vpop.f32.mrf.mxu0
      %v1783 = vadd.f32 0.0, %v1782
      %v1784 = vpop.f32.mrf.mxu0
      %v1785 = vpop.f32.mrf.mxu0
      %v1786 = vadd.f32 0.0, %v1785
      %v1787 = vpop.f32.mrf.mxu0
      %1788 = vmatprep.mubr.bf16.mxu0 0
      %1789 = vmatmul.mubr.bf16.gmra.mxu0 %v1738
      %v1790 = vpop.f32.mrf.mxu0
      %v1791 = vadd.f32 0.0, %v1790
      %v1792 = vpop.f32.mrf.mxu0
      %v1793 = vpop.f32.mrf.mxu0
      %v1794 = vadd.f32 0.0, %v1793
      %v1795 = vpop.f32.mrf.mxu0
      %1796 = vdwg.mxu0
      %1797 = vrot.lane.b32.xlu0 %v1328, 112
      %v1798 = vpop.permute.xlu0 %1797
      %1799 = vrot.lane.b32.xlu0 %v1329, 112
      %v1800 = vpop.permute.xlu0 %1799
      %1801 = vrot.lane.b32.xlu0 %v1330, 112
      %v1802 = vpop.permute.xlu0 %1801
      %1803 = vrot.lane.b32.xlu0 %v1331, 80
      %v1804 = vpop.permute.xlu0 %1803
      %1805 = vrot.lane.b32.xlu0 %v1332, 80
      %v1806 = vpop.permute.xlu0 %1805
      %1807 = vrot.lane.b32.xlu0 %v1333, 80
      %v1808 = vpop.permute.xlu0 %1807
      %v1810 = vsel %vm988, %v1798, 0
      %v1813 = vsel %vm988, %v1800, 0
      %v1816 = vsel %vm988, %v1802, 0
      %v1819 = vsel %vm988, %v1804, 0
      %v1822 = vsel %vm988, %v1806, 0
      %v1825 = vsel %vm988, %v1808, 0
      %1827 = vmatprep.subr.bf16.mxu0 0
      %1828 = vmatpush1.bf16.xpose.msra.mxu0 0
      %1829 = vmatprep.subr.bf16.mxu0 0
      %1830 = vmatpush1.bf16.xpose.msra.mxu0 0
      %1831 = vmatprep.subr.bf16.mxu0 0
      %1832 = vmatpush1.bf16.xpose.msra.mxu0 0
      %1833 = vmatprep.subr.bf16.mxu0 0
      %1834 = vmatpush1.bf16.xpose.msra.mxu0 0
      %1835 = vmatprep.subr.bf16.mxu0 0
      %1836 = vmatpush1.bf16.xpose.msra.mxu0 0
      %1837 = vmatprep.subr.bf16.mxu0 0
      %1838 = vmatpush1.bf16.xpose.msra.mxu0 %v1825
      %1839 = vmatprep.subr.bf16.mxu0 0
      %1840 = vmatpush1.bf16.xpose.msra.mxu0 %v1822
      %1841 = vmatprep.subr.bf16.mxu0 0
      %1842 = vmatpush1.bf16.xpose.msra.mxu0 %v1819
      %1843 = vmatprep.subr.bf16.mxu0 0
      %1844 = vmatpush2.bf16.xpose.msra.mxu0 0
      %1845 = vmatprep.subr.bf16.mxu0 0
      %1846 = vmatpush2.bf16.xpose.msra.mxu0 0
      %1847 = vmatprep.subr.bf16.mxu0 0
      %1848 = vmatpush2.bf16.xpose.msra.mxu0 0
      %1849 = vmatprep.subr.bf16.mxu0 0
      %1850 = vmatpush2.bf16.xpose.msra.mxu0 0
      %1851 = vmatprep.subr.bf16.mxu0 0
      %1852 = vmatpush2.bf16.xpose.msra.mxu0 0
      %1853 = vmatprep.subr.bf16.mxu0 0
      %1854 = vmatpush2.bf16.xpose.msra.mxu0 0
      %1855 = vmatprep.subr.bf16.mxu0 0
      %1856 = vmatpush2.bf16.xpose.msra.mxu0 0
      %1857 = vmatprep.subr.bf16.mxu0 0
      %1858 = vmatpush2.bf16.xpose.msra.mxu0 0
      %1859 = vmatprep.mubr.bf16.mxu0 0
      %1860 = vmatmul.mubr.bf16.gmra.mxu0 %v1810
      %v1861 = vpop.f32.mrf.mxu0
      %v1862 = vadd.f32 0.0, %v1861
      %v1863 = vpop.f32.mrf.mxu0
      %v1864 = vpop.f32.mrf.mxu0
      %v1865 = vadd.f32 0.0, %v1864
      %v1866 = vpop.f32.mrf.mxu0
      %1867 = vmatprep.mubr.bf16.mxu0 0
      %1868 = vmatmul.mubr.bf16.gmra.mxu0 %v1813
      %v1869 = vpop.f32.mrf.mxu0
      %v1870 = vadd.f32 0.0, %v1869
      %v1871 = vpop.f32.mrf.mxu0
      %v1872 = vpop.f32.mrf.mxu0
      %v1873 = vadd.f32 0.0, %v1872
      %v1874 = vpop.f32.mrf.mxu0
      %1875 = vmatprep.mubr.bf16.mxu0 0
      %1876 = vmatmul.mubr.bf16.gmra.mxu0 %v1816
      %v1877 = vpop.f32.mrf.mxu0
      %v1878 = vadd.f32 0.0, %v1877
      %v1879 = vpop.f32.mrf.mxu0
      %v1880 = vpop.f32.mrf.mxu0
      %v1881 = vadd.f32 0.0, %v1880
      %v1882 = vpop.f32.mrf.mxu0
      %1883 = vdwg.mxu0
      %v1884 = vsel %vm1418, %v1862, -inf
      %1885 = vmax.xlane.f32.xlu0 %v1884
      %v1886 = vpop.xlane.xlu0 %1885
      %v1887 = vsel %vm1418, %v1865, -inf
      %1888 = vmax.xlane.f32.xlu0 %v1887
      %v1889 = vpop.xlane.xlu0 %1888
      %v1890 = vsel %vm1418, %v1870, -inf
      %1891 = vmax.xlane.f32.xlu0 %v1890
      %v1892 = vpop.xlane.xlu0 %1891
      %v1893 = vsel %vm1418, %v1873, -inf
      %1894 = vmax.xlane.f32.xlu0 %v1893
      %v1895 = vpop.xlane.xlu0 %1894
      %v1896 = vsel %vm1418, %v1878, -inf
      %1897 = vmax.xlane.f32.xlu0 %v1896
      %v1898 = vpop.xlane.xlu0 %1897
      %v1899 = vsel %vm1418, %v1881, -inf
      %1900 = vmax.xlane.f32.xlu0 %v1899
      %v1901 = vpop.xlane.xlu0 %1900
      %v1902 = vsub.f32 %v1862, %v1886
      %v1903 = vsub.f32 %v1865, %v1889
      %v1904 = vsub.f32 %v1870, %v1892
      %v1905 = vsub.f32 %v1873, %v1895
      %v1906 = vsub.f32 %v1878, %v1898
      %v1907 = vsub.f32 %v1881, %v1901
      %v1908 = vmul.f32 %v1902, 1.442695
      %v1909 = vpow.pop %v1908
      %v1910 = vmul.f32 %v1903, 1.442695
      %v1911 = vpow.pop %v1910
      %v1912 = vmul.f32 %v1904, 1.442695
      %v1913 = vpow.pop %v1912
      %v1914 = vmul.f32 %v1905, 1.442695
      %v1915 = vpow.pop %v1914
      %v1916 = vmul.f32 %v1906, 1.442695
      %v1917 = vpow.pop %v1916
      %v1918 = vmul.f32 %v1907, 1.442695
      %v1919 = vpow.pop %v1918
      %v1920 = vsel %vm1418, %v1909, 0.0
      %1921 = vadd.xlane.f32.xlu0 %v1920
      %v1922 = vpop.xlane.xlu0 %1921
      %v1923 = vsel %vm1418, %v1911, 0.0
      %1924 = vadd.xlane.f32.xlu0 %v1923
      %v1925 = vpop.xlane.xlu0 %1924
      %v1926 = vsel %vm1418, %v1913, 0.0
      %1927 = vadd.xlane.f32.xlu0 %v1926
      %v1928 = vpop.xlane.xlu0 %1927
      %v1929 = vsel %vm1418, %v1915, 0.0
      %1930 = vadd.xlane.f32.xlu0 %v1929
      %v1931 = vpop.xlane.xlu0 %1930
      %v1932 = vsel %vm1418, %v1917, 0.0
      %1933 = vadd.xlane.f32.xlu0 %v1932
      %v1934 = vpop.xlane.xlu0 %1933
      %v1935 = vsel %vm1418, %v1919, 0.0
      %1936 = vadd.xlane.f32.xlu0 %v1935
      %v1937 = vpop.xlane.xlu0 %1936
      %v1938 = vrcp.pop %v1922
      %v1939 = vrcp.pop %v1925
      %v1940 = vrcp.pop %v1928
      %v1941 = vrcp.pop %v1931
      %v1942 = vrcp.pop %v1934
      %v1943 = vrcp.pop %v1937
      %v1944 = vmul.f32 %v1909, %v1938
      %v1945 = vmul.f32 %v1911, %v1939
      %v1946 = vmul.f32 %v1913, %v1940
      %v1947 = vmul.f32 %v1915, %v1941
      %v1948 = vmul.f32 %v1917, %v1942
      %v1949 = vmul.f32 %v1919, %v1943
      %v1950 = vpack.c.bf16 %v1945, %v1944
      %v1951 = vpack.c.bf16 %v1947, %v1946
      %v1952 = vpack.c.bf16 %v1949, %v1948
      %1953 = vrot.lane.b32.xlu0 %v1331, 48
      %v1954 = vpop.permute.xlu0 %1953
      %1955 = vrot.lane.b32.xlu0 %v1332, 48
      %v1956 = vpop.permute.xlu0 %1955
      %1957 = vrot.lane.b32.xlu0 %v1333, 48
      %v1958 = vpop.permute.xlu0 %1957
      %v1963 = vsel %vm1418, %v1950, 0
      %v1966 = vsel %vm1418, %v1951, 0
      %v1969 = vsel %vm1418, %v1952, 0
      %1971 = vmatprep.subr.bf16.mxu0 0
      %1972 = vmatpush1.bf16.msra.mxu0 0
      %1973 = vmatprep.subr.bf16.mxu0 0
      %1974 = vmatpush1.bf16.msra.mxu0 0
      %1975 = vmatprep.subr.bf16.mxu0 0
      %1976 = vmatpush1.bf16.msra.mxu0 0
      %1977 = vmatprep.subr.bf16.mxu0 0
      %1978 = vmatpush1.bf16.msra.mxu0 0
      %1979 = vmatprep.subr.bf16.mxu0 0
      %1980 = vmatpush1.bf16.msra.mxu0 0
      %1981 = vmatprep.subr.bf16.mxu0 0
      %1982 = vmatpush1.bf16.msra.mxu0 %v1958
      %1983 = vmatprep.subr.bf16.mxu0 0
      %1984 = vmatpush1.bf16.msra.mxu0 %v1956
      %1985 = vmatprep.subr.bf16.mxu0 0
      %1986 = vmatpush1.bf16.msra.mxu0 %v1954
      %1987 = vmatprep.subr.bf16.mxu0 0
      %1988 = vmatpush2.bf16.msra.mxu0 0
      %1989 = vmatprep.subr.bf16.mxu0 0
      %1990 = vmatpush2.bf16.msra.mxu0 0
      %1991 = vmatprep.subr.bf16.mxu0 0
      %1992 = vmatpush2.bf16.msra.mxu0 0
      %1993 = vmatprep.subr.bf16.mxu0 0
      %1994 = vmatpush2.bf16.msra.mxu0 0
      %1995 = vmatprep.subr.bf16.mxu0 0
      %1996 = vmatpush2.bf16.msra.mxu0 0
      %1997 = vmatprep.subr.bf16.mxu0 0
      %1998 = vmatpush2.bf16.msra.mxu0 0
      %1999 = vmatprep.subr.bf16.mxu0 0
      %2000 = vmatpush2.bf16.msra.mxu0 0
      %2001 = vmatprep.subr.bf16.mxu0 0
      %2002 = vmatpush2.bf16.msra.mxu0 0
      %2003 = vmatprep.mubr.bf16.mxu0 0
      %2004 = vmatmul.mubr.bf16.gmra.mxu0 %v1963
      %v2005 = vpop.f32.mrf.mxu0
      %v2006 = vadd.f32 0.0, %v2005
      %v2007 = vpop.f32.mrf.mxu0
      %v2008 = vpop.f32.mrf.mxu0
      %v2009 = vadd.f32 0.0, %v2008
      %v2010 = vpop.f32.mrf.mxu0
      %2011 = vmatprep.mubr.bf16.mxu0 0
      %2012 = vmatmul.mubr.bf16.gmra.mxu0 %v1966
      %v2013 = vpop.f32.mrf.mxu0
      %v2014 = vadd.f32 0.0, %v2013
      %v2015 = vpop.f32.mrf.mxu0
      %v2016 = vpop.f32.mrf.mxu0
      %v2017 = vadd.f32 0.0, %v2016
      %v2018 = vpop.f32.mrf.mxu0
      %2019 = vmatprep.mubr.bf16.mxu0 0
      %2020 = vmatmul.mubr.bf16.gmra.mxu0 %v1969
      %v2021 = vpop.f32.mrf.mxu0
      %v2022 = vadd.f32 0.0, %v2021
      %v2023 = vpop.f32.mrf.mxu0
      %v2024 = vpop.f32.mrf.mxu0
      %v2025 = vadd.f32 0.0, %v2024
      %v2026 = vpop.f32.mrf.mxu0
      %2027 = vdwg.mxu0
      %2028 = vrot.lane.b32.xlu0 %v1328, 104
      %v2029 = vpop.permute.xlu0 %2028
      %2030 = vrot.lane.b32.xlu0 %v1329, 104
      %v2031 = vpop.permute.xlu0 %2030
      %2032 = vrot.lane.b32.xlu0 %v1330, 104
      %v2033 = vpop.permute.xlu0 %2032
      %2034 = vrot.lane.b32.xlu0 %v1331, 72
      %v2035 = vpop.permute.xlu0 %2034
      %2036 = vrot.lane.b32.xlu0 %v1332, 72
      %v2037 = vpop.permute.xlu0 %2036
      %2038 = vrot.lane.b32.xlu0 %v1333, 72
      %v2039 = vpop.permute.xlu0 %2038
      %v2041 = vsel %vm988, %v2029, 0
      %v2044 = vsel %vm988, %v2031, 0
      %v2047 = vsel %vm988, %v2033, 0
      %v2050 = vsel %vm988, %v2035, 0
      %v2053 = vsel %vm988, %v2037, 0
      %v2056 = vsel %vm988, %v2039, 0
      %2058 = vmatprep.subr.bf16.mxu0 0
      %2059 = vmatpush1.bf16.xpose.msra.mxu0 0
      %2060 = vmatprep.subr.bf16.mxu0 0
      %2061 = vmatpush1.bf16.xpose.msra.mxu0 0
      %2062 = vmatprep.subr.bf16.mxu0 0
      %2063 = vmatpush1.bf16.xpose.msra.mxu0 0
      %2064 = vmatprep.subr.bf16.mxu0 0
      %2065 = vmatpush1.bf16.xpose.msra.mxu0 0
      %2066 = vmatprep.subr.bf16.mxu0 0
      %2067 = vmatpush1.bf16.xpose.msra.mxu0 0
      %2068 = vmatprep.subr.bf16.mxu0 0
      %2069 = vmatpush1.bf16.xpose.msra.mxu0 %v2056
      %2070 = vmatprep.subr.bf16.mxu0 0
      %2071 = vmatpush1.bf16.xpose.msra.mxu0 %v2053
      %2072 = vmatprep.subr.bf16.mxu0 0
      %2073 = vmatpush1.bf16.xpose.msra.mxu0 %v2050
      %2074 = vmatprep.subr.bf16.mxu0 0
      %2075 = vmatpush2.bf16.xpose.msra.mxu0 0
      %2076 = vmatprep.subr.bf16.mxu0 0
      %2077 = vmatpush2.bf16.xpose.msra.mxu0 0
      %2078 = vmatprep.subr.bf16.mxu0 0
      %2079 = vmatpush2.bf16.xpose.msra.mxu0 0
      %2080 = vmatprep.subr.bf16.mxu0 0
      %2081 = vmatpush2.bf16.xpose.msra.mxu0 0
      %2082 = vmatprep.subr.bf16.mxu0 0
      %2083 = vmatpush2.bf16.xpose.msra.mxu0 0
      %2084 = vmatprep.subr.bf16.mxu0 0
      %2085 = vmatpush2.bf16.xpose.msra.mxu0 0
      %2086 = vmatprep.subr.bf16.mxu0 0
      %2087 = vmatpush2.bf16.xpose.msra.mxu0 0
      %2088 = vmatprep.subr.bf16.mxu0 0
      %2089 = vmatpush2.bf16.xpose.msra.mxu0 0
      %2090 = vmatprep.mubr.bf16.mxu0 0
      %2091 = vmatmul.mubr.bf16.gmra.mxu0 %v2041
      %v2092 = vpop.f32.mrf.mxu0
      %v2093 = vadd.f32 0.0, %v2092
      %v2094 = vpop.f32.mrf.mxu0
      %v2095 = vpop.f32.mrf.mxu0
      %v2096 = vadd.f32 0.0, %v2095
      %v2097 = vpop.f32.mrf.mxu0
      %2098 = vmatprep.mubr.bf16.mxu0 0
      %2099 = vmatmul.mubr.bf16.gmra.mxu0 %v2044
      %v2100 = vpop.f32.mrf.mxu0
      %v2101 = vadd.f32 0.0, %v2100
      %v2102 = vpop.f32.mrf.mxu0
      %v2103 = vpop.f32.mrf.mxu0
      %v2104 = vadd.f32 0.0, %v2103
      %v2105 = vpop.f32.mrf.mxu0
      %2106 = vmatprep.mubr.bf16.mxu0 0
      %2107 = vmatmul.mubr.bf16.gmra.mxu0 %v2047
      %v2108 = vpop.f32.mrf.mxu0
      %v2109 = vadd.f32 0.0, %v2108
      %v2110 = vpop.f32.mrf.mxu0
      %v2111 = vpop.f32.mrf.mxu0
      %v2112 = vadd.f32 0.0, %v2111
      %v2113 = vpop.f32.mrf.mxu0
      %2114 = vdwg.mxu0
      %v2115 = vsel %vm1418, %v2093, -inf
      %2116 = vmax.xlane.f32.xlu0 %v2115
      %v2117 = vpop.xlane.xlu0 %2116
      %v2118 = vsel %vm1418, %v2096, -inf
      %2119 = vmax.xlane.f32.xlu0 %v2118
      %v2120 = vpop.xlane.xlu0 %2119
      %v2121 = vsel %vm1418, %v2101, -inf
      %2122 = vmax.xlane.f32.xlu0 %v2121
      %v2123 = vpop.xlane.xlu0 %2122
      %v2124 = vsel %vm1418, %v2104, -inf
      %2125 = vmax.xlane.f32.xlu0 %v2124
      %v2126 = vpop.xlane.xlu0 %2125
      %v2127 = vsel %vm1418, %v2109, -inf
      %2128 = vmax.xlane.f32.xlu0 %v2127
      %v2129 = vpop.xlane.xlu0 %2128
      %v2130 = vsel %vm1418, %v2112, -inf
      %2131 = vmax.xlane.f32.xlu0 %v2130
      %v2132 = vpop.xlane.xlu0 %2131
      %v2133 = vsub.f32 %v2093, %v2117
      %v2134 = vsub.f32 %v2096, %v2120
      %v2135 = vsub.f32 %v2101, %v2123
      %v2136 = vsub.f32 %v2104, %v2126
      %v2137 = vsub.f32 %v2109, %v2129
      %v2138 = vsub.f32 %v2112, %v2132
      %v2139 = vmul.f32 %v2133, 1.442695
      %v2140 = vpow.pop %v2139
      %v2141 = vmul.f32 %v2134, 1.442695
      %v2142 = vpow.pop %v2141
      %v2143 = vmul.f32 %v2135, 1.442695
      %v2144 = vpow.pop %v2143
      %v2145 = vmul.f32 %v2136, 1.442695
      %v2146 = vpow.pop %v2145
      %v2147 = vmul.f32 %v2137, 1.442695
      %v2148 = vpow.pop %v2147
      %v2149 = vmul.f32 %v2138, 1.442695
      %v2150 = vpow.pop %v2149
      %v2151 = vsel %vm1418, %v2140, 0.0
      %2152 = vadd.xlane.f32.xlu0 %v2151
      %v2153 = vpop.xlane.xlu0 %2152
      %v2154 = vsel %vm1418, %v2142, 0.0
      %2155 = vadd.xlane.f32.xlu0 %v2154
      %v2156 = vpop.xlane.xlu0 %2155
      %v2157 = vsel %vm1418, %v2144, 0.0
      %2158 = vadd.xlane.f32.xlu0 %v2157
      %v2159 = vpop.xlane.xlu0 %2158
      %v2160 = vsel %vm1418, %v2146, 0.0
      %2161 = vadd.xlane.f32.xlu0 %v2160
      %v2162 = vpop.xlane.xlu0 %2161
      %v2163 = vsel %vm1418, %v2148, 0.0
      %2164 = vadd.xlane.f32.xlu0 %v2163
      %v2165 = vpop.xlane.xlu0 %2164
      %v2166 = vsel %vm1418, %v2150, 0.0
      %2167 = vadd.xlane.f32.xlu0 %v2166
      %v2168 = vpop.xlane.xlu0 %2167
      %v2169 = vrcp.pop %v2153
      %v2170 = vrcp.pop %v2156
      %v2171 = vrcp.pop %v2159
      %v2172 = vrcp.pop %v2162
      %v2173 = vrcp.pop %v2165
      %v2174 = vrcp.pop %v2168
      %v2175 = vmul.f32 %v2140, %v2169
      %v2176 = vmul.f32 %v2142, %v2170
      %v2177 = vmul.f32 %v2144, %v2171
      %v2178 = vmul.f32 %v2146, %v2172
      %v2179 = vmul.f32 %v2148, %v2173
      %v2180 = vmul.f32 %v2150, %v2174
      %v2181 = vpack.c.bf16 %v2176, %v2175
      %v2182 = vpack.c.bf16 %v2178, %v2177
      %v2183 = vpack.c.bf16 %v2180, %v2179
      %2184 = vrot.lane.b32.xlu0 %v1331, 40
      %v2185 = vpop.permute.xlu0 %2184
      %2186 = vrot.lane.b32.xlu0 %v1332, 40
      %v2187 = vpop.permute.xlu0 %2186
      %2188 = vrot.lane.b32.xlu0 %v1333, 40
      %v2189 = vpop.permute.xlu0 %2188
      %v2194 = vsel %vm1418, %v2181, 0
      %v2197 = vsel %vm1418, %v2182, 0
      %v2200 = vsel %vm1418, %v2183, 0
      %2202 = vmatprep.subr.bf16.mxu0 0
      %2203 = vmatpush1.bf16.msra.mxu0 0
      %2204 = vmatprep.subr.bf16.mxu0 0
      %2205 = vmatpush1.bf16.msra.mxu0 0
      %2206 = vmatprep.subr.bf16.mxu0 0
      %2207 = vmatpush1.bf16.msra.mxu0 0
      %2208 = vmatprep.subr.bf16.mxu0 0
      %2209 = vmatpush1.bf16.msra.mxu0 0
      %2210 = vmatprep.subr.bf16.mxu0 0
      %2211 = vmatpush1.bf16.msra.mxu0 0
      %2212 = vmatprep.subr.bf16.mxu0 0
      %2213 = vmatpush1.bf16.msra.mxu0 %v2189
      %2214 = vmatprep.subr.bf16.mxu0 0
      %2215 = vmatpush1.bf16.msra.mxu0 %v2187
      %2216 = vmatprep.subr.bf16.mxu0 0
      %2217 = vmatpush1.bf16.msra.mxu0 %v2185
      %2218 = vmatprep.subr.bf16.mxu0 0
      %2219 = vmatpush2.bf16.msra.mxu0 0
      %2220 = vmatprep.subr.bf16.mxu0 0
      %2221 = vmatpush2.bf16.msra.mxu0 0
      %2222 = vmatprep.subr.bf16.mxu0 0
      %2223 = vmatpush2.bf16.msra.mxu0 0
      %2224 = vmatprep.subr.bf16.mxu0 0
      %2225 = vmatpush2.bf16.msra.mxu0 0
      %2226 = vmatprep.subr.bf16.mxu0 0
      %2227 = vmatpush2.bf16.msra.mxu0 0
      %2228 = vmatprep.subr.bf16.mxu0 0
      %2229 = vmatpush2.bf16.msra.mxu0 0
      %2230 = vmatprep.subr.bf16.mxu0 0
      %2231 = vmatpush2.bf16.msra.mxu0 0
      %2232 = vmatprep.subr.bf16.mxu0 0
      %2233 = vmatpush2.bf16.msra.mxu0 0
      %2234 = vmatprep.mubr.bf16.mxu0 0
      %2235 = vmatmul.mubr.bf16.gmra.mxu0 %v2194
      %v2236 = vpop.f32.mrf.mxu0
      %v2237 = vadd.f32 0.0, %v2236
      %v2238 = vpop.f32.mrf.mxu0
      %v2239 = vpop.f32.mrf.mxu0
      %v2240 = vadd.f32 0.0, %v2239
      %v2241 = vpop.f32.mrf.mxu0
      %2242 = vmatprep.mubr.bf16.mxu0 0
      %2243 = vmatmul.mubr.bf16.gmra.mxu0 %v2197
      %v2244 = vpop.f32.mrf.mxu0
      %v2245 = vadd.f32 0.0, %v2244
      %v2246 = vpop.f32.mrf.mxu0
      %v2247 = vpop.f32.mrf.mxu0
      %v2248 = vadd.f32 0.0, %v2247
      %v2249 = vpop.f32.mrf.mxu0
      %2250 = vmatprep.mubr.bf16.mxu0 0
      %2251 = vmatmul.mubr.bf16.gmra.mxu0 %v2200
      %v2252 = vpop.f32.mrf.mxu0
      %v2253 = vadd.f32 0.0, %v2252
      %v2254 = vpop.f32.mrf.mxu0
      %v2255 = vpop.f32.mrf.mxu0
      %v2256 = vadd.f32 0.0, %v2255
      %v2257 = vpop.f32.mrf.mxu0
      %2258 = vdwg.mxu0
      %2265 = vrot.lane.b32.xlu0 %v1775, 8
      %v2266 = vpop.permute.xlu0 %2265
      %2267 = vrot.lane.b32.xlu0 %v1778, 8
      %v2268 = vpop.permute.xlu0 %2267
      %2269 = vrot.lane.b32.xlu0 %v1783, 8
      %v2270 = vpop.permute.xlu0 %2269
      %2271 = vrot.lane.b32.xlu0 %v1786, 8
      %v2272 = vpop.permute.xlu0 %2271
      %2273 = vrot.lane.b32.xlu0 %v1791, 8
      %v2274 = vpop.permute.xlu0 %2273
      %2275 = vrot.lane.b32.xlu0 %v1794, 8
      %v2276 = vpop.permute.xlu0 %2275
      %2289 = vrot.lane.b32.xlu0 %v2006, 16
      %v2290 = vpop.permute.xlu0 %2289
      %2291 = vrot.lane.b32.xlu0 %v2009, 16
      %v2292 = vpop.permute.xlu0 %2291
      %2293 = vrot.lane.b32.xlu0 %v2014, 16
      %v2294 = vpop.permute.xlu0 %2293
      %2295 = vrot.lane.b32.xlu0 %v2017, 16
      %v2296 = vpop.permute.xlu0 %2295
      %2297 = vrot.lane.b32.xlu0 %v2022, 16
      %v2298 = vpop.permute.xlu0 %2297
      %2299 = vrot.lane.b32.xlu0 %v2025, 16
      %v2300 = vpop.permute.xlu0 %2299
      %2313 = vrot.lane.b32.xlu0 %v2237, 24
      %v2314 = vpop.permute.xlu0 %2313
      %2315 = vrot.lane.b32.xlu0 %v2240, 24
      %v2316 = vpop.permute.xlu0 %2315
      %2317 = vrot.lane.b32.xlu0 %v2245, 24
      %v2318 = vpop.permute.xlu0 %2317
      %2319 = vrot.lane.b32.xlu0 %v2248, 24
      %v2320 = vpop.permute.xlu0 %2319
      %2321 = vrot.lane.b32.xlu0 %v2253, 24
      %v2322 = vpop.permute.xlu0 %2321
      %2323 = vrot.lane.b32.xlu0 %v2256, 24
      %v2324 = vpop.permute.xlu0 %2323
      %v2331 = vsel %vm988, %v1541, %v2266
      %v2332 = vsel %vm988, %v1544, %v2268
      %v2333 = vsel %vm988, %v1549, %v2270
      %v2334 = vsel %vm988, %v1552, %v2272
      %v2335 = vsel %vm988, %v1557, %v2274
      %v2336 = vsel %vm988, %v1560, %v2276
      %vm2337 = vcmask 130048
      %v2338 = vsel %vm2337, %v2331, %v2290
      %v2339 = vsel %vm2337, %v2332, %v2292
      %v2340 = vsel %vm2337, %v2333, %v2294
      %v2341 = vsel %vm2337, %v2334, %v2296
      %v2342 = vsel %vm2337, %v2335, %v2298
      %v2343 = vsel %vm2337, %v2336, %v2300
      %vm2344 = vcmask 195584
      %v2345 = vsel %vm2344, %v2338, %v2314
      %v2346 = vsel %vm2344, %v2339, %v2316
      %v2347 = vsel %vm2344, %v2340, %v2318
      %v2348 = vsel %vm2344, %v2341, %v2320
      %v2349 = vsel %vm2344, %v2342, %v2322
      %v2350 = vsel %vm2344, %v2343, %v2324
      %v2351 = vld [vmem:[%s704] sm:$0xf]
      %v2352 = vld [vmem:[%s704 + $0x4] sm:$0xf]
      %v2353 = vld [vmem:[%s704 + $0x8] sm:$0xf]
      %v2354 = vld [vmem:[%s704 + $0xc] sm:$0xf]
      %v2355 = vpack.c.bf16 %v2346, %v2345
      %v2356 = vpack.c.bf16 %v2348, %v2347
      %v2357 = vpack.c.bf16 %v2350, %v2349
      %v2358 = vld [vmem:[%s707] sm:$0x1]
      %v2360 = vlaneseq
      %v2361 = vshrl.u32 %v2360, 7
      %v2362 = vsub.s32 0, %v2361
      %v2363 = vrot.slane %v2358, %v2362
      %v2369 = vunpack.c.l.b16 %v2351
      %v2370 = vunpack.c.l.b16 %v2352
      %v2371 = vunpack.c.l.b16 %v2353
      %v2372 = vunpack.c.l.b16 %v2354
      %v2373 = vpack.c.b16 %v2370, %v2369
      %v2374 = vpack.c.b16 %v2372, %v2371
      %v2378 = vsel %vm1108, %v2355, 0
      %v2381 = vsel %vm1108, %v2356, 0
      %v2384 = vsel %vm1108, %v2357, 0
      %2386 = vmatprep.subr.bf16.mxu0 0
      %2387 = vmatpush1.bf16.msra.mxu0 0
      %2388 = vmatprep.subr.bf16.mxu0 0
      %2389 = vmatpush1.bf16.msra.mxu0 0
      %2390 = vmatprep.subr.bf16.mxu0 0
      %2391 = vmatpush1.bf16.msra.mxu0 0
      %2392 = vmatprep.subr.bf16.mxu0 0
      %2393 = vmatpush1.bf16.msra.mxu0 0
      %2394 = vmatprep.subr.bf16.mxu0 0
      %2395 = vmatpush1.bf16.msra.mxu0 0
      %2396 = vmatprep.subr.bf16.mxu0 0
      %2397 = vmatpush1.bf16.msra.mxu0 0
      %2398 = vmatprep.subr.bf16.mxu0 0
      %2399 = vmatpush1.bf16.msra.mxu0 %v2374
      %2400 = vmatprep.subr.bf16.mxu0 0
      %2401 = vmatpush1.bf16.msra.mxu0 %v2373
      %2402 = vmatprep.subr.bf16.mxu0 0
      %2403 = vmatpush2.bf16.msra.mxu0 0
      %2404 = vmatprep.subr.bf16.mxu0 0
      %2405 = vmatpush2.bf16.msra.mxu0 0
      %2406 = vmatprep.subr.bf16.mxu0 0
      %2407 = vmatpush2.bf16.msra.mxu0 0
      %2408 = vmatprep.subr.bf16.mxu0 0
      %2409 = vmatpush2.bf16.msra.mxu0 0
      %2410 = vmatprep.subr.bf16.mxu0 0
      %2411 = vmatpush2.bf16.msra.mxu0 0
      %2412 = vmatprep.subr.bf16.mxu0 0
      %2413 = vmatpush2.bf16.msra.mxu0 0
      %2414 = vmatprep.subr.bf16.mxu0 0
      %2415 = vmatpush2.bf16.msra.mxu0 0
      %2416 = vmatprep.subr.bf16.mxu0 0
      %2417 = vmatpush2.bf16.msra.mxu0 0
      %2418 = vmatprep.mubr.bf16.mxu0 0
      %2419 = vmatmul.mubr.bf16.gmra.mxu0 %v2378
      %v2420 = vpop.f32.mrf.mxu0
      %v2421 = vadd.f32 %v2363, %v2420
      %v2422 = vpop.f32.mrf.mxu0
      %v2423 = vpop.f32.mrf.mxu0
      %v2424 = vadd.f32 %v2363, %v2423
      %v2425 = vpop.f32.mrf.mxu0
      %2426 = vmatprep.mubr.bf16.mxu0 0
      %2427 = vmatmul.mubr.bf16.gmra.mxu0 %v2381
      %v2428 = vpop.f32.mrf.mxu0
      %v2429 = vadd.f32 %v2363, %v2428
      %v2430 = vpop.f32.mrf.mxu0
      %v2431 = vpop.f32.mrf.mxu0
      %v2432 = vadd.f32 %v2363, %v2431
      %v2433 = vpop.f32.mrf.mxu0
      %2434 = vmatprep.mubr.bf16.mxu0 0
      %2435 = vmatmul.mubr.bf16.gmra.mxu0 %v2384
      %v2436 = vpop.f32.mrf.mxu0
      %v2437 = vadd.f32 %v2363, %v2436
      %v2438 = vpop.f32.mrf.mxu0
      %v2439 = vpop.f32.mrf.mxu0
      %v2440 = vadd.f32 %v2363, %v2439
      %v2441 = vpop.f32.mrf.mxu0
      %2442 = vdwg.mxu0
      %2449 = vrot.lane.b32.xlu0 %v2421, 64
      %v2450 = vpop.permute.xlu0 %2449
      %2451 = vrot.lane.b32.xlu0 %v2424, 64
      %v2452 = vpop.permute.xlu0 %2451
      %2453 = vrot.lane.b32.xlu0 %v2429, 64
      %v2454 = vpop.permute.xlu0 %2453
      %2455 = vrot.lane.b32.xlu0 %v2432, 64
      %v2456 = vpop.permute.xlu0 %2455
      %2457 = vrot.lane.b32.xlu0 %v2437, 64
      %v2458 = vpop.permute.xlu0 %2457
      %2459 = vrot.lane.b32.xlu0 %v2440, 64
      %v2460 = vpop.permute.xlu0 %2459
      %v2467 = vmul.f32 %v1074, %v2450
      %v2468 = vmul.f32 %v1080, %v2452
      %v2469 = vmul.f32 %v1086, %v2454
      %v2470 = vmul.f32 %v1092, %v2456
      %v2471 = vmul.f32 %v1098, %v2458
      %v2472 = vmul.f32 %v1104, %v2460
      %2479 = vrot.lane.b32.xlu0 %v2467, 64
      %v2480 = vpop.permute.xlu0 %2479
      %2481 = vrot.lane.b32.xlu0 %v2468, 64
      %v2482 = vpop.permute.xlu0 %2481
      %2483 = vrot.lane.b32.xlu0 %v2469, 64
      %v2484 = vpop.permute.xlu0 %2483
      %2485 = vrot.lane.b32.xlu0 %v2470, 64
      %v2486 = vpop.permute.xlu0 %2485
      %2487 = vrot.lane.b32.xlu0 %v2471, 64
      %v2488 = vpop.permute.xlu0 %2487
      %2489 = vrot.lane.b32.xlu0 %v2472, 64
      %v2490 = vpop.permute.xlu0 %2489
      %v2497 = vadd.f32 %v974, %v2480
      %v2498 = vadd.f32 %v975, %v2482
      %v2499 = vadd.f32 %v976, %v2484
      %v2500 = vadd.f32 %v977, %v2486
      %v2501 = vadd.f32 %v978, %v2488
      %v2502 = vadd.f32 %v979, %v2490
      %v2503 = vsel %vm1108, %v2497, 0.0
      %2504 = vadd.xlane.f32.xlu0 %v2503
      %v2505 = vpop.xlane.xlu0 %2504
      %v2506 = vsel %vm1108, %v2498, 0.0
      %2507 = vadd.xlane.f32.xlu0 %v2506
      %v2508 = vpop.xlane.xlu0 %2507
      %v2509 = vsel %vm1108, %v2499, 0.0
      %2510 = vadd.xlane.f32.xlu0 %v2509
      %v2511 = vpop.xlane.xlu0 %2510
      %v2512 = vsel %vm1108, %v2500, 0.0
      %2513 = vadd.xlane.f32.xlu0 %v2512
      %v2514 = vpop.xlane.xlu0 %2513
      %v2515 = vsel %vm1108, %v2501, 0.0
      %2516 = vadd.xlane.f32.xlu0 %v2515
      %v2517 = vpop.xlane.xlu0 %2516
      %v2518 = vsel %vm1108, %v2502, 0.0
      %2519 = vadd.xlane.f32.xlu0 %v2518
      %v2520 = vpop.xlane.xlu0 %2519
      %v2521 = vmul.f32 %v2505, %v1127
      %v2522 = vmul.f32 %v2508, %v1127
      %v2523 = vmul.f32 %v2511, %v1127
      %v2524 = vmul.f32 %v2514, %v1127
      %v2525 = vmul.f32 %v2517, %v1127
      %v2526 = vmul.f32 %v2520, %v1127
      %v2527 = vsub.f32 %v2497, %v2521
      %v2528 = vsub.f32 %v2498, %v2522
      %v2529 = vsub.f32 %v2499, %v2523
      %v2530 = vsub.f32 %v2500, %v2524
      %v2531 = vsub.f32 %v2501, %v2525
      %v2532 = vsub.f32 %v2502, %v2526
      %v2533 = vmul.f32 %v2527, %v2527
      %v2534 = vmul.f32 %v2528, %v2528
      %v2535 = vmul.f32 %v2529, %v2529
      %v2536 = vmul.f32 %v2530, %v2530
      %v2537 = vmul.f32 %v2531, %v2531
      %v2538 = vmul.f32 %v2532, %v2532
      %v2539 = vsel %vm1108, %v2533, 0.0
      %2540 = vadd.xlane.f32.xlu0 %v2539
      %v2541 = vpop.xlane.xlu0 %2540
      %v2542 = vsel %vm1108, %v2534, 0.0
      %2543 = vadd.xlane.f32.xlu0 %v2542
      %v2544 = vpop.xlane.xlu0 %2543
      %v2545 = vsel %vm1108, %v2535, 0.0
      %2546 = vadd.xlane.f32.xlu0 %v2545
      %v2547 = vpop.xlane.xlu0 %2546
      %v2548 = vsel %vm1108, %v2536, 0.0
      %2549 = vadd.xlane.f32.xlu0 %v2548
      %v2550 = vpop.xlane.xlu0 %2549
      %v2551 = vsel %vm1108, %v2537, 0.0
      %2552 = vadd.xlane.f32.xlu0 %v2551
      %v2553 = vpop.xlane.xlu0 %2552
      %v2554 = vsel %vm1108, %v2538, 0.0
      %2555 = vadd.xlane.f32.xlu0 %v2554
      %v2556 = vpop.xlane.xlu0 %2555
      %v2557 = vmul.f32 %v2541, %v1127
      %v2558 = vmul.f32 %v2544, %v1127
      %v2559 = vmul.f32 %v2547, %v1127
      %v2560 = vmul.f32 %v2550, %v1127
      %v2561 = vmul.f32 %v2553, %v1127
      %v2562 = vmul.f32 %v2556, %v1127
      %v2563 = vadd.f32 %v2557, 1e-06
      %v2564 = vadd.f32 %v2558, 1e-06
      %v2565 = vadd.f32 %v2559, 1e-06
      %v2566 = vadd.f32 %v2560, 1e-06
      %v2567 = vadd.f32 %v2561, 1e-06
      %v2568 = vadd.f32 %v2562, 1e-06
      %v2569 = vrsqrt.pop %v2563
      %v2570 = vrsqrt.pop %v2564
      %v2571 = vrsqrt.pop %v2565
      %v2572 = vrsqrt.pop %v2566
      %v2573 = vrsqrt.pop %v2567
      %v2574 = vrsqrt.pop %v2568
      %v2575 = vmul.f32 %v2527, %v2569
      %v2576 = vmul.f32 %v2528, %v2570
      %v2577 = vmul.f32 %v2529, %v2571
      %v2578 = vmul.f32 %v2530, %v2572
      %v2579 = vmul.f32 %v2531, %v2573
      %v2580 = vmul.f32 %v2532, %v2574
      %v2581 = vadd.f32 %v1076, 1.0
      %v2582 = vadd.f32 %v1082, 1.0
      %v2583 = vadd.f32 %v1088, 1.0
      %v2584 = vadd.f32 %v1094, 1.0
      %v2585 = vadd.f32 %v1100, 1.0
      %v2586 = vadd.f32 %v1106, 1.0
      %v2587 = vmul.f32 %v2575, %v2581
      %v2588 = vmul.f32 %v2576, %v2582
      %v2589 = vmul.f32 %v2577, %v2583
      %v2590 = vmul.f32 %v2578, %v2584
      %v2591 = vmul.f32 %v2579, %v2585
      %v2592 = vmul.f32 %v2580, %v2586
      %2599 = vrot.lane.b32.xlu0 %v1074, 32
      %v2600 = vpop.permute.xlu0 %2599
      %2601 = vrot.lane.b32.xlu0 %v1080, 32
      %v2602 = vpop.permute.xlu0 %2601
      %2603 = vrot.lane.b32.xlu0 %v1086, 32
      %v2604 = vpop.permute.xlu0 %2603
      %2605 = vrot.lane.b32.xlu0 %v1092, 32
      %v2606 = vpop.permute.xlu0 %2605
      %2607 = vrot.lane.b32.xlu0 %v1098, 32
      %v2608 = vpop.permute.xlu0 %2607
      %2609 = vrot.lane.b32.xlu0 %v1104, 32
      %v2610 = vpop.permute.xlu0 %2609
      %v2617 = vadd.f32 %v2587, %v2600
      %v2618 = vadd.f32 %v2588, %v2602
      %v2619 = vadd.f32 %v2589, %v2604
      %v2620 = vadd.f32 %v2590, %v2606
      %v2621 = vadd.f32 %v2591, %v2608
      %v2622 = vadd.f32 %v2592, %v2610
      %v2623 = vld [vmem:[%s712] sm:$0xf]
      %v2624 = vld [vmem:[%s712 + $0x4] sm:$0xf]
      %v2625 = vld [vmem:[%s712 + $0x8] sm:$0xf]
      %v2626 = vld [vmem:[%s712 + $0xc] sm:$0xf]
      %v2627 = vpack.c.bf16 %v2618, %v2617
      %v2628 = vpack.c.bf16 %v2620, %v2619
      %v2629 = vpack.c.bf16 %v2622, %v2621
      %v2630 = vld [vmem:[%s715] sm:$0x1]
      %v2632 = vlaneseq
      %v2633 = vshrl.u32 %v2632, 7
      %v2634 = vsub.s32 0, %v2633
      %v2635 = vrot.slane %v2630, %v2634
      %v2641 = vunpack.c.l.b16 %v2623
      %v2642 = vunpack.c.l.b16 %v2624
      %v2643 = vunpack.c.l.b16 %v2625
      %v2644 = vunpack.c.l.b16 %v2626
      %v2645 = vpack.c.b16 %v2642, %v2641
      %v2646 = vpack.c.b16 %v2644, %v2643
      %v2650 = vsel %vm1108, %v2627, 0
      %v2653 = vsel %vm1108, %v2628, 0
      %v2656 = vsel %vm1108, %v2629, 0
      %2658 = vmatprep.subr.bf16.mxu0 0
      %2659 = vmatpush1.bf16.msra.mxu0 0
      %2660 = vmatprep.subr.bf16.mxu0 0
      %2661 = vmatpush1.bf16.msra.mxu0 0
      %2662 = vmatprep.subr.bf16.mxu0 0
      %2663 = vmatpush1.bf16.msra.mxu0 0
      %2664 = vmatprep.subr.bf16.mxu0 0
      %2665 = vmatpush1.bf16.msra.mxu0 0
      %2666 = vmatprep.subr.bf16.mxu0 0
      %2667 = vmatpush1.bf16.msra.mxu0 0
      %2668 = vmatprep.subr.bf16.mxu0 0
      %2669 = vmatpush1.bf16.msra.mxu0 0
      %2670 = vmatprep.subr.bf16.mxu0 0
      %2671 = vmatpush1.bf16.msra.mxu0 %v2646
      %2672 = vmatprep.subr.bf16.mxu0 0
      %2673 = vmatpush1.bf16.msra.mxu0 %v2645
      %2674 = vmatprep.subr.bf16.mxu0 0
      %2675 = vmatpush2.bf16.msra.mxu0 0
      %2676 = vmatprep.subr.bf16.mxu0 0
      %2677 = vmatpush2.bf16.msra.mxu0 0
      %2678 = vmatprep.subr.bf16.mxu0 0
      %2679 = vmatpush2.bf16.msra.mxu0 0
      %2680 = vmatprep.subr.bf16.mxu0 0
      %2681 = vmatpush2.bf16.msra.mxu0 0
      %2682 = vmatprep.subr.bf16.mxu0 0
      %2683 = vmatpush2.bf16.msra.mxu0 0
      %2684 = vmatprep.subr.bf16.mxu0 0
      %2685 = vmatpush2.bf16.msra.mxu0 0
      %2686 = vmatprep.subr.bf16.mxu0 0
      %2687 = vmatpush2.bf16.msra.mxu0 0
      %2688 = vmatprep.subr.bf16.mxu0 0
      %2689 = vmatpush2.bf16.msra.mxu0 0
      %2690 = vmatprep.mubr.bf16.mxu0 0
      %2691 = vmatmul.mubr.bf16.gmra.mxu0 %v2650
      %v2692 = vpop.f32.mrf.mxu0
      %v2693 = vadd.f32 %v2635, %v2692
      %v2694 = vpop.f32.mrf.mxu0
      %v2695 = vpop.f32.mrf.mxu0
      %v2696 = vadd.f32 %v2635, %v2695
      %v2697 = vpop.f32.mrf.mxu0
      %2698 = vmatprep.mubr.bf16.mxu0 0
      %2699 = vmatmul.mubr.bf16.gmra.mxu0 %v2653
      %v2700 = vpop.f32.mrf.mxu0
      %v2701 = vadd.f32 %v2635, %v2700
      %v2702 = vpop.f32.mrf.mxu0
      %v2703 = vpop.f32.mrf.mxu0
      %v2704 = vadd.f32 %v2635, %v2703
      %v2705 = vpop.f32.mrf.mxu0
      %2706 = vmatprep.mubr.bf16.mxu0 0
      %2707 = vmatmul.mubr.bf16.gmra.mxu0 %v2656
      %v2708 = vpop.f32.mrf.mxu0
      %v2709 = vadd.f32 %v2635, %v2708
      %v2710 = vpop.f32.mrf.mxu0
      %v2711 = vpop.f32.mrf.mxu0
      %v2712 = vadd.f32 %v2635, %v2711
      %v2713 = vpop.f32.mrf.mxu0
      %2714 = vdwg.mxu0
      %v2715 = vmul.f32 %v2693, %v2693
      %v2716 = vmul.f32 %v2696, %v2696
      %v2717 = vmul.f32 %v2701, %v2701
      %v2718 = vmul.f32 %v2704, %v2704
      %v2719 = vmul.f32 %v2709, %v2709
      %v2720 = vmul.f32 %v2712, %v2712
      %v2721 = vmul.f32 %v2693, %v2715
      %v2722 = vmul.f32 %v2696, %v2716
      %v2723 = vmul.f32 %v2701, %v2717
      %v2724 = vmul.f32 %v2704, %v2718
      %v2725 = vmul.f32 %v2709, %v2719
      %v2726 = vmul.f32 %v2712, %v2720
      %v2727 = vmul.f32 %v2721, 0.044715
      %v2728 = vmul.f32 %v2722, 0.044715
      %v2729 = vmul.f32 %v2723, 0.044715
      %v2730 = vmul.f32 %v2724, 0.044715
      %v2731 = vmul.f32 %v2725, 0.044715
      %v2732 = vmul.f32 %v2726, 0.044715
      %v2733 = vadd.f32 %v2693, %v2727
      %v2734 = vadd.f32 %v2696, %v2728
      %v2735 = vadd.f32 %v2701, %v2729
      %v2736 = vadd.f32 %v2704, %v2730
      %v2737 = vadd.f32 %v2709, %v2731
      %v2738 = vadd.f32 %v2712, %v2732
      %v2739 = vmul.f32 %v2733, 0.7978846
      %v2740 = vmul.f32 %v2734, 0.7978846
      %v2741 = vmul.f32 %v2735, 0.7978846
      %v2742 = vmul.f32 %v2736, 0.7978846
      %v2743 = vmul.f32 %v2737, 0.7978846
      %v2744 = vmul.f32 %v2738, 0.7978846
      %v2745 = vtanh.pop %v2739
      %v2746 = vtanh.pop %v2740
      %v2747 = vtanh.pop %v2741
      %v2748 = vtanh.pop %v2742
      %v2749 = vtanh.pop %v2743
      %v2750 = vtanh.pop %v2744
      %v2751 = vadd.f32 %v2745, 1.0
      %v2752 = vadd.f32 %v2746, 1.0
      %v2753 = vadd.f32 %v2747, 1.0
      %v2754 = vadd.f32 %v2748, 1.0
      %v2755 = vadd.f32 %v2749, 1.0
      %v2756 = vadd.f32 %v2750, 1.0
      %v2757 = vmul.f32 %v2751, 0.5
      %v2758 = vmul.f32 %v2752, 0.5
      %v2759 = vmul.f32 %v2753, 0.5
      %v2760 = vmul.f32 %v2754, 0.5
      %v2761 = vmul.f32 %v2755, 0.5
      %v2762 = vmul.f32 %v2756, 0.5
      %v2763 = vmul.f32 %v2693, %v2757
      %v2764 = vmul.f32 %v2696, %v2758
      %v2765 = vmul.f32 %v2701, %v2759
      %v2766 = vmul.f32 %v2704, %v2760
      %v2767 = vmul.f32 %v2709, %v2761
      %v2768 = vmul.f32 %v2712, %v2762
      %v2769 = vld [vmem:[%s720] sm:$0xf]
      %v2770 = vld [vmem:[%s720 + $0x4] sm:$0xf]
      %v2771 = vld [vmem:[%s720 + $0x8] sm:$0xf]
      %v2772 = vld [vmem:[%s720 + $0xc] sm:$0xf]
      %v2773 = vld [vmem:[%s720 + $0x10] sm:$0xf]
      %v2774 = vld [vmem:[%s720 + $0x14] sm:$0xf]
      %v2775 = vld [vmem:[%s720 + $0x18] sm:$0xf]
      %v2776 = vld [vmem:[%s720 + $0x1c] sm:$0xf]
      %v2777 = vld [vmem:[%s720 + $0x20] sm:$0xf]
      %v2778 = vld [vmem:[%s720 + $0x24] sm:$0xf]
      %v2779 = vld [vmem:[%s720 + $0x28] sm:$0xf]
      %v2780 = vld [vmem:[%s720 + $0x2c] sm:$0xf]
      %v2781 = vld [vmem:[%s720 + $0x30] sm:$0xf]
      %v2782 = vld [vmem:[%s720 + $0x34] sm:$0xf]
      %v2783 = vld [vmem:[%s720 + $0x38] sm:$0xf]
      %v2784 = vld [vmem:[%s720 + $0x3c] sm:$0xf]
      %v2785 = vpack.c.bf16 %v2764, %v2763
      %v2786 = vpack.c.bf16 %v2766, %v2765
      %v2787 = vpack.c.bf16 %v2768, %v2767
      %v2788 = vld [vmem:[%s723] sm:$0x1]
      %v2790 = vlaneseq
      %v2791 = vshrl.u32 %v2790, 7
      %v2792 = vsub.s32 0, %v2791
      %v2793 = vrot.slane %v2788, %v2792
      %v2811 = vunpack.c.l.b16 %v2769
      %v2812 = vunpack.c.l.b16 %v2770
      %v2813 = vunpack.c.l.b16 %v2771
      %v2814 = vunpack.c.l.b16 %v2772
      %v2815 = vunpack.c.l.b16 %v2773
      %v2816 = vunpack.c.l.b16 %v2774
      %v2817 = vunpack.c.l.b16 %v2775
      %v2818 = vunpack.c.l.b16 %v2776
      %v2819 = vunpack.c.l.b16 %v2777
      %v2820 = vunpack.c.l.b16 %v2778
      %v2821 = vunpack.c.l.b16 %v2779
      %v2822 = vunpack.c.l.b16 %v2780
      %v2823 = vunpack.c.l.b16 %v2781
      %v2824 = vunpack.c.l.b16 %v2782
      %v2825 = vunpack.c.l.b16 %v2783
      %v2826 = vunpack.c.l.b16 %v2784
      %v2827 = vpack.c.b16 %v2812, %v2811
      %v2828 = vpack.c.b16 %v2814, %v2813
      %v2829 = vpack.c.b16 %v2816, %v2815
      %v2830 = vpack.c.b16 %v2818, %v2817
      %v2831 = vpack.c.b16 %v2820, %v2819
      %v2832 = vpack.c.b16 %v2822, %v2821
      %v2833 = vpack.c.b16 %v2824, %v2823
      %v2834 = vpack.c.b16 %v2826, %v2825
      %2843 = vmatprep.subr.bf16.mxu0 0
      %2844 = vmatpush1.bf16.msra.mxu0 %v2834
      %2845 = vmatprep.subr.bf16.mxu0 0
      %2846 = vmatpush1.bf16.msra.mxu0 %v2833
      %2847 = vmatprep.subr.bf16.mxu0 0
      %2848 = vmatpush1.bf16.msra.mxu0 %v2832
      %2849 = vmatprep.subr.bf16.mxu0 0
      %2850 = vmatpush1.bf16.msra.mxu0 %v2831
      %2851 = vmatprep.subr.bf16.mxu0 0
      %2852 = vmatpush1.bf16.msra.mxu0 %v2830
      %2853 = vmatprep.subr.bf16.mxu0 0
      %2854 = vmatpush1.bf16.msra.mxu0 %v2829
      %2855 = vmatprep.subr.bf16.mxu0 0
      %2856 = vmatpush1.bf16.msra.mxu0 %v2828
      %2857 = vmatprep.subr.bf16.mxu0 0
      %2858 = vmatpush1.bf16.msra.mxu0 %v2827
      %2859 = vmatprep.subr.bf16.mxu0 0
      %2860 = vmatpush2.bf16.msra.mxu0 0
      %2861 = vmatprep.subr.bf16.mxu0 0
      %2862 = vmatpush2.bf16.msra.mxu0 0
      %2863 = vmatprep.subr.bf16.mxu0 0
      %2864 = vmatpush2.bf16.msra.mxu0 0
      %2865 = vmatprep.subr.bf16.mxu0 0
      %2866 = vmatpush2.bf16.msra.mxu0 0
      %2867 = vmatprep.subr.bf16.mxu0 0
      %2868 = vmatpush2.bf16.msra.mxu0 0
      %2869 = vmatprep.subr.bf16.mxu0 0
      %2870 = vmatpush2.bf16.msra.mxu0 0
      %2871 = vmatprep.subr.bf16.mxu0 0
      %2872 = vmatpush2.bf16.msra.mxu0 0
      %2873 = vmatprep.subr.bf16.mxu0 0
      %2874 = vmatpush2.bf16.msra.mxu0 0
      %2875 = vmatprep.mubr.bf16.mxu0 0
      %2876 = vmatmul.mubr.bf16.gmra.mxu0 %v2785
      %v2877 = vpop.f32.mrf.mxu0
      %v2878 = vadd.f32 %v2793, %v2877
      %v2879 = vpop.f32.mrf.mxu0
      %v2880 = vpop.f32.mrf.mxu0
      %v2881 = vadd.f32 %v2793, %v2880
      %v2882 = vpop.f32.mrf.mxu0
      %2883 = vmatprep.mubr.bf16.mxu0 0
      %2884 = vmatmul.mubr.bf16.gmra.mxu0 %v2786
      %v2885 = vpop.f32.mrf.mxu0
      %v2886 = vadd.f32 %v2793, %v2885
      %v2887 = vpop.f32.mrf.mxu0
      %v2888 = vpop.f32.mrf.mxu0
      %v2889 = vadd.f32 %v2793, %v2888
      %v2890 = vpop.f32.mrf.mxu0
      %2891 = vmatprep.mubr.bf16.mxu0 0
      %2892 = vmatmul.mubr.bf16.gmra.mxu0 %v2787
      %v2893 = vpop.f32.mrf.mxu0
      %v2894 = vadd.f32 %v2793, %v2893
      %v2895 = vpop.f32.mrf.mxu0
      %v2896 = vpop.f32.mrf.mxu0
      %v2897 = vadd.f32 %v2793, %v2896
      %v2898 = vpop.f32.mrf.mxu0
      %2899 = vdwg.mxu0
      %2906 = vrot.lane.b32.xlu0 %v2878, 32
      %v2907 = vpop.permute.xlu0 %2906
      %2908 = vrot.lane.b32.xlu0 %v2881, 32
      %v2909 = vpop.permute.xlu0 %2908
      %2910 = vrot.lane.b32.xlu0 %v2886, 32
      %v2911 = vpop.permute.xlu0 %2910
      %2912 = vrot.lane.b32.xlu0 %v2889, 32
      %v2913 = vpop.permute.xlu0 %2912
      %2914 = vrot.lane.b32.xlu0 %v2894, 32
      %v2915 = vpop.permute.xlu0 %2914
      %2916 = vrot.lane.b32.xlu0 %v2897, 32
      %v2917 = vpop.permute.xlu0 %2916
      %v2924 = vmul.f32 %v1076, %v2907
      %v2925 = vmul.f32 %v1082, %v2909
      %v2926 = vmul.f32 %v1088, %v2911
      %v2927 = vmul.f32 %v1094, %v2913
      %v2928 = vmul.f32 %v1100, %v2915
      %v2929 = vmul.f32 %v1106, %v2917
      %2936 = vrot.lane.b32.xlu0 %v2924, 96
      %v2937 = vpop.permute.xlu0 %2936
      %2938 = vrot.lane.b32.xlu0 %v2925, 96
      %v2939 = vpop.permute.xlu0 %2938
      %2940 = vrot.lane.b32.xlu0 %v2926, 96
      %v2941 = vpop.permute.xlu0 %2940
      %2942 = vrot.lane.b32.xlu0 %v2927, 96
      %v2943 = vpop.permute.xlu0 %2942
      %2944 = vrot.lane.b32.xlu0 %v2928, 96
      %v2945 = vpop.permute.xlu0 %2944
      %2946 = vrot.lane.b32.xlu0 %v2929, 96
      %v2947 = vpop.permute.xlu0 %2946
      %v2954 = vadd.f32 %v2497, %v2937
      %v2955 = vadd.f32 %v2498, %v2939
      %v2956 = vadd.f32 %v2499, %v2941
      %v2957 = vadd.f32 %v2500, %v2943
      %v2958 = vadd.f32 %v2501, %v2945
      %v2959 = vadd.f32 %v2502, %v2947
      %2960 = vst.msk [vmem:[#allocation2] sm:$0xff] %vm1108, %v2954
      %2961 = vst.msk [vmem:[#allocation2 + $0x8] sm:$0xff] %vm1108, %v2955
      %2962 = vst.msk [vmem:[#allocation2 + $0x10] sm:$0xff] %vm1108, %v2956
      %2963 = vst.msk [vmem:[#allocation2 + $0x18] sm:$0xff] %vm1108, %v2957
      %2964 = vst.msk [vmem:[#allocation2 + $0x20] sm:$0xff] %vm1108, %v2958
      %2965 = vst.msk [vmem:[#allocation2 + $0x28] sm:$0xff] %vm1108, %v2959
      // Predicated region
      $region105: #{fbed_forward.8} parent=95 // pred_check
        %p2966 = pneg %p876
      $region106: #{fbed_forward.8} parent=95 // pred_check_branch
        %2968 = sbr.rel (%p2966) target = $region108
      $region107: #{fbed_forward.8} parent=95 // pred_region
        %2969 = vst.msk [vmem:[%s19] sm:$0xff] %vm1108, %v2954
        %2970 = vst.msk [vmem:[%s19 + $0x8] sm:$0xff] %vm1108, %v2955
        %2971 = vst.msk [vmem:[%s19 + $0x10] sm:$0xff] %vm1108, %v2956
        %2972 = vst.msk [vmem:[%s19 + $0x18] sm:$0xff] %vm1108, %v2957
        %2973 = vst.msk [vmem:[%s19 + $0x20] sm:$0xff] %vm1108, %v2958
        %2974 = vst.msk [vmem:[%s19 + $0x28] sm:$0xff] %vm1108, %v2959
      $region108: #{fbed_forward.8} parent=95 // pred_fallthru
        _
      // Predicated region
      $region109: #{fbed_forward.8} parent=95 // pred_check
        %p2975 = pneg %p487
      $region110: #{fbed_forward.8} parent=95 // pred_check_branch
        %2977 = sbr.rel (%p2975) target = $region112
      $region111: #{fbed_forward.8} parent=95 // pred_region
        _
      $region112: #{fbed_forward.8} parent=95 // pred_fallthru
        _
      // Predicated region
      $region113: #{fbed_forward.8} parent=95 // pred_check
        %p2978 = pneg %p487
      $region114: #{fbed_forward.8} parent=95 // pred_check_branch
        %2980 = sbr.rel (%p2978) target = $region116
      $region115: #{fbed_forward.8} parent=95 // pred_region
        _
      $region116: #{fbed_forward.8} parent=95 // pred_fallthru
        _
    $region96: #{fbed_forward.8} parent=5 // pred_fallthru
      _
    %p2981 = scmp.le.s32.totalorder 2, %s25
    // Predicated region
    $region117: #{fbed_forward.8} parent=5 // pred_check
      %p2982 = pneg %p2981
    $region118: #{fbed_forward.8} parent=5 // pred_check_branch
      %2984 = sbr.rel (%p2982) target = $region120
    $region119: #{fbed_forward.8} parent=5 // pred_region
      %s2985 = ssub.s32 %s25, 2
    $region120: #{fbed_forward.8} parent=5 // pred_fallthru
      _
  $region6: #{fbed_forward.8} parent=0 // loop_footer
    %s29 = sadd.s32 1, %s25
  $region7: #{fbed_forward.8} parent=0 // loop_footer_branch
    %24 = sbr.rel target = $region3
  $region8: #{fbed_forward.8} parent=0 // loop_exit
    _

// kernel: fbed_forward.9
$region0: #{fbed_forward.9}
  #allocation0 [shape = 'u32[]', space=smem, size = 0x4, offset = 0x4, fixed_abs, tag = 'smem constant byte address 0x4 - core index']
  #allocation1 [shape = 'u32[144,128]{1,0:T(1,128)}', space=vmem, size = 0x12000, scoped, tag = 'internal scratch']
  #allocation2 [shape = 'f32[16,64]{1,0:T(8,128)}', space=vmem, size = 0x2000, scoped, tag = 'scratch operand']
  %s0 = inlined_call_operand.vmem [shape: f32[128,32], index: 0, kind: input, shape index: {}]
  %s1 = inlined_call_operand.vmem [shape: f32[16,32], index: 1, kind: input, shape index: {}]
  %s2 = inlined_call_operand.vmem [shape: f32[1,32], index: 2, kind: input, shape index: {}]
  %s3 = inlined_call_operand.vmem [shape: bf16[32,32], index: 3, kind: input, shape index: {}]
  %s4 = inlined_call_operand.vmem [shape: f32[1,32], index: 4, kind: input, shape index: {}]
  %s5 = inlined_call_operand.vmem [shape: bf16[32,192], index: 5, kind: input, shape index: {}]
  %s6 = inlined_call_operand.vmem [shape: f32[1,192], index: 6, kind: input, shape index: {}]
  %s7 = inlined_call_operand.vmem [shape: bf16[32,32], index: 7, kind: input, shape index: {}]
  %s8 = inlined_call_operand.vmem [shape: f32[1,32], index: 8, kind: input, shape index: {}]
  %s9 = inlined_call_operand.vmem [shape: bf16[32,64], index: 9, kind: input, shape index: {}]
  %s10 = inlined_call_operand.vmem [shape: f32[1,64], index: 10, kind: input, shape index: {}]
  %s11 = inlined_call_operand.vmem [shape: bf16[32,32], index: 11, kind: input, shape index: {}]
  %s12 = inlined_call_operand.vmem [shape: f32[1,32], index: 12, kind: input, shape index: {}]
  %s13 = inlined_call_operand.vmem [shape: bf16[32,128], index: 13, kind: input, shape index: {}]
  %s14 = inlined_call_operand.vmem [shape: f32[1,128], index: 14, kind: input, shape index: {}]
  %s15 = inlined_call_operand.vmem [shape: bf16[128,32], index: 15, kind: input, shape index: {}]
  %s16 = inlined_call_operand.vmem [shape: f32[1,32], index: 16, kind: input, shape index: {}]
  %s17 = inlined_call_operand.vmem [shape: bf16[32,128], index: 17, kind: input, shape index: {}]
  %s18 = inlined_call_operand.vmem [shape: f32[1,128], index: 18, kind: input, shape index: {}]
  %s19 = inlined_call_operand.vmem [shape: f32[128,128], index: 19, kind: output, shape index: {}]
  %s20 = sld [smem:[#allocation0]]
  $region90: #{fbed_forward.9} parent=0
    _
  %s22 = ssub.s32 1, %s20
  %s23 = scalar_select 0, %s22, %s20
  // Predicated region
  $region2: #{fbed_forward.9} parent=0 // pred_check
    _
  $region3: #{fbed_forward.9} parent=0 // pred_check_branch
    %25 = sbr.rel (0) target = $region5
  $region4: #{fbed_forward.9} parent=0 // pred_region
    _
  $region5: #{fbed_forward.9} parent=0 // pred_fallthru
    _
  // Predicated region
  $region6: #{fbed_forward.9} parent=0 // pred_check
    _
  $region7: #{fbed_forward.9} parent=0 // pred_check_branch
    %27 = sbr.rel (0) target = $region9
  $region8: #{fbed_forward.9} parent=0 // pred_region
    _
  $region9: #{fbed_forward.9} parent=0 // pred_fallthru
    _
  // Predicated region
  $region10: #{fbed_forward.9} parent=0 // pred_check
    _
  $region11: #{fbed_forward.9} parent=0 // pred_check_branch
    %29 = sbr.rel (0) target = $region13
  $region12: #{fbed_forward.9} parent=0 // pred_region
    _
  $region13: #{fbed_forward.9} parent=0 // pred_fallthru
    _
  // Predicated region
  $region14: #{fbed_forward.9} parent=0 // pred_check
    _
  $region15: #{fbed_forward.9} parent=0 // pred_check_branch
    %31 = sbr.rel (0) target = $region17
  $region16: #{fbed_forward.9} parent=0 // pred_region
    _
  $region17: #{fbed_forward.9} parent=0 // pred_fallthru
    _
  // Predicated region
  $region18: #{fbed_forward.9} parent=0 // pred_check
    _
  $region19: #{fbed_forward.9} parent=0 // pred_check_branch
    %33 = sbr.rel (0) target = $region21
  $region20: #{fbed_forward.9} parent=0 // pred_region
    _
  $region21: #{fbed_forward.9} parent=0 // pred_fallthru
    _
  // Predicated region
  $region22: #{fbed_forward.9} parent=0 // pred_check
    _
  $region23: #{fbed_forward.9} parent=0 // pred_check_branch
    %35 = sbr.rel (0) target = $region25
  $region24: #{fbed_forward.9} parent=0 // pred_region
    _
  $region25: #{fbed_forward.9} parent=0 // pred_fallthru
    _
  // Predicated region
  $region26: #{fbed_forward.9} parent=0 // pred_check
    _
  $region27: #{fbed_forward.9} parent=0 // pred_check_branch
    %37 = sbr.rel (0) target = $region29
  $region28: #{fbed_forward.9} parent=0 // pred_region
    _
  $region29: #{fbed_forward.9} parent=0 // pred_fallthru
    _
  // Predicated region
  $region30: #{fbed_forward.9} parent=0 // pred_check
    _
  $region31: #{fbed_forward.9} parent=0 // pred_check_branch
    %39 = sbr.rel (0) target = $region33
  $region32: #{fbed_forward.9} parent=0 // pred_region
    _
  $region33: #{fbed_forward.9} parent=0 // pred_fallthru
    _
  // Predicated region
  $region34: #{fbed_forward.9} parent=0 // pred_check
    _
  $region35: #{fbed_forward.9} parent=0 // pred_check_branch
    %41 = sbr.rel (0) target = $region37
  $region36: #{fbed_forward.9} parent=0 // pred_region
    _
  $region37: #{fbed_forward.9} parent=0 // pred_fallthru
    _
  // Predicated region
  $region38: #{fbed_forward.9} parent=0 // pred_check
    _
  $region39: #{fbed_forward.9} parent=0 // pred_check_branch
    %43 = sbr.rel (0) target = $region41
  $region40: #{fbed_forward.9} parent=0 // pred_region
    _
  $region41: #{fbed_forward.9} parent=0 // pred_fallthru
    _
  // Predicated region
  $region42: #{fbed_forward.9} parent=0 // pred_check
    _
  $region43: #{fbed_forward.9} parent=0 // pred_check_branch
    %45 = sbr.rel (0) target = $region45
  $region44: #{fbed_forward.9} parent=0 // pred_region
    _
  $region45: #{fbed_forward.9} parent=0 // pred_fallthru
    _
  // Predicated region
  $region46: #{fbed_forward.9} parent=0 // pred_check
    _
  $region47: #{fbed_forward.9} parent=0 // pred_check_branch
    %47 = sbr.rel (0) target = $region49
  $region48: #{fbed_forward.9} parent=0 // pred_region
    _
  $region49: #{fbed_forward.9} parent=0 // pred_fallthru
    _
  // Predicated region
  $region50: #{fbed_forward.9} parent=0 // pred_check
    _
  $region51: #{fbed_forward.9} parent=0 // pred_check_branch
    %49 = sbr.rel (0) target = $region53
  $region52: #{fbed_forward.9} parent=0 // pred_region
    _
  $region53: #{fbed_forward.9} parent=0 // pred_fallthru
    _
  // Predicated region
  $region54: #{fbed_forward.9} parent=0 // pred_check
    _
  $region55: #{fbed_forward.9} parent=0 // pred_check_branch
    %51 = sbr.rel (0) target = $region57
  $region56: #{fbed_forward.9} parent=0 // pred_region
    _
  $region57: #{fbed_forward.9} parent=0 // pred_fallthru
    _
  // Predicated region
  $region58: #{fbed_forward.9} parent=0 // pred_check
    _
  $region59: #{fbed_forward.9} parent=0 // pred_check_branch
    %53 = sbr.rel (0) target = $region61
  $region60: #{fbed_forward.9} parent=0 // pred_region
    _
  $region61: #{fbed_forward.9} parent=0 // pred_fallthru
    _
  // Predicated region
  $region62: #{fbed_forward.9} parent=0 // pred_check
    _
  $region63: #{fbed_forward.9} parent=0 // pred_check_branch
    %55 = sbr.rel (0) target = $region65
  $region64: #{fbed_forward.9} parent=0 // pred_region
    _
  $region65: #{fbed_forward.9} parent=0 // pred_fallthru
    _
  // Predicated region
  $region66: #{fbed_forward.9} parent=0 // pred_check
    _
  $region67: #{fbed_forward.9} parent=0 // pred_check_branch
    %57 = sbr.rel (0) target = $region69
  $region68: #{fbed_forward.9} parent=0 // pred_region
    _
  $region69: #{fbed_forward.9} parent=0 // pred_fallthru
    _
  // Predicated region
  $region70: #{fbed_forward.9} parent=0 // pred_check
    _
  $region71: #{fbed_forward.9} parent=0 // pred_check_branch
    %59 = sbr.rel (0) target = $region73
  $region72: #{fbed_forward.9} parent=0 // pred_region
    _
  $region73: #{fbed_forward.9} parent=0 // pred_fallthru
    _
  // Predicated region
  $region74: #{fbed_forward.9} parent=0 // pred_check
    _
  $region75: #{fbed_forward.9} parent=0 // pred_check_branch
    %61 = sbr.rel (0) target = $region77
  $region76: #{fbed_forward.9} parent=0 // pred_region
    _
  $region77: #{fbed_forward.9} parent=0 // pred_fallthru
    _
  %p63 = scmp.eq.s32.totalorder 0, 0
  // Predicated region
  $region78: #{fbed_forward.9} parent=0 // pred_check
    %p64 = pneg %p63
  $region79: #{fbed_forward.9} parent=0 // pred_check_branch
    %66 = sbr.rel (%p64) target = $region81
  $region80: #{fbed_forward.9} parent=0 // pred_region
    %v67 = vld [vmem:[%s1] sm:$0xff]
    %v68 = vld [vmem:[%s1 + $0x8] sm:$0xff]
    %v69 = vld [vmem:[%s9] sm:$0xf]
    %v70 = vld [vmem:[%s9 + $0x4] sm:$0xf]
    %v71 = vld [vmem:[%s9 + $0x8] sm:$0xf]
    %v72 = vld [vmem:[%s9 + $0xc] sm:$0xf]
    %v73 = vpack.c.bf16 %v68, %v67
    %v74 = vld [vmem:[%s10] sm:$0x1]
    %v76 = vlaneseq
    %v77 = vshrl.u32 %v76, 7
    %v78 = vsub.s32 0, %v77
    %v79 = vrot.slane %v74, %v78
    %v85 = vunpack.c.l.b16 %v69
    %v86 = vunpack.c.l.b16 %v70
    %v87 = vunpack.c.l.b16 %v71
    %v88 = vunpack.c.l.b16 %v72
    %v89 = vpack.c.b16 %v86, %v85
    %v90 = vpack.c.b16 %v88, %v87
    %vm93 = vcmask 261120
    %v95 = vsel %vm93, %v73, 0
    %97 = vmatprep.subr.bf16.mxu0 0
    %98 = vmatpush1.bf16.msra.mxu0 0
    %99 = vmatprep.subr.bf16.mxu0 0
    %100 = vmatpush1.bf16.msra.mxu0 0
    %101 = vmatprep.subr.bf16.mxu0 0
    %102 = vmatpush1.bf16.msra.mxu0 0
    %103 = vmatprep.subr.bf16.mxu0 0
    %104 = vmatpush1.bf16.msra.mxu0 0
    %105 = vmatprep.subr.bf16.mxu0 0
    %106 = vmatpush1.bf16.msra.mxu0 0
    %107 = vmatprep.subr.bf16.mxu0 0
    %108 = vmatpush1.bf16.msra.mxu0 0
    %109 = vmatprep.subr.bf16.mxu0 0
    %110 = vmatpush1.bf16.msra.mxu0 %v90
    %111 = vmatprep.subr.bf16.mxu0 0
    %112 = vmatpush1.bf16.msra.mxu0 %v89
    %113 = vmatprep.subr.bf16.mxu0 0
    %114 = vmatpush2.bf16.msra.mxu0 0
    %115 = vmatprep.subr.bf16.mxu0 0
    %116 = vmatpush2.bf16.msra.mxu0 0
    %117 = vmatprep.subr.bf16.mxu0 0
    %118 = vmatpush2.bf16.msra.mxu0 0
    %119 = vmatprep.subr.bf16.mxu0 0
    %120 = vmatpush2.bf16.msra.mxu0 0
    %121 = vmatprep.subr.bf16.mxu0 0
    %122 = vmatpush2.bf16.msra.mxu0 0
    %123 = vmatprep.subr.bf16.mxu0 0
    %124 = vmatpush2.bf16.msra.mxu0 0
    %125 = vmatprep.subr.bf16.mxu0 0
    %126 = vmatpush2.bf16.msra.mxu0 0
    %127 = vmatprep.subr.bf16.mxu0 0
    %128 = vmatpush2.bf16.msra.mxu0 0
    %129 = vmatprep.mubr.bf16.mxu0 0
    %130 = vmatmul.mubr.bf16.gmra.mxu0 %v95
    %v131 = vpop.f32.mrf.mxu0
    %v132 = vadd.f32 %v79, %v131
    %v133 = vpop.f32.mrf.mxu0
    %v134 = vpop.f32.mrf.mxu0
    %v135 = vadd.f32 %v79, %v134
    %v136 = vpop.f32.mrf.mxu0
    %137 = vdwg.mxu0
    %vm138 = vcmask 523264
    %139 = vst.msk [vmem:[#allocation2] sm:$0xff] %vm138, %v132
    %140 = vst.msk [vmem:[#allocation2 + $0x8] sm:$0xff] %vm138, %v135
  $region81: #{fbed_forward.9} parent=0 // pred_fallthru
    _
  %v141 = vld [vmem:[%s2] sm:$0x1]
  %v142 = vld [vmem:[%s5] sm:$0xff]
  %v143 = vld [vmem:[%s5 + $0x8] sm:$0xff]
  %v144 = vld [vmem:[%s5 + $0x10] sm:$0xff]
  %v145 = vld [vmem:[%s5 + $0x18] sm:$0xff]
  %v146 = vpack.c.bf16 %v141, %v141
  %v147 = vld [vmem:[%s6] sm:$0x3]
  %v152 = vunpack.c.l.b16 %v142
  %v153 = vunpack.c.h.b16 %v142
  %v154 = vunpack.c.l.b16 %v143
  %v155 = vunpack.c.h.b16 %v143
  %v156 = vunpack.c.l.b16 %v144
  %v157 = vunpack.c.h.b16 %v144
  %v158 = vunpack.c.l.b16 %v145
  %v159 = vunpack.c.h.b16 %v145
  %v160 = vpack.c.b16 %v154, %v152
  %v161 = vpack.c.b16 %v155, %v153
  %v162 = vpack.c.b16 %v158, %v156
  %v163 = vpack.c.b16 %v159, %v157
  %v169 = vlaneseq
  %v170 = vshrl.u32 %v169, 7
  %v171 = vsub.s32 0, %v170
  %v172 = vrot.slane %v147, %v171
  %v173 = vlaneseq
  %v174 = vshrl.u32 %v173, 7
  %v175 = vsub.s32 1, %v174
  %v176 = vrot.slane %v147, %v175
  %vm179 = vcmask 261120
  %v181 = vsel %vm179, %v146, 0
  %183 = vmatprep.subr.bf16.mxu0 0
  %184 = vmatpush1.bf16.msra.mxu0 0
  %185 = vmatprep.subr.bf16.mxu0 0
  %186 = vmatpush1.bf16.msra.mxu0 0
  %187 = vmatprep.subr.bf16.mxu0 0
  %188 = vmatpush1.bf16.msra.mxu0 0
  %189 = vmatprep.subr.bf16.mxu0 0
  %190 = vmatpush1.bf16.msra.mxu0 0
  %191 = vmatprep.subr.bf16.mxu0 0
  %192 = vmatpush1.bf16.msra.mxu0 0
  %193 = vmatprep.subr.bf16.mxu0 0
  %194 = vmatpush1.bf16.msra.mxu0 0
  %195 = vmatprep.subr.bf16.mxu0 %v163
  %196 = vmatpush1.bf16.msra.mxu0 %v162
  %197 = vmatprep.subr.bf16.mxu0 %v161
  %198 = vmatpush1.bf16.msra.mxu0 %v160
  %199 = vmatprep.subr.bf16.mxu0 0
  %200 = vmatpush2.bf16.msra.mxu0 0
  %201 = vmatprep.subr.bf16.mxu0 0
  %202 = vmatpush2.bf16.msra.mxu0 0
  %203 = vmatprep.subr.bf16.mxu0 0
  %204 = vmatpush2.bf16.msra.mxu0 0
  %205 = vmatprep.subr.bf16.mxu0 0
  %206 = vmatpush2.bf16.msra.mxu0 0
  %207 = vmatprep.subr.bf16.mxu0 0
  %208 = vmatpush2.bf16.msra.mxu0 0
  %209 = vmatprep.subr.bf16.mxu0 0
  %210 = vmatpush2.bf16.msra.mxu0 0
  %211 = vmatprep.subr.bf16.mxu0 0
  %212 = vmatpush2.bf16.msra.mxu0 0
  %213 = vmatprep.subr.bf16.mxu0 0
  %214 = vmatpush2.bf16.msra.mxu0 0
  %215 = vmatprep.mubr.bf16.mxu0 0
  %216 = vmatmul.mubr.bf16.gmra.mxu0 %v181
  %v217 = vpop.f32.mrf.mxu0
  %v218 = vadd.f32 %v172, %v217
  %v219 = vpop.f32.mrf.mxu0
  %v220 = vadd.f32 %v176, %v219
  %v221 = vpop.f32.mrf.mxu0
  %v222 = vpop.f32.mrf.mxu0
  %223 = vdwg.mxu0
  %v224 = vld [vmem:[%s0] sm:$0xff]
  %v225 = vld [vmem:[%s0 + $0x8] sm:$0xff]
  %v226 = vld [vmem:[%s0 + $0x10] sm:$0xff]
  %v227 = vld [vmem:[%s0 + $0x18] sm:$0xff]
  %v228 = vld [vmem:[%s0 + $0x20] sm:$0xff]
  %v229 = vld [vmem:[%s0 + $0x28] sm:$0xff]
  %v230 = vld [vmem:[%s0 + $0x30] sm:$0xff]
  %v231 = vld [vmem:[%s0 + $0x38] sm:$0xff]
  %v232 = vld [vmem:[%s0 + $0x40] sm:$0xff]
  %v233 = vld [vmem:[%s0 + $0x48] sm:$0xff]
  %v234 = vld [vmem:[%s0 + $0x50] sm:$0xff]
  %v235 = vld [vmem:[%s0 + $0x58] sm:$0xff]
  %v236 = vld [vmem:[%s0 + $0x60] sm:$0xff]
  %v237 = vld [vmem:[%s0 + $0x68] sm:$0xff]
  %v238 = vld [vmem:[%s0 + $0x70] sm:$0xff]
  %v239 = vld [vmem:[%s0 + $0x78] sm:$0xff]
  %v240 = vld [vmem:[%s3] sm:$0xf]
  %v241 = vld [vmem:[%s3 + $0x4] sm:$0xf]
  %v242 = vld [vmem:[%s3 + $0x8] sm:$0xf]
  %v243 = vld [vmem:[%s3 + $0xc] sm:$0xf]
  %v244 = vpack.c.bf16 %v225, %v224
  %v245 = vpack.c.bf16 %v227, %v226
  %v246 = vpack.c.bf16 %v229, %v228
  %v247 = vpack.c.bf16 %v231, %v230
  %v248 = vpack.c.bf16 %v233, %v232
  %v249 = vpack.c.bf16 %v235, %v234
  %v250 = vpack.c.bf16 %v237, %v236
  %v251 = vpack.c.bf16 %v239, %v238
  %v252 = vld [vmem:[%s4] sm:$0x1]
  %v254 = vlaneseq
  %v255 = vshrl.u32 %v254, 7
  %v256 = vsub.s32 0, %v255
  %v257 = vrot.slane %v252, %v256
  %v263 = vunpack.c.l.b16 %v240
  %v264 = vunpack.c.l.b16 %v241
  %v265 = vunpack.c.l.b16 %v242
  %v266 = vunpack.c.l.b16 %v243
  %v267 = vpack.c.b16 %v264, %v263
  %v268 = vpack.c.b16 %v266, %v265
  %v272 = vsel %vm179, %v244, 0
  %v275 = vsel %vm179, %v245, 0
  %v278 = vsel %vm179, %v246, 0
  %v281 = vsel %vm179, %v247, 0
  %v284 = vsel %vm179, %v248, 0
  %v287 = vsel %vm179, %v249, 0
  %v290 = vsel %vm179, %v250, 0
  %v293 = vsel %vm179, %v251, 0
  %295 = vmatprep.subr.bf16.mxu0 0
  %296 = vmatpush1.bf16.msra.mxu0 0
  %297 = vmatprep.subr.bf16.mxu0 0
  %298 = vmatpush1.bf16.msra.mxu0 0
  %299 = vmatprep.subr.bf16.mxu0 0
  %300 = vmatpush1.bf16.msra.mxu0 0
  %301 = vmatprep.subr.bf16.mxu0 0
  %302 = vmatpush1.bf16.msra.mxu0 0
  %303 = vmatprep.subr.bf16.mxu0 0
  %304 = vmatpush1.bf16.msra.mxu0 0
  %305 = vmatprep.subr.bf16.mxu0 0
  %306 = vmatpush1.bf16.msra.mxu0 0
  %307 = vmatprep.subr.bf16.mxu0 0
  %308 = vmatpush1.bf16.msra.mxu0 %v268
  %309 = vmatprep.subr.bf16.mxu0 0
  %310 = vmatpush1.bf16.msra.mxu0 %v267
  %311 = vmatprep.subr.bf16.mxu0 0
  %312 = vmatpush2.bf16.msra.mxu0 0
  %313 = vmatprep.subr.bf16.mxu0 0
  %314 = vmatpush2.bf16.msra.mxu0 0
  %315 = vmatprep.subr.bf16.mxu0 0
  %316 = vmatpush2.bf16.msra.mxu0 0
  %317 = vmatprep.subr.bf16.mxu0 0
  %318 = vmatpush2.bf16.msra.mxu0 0
  %319 = vmatprep.subr.bf16.mxu0 0
  %320 = vmatpush2.bf16.msra.mxu0 0
  %321 = vmatprep.subr.bf16.mxu0 0
  %322 = vmatpush2.bf16.msra.mxu0 0
  %323 = vmatprep.subr.bf16.mxu0 0
  %324 = vmatpush2.bf16.msra.mxu0 0
  %325 = vmatprep.subr.bf16.mxu0 0
  %326 = vmatpush2.bf16.msra.mxu0 0
  %327 = vmatprep.mubr.bf16.mxu0 0
  %328 = vmatmul.mubr.bf16.gmra.mxu0 %v272
  %v329 = vpop.f32.mrf.mxu0
  %v330 = vadd.f32 %v257, %v329
  %v331 = vpop.f32.mrf.mxu0
  %v332 = vpop.f32.mrf.mxu0
  %v333 = vadd.f32 %v257, %v332
  %v334 = vpop.f32.mrf.mxu0
  %335 = vmatprep.mubr.bf16.mxu0 0
  %336 = vmatmul.mubr.bf16.gmra.mxu0 %v275
  %v337 = vpop.f32.mrf.mxu0
  %v338 = vadd.f32 %v257, %v337
  %v339 = vpop.f32.mrf.mxu0
  %v340 = vpop.f32.mrf.mxu0
  %v341 = vadd.f32 %v257, %v340
  %v342 = vpop.f32.mrf.mxu0
  %343 = vmatprep.mubr.bf16.mxu0 0
  %344 = vmatmul.mubr.bf16.gmra.mxu0 %v278
  %v345 = vpop.f32.mrf.mxu0
  %v346 = vadd.f32 %v257, %v345
  %v347 = vpop.f32.mrf.mxu0
  %v348 = vpop.f32.mrf.mxu0
  %v349 = vadd.f32 %v257, %v348
  %v350 = vpop.f32.mrf.mxu0
  %351 = vmatprep.mubr.bf16.mxu0 0
  %352 = vmatmul.mubr.bf16.gmra.mxu0 %v281
  %v353 = vpop.f32.mrf.mxu0
  %v354 = vadd.f32 %v257, %v353
  %v355 = vpop.f32.mrf.mxu0
  %v356 = vpop.f32.mrf.mxu0
  %v357 = vadd.f32 %v257, %v356
  %v358 = vpop.f32.mrf.mxu0
  %359 = vmatprep.mubr.bf16.mxu0 0
  %360 = vmatmul.mubr.bf16.gmra.mxu0 %v284
  %v361 = vpop.f32.mrf.mxu0
  %v362 = vadd.f32 %v257, %v361
  %v363 = vpop.f32.mrf.mxu0
  %v364 = vpop.f32.mrf.mxu0
  %v365 = vadd.f32 %v257, %v364
  %v366 = vpop.f32.mrf.mxu0
  %367 = vmatprep.mubr.bf16.mxu0 0
  %368 = vmatmul.mubr.bf16.gmra.mxu0 %v287
  %v369 = vpop.f32.mrf.mxu0
  %v370 = vadd.f32 %v257, %v369
  %v371 = vpop.f32.mrf.mxu0
  %v372 = vpop.f32.mrf.mxu0
  %v373 = vadd.f32 %v257, %v372
  %v374 = vpop.f32.mrf.mxu0
  %375 = vmatprep.mubr.bf16.mxu0 0
  %376 = vmatmul.mubr.bf16.gmra.mxu0 %v290
  %v377 = vpop.f32.mrf.mxu0
  %v378 = vadd.f32 %v257, %v377
  %v379 = vpop.f32.mrf.mxu0
  %v380 = vpop.f32.mrf.mxu0
  %v381 = vadd.f32 %v257, %v380
  %v382 = vpop.f32.mrf.mxu0
  %383 = vmatprep.mubr.bf16.mxu0 0
  %384 = vmatmul.mubr.bf16.gmra.mxu0 %v293
  %v385 = vpop.f32.mrf.mxu0
  %v386 = vadd.f32 %v257, %v385
  %v387 = vpop.f32.mrf.mxu0
  %v388 = vpop.f32.mrf.mxu0
  %v389 = vadd.f32 %v257, %v388
  %v390 = vpop.f32.mrf.mxu0
  %391 = vdwg.mxu0
  %v392 = vsel %vm179, %v330, 0.0
  %393 = vadd.xlane.f32.xlu0 %v392
  %v394 = vpop.xlane.xlu0 %393
  %v395 = vsel %vm179, %v333, 0.0
  %396 = vadd.xlane.f32.xlu0 %v395
  %v397 = vpop.xlane.xlu0 %396
  %v398 = vsel %vm179, %v338, 0.0
  %399 = vadd.xlane.f32.xlu0 %v398
  %v400 = vpop.xlane.xlu0 %399
  %v401 = vsel %vm179, %v341, 0.0
  %402 = vadd.xlane.f32.xlu0 %v401
  %v403 = vpop.xlane.xlu0 %402
  %v404 = vsel %vm179, %v346, 0.0
  %405 = vadd.xlane.f32.xlu0 %v404
  %v406 = vpop.xlane.xlu0 %405
  %v407 = vsel %vm179, %v349, 0.0
  %408 = vadd.xlane.f32.xlu0 %v407
  %v409 = vpop.xlane.xlu0 %408
  %v410 = vsel %vm179, %v354, 0.0
  %411 = vadd.xlane.f32.xlu0 %v410
  %v412 = vpop.xlane.xlu0 %411
  %v413 = vsel %vm179, %v357, 0.0
  %414 = vadd.xlane.f32.xlu0 %v413
  %v415 = vpop.xlane.xlu0 %414
  %v416 = vsel %vm179, %v362, 0.0
  %417 = vadd.xlane.f32.xlu0 %v416
  %v418 = vpop.xlane.xlu0 %417
  %v419 = vsel %vm179, %v365, 0.0
  %420 = vadd.xlane.f32.xlu0 %v419
  %v421 = vpop.xlane.xlu0 %420
  %v422 = vsel %vm179, %v370, 0.0
  %423 = vadd.xlane.f32.xlu0 %v422
  %v424 = vpop.xlane.xlu0 %423
  %v425 = vsel %vm179, %v373, 0.0
  %426 = vadd.xlane.f32.xlu0 %v425
  %v427 = vpop.xlane.xlu0 %426
  %v428 = vsel %vm179, %v378, 0.0
  %429 = vadd.xlane.f32.xlu0 %v428
  %v430 = vpop.xlane.xlu0 %429
  %v431 = vsel %vm179, %v381, 0.0
  %432 = vadd.xlane.f32.xlu0 %v431
  %v433 = vpop.xlane.xlu0 %432
  %v434 = vsel %vm179, %v386, 0.0
  %435 = vadd.xlane.f32.xlu0 %v434
  %v436 = vpop.xlane.xlu0 %435
  %v437 = vsel %vm179, %v389, 0.0
  %438 = vadd.xlane.f32.xlu0 %v437
  %v439 = vpop.xlane.xlu0 %438
  %v440 = vrcp.pop 32.0
  %v441 = vmul.f32 %v394, %v440
  %v442 = vmul.f32 %v397, %v440
  %v443 = vmul.f32 %v400, %v440
  %v444 = vmul.f32 %v403, %v440
  %v445 = vmul.f32 %v406, %v440
  %v446 = vmul.f32 %v409, %v440
  %v447 = vmul.f32 %v412, %v440
  %v448 = vmul.f32 %v415, %v440
  %v449 = vmul.f32 %v418, %v440
  %v450 = vmul.f32 %v421, %v440
  %v451 = vmul.f32 %v424, %v440
  %v452 = vmul.f32 %v427, %v440
  %v453 = vmul.f32 %v430, %v440
  %v454 = vmul.f32 %v433, %v440
  %v455 = vmul.f32 %v436, %v440
  %v456 = vmul.f32 %v439, %v440
  %v457 = vsub.f32 %v330, %v441
  %v458 = vsub.f32 %v333, %v442
  %v459 = vsub.f32 %v338, %v443
  %v460 = vsub.f32 %v341, %v444
  %v461 = vsub.f32 %v346, %v445
  %v462 = vsub.f32 %v349, %v446
  %v463 = vsub.f32 %v354, %v447
  %v464 = vsub.f32 %v357, %v448
  %v465 = vsub.f32 %v362, %v449
  %v466 = vsub.f32 %v365, %v450
  %v467 = vsub.f32 %v370, %v451
  %v468 = vsub.f32 %v373, %v452
  %v469 = vsub.f32 %v378, %v453
  %v470 = vsub.f32 %v381, %v454
  %v471 = vsub.f32 %v386, %v455
  %v472 = vsub.f32 %v389, %v456
  %v473 = vmul.f32 %v457, %v457
  %v474 = vmul.f32 %v458, %v458
  %v475 = vmul.f32 %v459, %v459
  %v476 = vmul.f32 %v460, %v460
  %v477 = vmul.f32 %v461, %v461
  %v478 = vmul.f32 %v462, %v462
  %v479 = vmul.f32 %v463, %v463
  %v480 = vmul.f32 %v464, %v464
  %v481 = vmul.f32 %v465, %v465
  %v482 = vmul.f32 %v466, %v466
  %v483 = vmul.f32 %v467, %v467
  %v484 = vmul.f32 %v468, %v468
  %v485 = vmul.f32 %v469, %v469
  %v486 = vmul.f32 %v470, %v470
  %v487 = vmul.f32 %v471, %v471
  %v488 = vmul.f32 %v472, %v472
  %v489 = vsel %vm179, %v473, 0.0
  %490 = vadd.xlane.f32.xlu0 %v489
  %v491 = vpop.xlane.xlu0 %490
  %v492 = vsel %vm179, %v474, 0.0
  %493 = vadd.xlane.f32.xlu0 %v492
  %v494 = vpop.xlane.xlu0 %493
  %v495 = vsel %vm179, %v475, 0.0
  %496 = vadd.xlane.f32.xlu0 %v495
  %v497 = vpop.xlane.xlu0 %496
  %v498 = vsel %vm179, %v476, 0.0
  %499 = vadd.xlane.f32.xlu0 %v498
  %v500 = vpop.xlane.xlu0 %499
  %v501 = vsel %vm179, %v477, 0.0
  %502 = vadd.xlane.f32.xlu0 %v501
  %v503 = vpop.xlane.xlu0 %502
  %v504 = vsel %vm179, %v478, 0.0
  %505 = vadd.xlane.f32.xlu0 %v504
  %v506 = vpop.xlane.xlu0 %505
  %v507 = vsel %vm179, %v479, 0.0
  %508 = vadd.xlane.f32.xlu0 %v507
  %v509 = vpop.xlane.xlu0 %508
  %v510 = vsel %vm179, %v480, 0.0
  %511 = vadd.xlane.f32.xlu0 %v510
  %v512 = vpop.xlane.xlu0 %511
  %v513 = vsel %vm179, %v481, 0.0
  %514 = vadd.xlane.f32.xlu0 %v513
  %v515 = vpop.xlane.xlu0 %514
  %v516 = vsel %vm179, %v482, 0.0
  %517 = vadd.xlane.f32.xlu0 %v516
  %v518 = vpop.xlane.xlu0 %517
  %v519 = vsel %vm179, %v483, 0.0
  %520 = vadd.xlane.f32.xlu0 %v519
  %v521 = vpop.xlane.xlu0 %520
  %v522 = vsel %vm179, %v484, 0.0
  %523 = vadd.xlane.f32.xlu0 %v522
  %v524 = vpop.xlane.xlu0 %523
  %v525 = vsel %vm179, %v485, 0.0
  %526 = vadd.xlane.f32.xlu0 %v525
  %v527 = vpop.xlane.xlu0 %526
  %v528 = vsel %vm179, %v486, 0.0
  %529 = vadd.xlane.f32.xlu0 %v528
  %v530 = vpop.xlane.xlu0 %529
  %v531 = vsel %vm179, %v487, 0.0
  %532 = vadd.xlane.f32.xlu0 %v531
  %v533 = vpop.xlane.xlu0 %532
  %v534 = vsel %vm179, %v488, 0.0
  %535 = vadd.xlane.f32.xlu0 %v534
  %v536 = vpop.xlane.xlu0 %535
  %v537 = vmul.f32 %v491, %v440
  %v538 = vmul.f32 %v494, %v440
  %v539 = vmul.f32 %v497, %v440
  %v540 = vmul.f32 %v500, %v440
  %v541 = vmul.f32 %v503, %v440
  %v542 = vmul.f32 %v506, %v440
  %v543 = vmul.f32 %v509, %v440
  %v544 = vmul.f32 %v512, %v440
  %v545 = vmul.f32 %v515, %v440
  %v546 = vmul.f32 %v518, %v440
  %v547 = vmul.f32 %v521, %v440
  %v548 = vmul.f32 %v524, %v440
  %v549 = vmul.f32 %v527, %v440
  %v550 = vmul.f32 %v530, %v440
  %v551 = vmul.f32 %v533, %v440
  %v552 = vmul.f32 %v536, %v440
  %v553 = vadd.f32 %v537, 1e-06
  %v554 = vadd.f32 %v538, 1e-06
  %v555 = vadd.f32 %v539, 1e-06
  %v556 = vadd.f32 %v540, 1e-06
  %v557 = vadd.f32 %v541, 1e-06
  %v558 = vadd.f32 %v542, 1e-06
  %v559 = vadd.f32 %v543, 1e-06
  %v560 = vadd.f32 %v544, 1e-06
  %v561 = vadd.f32 %v545, 1e-06
  %v562 = vadd.f32 %v546, 1e-06
  %v563 = vadd.f32 %v547, 1e-06
  %v564 = vadd.f32 %v548, 1e-06
  %v565 = vadd.f32 %v549, 1e-06
  %v566 = vadd.f32 %v550, 1e-06
  %v567 = vadd.f32 %v551, 1e-06
  %v568 = vadd.f32 %v552, 1e-06
  %v569 = vrsqrt.pop %v553
  %v570 = vrsqrt.pop %v554
  %v571 = vrsqrt.pop %v555
  %v572 = vrsqrt.pop %v556
  %v573 = vrsqrt.pop %v557
  %v574 = vrsqrt.pop %v558
  %v575 = vrsqrt.pop %v559
  %v576 = vrsqrt.pop %v560
  %v577 = vrsqrt.pop %v561
  %v578 = vrsqrt.pop %v562
  %v579 = vrsqrt.pop %v563
  %v580 = vrsqrt.pop %v564
  %v581 = vrsqrt.pop %v565
  %v582 = vrsqrt.pop %v566
  %v583 = vrsqrt.pop %v567
  %v584 = vrsqrt.pop %v568
  %v585 = vmul.f32 %v457, %v569
  %v586 = vmul.f32 %v458, %v570
  %v587 = vmul.f32 %v459, %v571
  %v588 = vmul.f32 %v460, %v572
  %v589 = vmul.f32 %v461, %v573
  %v590 = vmul.f32 %v462, %v574
  %v591 = vmul.f32 %v463, %v575
  %v592 = vmul.f32 %v464, %v576
  %v593 = vmul.f32 %v465, %v577
  %v594 = vmul.f32 %v466, %v578
  %v595 = vmul.f32 %v467, %v579
  %v596 = vmul.f32 %v468, %v580
  %v597 = vmul.f32 %v469, %v581
  %v598 = vmul.f32 %v470, %v582
  %v599 = vmul.f32 %v471, %v583
  %v600 = vmul.f32 %v472, %v584
  %v601 = vadd.f32 %v218, 1.0
  %v602 = vlaneseq
  %v603 = vshrl.u32 %v602, 7
  %v604 = vsub.s32 0, %v603
  %v605 = vrot.slane %v601, %v604
  %607 = vrot.lane.b32.xlu0 %v605, 96
  %v608 = vpop.permute.xlu0 %607
  %v610 = vmul.f32 %v585, %v608
  %v611 = vmul.f32 %v586, %v608
  %v612 = vmul.f32 %v587, %v608
  %v613 = vmul.f32 %v588, %v608
  %v614 = vmul.f32 %v589, %v608
  %v615 = vmul.f32 %v590, %v608
  %v616 = vmul.f32 %v591, %v608
  %v617 = vmul.f32 %v592, %v608
  %v618 = vmul.f32 %v593, %v608
  %v619 = vmul.f32 %v594, %v608
  %v620 = vmul.f32 %v595, %v608
  %v621 = vmul.f32 %v596, %v608
  %v622 = vmul.f32 %v597, %v608
  %v623 = vmul.f32 %v598, %v608
  %v624 = vmul.f32 %v599, %v608
  %v625 = vmul.f32 %v600, %v608
  %v626 = vlaneseq
  %v627 = vshrl.u32 %v626, 7
  %v628 = vsub.s32 0, %v627
  %v629 = vrot.slane %v218, %v628
  %v630 = vadd.f32 %v610, %v629
  %v631 = vadd.f32 %v611, %v629
  %v632 = vadd.f32 %v612, %v629
  %v633 = vadd.f32 %v613, %v629
  %v634 = vadd.f32 %v614, %v629
  %v635 = vadd.f32 %v615, %v629
  %v636 = vadd.f32 %v616, %v629
  %v637 = vadd.f32 %v617, %v629
  %v638 = vadd.f32 %v618, %v629
  %v639 = vadd.f32 %v619, %v629
  %v640 = vadd.f32 %v620, %v629
  %v641 = vadd.f32 %v621, %v629
  %v642 = vadd.f32 %v622, %v629
  %v643 = vadd.f32 %v623, %v629
  %v644 = vadd.f32 %v624, %v629
  %v645 = vadd.f32 %v625, %v629
  %v646 = vld [vmem:[%s7] sm:$0xf]
  %v647 = vld [vmem:[%s7 + $0x4] sm:$0xf]
  %v648 = vld [vmem:[%s7 + $0x8] sm:$0xf]
  %v649 = vld [vmem:[%s7 + $0xc] sm:$0xf]
  %v650 = vpack.c.bf16 %v631, %v630
  %v651 = vpack.c.bf16 %v633, %v632
  %v652 = vpack.c.bf16 %v635, %v634
  %v653 = vpack.c.bf16 %v637, %v636
  %v654 = vpack.c.bf16 %v639, %v638
  %v655 = vpack.c.bf16 %v641, %v640
  %v656 = vpack.c.bf16 %v643, %v642
  %v657 = vpack.c.bf16 %v645, %v644
  %v658 = vld [vmem:[%s8] sm:$0x1]
  %v660 = vlaneseq
  %v661 = vshrl.u32 %v660, 7
  %v662 = vsub.s32 0, %v661
  %v663 = vrot.slane %v658, %v662
  %v669 = vunpack.c.l.b16 %v646
  %v670 = vunpack.c.l.b16 %v647
  %v671 = vunpack.c.l.b16 %v648
  %v672 = vunpack.c.l.b16 %v649
  %v673 = vpack.c.b16 %v670, %v669
  %v674 = vpack.c.b16 %v672, %v671
  %v678 = vsel %vm179, %v650, 0
  %v681 = vsel %vm179, %v651, 0
  %v684 = vsel %vm179, %v652, 0
  %v687 = vsel %vm179, %v653, 0
  %v690 = vsel %vm179, %v654, 0
  %v693 = vsel %vm179, %v655, 0
  %v696 = vsel %vm179, %v656, 0
  %v699 = vsel %vm179, %v657, 0
  %701 = vmatprep.subr.bf16.mxu0 0
  %702 = vmatpush1.bf16.msra.mxu0 0
  %703 = vmatprep.subr.bf16.mxu0 0
  %704 = vmatpush1.bf16.msra.mxu0 0
  %705 = vmatprep.subr.bf16.mxu0 0
  %706 = vmatpush1.bf16.msra.mxu0 0
  %707 = vmatprep.subr.bf16.mxu0 0
  %708 = vmatpush1.bf16.msra.mxu0 0
  %709 = vmatprep.subr.bf16.mxu0 0
  %710 = vmatpush1.bf16.msra.mxu0 0
  %711 = vmatprep.subr.bf16.mxu0 0
  %712 = vmatpush1.bf16.msra.mxu0 0
  %713 = vmatprep.subr.bf16.mxu0 0
  %714 = vmatpush1.bf16.msra.mxu0 %v674
  %715 = vmatprep.subr.bf16.mxu0 0
  %716 = vmatpush1.bf16.msra.mxu0 %v673
  %717 = vmatprep.subr.bf16.mxu0 0
  %718 = vmatpush2.bf16.msra.mxu0 0
  %719 = vmatprep.subr.bf16.mxu0 0
  %720 = vmatpush2.bf16.msra.mxu0 0
  %721 = vmatprep.subr.bf16.mxu0 0
  %722 = vmatpush2.bf16.msra.mxu0 0
  %723 = vmatprep.subr.bf16.mxu0 0
  %724 = vmatpush2.bf16.msra.mxu0 0
  %725 = vmatprep.subr.bf16.mxu0 0
  %726 = vmatpush2.bf16.msra.mxu0 0
  %727 = vmatprep.subr.bf16.mxu0 0
  %728 = vmatpush2.bf16.msra.mxu0 0
  %729 = vmatprep.subr.bf16.mxu0 0
  %730 = vmatpush2.bf16.msra.mxu0 0
  %731 = vmatprep.subr.bf16.mxu0 0
  %732 = vmatpush2.bf16.msra.mxu0 0
  %733 = vmatprep.mubr.bf16.mxu0 0
  %734 = vmatmul.mubr.bf16.gmra.mxu0 %v678
  %v735 = vpop.f32.mrf.mxu0
  %v736 = vadd.f32 %v663, %v735
  %v737 = vpop.f32.mrf.mxu0
  %v738 = vpop.f32.mrf.mxu0
  %v739 = vadd.f32 %v663, %v738
  %v740 = vpop.f32.mrf.mxu0
  %741 = vmatprep.mubr.bf16.mxu0 0
  %742 = vmatmul.mubr.bf16.gmra.mxu0 %v681
  %v743 = vpop.f32.mrf.mxu0
  %v744 = vadd.f32 %v663, %v743
  %v745 = vpop.f32.mrf.mxu0
  %v746 = vpop.f32.mrf.mxu0
  %v747 = vadd.f32 %v663, %v746
  %v748 = vpop.f32.mrf.mxu0
  %749 = vmatprep.mubr.bf16.mxu0 0
  %750 = vmatmul.mubr.bf16.gmra.mxu0 %v684
  %v751 = vpop.f32.mrf.mxu0
  %v752 = vadd.f32 %v663, %v751
  %v753 = vpop.f32.mrf.mxu0
  %v754 = vpop.f32.mrf.mxu0
  %v755 = vadd.f32 %v663, %v754
  %v756 = vpop.f32.mrf.mxu0
  %757 = vmatprep.mubr.bf16.mxu0 0
  %758 = vmatmul.mubr.bf16.gmra.mxu0 %v687
  %v759 = vpop.f32.mrf.mxu0
  %v760 = vadd.f32 %v663, %v759
  %v761 = vpop.f32.mrf.mxu0
  %v762 = vpop.f32.mrf.mxu0
  %v763 = vadd.f32 %v663, %v762
  %v764 = vpop.f32.mrf.mxu0
  %765 = vmatprep.mubr.bf16.mxu0 0
  %766 = vmatmul.mubr.bf16.gmra.mxu0 %v690
  %v767 = vpop.f32.mrf.mxu0
  %v768 = vadd.f32 %v663, %v767
  %v769 = vpop.f32.mrf.mxu0
  %v770 = vpop.f32.mrf.mxu0
  %v771 = vadd.f32 %v663, %v770
  %v772 = vpop.f32.mrf.mxu0
  %773 = vmatprep.mubr.bf16.mxu0 0
  %774 = vmatmul.mubr.bf16.gmra.mxu0 %v693
  %v775 = vpop.f32.mrf.mxu0
  %v776 = vadd.f32 %v663, %v775
  %v777 = vpop.f32.mrf.mxu0
  %v778 = vpop.f32.mrf.mxu0
  %v779 = vadd.f32 %v663, %v778
  %v780 = vpop.f32.mrf.mxu0
  %781 = vmatprep.mubr.bf16.mxu0 0
  %782 = vmatmul.mubr.bf16.gmra.mxu0 %v696
  %v783 = vpop.f32.mrf.mxu0
  %v784 = vadd.f32 %v663, %v783
  %v785 = vpop.f32.mrf.mxu0
  %v786 = vpop.f32.mrf.mxu0
  %v787 = vadd.f32 %v663, %v786
  %v788 = vpop.f32.mrf.mxu0
  %789 = vmatprep.mubr.bf16.mxu0 0
  %790 = vmatmul.mubr.bf16.gmra.mxu0 %v699
  %v791 = vpop.f32.mrf.mxu0
  %v792 = vadd.f32 %v663, %v791
  %v793 = vpop.f32.mrf.mxu0
  %v794 = vpop.f32.mrf.mxu0
  %v795 = vadd.f32 %v663, %v794
  %v796 = vpop.f32.mrf.mxu0
  %797 = vdwg.mxu0
  %v798 = vmul.f32 %v736, 0.35355338
  %v799 = vmul.f32 %v739, 0.35355338
  %v800 = vmul.f32 %v744, 0.35355338
  %v801 = vmul.f32 %v747, 0.35355338
  %v802 = vmul.f32 %v752, 0.35355338
  %v803 = vmul.f32 %v755, 0.35355338
  %v804 = vmul.f32 %v760, 0.35355338
  %v805 = vmul.f32 %v763, 0.35355338
  %v806 = vmul.f32 %v768, 0.35355338
  %v807 = vmul.f32 %v771, 0.35355338
  %v808 = vmul.f32 %v776, 0.35355338
  %v809 = vmul.f32 %v779, 0.35355338
  %v810 = vmul.f32 %v784, 0.35355338
  %v811 = vmul.f32 %v787, 0.35355338
  %v812 = vmul.f32 %v792, 0.35355338
  %v813 = vmul.f32 %v795, 0.35355338
  %v814 = vld [vmem:[#allocation2] sm:$0xff]
  %v815 = vld [vmem:[#allocation2 + $0x8] sm:$0xff]
  %v816 = vpack.c.bf16 %v799, %v798
  %v817 = vpack.c.bf16 %v801, %v800
  %v818 = vpack.c.bf16 %v803, %v802
  %v819 = vpack.c.bf16 %v805, %v804
  %v820 = vpack.c.bf16 %v807, %v806
  %v821 = vpack.c.bf16 %v809, %v808
  %v822 = vpack.c.bf16 %v811, %v810
  %v823 = vpack.c.bf16 %v813, %v812
  %v824 = vpack.c.bf16 %v815, %v814
  %vm825 = vcmask 64512
  %v827 = vsel %vm825, %v816, 0
  %v830 = vsel %vm825, %v817, 0
  %v833 = vsel %vm825, %v818, 0
  %v836 = vsel %vm825, %v819, 0
  %v839 = vsel %vm825, %v820, 0
  %v842 = vsel %vm825, %v821, 0
  %v845 = vsel %vm825, %v822, 0
  %v848 = vsel %vm825, %v823, 0
  %v851 = vsel %vm825, %v824, 0
  %853 = vmatprep.subr.bf16.mxu0 0
  %854 = vmatpush1.bf16.xpose.msra.mxu0 0
  %855 = vmatprep.subr.bf16.mxu0 0
  %856 = vmatpush1.bf16.xpose.msra.mxu0 0
  %857 = vmatprep.subr.bf16.mxu0 0
  %858 = vmatpush1.bf16.xpose.msra.mxu0 0
  %859 = vmatprep.subr.bf16.mxu0 0
  %860 = vmatpush1.bf16.xpose.msra.mxu0 0
  %861 = vmatprep.subr.bf16.mxu0 0
  %862 = vmatpush1.bf16.xpose.msra.mxu0 0
  %863 = vmatprep.subr.bf16.mxu0 0
  %864 = vmatpush1.bf16.xpose.msra.mxu0 0
  %865 = vmatprep.subr.bf16.mxu0 0
  %866 = vmatpush1.bf16.xpose.msra.mxu0 0
  %867 = vmatprep.subr.bf16.mxu0 0
  %868 = vmatpush1.bf16.xpose.msra.mxu0 %v851
  %869 = vmatprep.subr.bf16.mxu0 0
  %870 = vmatpush2.bf16.xpose.msra.mxu0 0
  %871 = vmatprep.subr.bf16.mxu0 0
  %872 = vmatpush2.bf16.xpose.msra.mxu0 0
  %873 = vmatprep.subr.bf16.mxu0 0
  %874 = vmatpush2.bf16.xpose.msra.mxu0 0
  %875 = vmatprep.subr.bf16.mxu0 0
  %876 = vmatpush2.bf16.xpose.msra.mxu0 0
  %877 = vmatprep.subr.bf16.mxu0 0
  %878 = vmatpush2.bf16.xpose.msra.mxu0 0
  %879 = vmatprep.subr.bf16.mxu0 0
  %880 = vmatpush2.bf16.xpose.msra.mxu0 0
  %881 = vmatprep.subr.bf16.mxu0 0
  %882 = vmatpush2.bf16.xpose.msra.mxu0 0
  %883 = vmatprep.subr.bf16.mxu0 0
  %884 = vmatpush2.bf16.xpose.msra.mxu0 0
  %885 = vmatprep.mubr.bf16.mxu0 0
  %886 = vmatmul.mubr.bf16.gmra.mxu0 %v827
  %v887 = vpop.f32.mrf.mxu0
  %v888 = vadd.f32 0.0, %v887
  %v889 = vpop.f32.mrf.mxu0
  %v890 = vpop.f32.mrf.mxu0
  %v891 = vadd.f32 0.0, %v890
  %v892 = vpop.f32.mrf.mxu0
  %893 = vmatprep.mubr.bf16.mxu0 0
  %894 = vmatmul.mubr.bf16.gmra.mxu0 %v830
  %v895 = vpop.f32.mrf.mxu0
  %v896 = vadd.f32 0.0, %v895
  %v897 = vpop.f32.mrf.mxu0
  %v898 = vpop.f32.mrf.mxu0
  %v899 = vadd.f32 0.0, %v898
  %v900 = vpop.f32.mrf.mxu0
  %901 = vmatprep.mubr.bf16.mxu0 0
  %902 = vmatmul.mubr.bf16.gmra.mxu0 %v833
  %v903 = vpop.f32.mrf.mxu0
  %v904 = vadd.f32 0.0, %v903
  %v905 = vpop.f32.mrf.mxu0
  %v906 = vpop.f32.mrf.mxu0
  %v907 = vadd.f32 0.0, %v906
  %v908 = vpop.f32.mrf.mxu0
  %909 = vmatprep.mubr.bf16.mxu0 0
  %910 = vmatmul.mubr.bf16.gmra.mxu0 %v836
  %v911 = vpop.f32.mrf.mxu0
  %v912 = vadd.f32 0.0, %v911
  %v913 = vpop.f32.mrf.mxu0
  %v914 = vpop.f32.mrf.mxu0
  %v915 = vadd.f32 0.0, %v914
  %v916 = vpop.f32.mrf.mxu0
  %917 = vmatprep.mubr.bf16.mxu0 0
  %918 = vmatmul.mubr.bf16.gmra.mxu0 %v839
  %v919 = vpop.f32.mrf.mxu0
  %v920 = vadd.f32 0.0, %v919
  %v921 = vpop.f32.mrf.mxu0
  %v922 = vpop.f32.mrf.mxu0
  %v923 = vadd.f32 0.0, %v922
  %v924 = vpop.f32.mrf.mxu0
  %925 = vmatprep.mubr.bf16.mxu0 0
  %926 = vmatmul.mubr.bf16.gmra.mxu0 %v842
  %v927 = vpop.f32.mrf.mxu0
  %v928 = vadd.f32 0.0, %v927
  %v929 = vpop.f32.mrf.mxu0
  %v930 = vpop.f32.mrf.mxu0
  %v931 = vadd.f32 0.0, %v930
  %v932 = vpop.f32.mrf.mxu0
  %933 = vmatprep.mubr.bf16.mxu0 0
  %934 = vmatmul.mubr.bf16.gmra.mxu0 %v845
  %v935 = vpop.f32.mrf.mxu0
  %v936 = vadd.f32 0.0, %v935
  %v937 = vpop.f32.mrf.mxu0
  %v938 = vpop.f32.mrf.mxu0
  %v939 = vadd.f32 0.0, %v938
  %v940 = vpop.f32.mrf.mxu0
  %941 = vmatprep.mubr.bf16.mxu0 0
  %942 = vmatmul.mubr.bf16.gmra.mxu0 %v848
  %v943 = vpop.f32.mrf.mxu0
  %v944 = vadd.f32 0.0, %v943
  %v945 = vpop.f32.mrf.mxu0
  %v946 = vpop.f32.mrf.mxu0
  %v947 = vadd.f32 0.0, %v946
  %v948 = vpop.f32.mrf.mxu0
  %949 = vdwg.mxu0
  %vm950 = vcmask 130048
  %v951 = vsel %vm950, %v888, -inf
  %952 = vmax.xlane.f32.xlu0 %v951
  %v953 = vpop.xlane.xlu0 %952
  %v954 = vsel %vm950, %v891, -inf
  %955 = vmax.xlane.f32.xlu0 %v954
  %v956 = vpop.xlane.xlu0 %955
  %v957 = vsel %vm950, %v896, -inf
  %958 = vmax.xlane.f32.xlu0 %v957
  %v959 = vpop.xlane.xlu0 %958
  %v960 = vsel %vm950, %v899, -inf
  %961 = vmax.xlane.f32.xlu0 %v960
  %v962 = vpop.xlane.xlu0 %961
  %v963 = vsel %vm950, %v904, -inf
  %964 = vmax.xlane.f32.xlu0 %v963
  %v965 = vpop.xlane.xlu0 %964
  %v966 = vsel %vm950, %v907, -inf
  %967 = vmax.xlane.f32.xlu0 %v966
  %v968 = vpop.xlane.xlu0 %967
  %v969 = vsel %vm950, %v912, -inf
  %970 = vmax.xlane.f32.xlu0 %v969
  %v971 = vpop.xlane.xlu0 %970
  %v972 = vsel %vm950, %v915, -inf
  %973 = vmax.xlane.f32.xlu0 %v972
  %v974 = vpop.xlane.xlu0 %973
  %v975 = vsel %vm950, %v920, -inf
  %976 = vmax.xlane.f32.xlu0 %v975
  %v977 = vpop.xlane.xlu0 %976
  %v978 = vsel %vm950, %v923, -inf
  %979 = vmax.xlane.f32.xlu0 %v978
  %v980 = vpop.xlane.xlu0 %979
  %v981 = vsel %vm950, %v928, -inf
  %982 = vmax.xlane.f32.xlu0 %v981
  %v983 = vpop.xlane.xlu0 %982
  %v984 = vsel %vm950, %v931, -inf
  %985 = vmax.xlane.f32.xlu0 %v984
  %v986 = vpop.xlane.xlu0 %985
  %v987 = vsel %vm950, %v936, -inf
  %988 = vmax.xlane.f32.xlu0 %v987
  %v989 = vpop.xlane.xlu0 %988
  %v990 = vsel %vm950, %v939, -inf
  %991 = vmax.xlane.f32.xlu0 %v990
  %v992 = vpop.xlane.xlu0 %991
  %v993 = vsel %vm950, %v944, -inf
  %994 = vmax.xlane.f32.xlu0 %v993
  %v995 = vpop.xlane.xlu0 %994
  %v996 = vsel %vm950, %v947, -inf
  %997 = vmax.xlane.f32.xlu0 %v996
  %v998 = vpop.xlane.xlu0 %997
  %v999 = vsub.f32 %v888, %v953
  %v1000 = vsub.f32 %v891, %v956
  %v1001 = vsub.f32 %v896, %v959
  %v1002 = vsub.f32 %v899, %v962
  %v1003 = vsub.f32 %v904, %v965
  %v1004 = vsub.f32 %v907, %v968
  %v1005 = vsub.f32 %v912, %v971
  %v1006 = vsub.f32 %v915, %v974
  %v1007 = vsub.f32 %v920, %v977
  %v1008 = vsub.f32 %v923, %v980
  %v1009 = vsub.f32 %v928, %v983
  %v1010 = vsub.f32 %v931, %v986
  %v1011 = vsub.f32 %v936, %v989
  %v1012 = vsub.f32 %v939, %v992
  %v1013 = vsub.f32 %v944, %v995
  %v1014 = vsub.f32 %v947, %v998
  %v1015 = vmul.f32 %v999, 1.442695
  %v1016 = vpow.pop %v1015
  %v1017 = vmul.f32 %v1000, 1.442695
  %v1018 = vpow.pop %v1017
  %v1019 = vmul.f32 %v1001, 1.442695
  %v1020 = vpow.pop %v1019
  %v1021 = vmul.f32 %v1002, 1.442695
  %v1022 = vpow.pop %v1021
  %v1023 = vmul.f32 %v1003, 1.442695
  %v1024 = vpow.pop %v1023
  %v1025 = vmul.f32 %v1004, 1.442695
  %v1026 = vpow.pop %v1025
  %v1027 = vmul.f32 %v1005, 1.442695
  %v1028 = vpow.pop %v1027
  %v1029 = vmul.f32 %v1006, 1.442695
  %v1030 = vpow.pop %v1029
  %v1031 = vmul.f32 %v1007, 1.442695
  %v1032 = vpow.pop %v1031
  %v1033 = vmul.f32 %v1008, 1.442695
  %v1034 = vpow.pop %v1033
  %v1035 = vmul.f32 %v1009, 1.442695
  %v1036 = vpow.pop %v1035
  %v1037 = vmul.f32 %v1010, 1.442695
  %v1038 = vpow.pop %v1037
  %v1039 = vmul.f32 %v1011, 1.442695
  %v1040 = vpow.pop %v1039
  %v1041 = vmul.f32 %v1012, 1.442695
  %v1042 = vpow.pop %v1041
  %v1043 = vmul.f32 %v1013, 1.442695
  %v1044 = vpow.pop %v1043
  %v1045 = vmul.f32 %v1014, 1.442695
  %v1046 = vpow.pop %v1045
  %v1047 = vsel %vm950, %v1016, 0.0
  %1048 = vadd.xlane.f32.xlu0 %v1047
  %v1049 = vpop.xlane.xlu0 %1048
  %v1050 = vsel %vm950, %v1018, 0.0
  %1051 = vadd.xlane.f32.xlu0 %v1050
  %v1052 = vpop.xlane.xlu0 %1051
  %v1053 = vsel %vm950, %v1020, 0.0
  %1054 = vadd.xlane.f32.xlu0 %v1053
  %v1055 = vpop.xlane.xlu0 %1054
  %v1056 = vsel %vm950, %v1022, 0.0
  %1057 = vadd.xlane.f32.xlu0 %v1056
  %v1058 = vpop.xlane.xlu0 %1057
  %v1059 = vsel %vm950, %v1024, 0.0
  %1060 = vadd.xlane.f32.xlu0 %v1059
  %v1061 = vpop.xlane.xlu0 %1060
  %v1062 = vsel %vm950, %v1026, 0.0
  %1063 = vadd.xlane.f32.xlu0 %v1062
  %v1064 = vpop.xlane.xlu0 %1063
  %v1065 = vsel %vm950, %v1028, 0.0
  %1066 = vadd.xlane.f32.xlu0 %v1065
  %v1067 = vpop.xlane.xlu0 %1066
  %v1068 = vsel %vm950, %v1030, 0.0
  %1069 = vadd.xlane.f32.xlu0 %v1068
  %v1070 = vpop.xlane.xlu0 %1069
  %v1071 = vsel %vm950, %v1032, 0.0
  %1072 = vadd.xlane.f32.xlu0 %v1071
  %v1073 = vpop.xlane.xlu0 %1072
  %v1074 = vsel %vm950, %v1034, 0.0
  %1075 = vadd.xlane.f32.xlu0 %v1074
  %v1076 = vpop.xlane.xlu0 %1075
  %v1077 = vsel %vm950, %v1036, 0.0
  %1078 = vadd.xlane.f32.xlu0 %v1077
  %v1079 = vpop.xlane.xlu0 %1078
  %v1080 = vsel %vm950, %v1038, 0.0
  %1081 = vadd.xlane.f32.xlu0 %v1080
  %v1082 = vpop.xlane.xlu0 %1081
  %v1083 = vsel %vm950, %v1040, 0.0
  %1084 = vadd.xlane.f32.xlu0 %v1083
  %v1085 = vpop.xlane.xlu0 %1084
  %v1086 = vsel %vm950, %v1042, 0.0
  %1087 = vadd.xlane.f32.xlu0 %v1086
  %v1088 = vpop.xlane.xlu0 %1087
  %v1089 = vsel %vm950, %v1044, 0.0
  %1090 = vadd.xlane.f32.xlu0 %v1089
  %v1091 = vpop.xlane.xlu0 %1090
  %v1092 = vsel %vm950, %v1046, 0.0
  %1093 = vadd.xlane.f32.xlu0 %v1092
  %v1094 = vpop.xlane.xlu0 %1093
  %v1095 = vrcp.pop %v1049
  %v1096 = vrcp.pop %v1052
  %v1097 = vrcp.pop %v1055
  %v1098 = vrcp.pop %v1058
  %v1099 = vrcp.pop %v1061
  %v1100 = vrcp.pop %v1064
  %v1101 = vrcp.pop %v1067
  %v1102 = vrcp.pop %v1070
  %v1103 = vrcp.pop %v1073
  %v1104 = vrcp.pop %v1076
  %v1105 = vrcp.pop %v1079
  %v1106 = vrcp.pop %v1082
  %v1107 = vrcp.pop %v1085
  %v1108 = vrcp.pop %v1088
  %v1109 = vrcp.pop %v1091
  %v1110 = vrcp.pop %v1094
  %v1111 = vmul.f32 %v1016, %v1095
  %v1112 = vmul.f32 %v1018, %v1096
  %v1113 = vmul.f32 %v1020, %v1097
  %v1114 = vmul.f32 %v1022, %v1098
  %v1115 = vmul.f32 %v1024, %v1099
  %v1116 = vmul.f32 %v1026, %v1100
  %v1117 = vmul.f32 %v1028, %v1101
  %v1118 = vmul.f32 %v1030, %v1102
  %v1119 = vmul.f32 %v1032, %v1103
  %v1120 = vmul.f32 %v1034, %v1104
  %v1121 = vmul.f32 %v1036, %v1105
  %v1122 = vmul.f32 %v1038, %v1106
  %v1123 = vmul.f32 %v1040, %v1107
  %v1124 = vmul.f32 %v1042, %v1108
  %v1125 = vmul.f32 %v1044, %v1109
  %v1126 = vmul.f32 %v1046, %v1110
  %v1127 = vpack.c.bf16 %v1112, %v1111
  %v1128 = vpack.c.bf16 %v1114, %v1113
  %v1129 = vpack.c.bf16 %v1116, %v1115
  %v1130 = vpack.c.bf16 %v1118, %v1117
  %v1131 = vpack.c.bf16 %v1120, %v1119
  %v1132 = vpack.c.bf16 %v1122, %v1121
  %v1133 = vpack.c.bf16 %v1124, %v1123
  %v1134 = vpack.c.bf16 %v1126, %v1125
  %1136 = vrot.lane.b32.xlu0 %v824, 96
  %v1137 = vpop.permute.xlu0 %1136
  %v1140 = vsel %vm950, %v1127, 0
  %v1143 = vsel %vm950, %v1128, 0
  %v1146 = vsel %vm950, %v1129, 0
  %v1149 = vsel %vm950, %v1130, 0
  %v1152 = vsel %vm950, %v1131, 0
  %v1155 = vsel %vm950, %v1132, 0
  %v1158 = vsel %vm950, %v1133, 0
  %v1161 = vsel %vm950, %v1134, 0
  %1163 = vmatprep.subr.bf16.mxu0 0
  %1164 = vmatpush1.bf16.msra.mxu0 0
  %1165 = vmatprep.subr.bf16.mxu0 0
  %1166 = vmatpush1.bf16.msra.mxu0 0
  %1167 = vmatprep.subr.bf16.mxu0 0
  %1168 = vmatpush1.bf16.msra.mxu0 0
  %1169 = vmatprep.subr.bf16.mxu0 0
  %1170 = vmatpush1.bf16.msra.mxu0 0
  %1171 = vmatprep.subr.bf16.mxu0 0
  %1172 = vmatpush1.bf16.msra.mxu0 0
  %1173 = vmatprep.subr.bf16.mxu0 0
  %1174 = vmatpush1.bf16.msra.mxu0 0
  %1175 = vmatprep.subr.bf16.mxu0 0
  %1176 = vmatpush1.bf16.msra.mxu0 0
  %1177 = vmatprep.subr.bf16.mxu0 0
  %1178 = vmatpush1.bf16.msra.mxu0 %v1137
  %1179 = vmatprep.subr.bf16.mxu0 0
  %1180 = vmatpush2.bf16.msra.mxu0 0
  %1181 = vmatprep.subr.bf16.mxu0 0
  %1182 = vmatpush2.bf16.msra.mxu0 0
  %1183 = vmatprep.subr.bf16.mxu0 0
  %1184 = vmatpush2.bf16.msra.mxu0 0
  %1185 = vmatprep.subr.bf16.mxu0 0
  %1186 = vmatpush2.bf16.msra.mxu0 0
  %1187 = vmatprep.subr.bf16.mxu0 0
  %1188 = vmatpush2.bf16.msra.mxu0 0
  %1189 = vmatprep.subr.bf16.mxu0 0
  %1190 = vmatpush2.bf16.msra.mxu0 0
  %1191 = vmatprep.subr.bf16.mxu0 0
  %1192 = vmatpush2.bf16.msra.mxu0 0
  %1193 = vmatprep.subr.bf16.mxu0 0
  %1194 = vmatpush2.bf16.msra.mxu0 0
  %1195 = vmatprep.mubr.bf16.mxu0 0
  %1196 = vmatmul.mubr.bf16.gmra.mxu0 %v1140
  %v1197 = vpop.f32.mrf.mxu0
  %v1198 = vadd.f32 0.0, %v1197
  %v1199 = vpop.f32.mrf.mxu0
  %v1200 = vpop.f32.mrf.mxu0
  %v1201 = vadd.f32 0.0, %v1200
  %v1202 = vpop.f32.mrf.mxu0
  %1203 = vmatprep.mubr.bf16.mxu0 0
  %1204 = vmatmul.mubr.bf16.gmra.mxu0 %v1143
  %v1205 = vpop.f32.mrf.mxu0
  %v1206 = vadd.f32 0.0, %v1205
  %v1207 = vpop.f32.mrf.mxu0
  %v1208 = vpop.f32.mrf.mxu0
  %v1209 = vadd.f32 0.0, %v1208
  %v1210 = vpop.f32.mrf.mxu0
  %1211 = vmatprep.mubr.bf16.mxu0 0
  %1212 = vmatmul.mubr.bf16.gmra.mxu0 %v1146
  %v1213 = vpop.f32.mrf.mxu0
  %v1214 = vadd.f32 0.0, %v1213
  %v1215 = vpop.f32.mrf.mxu0
  %v1216 = vpop.f32.mrf.mxu0
  %v1217 = vadd.f32 0.0, %v1216
  %v1218 = vpop.f32.mrf.mxu0
  %1219 = vmatprep.mubr.bf16.mxu0 0
  %1220 = vmatmul.mubr.bf16.gmra.mxu0 %v1149
  %v1221 = vpop.f32.mrf.mxu0
  %v1222 = vadd.f32 0.0, %v1221
  %v1223 = vpop.f32.mrf.mxu0
  %v1224 = vpop.f32.mrf.mxu0
  %v1225 = vadd.f32 0.0, %v1224
  %v1226 = vpop.f32.mrf.mxu0
  %1227 = vmatprep.mubr.bf16.mxu0 0
  %1228 = vmatmul.mubr.bf16.gmra.mxu0 %v1152
  %v1229 = vpop.f32.mrf.mxu0
  %v1230 = vadd.f32 0.0, %v1229
  %v1231 = vpop.f32.mrf.mxu0
  %v1232 = vpop.f32.mrf.mxu0
  %v1233 = vadd.f32 0.0, %v1232
  %v1234 = vpop.f32.mrf.mxu0
  %1235 = vmatprep.mubr.bf16.mxu0 0
  %1236 = vmatmul.mubr.bf16.gmra.mxu0 %v1155
  %v1237 = vpop.f32.mrf.mxu0
  %v1238 = vadd.f32 0.0, %v1237
  %v1239 = vpop.f32.mrf.mxu0
  %v1240 = vpop.f32.mrf.mxu0
  %v1241 = vadd.f32 0.0, %v1240
  %v1242 = vpop.f32.mrf.mxu0
  %1243 = vmatprep.mubr.bf16.mxu0 0
  %1244 = vmatmul.mubr.bf16.gmra.mxu0 %v1158
  %v1245 = vpop.f32.mrf.mxu0
  %v1246 = vadd.f32 0.0, %v1245
  %v1247 = vpop.f32.mrf.mxu0
  %v1248 = vpop.f32.mrf.mxu0
  %v1249 = vadd.f32 0.0, %v1248
  %v1250 = vpop.f32.mrf.mxu0
  %1251 = vmatprep.mubr.bf16.mxu0 0
  %1252 = vmatmul.mubr.bf16.gmra.mxu0 %v1161
  %v1253 = vpop.f32.mrf.mxu0
  %v1254 = vadd.f32 0.0, %v1253
  %v1255 = vpop.f32.mrf.mxu0
  %v1256 = vpop.f32.mrf.mxu0
  %v1257 = vadd.f32 0.0, %v1256
  %v1258 = vpop.f32.mrf.mxu0
  %1259 = vdwg.mxu0
  %1268 = vrot.lane.b32.xlu0 %v816, 120
  %v1269 = vpop.permute.xlu0 %1268
  %1270 = vrot.lane.b32.xlu0 %v817, 120
  %v1271 = vpop.permute.xlu0 %1270
  %1272 = vrot.lane.b32.xlu0 %v818, 120
  %v1273 = vpop.permute.xlu0 %1272
  %1274 = vrot.lane.b32.xlu0 %v819, 120
  %v1275 = vpop.permute.xlu0 %1274
  %1276 = vrot.lane.b32.xlu0 %v820, 120
  %v1277 = vpop.permute.xlu0 %1276
  %1278 = vrot.lane.b32.xlu0 %v821, 120
  %v1279 = vpop.permute.xlu0 %1278
  %1280 = vrot.lane.b32.xlu0 %v822, 120
  %v1281 = vpop.permute.xlu0 %1280
  %1282 = vrot.lane.b32.xlu0 %v823, 120
  %v1283 = vpop.permute.xlu0 %1282
  %1284 = vrot.lane.b32.xlu0 %v824, 120
  %v1285 = vpop.permute.xlu0 %1284
  %v1287 = vsel %vm825, %v1269, 0
  %v1290 = vsel %vm825, %v1271, 0
  %v1293 = vsel %vm825, %v1273, 0
  %v1296 = vsel %vm825, %v1275, 0
  %v1299 = vsel %vm825, %v1277, 0
  %v1302 = vsel %vm825, %v1279, 0
  %v1305 = vsel %vm825, %v1281, 0
  %v1308 = vsel %vm825, %v1283, 0
  %v1311 = vsel %vm825, %v1285, 0
  %1313 = vmatprep.subr.bf16.mxu0 0
  %1314 = vmatpush1.bf16.xpose.msra.mxu0 0
  %1315 = vmatprep.subr.bf16.mxu0 0
  %1316 = vmatpush1.bf16.xpose.msra.mxu0 0
  %1317 = vmatprep.subr.bf16.mxu0 0
  %1318 = vmatpush1.bf16.xpose.msra.mxu0 0
  %1319 = vmatprep.subr.bf16.mxu0 0
  %1320 = vmatpush1.bf16.xpose.msra.mxu0 0
  %1321 = vmatprep.subr.bf16.mxu0 0
  %1322 = vmatpush1.bf16.xpose.msra.mxu0 0
  %1323 = vmatprep.subr.bf16.mxu0 0
  %1324 = vmatpush1.bf16.xpose.msra.mxu0 0
  %1325 = vmatprep.subr.bf16.mxu0 0
  %1326 = vmatpush1.bf16.xpose.msra.mxu0 0
  %1327 = vmatprep.subr.bf16.mxu0 0
  %1328 = vmatpush1.bf16.xpose.msra.mxu0 %v1311
  %1329 = vmatprep.subr.bf16.mxu0 0
  %1330 = vmatpush2.bf16.xpose.msra.mxu0 0
  %1331 = vmatprep.subr.bf16.mxu0 0
  %1332 = vmatpush2.bf16.xpose.msra.mxu0 0
  %1333 = vmatprep.subr.bf16.mxu0 0
  %1334 = vmatpush2.bf16.xpose.msra.mxu0 0
  %1335 = vmatprep.subr.bf16.mxu0 0
  %1336 = vmatpush2.bf16.xpose.msra.mxu0 0
  %1337 = vmatprep.subr.bf16.mxu0 0
  %1338 = vmatpush2.bf16.xpose.msra.mxu0 0
  %1339 = vmatprep.subr.bf16.mxu0 0
  %1340 = vmatpush2.bf16.xpose.msra.mxu0 0
  %1341 = vmatprep.subr.bf16.mxu0 0
  %1342 = vmatpush2.bf16.xpose.msra.mxu0 0
  %1343 = vmatprep.subr.bf16.mxu0 0
  %1344 = vmatpush2.bf16.xpose.msra.mxu0 0
  %1345 = vmatprep.mubr.bf16.mxu0 0
  %1346 = vmatmul.mubr.bf16.gmra.mxu0 %v1287
  %v1347 = vpop.f32.mrf.mxu0
  %v1348 = vadd.f32 0.0, %v1347
  %v1349 = vpop.f32.mrf.mxu0
  %v1350 = vpop.f32.mrf.mxu0
  %v1351 = vadd.f32 0.0, %v1350
  %v1352 = vpop.f32.mrf.mxu0
  %1353 = vmatprep.mubr.bf16.mxu0 0
  %1354 = vmatmul.mubr.bf16.gmra.mxu0 %v1290
  %v1355 = vpop.f32.mrf.mxu0
  %v1356 = vadd.f32 0.0, %v1355
  %v1357 = vpop.f32.mrf.mxu0
  %v1358 = vpop.f32.mrf.mxu0
  %v1359 = vadd.f32 0.0, %v1358
  %v1360 = vpop.f32.mrf.mxu0
  %1361 = vmatprep.mubr.bf16.mxu0 0
  %1362 = vmatmul.mubr.bf16.gmra.mxu0 %v1293
  %v1363 = vpop.f32.mrf.mxu0
  %v1364 = vadd.f32 0.0, %v1363
  %v1365 = vpop.f32.mrf.mxu0
  %v1366 = vpop.f32.mrf.mxu0
  %v1367 = vadd.f32 0.0, %v1366
  %v1368 = vpop.f32.mrf.mxu0
  %1369 = vmatprep.mubr.bf16.mxu0 0
  %1370 = vmatmul.mubr.bf16.gmra.mxu0 %v1296
  %v1371 = vpop.f32.mrf.mxu0
  %v1372 = vadd.f32 0.0, %v1371
  %v1373 = vpop.f32.mrf.mxu0
  %v1374 = vpop.f32.mrf.mxu0
  %v1375 = vadd.f32 0.0, %v1374
  %v1376 = vpop.f32.mrf.mxu0
  %1377 = vmatprep.mubr.bf16.mxu0 0
  %1378 = vmatmul.mubr.bf16.gmra.mxu0 %v1299
  %v1379 = vpop.f32.mrf.mxu0
  %v1380 = vadd.f32 0.0, %v1379
  %v1381 = vpop.f32.mrf.mxu0
  %v1382 = vpop.f32.mrf.mxu0
  %v1383 = vadd.f32 0.0, %v1382
  %v1384 = vpop.f32.mrf.mxu0
  %1385 = vmatprep.mubr.bf16.mxu0 0
  %1386 = vmatmul.mubr.bf16.gmra.mxu0 %v1302
  %v1387 = vpop.f32.mrf.mxu0
  %v1388 = vadd.f32 0.0, %v1387
  %v1389 = vpop.f32.mrf.mxu0
  %v1390 = vpop.f32.mrf.mxu0
  %v1391 = vadd.f32 0.0, %v1390
  %v1392 = vpop.f32.mrf.mxu0
  %1393 = vmatprep.mubr.bf16.mxu0 0
  %1394 = vmatmul.mubr.bf16.gmra.mxu0 %v1305
  %v1395 = vpop.f32.mrf.mxu0
  %v1396 = vadd.f32 0.0, %v1395
  %v1397 = vpop.f32.mrf.mxu0
  %v1398 = vpop.f32.mrf.mxu0
  %v1399 = vadd.f32 0.0, %v1398
  %v1400 = vpop.f32.mrf.mxu0
  %1401 = vmatprep.mubr.bf16.mxu0 0
  %1402 = vmatmul.mubr.bf16.gmra.mxu0 %v1308
  %v1403 = vpop.f32.mrf.mxu0
  %v1404 = vadd.f32 0.0, %v1403
  %v1405 = vpop.f32.mrf.mxu0
  %v1406 = vpop.f32.mrf.mxu0
  %v1407 = vadd.f32 0.0, %v1406
  %v1408 = vpop.f32.mrf.mxu0
  %1409 = vdwg.mxu0
  %v1410 = vsel %vm950, %v1348, -inf
  %1411 = vmax.xlane.f32.xlu0 %v1410
  %v1412 = vpop.xlane.xlu0 %1411
  %v1413 = vsel %vm950, %v1351, -inf
  %1414 = vmax.xlane.f32.xlu0 %v1413
  %v1415 = vpop.xlane.xlu0 %1414
  %v1416 = vsel %vm950, %v1356, -inf
  %1417 = vmax.xlane.f32.xlu0 %v1416
  %v1418 = vpop.xlane.xlu0 %1417
  %v1419 = vsel %vm950, %v1359, -inf
  %1420 = vmax.xlane.f32.xlu0 %v1419
  %v1421 = vpop.xlane.xlu0 %1420
  %v1422 = vsel %vm950, %v1364, -inf
  %1423 = vmax.xlane.f32.xlu0 %v1422
  %v1424 = vpop.xlane.xlu0 %1423
  %v1425 = vsel %vm950, %v1367, -inf
  %1426 = vmax.xlane.f32.xlu0 %v1425
  %v1427 = vpop.xlane.xlu0 %1426
  %v1428 = vsel %vm950, %v1372, -inf
  %1429 = vmax.xlane.f32.xlu0 %v1428
  %v1430 = vpop.xlane.xlu0 %1429
  %v1431 = vsel %vm950, %v1375, -inf
  %1432 = vmax.xlane.f32.xlu0 %v1431
  %v1433 = vpop.xlane.xlu0 %1432
  %v1434 = vsel %vm950, %v1380, -inf
  %1435 = vmax.xlane.f32.xlu0 %v1434
  %v1436 = vpop.xlane.xlu0 %1435
  %v1437 = vsel %vm950, %v1383, -inf
  %1438 = vmax.xlane.f32.xlu0 %v1437
  %v1439 = vpop.xlane.xlu0 %1438
  %v1440 = vsel %vm950, %v1388, -inf
  %1441 = vmax.xlane.f32.xlu0 %v1440
  %v1442 = vpop.xlane.xlu0 %1441
  %v1443 = vsel %vm950, %v1391, -inf
  %1444 = vmax.xlane.f32.xlu0 %v1443
  %v1445 = vpop.xlane.xlu0 %1444
  %v1446 = vsel %vm950, %v1396, -inf
  %1447 = vmax.xlane.f32.xlu0 %v1446
  %v1448 = vpop.xlane.xlu0 %1447
  %v1449 = vsel %vm950, %v1399, -inf
  %1450 = vmax.xlane.f32.xlu0 %v1449
  %v1451 = vpop.xlane.xlu0 %1450
  %v1452 = vsel %vm950, %v1404, -inf
  %1453 = vmax.xlane.f32.xlu0 %v1452
  %v1454 = vpop.xlane.xlu0 %1453
  %v1455 = vsel %vm950, %v1407, -inf
  %1456 = vmax.xlane.f32.xlu0 %v1455
  %v1457 = vpop.xlane.xlu0 %1456
  %v1458 = vsub.f32 %v1348, %v1412
  %v1459 = vsub.f32 %v1351, %v1415
  %v1460 = vsub.f32 %v1356, %v1418
  %v1461 = vsub.f32 %v1359, %v1421
  %v1462 = vsub.f32 %v1364, %v1424
  %v1463 = vsub.f32 %v1367, %v1427
  %v1464 = vsub.f32 %v1372, %v1430
  %v1465 = vsub.f32 %v1375, %v1433
  %v1466 = vsub.f32 %v1380, %v1436
  %v1467 = vsub.f32 %v1383, %v1439
  %v1468 = vsub.f32 %v1388, %v1442
  %v1469 = vsub.f32 %v1391, %v1445
  %v1470 = vsub.f32 %v1396, %v1448
  %v1471 = vsub.f32 %v1399, %v1451
  %v1472 = vsub.f32 %v1404, %v1454
  %v1473 = vsub.f32 %v1407, %v1457
  %v1474 = vmul.f32 %v1458, 1.442695
  %v1475 = vpow.pop %v1474
  %v1476 = vmul.f32 %v1459, 1.442695
  %v1477 = vpow.pop %v1476
  %v1478 = vmul.f32 %v1460, 1.442695
  %v1479 = vpow.pop %v1478
  %v1480 = vmul.f32 %v1461, 1.442695
  %v1481 = vpow.pop %v1480
  %v1482 = vmul.f32 %v1462, 1.442695
  %v1483 = vpow.pop %v1482
  %v1484 = vmul.f32 %v1463, 1.442695
  %v1485 = vpow.pop %v1484
  %v1486 = vmul.f32 %v1464, 1.442695
  %v1487 = vpow.pop %v1486
  %v1488 = vmul.f32 %v1465, 1.442695
  %v1489 = vpow.pop %v1488
  %v1490 = vmul.f32 %v1466, 1.442695
  %v1491 = vpow.pop %v1490
  %v1492 = vmul.f32 %v1467, 1.442695
  %v1493 = vpow.pop %v1492
  %v1494 = vmul.f32 %v1468, 1.442695
  %v1495 = vpow.pop %v1494
  %v1496 = vmul.f32 %v1469, 1.442695
  %v1497 = vpow.pop %v1496
  %v1498 = vmul.f32 %v1470, 1.442695
  %v1499 = vpow.pop %v1498
  %v1500 = vmul.f32 %v1471, 1.442695
  %v1501 = vpow.pop %v1500
  %v1502 = vmul.f32 %v1472, 1.442695
  %v1503 = vpow.pop %v1502
  %v1504 = vmul.f32 %v1473, 1.442695
  %v1505 = vpow.pop %v1504
  %v1506 = vsel %vm950, %v1475, 0.0
  %1507 = vadd.xlane.f32.xlu0 %v1506
  %v1508 = vpop.xlane.xlu0 %1507
  %v1509 = vsel %vm950, %v1477, 0.0
  %1510 = vadd.xlane.f32.xlu0 %v1509
  %v1511 = vpop.xlane.xlu0 %1510
  %v1512 = vsel %vm950, %v1479, 0.0
  %1513 = vadd.xlane.f32.xlu0 %v1512
  %v1514 = vpop.xlane.xlu0 %1513
  %v1515 = vsel %vm950, %v1481, 0.0
  %1516 = vadd.xlane.f32.xlu0 %v1515
  %v1517 = vpop.xlane.xlu0 %1516
  %v1518 = vsel %vm950, %v1483, 0.0
  %1519 = vadd.xlane.f32.xlu0 %v1518
  %v1520 = vpop.xlane.xlu0 %1519
  %v1521 = vsel %vm950, %v1485, 0.0
  %1522 = vadd.xlane.f32.xlu0 %v1521
  %v1523 = vpop.xlane.xlu0 %1522
  %v1524 = vsel %vm950, %v1487, 0.0
  %1525 = vadd.xlane.f32.xlu0 %v1524
  %v1526 = vpop.xlane.xlu0 %1525
  %v1527 = vsel %vm950, %v1489, 0.0
  %1528 = vadd.xlane.f32.xlu0 %v1527
  %v1529 = vpop.xlane.xlu0 %1528
  %v1530 = vsel %vm950, %v1491, 0.0
  %1531 = vadd.xlane.f32.xlu0 %v1530
  %v1532 = vpop.xlane.xlu0 %1531
  %v1533 = vsel %vm950, %v1493, 0.0
  %1534 = vadd.xlane.f32.xlu0 %v1533
  %v1535 = vpop.xlane.xlu0 %1534
  %v1536 = vsel %vm950, %v1495, 0.0
  %1537 = vadd.xlane.f32.xlu0 %v1536
  %v1538 = vpop.xlane.xlu0 %1537
  %v1539 = vsel %vm950, %v1497, 0.0
  %1540 = vadd.xlane.f32.xlu0 %v1539
  %v1541 = vpop.xlane.xlu0 %1540
  %v1542 = vsel %vm950, %v1499, 0.0
  %1543 = vadd.xlane.f32.xlu0 %v1542
  %v1544 = vpop.xlane.xlu0 %1543
  %v1545 = vsel %vm950, %v1501, 0.0
  %1546 = vadd.xlane.f32.xlu0 %v1545
  %v1547 = vpop.xlane.xlu0 %1546
  %v1548 = vsel %vm950, %v1503, 0.0
  %1549 = vadd.xlane.f32.xlu0 %v1548
  %v1550 = vpop.xlane.xlu0 %1549
  %v1551 = vsel %vm950, %v1505, 0.0
  %1552 = vadd.xlane.f32.xlu0 %v1551
  %v1553 = vpop.xlane.xlu0 %1552
  %v1554 = vrcp.pop %v1508
  %v1555 = vrcp.pop %v1511
  %v1556 = vrcp.pop %v1514
  %v1557 = vrcp.pop %v1517
  %v1558 = vrcp.pop %v1520
  %v1559 = vrcp.pop %v1523
  %v1560 = vrcp.pop %v1526
  %v1561 = vrcp.pop %v1529
  %v1562 = vrcp.pop %v1532
  %v1563 = vrcp.pop %v1535
  %v1564 = vrcp.pop %v1538
  %v1565 = vrcp.pop %v1541
  %v1566 = vrcp.pop %v1544
  %v1567 = vrcp.pop %v1547
  %v1568 = vrcp.pop %v1550
  %v1569 = vrcp.pop %v1553
  %v1570 = vmul.f32 %v1475, %v1554
  %v1571 = vmul.f32 %v1477, %v1555
  %v1572 = vmul.f32 %v1479, %v1556
  %v1573 = vmul.f32 %v1481, %v1557
  %v1574 = vmul.f32 %v1483, %v1558
  %v1575 = vmul.f32 %v1485, %v1559
  %v1576 = vmul.f32 %v1487, %v1560
  %v1577 = vmul.f32 %v1489, %v1561
  %v1578 = vmul.f32 %v1491, %v1562
  %v1579 = vmul.f32 %v1493, %v1563
  %v1580 = vmul.f32 %v1495, %v1564
  %v1581 = vmul.f32 %v1497, %v1565
  %v1582 = vmul.f32 %v1499, %v1566
  %v1583 = vmul.f32 %v1501, %v1567
  %v1584 = vmul.f32 %v1503, %v1568
  %v1585 = vmul.f32 %v1505, %v1569
  %v1586 = vpack.c.bf16 %v1571, %v1570
  %v1587 = vpack.c.bf16 %v1573, %v1572
  %v1588 = vpack.c.bf16 %v1575, %v1574
  %v1589 = vpack.c.bf16 %v1577, %v1576
  %v1590 = vpack.c.bf16 %v1579, %v1578
  %v1591 = vpack.c.bf16 %v1581, %v1580
  %v1592 = vpack.c.bf16 %v1583, %v1582
  %v1593 = vpack.c.bf16 %v1585, %v1584
  %1594 = vrot.lane.b32.xlu0 %v824, 88
  %v1595 = vpop.permute.xlu0 %1594
  %v1598 = vsel %vm950, %v1586, 0
  %v1601 = vsel %vm950, %v1587, 0
  %v1604 = vsel %vm950, %v1588, 0
  %v1607 = vsel %vm950, %v1589, 0
  %v1610 = vsel %vm950, %v1590, 0
  %v1613 = vsel %vm950, %v1591, 0
  %v1616 = vsel %vm950, %v1592, 0
  %v1619 = vsel %vm950, %v1593, 0
  %1621 = vmatprep.subr.bf16.mxu0 0
  %1622 = vmatpush1.bf16.msra.mxu0 0
  %1623 = vmatprep.subr.bf16.mxu0 0
  %1624 = vmatpush1.bf16.msra.mxu0 0
  %1625 = vmatprep.subr.bf16.mxu0 0
  %1626 = vmatpush1.bf16.msra.mxu0 0
  %1627 = vmatprep.subr.bf16.mxu0 0
  %1628 = vmatpush1.bf16.msra.mxu0 0
  %1629 = vmatprep.subr.bf16.mxu0 0
  %1630 = vmatpush1.bf16.msra.mxu0 0
  %1631 = vmatprep.subr.bf16.mxu0 0
  %1632 = vmatpush1.bf16.msra.mxu0 0
  %1633 = vmatprep.subr.bf16.mxu0 0
  %1634 = vmatpush1.bf16.msra.mxu0 0
  %1635 = vmatprep.subr.bf16.mxu0 0
  %1636 = vmatpush1.bf16.msra.mxu0 %v1595
  %1637 = vmatprep.subr.bf16.mxu0 0
  %1638 = vmatpush2.bf16.msra.mxu0 0
  %1639 = vmatprep.subr.bf16.mxu0 0
  %1640 = vmatpush2.bf16.msra.mxu0 0
  %1641 = vmatprep.subr.bf16.mxu0 0
  %1642 = vmatpush2.bf16.msra.mxu0 0
  %1643 = vmatprep.subr.bf16.mxu0 0
  %1644 = vmatpush2.bf16.msra.mxu0 0
  %1645 = vmatprep.subr.bf16.mxu0 0
  %1646 = vmatpush2.bf16.msra.mxu0 0
  %1647 = vmatprep.subr.bf16.mxu0 0
  %1648 = vmatpush2.bf16.msra.mxu0 0
  %1649 = vmatprep.subr.bf16.mxu0 0
  %1650 = vmatpush2.bf16.msra.mxu0 0
  %1651 = vmatprep.subr.bf16.mxu0 0
  %1652 = vmatpush2.bf16.msra.mxu0 0
  %1653 = vmatprep.mubr.bf16.mxu0 0
  %1654 = vmatmul.mubr.bf16.gmra.mxu0 %v1598
  %v1655 = vpop.f32.mrf.mxu0
  %v1656 = vadd.f32 0.0, %v1655
  %v1657 = vpop.f32.mrf.mxu0
  %v1658 = vpop.f32.mrf.mxu0
  %v1659 = vadd.f32 0.0, %v1658
  %v1660 = vpop.f32.mrf.mxu0
  %1661 = vmatprep.mubr.bf16.mxu0 0
  %1662 = vmatmul.mubr.bf16.gmra.mxu0 %v1601
  %v1663 = vpop.f32.mrf.mxu0
  %v1664 = vadd.f32 0.0, %v1663
  %v1665 = vpop.f32.mrf.mxu0
  %v1666 = vpop.f32.mrf.mxu0
  %v1667 = vadd.f32 0.0, %v1666
  %v1668 = vpop.f32.mrf.mxu0
  %1669 = vmatprep.mubr.bf16.mxu0 0
  %1670 = vmatmul.mubr.bf16.gmra.mxu0 %v1604
  %v1671 = vpop.f32.mrf.mxu0
  %v1672 = vadd.f32 0.0, %v1671
  %v1673 = vpop.f32.mrf.mxu0
  %v1674 = vpop.f32.mrf.mxu0
  %v1675 = vadd.f32 0.0, %v1674
  %v1676 = vpop.f32.mrf.mxu0
  %1677 = vmatprep.mubr.bf16.mxu0 0
  %1678 = vmatmul.mubr.bf16.gmra.mxu0 %v1607
  %v1679 = vpop.f32.mrf.mxu0
  %v1680 = vadd.f32 0.0, %v1679
  %v1681 = vpop.f32.mrf.mxu0
  %v1682 = vpop.f32.mrf.mxu0
  %v1683 = vadd.f32 0.0, %v1682
  %v1684 = vpop.f32.mrf.mxu0
  %1685 = vmatprep.mubr.bf16.mxu0 0
  %1686 = vmatmul.mubr.bf16.gmra.mxu0 %v1610
  %v1687 = vpop.f32.mrf.mxu0
  %v1688 = vadd.f32 0.0, %v1687
  %v1689 = vpop.f32.mrf.mxu0
  %v1690 = vpop.f32.mrf.mxu0
  %v1691 = vadd.f32 0.0, %v1690
  %v1692 = vpop.f32.mrf.mxu0
  %1693 = vmatprep.mubr.bf16.mxu0 0
  %1694 = vmatmul.mubr.bf16.gmra.mxu0 %v1613
  %v1695 = vpop.f32.mrf.mxu0
  %v1696 = vadd.f32 0.0, %v1695
  %v1697 = vpop.f32.mrf.mxu0
  %v1698 = vpop.f32.mrf.mxu0
  %v1699 = vadd.f32 0.0, %v1698
  %v1700 = vpop.f32.mrf.mxu0
  %1701 = vmatprep.mubr.bf16.mxu0 0
  %1702 = vmatmul.mubr.bf16.gmra.mxu0 %v1616
  %v1703 = vpop.f32.mrf.mxu0
  %v1704 = vadd.f32 0.0, %v1703
  %v1705 = vpop.f32.mrf.mxu0
  %v1706 = vpop.f32.mrf.mxu0
  %v1707 = vadd.f32 0.0, %v1706
  %v1708 = vpop.f32.mrf.mxu0
  %1709 = vmatprep.mubr.bf16.mxu0 0
  %1710 = vmatmul.mubr.bf16.gmra.mxu0 %v1619
  %v1711 = vpop.f32.mrf.mxu0
  %v1712 = vadd.f32 0.0, %v1711
  %v1713 = vpop.f32.mrf.mxu0
  %v1714 = vpop.f32.mrf.mxu0
  %v1715 = vadd.f32 0.0, %v1714
  %v1716 = vpop.f32.mrf.mxu0
  %1717 = vdwg.mxu0
  %1718 = vrot.lane.b32.xlu0 %v816, 112
  %v1719 = vpop.permute.xlu0 %1718
  %1720 = vrot.lane.b32.xlu0 %v817, 112
  %v1721 = vpop.permute.xlu0 %1720
  %1722 = vrot.lane.b32.xlu0 %v818, 112
  %v1723 = vpop.permute.xlu0 %1722
  %1724 = vrot.lane.b32.xlu0 %v819, 112
  %v1725 = vpop.permute.xlu0 %1724
  %1726 = vrot.lane.b32.xlu0 %v820, 112
  %v1727 = vpop.permute.xlu0 %1726
  %1728 = vrot.lane.b32.xlu0 %v821, 112
  %v1729 = vpop.permute.xlu0 %1728
  %1730 = vrot.lane.b32.xlu0 %v822, 112
  %v1731 = vpop.permute.xlu0 %1730
  %1732 = vrot.lane.b32.xlu0 %v823, 112
  %v1733 = vpop.permute.xlu0 %1732
  %1734 = vrot.lane.b32.xlu0 %v824, 112
  %v1735 = vpop.permute.xlu0 %1734
  %v1737 = vsel %vm825, %v1719, 0
  %v1740 = vsel %vm825, %v1721, 0
  %v1743 = vsel %vm825, %v1723, 0
  %v1746 = vsel %vm825, %v1725, 0
  %v1749 = vsel %vm825, %v1727, 0
  %v1752 = vsel %vm825, %v1729, 0
  %v1755 = vsel %vm825, %v1731, 0
  %v1758 = vsel %vm825, %v1733, 0
  %v1761 = vsel %vm825, %v1735, 0
  %1763 = vmatprep.subr.bf16.mxu0 0
  %1764 = vmatpush1.bf16.xpose.msra.mxu0 0
  %1765 = vmatprep.subr.bf16.mxu0 0
  %1766 = vmatpush1.bf16.xpose.msra.mxu0 0
  %1767 = vmatprep.subr.bf16.mxu0 0
  %1768 = vmatpush1.bf16.xpose.msra.mxu0 0
  %1769 = vmatprep.subr.bf16.mxu0 0
  %1770 = vmatpush1.bf16.xpose.msra.mxu0 0
  %1771 = vmatprep.subr.bf16.mxu0 0
  %1772 = vmatpush1.bf16.xpose.msra.mxu0 0
  %1773 = vmatprep.subr.bf16.mxu0 0
  %1774 = vmatpush1.bf16.xpose.msra.mxu0 0
  %1775 = vmatprep.subr.bf16.mxu0 0
  %1776 = vmatpush1.bf16.xpose.msra.mxu0 0
  %1777 = vmatprep.subr.bf16.mxu0 0
  %1778 = vmatpush1.bf16.xpose.msra.mxu0 %v1761
  %1779 = vmatprep.subr.bf16.mxu0 0
  %1780 = vmatpush2.bf16.xpose.msra.mxu0 0
  %1781 = vmatprep.subr.bf16.mxu0 0
  %1782 = vmatpush2.bf16.xpose.msra.mxu0 0
  %1783 = vmatprep.subr.bf16.mxu0 0
  %1784 = vmatpush2.bf16.xpose.msra.mxu0 0
  %1785 = vmatprep.subr.bf16.mxu0 0
  %1786 = vmatpush2.bf16.xpose.msra.mxu0 0
  %1787 = vmatprep.subr.bf16.mxu0 0
  %1788 = vmatpush2.bf16.xpose.msra.mxu0 0
  %1789 = vmatprep.subr.bf16.mxu0 0
  %1790 = vmatpush2.bf16.xpose.msra.mxu0 0
  %1791 = vmatprep.subr.bf16.mxu0 0
  %1792 = vmatpush2.bf16.xpose.msra.mxu0 0
  %1793 = vmatprep.subr.bf16.mxu0 0
  %1794 = vmatpush2.bf16.xpose.msra.mxu0 0
  %1795 = vmatprep.mubr.bf16.mxu0 0
  %1796 = vmatmul.mubr.bf16.gmra.mxu0 %v1737
  %v1797 = vpop.f32.mrf.mxu0
  %v1798 = vadd.f32 0.0, %v1797
  %v1799 = vpop.f32.mrf.mxu0
  %v1800 = vpop.f32.mrf.mxu0
  %v1801 = vadd.f32 0.0, %v1800
  %v1802 = vpop.f32.mrf.mxu0
  %1803 = vmatprep.mubr.bf16.mxu0 0
  %1804 = vmatmul.mubr.bf16.gmra.mxu0 %v1740
  %v1805 = vpop.f32.mrf.mxu0
  %v1806 = vadd.f32 0.0, %v1805
  %v1807 = vpop.f32.mrf.mxu0
  %v1808 = vpop.f32.mrf.mxu0
  %v1809 = vadd.f32 0.0, %v1808
  %v1810 = vpop.f32.mrf.mxu0
  %1811 = vmatprep.mubr.bf16.mxu0 0
  %1812 = vmatmul.mubr.bf16.gmra.mxu0 %v1743
  %v1813 = vpop.f32.mrf.mxu0
  %v1814 = vadd.f32 0.0, %v1813
  %v1815 = vpop.f32.mrf.mxu0
  %v1816 = vpop.f32.mrf.mxu0
  %v1817 = vadd.f32 0.0, %v1816
  %v1818 = vpop.f32.mrf.mxu0
  %1819 = vmatprep.mubr.bf16.mxu0 0
  %1820 = vmatmul.mubr.bf16.gmra.mxu0 %v1746
  %v1821 = vpop.f32.mrf.mxu0
  %v1822 = vadd.f32 0.0, %v1821
  %v1823 = vpop.f32.mrf.mxu0
  %v1824 = vpop.f32.mrf.mxu0
  %v1825 = vadd.f32 0.0, %v1824
  %v1826 = vpop.f32.mrf.mxu0
  %1827 = vmatprep.mubr.bf16.mxu0 0
  %1828 = vmatmul.mubr.bf16.gmra.mxu0 %v1749
  %v1829 = vpop.f32.mrf.mxu0
  %v1830 = vadd.f32 0.0, %v1829
  %v1831 = vpop.f32.mrf.mxu0
  %v1832 = vpop.f32.mrf.mxu0
  %v1833 = vadd.f32 0.0, %v1832
  %v1834 = vpop.f32.mrf.mxu0
  %1835 = vmatprep.mubr.bf16.mxu0 0
  %1836 = vmatmul.mubr.bf16.gmra.mxu0 %v1752
  %v1837 = vpop.f32.mrf.mxu0
  %v1838 = vadd.f32 0.0, %v1837
  %v1839 = vpop.f32.mrf.mxu0
  %v1840 = vpop.f32.mrf.mxu0
  %v1841 = vadd.f32 0.0, %v1840
  %v1842 = vpop.f32.mrf.mxu0
  %1843 = vmatprep.mubr.bf16.mxu0 0
  %1844 = vmatmul.mubr.bf16.gmra.mxu0 %v1755
  %v1845 = vpop.f32.mrf.mxu0
  %v1846 = vadd.f32 0.0, %v1845
  %v1847 = vpop.f32.mrf.mxu0
  %v1848 = vpop.f32.mrf.mxu0
  %v1849 = vadd.f32 0.0, %v1848
  %v1850 = vpop.f32.mrf.mxu0
  %1851 = vmatprep.mubr.bf16.mxu0 0
  %1852 = vmatmul.mubr.bf16.gmra.mxu0 %v1758
  %v1853 = vpop.f32.mrf.mxu0
  %v1854 = vadd.f32 0.0, %v1853
  %v1855 = vpop.f32.mrf.mxu0
  %v1856 = vpop.f32.mrf.mxu0
  %v1857 = vadd.f32 0.0, %v1856
  %v1858 = vpop.f32.mrf.mxu0
  %1859 = vdwg.mxu0
  %v1860 = vsel %vm950, %v1798, -inf
  %1861 = vmax.xlane.f32.xlu0 %v1860
  %v1862 = vpop.xlane.xlu0 %1861
  %v1863 = vsel %vm950, %v1801, -inf
  %1864 = vmax.xlane.f32.xlu0 %v1863
  %v1865 = vpop.xlane.xlu0 %1864
  %v1866 = vsel %vm950, %v1806, -inf
  %1867 = vmax.xlane.f32.xlu0 %v1866
  %v1868 = vpop.xlane.xlu0 %1867
  %v1869 = vsel %vm950, %v1809, -inf
  %1870 = vmax.xlane.f32.xlu0 %v1869
  %v1871 = vpop.xlane.xlu0 %1870
  %v1872 = vsel %vm950, %v1814, -inf
  %1873 = vmax.xlane.f32.xlu0 %v1872
  %v1874 = vpop.xlane.xlu0 %1873
  %v1875 = vsel %vm950, %v1817, -inf
  %1876 = vmax.xlane.f32.xlu0 %v1875
  %v1877 = vpop.xlane.xlu0 %1876
  %v1878 = vsel %vm950, %v1822, -inf
  %1879 = vmax.xlane.f32.xlu0 %v1878
  %v1880 = vpop.xlane.xlu0 %1879
  %v1881 = vsel %vm950, %v1825, -inf
  %1882 = vmax.xlane.f32.xlu0 %v1881
  %v1883 = vpop.xlane.xlu0 %1882
  %v1884 = vsel %vm950, %v1830, -inf
  %1885 = vmax.xlane.f32.xlu0 %v1884
  %v1886 = vpop.xlane.xlu0 %1885
  %v1887 = vsel %vm950, %v1833, -inf
  %1888 = vmax.xlane.f32.xlu0 %v1887
  %v1889 = vpop.xlane.xlu0 %1888
  %v1890 = vsel %vm950, %v1838, -inf
  %1891 = vmax.xlane.f32.xlu0 %v1890
  %v1892 = vpop.xlane.xlu0 %1891
  %v1893 = vsel %vm950, %v1841, -inf
  %1894 = vmax.xlane.f32.xlu0 %v1893
  %v1895 = vpop.xlane.xlu0 %1894
  %v1896 = vsel %vm950, %v1846, -inf
  %1897 = vmax.xlane.f32.xlu0 %v1896
  %v1898 = vpop.xlane.xlu0 %1897
  %v1899 = vsel %vm950, %v1849, -inf
  %1900 = vmax.xlane.f32.xlu0 %v1899
  %v1901 = vpop.xlane.xlu0 %1900
  %v1902 = vsel %vm950, %v1854, -inf
  %1903 = vmax.xlane.f32.xlu0 %v1902
  %v1904 = vpop.xlane.xlu0 %1903
  %v1905 = vsel %vm950, %v1857, -inf
  %1906 = vmax.xlane.f32.xlu0 %v1905
  %v1907 = vpop.xlane.xlu0 %1906
  %v1908 = vsub.f32 %v1798, %v1862
  %v1909 = vsub.f32 %v1801, %v1865
  %v1910 = vsub.f32 %v1806, %v1868
  %v1911 = vsub.f32 %v1809, %v1871
  %v1912 = vsub.f32 %v1814, %v1874
  %v1913 = vsub.f32 %v1817, %v1877
  %v1914 = vsub.f32 %v1822, %v1880
  %v1915 = vsub.f32 %v1825, %v1883
  %v1916 = vsub.f32 %v1830, %v1886
  %v1917 = vsub.f32 %v1833, %v1889
  %v1918 = vsub.f32 %v1838, %v1892
  %v1919 = vsub.f32 %v1841, %v1895
  %v1920 = vsub.f32 %v1846, %v1898
  %v1921 = vsub.f32 %v1849, %v1901
  %v1922 = vsub.f32 %v1854, %v1904
  %v1923 = vsub.f32 %v1857, %v1907
  %v1924 = vmul.f32 %v1908, 1.442695
  %v1925 = vpow.pop %v1924
  %v1926 = vmul.f32 %v1909, 1.442695
  %v1927 = vpow.pop %v1926
  %v1928 = vmul.f32 %v1910, 1.442695
  %v1929 = vpow.pop %v1928
  %v1930 = vmul.f32 %v1911, 1.442695
  %v1931 = vpow.pop %v1930
  %v1932 = vmul.f32 %v1912, 1.442695
  %v1933 = vpow.pop %v1932
  %v1934 = vmul.f32 %v1913, 1.442695
  %v1935 = vpow.pop %v1934
  %v1936 = vmul.f32 %v1914, 1.442695
  %v1937 = vpow.pop %v1936
  %v1938 = vmul.f32 %v1915, 1.442695
  %v1939 = vpow.pop %v1938
  %v1940 = vmul.f32 %v1916, 1.442695
  %v1941 = vpow.pop %v1940
  %v1942 = vmul.f32 %v1917, 1.442695
  %v1943 = vpow.pop %v1942
  %v1944 = vmul.f32 %v1918, 1.442695
  %v1945 = vpow.pop %v1944
  %v1946 = vmul.f32 %v1919, 1.442695
  %v1947 = vpow.pop %v1946
  %v1948 = vmul.f32 %v1920, 1.442695
  %v1949 = vpow.pop %v1948
  %v1950 = vmul.f32 %v1921, 1.442695
  %v1951 = vpow.pop %v1950
  %v1952 = vmul.f32 %v1922, 1.442695
  %v1953 = vpow.pop %v1952
  %v1954 = vmul.f32 %v1923, 1.442695
  %v1955 = vpow.pop %v1954
  %v1956 = vsel %vm950, %v1925, 0.0
  %1957 = vadd.xlane.f32.xlu0 %v1956
  %v1958 = vpop.xlane.xlu0 %1957
  %v1959 = vsel %vm950, %v1927, 0.0
  %1960 = vadd.xlane.f32.xlu0 %v1959
  %v1961 = vpop.xlane.xlu0 %1960
  %v1962 = vsel %vm950, %v1929, 0.0
  %1963 = vadd.xlane.f32.xlu0 %v1962
  %v1964 = vpop.xlane.xlu0 %1963
  %v1965 = vsel %vm950, %v1931, 0.0
  %1966 = vadd.xlane.f32.xlu0 %v1965
  %v1967 = vpop.xlane.xlu0 %1966
  %v1968 = vsel %vm950, %v1933, 0.0
  %1969 = vadd.xlane.f32.xlu0 %v1968
  %v1970 = vpop.xlane.xlu0 %1969
  %v1971 = vsel %vm950, %v1935, 0.0
  %1972 = vadd.xlane.f32.xlu0 %v1971
  %v1973 = vpop.xlane.xlu0 %1972
  %v1974 = vsel %vm950, %v1937, 0.0
  %1975 = vadd.xlane.f32.xlu0 %v1974
  %v1976 = vpop.xlane.xlu0 %1975
  %v1977 = vsel %vm950, %v1939, 0.0
  %1978 = vadd.xlane.f32.xlu0 %v1977
  %v1979 = vpop.xlane.xlu0 %1978
  %v1980 = vsel %vm950, %v1941, 0.0
  %1981 = vadd.xlane.f32.xlu0 %v1980
  %v1982 = vpop.xlane.xlu0 %1981
  %v1983 = vsel %vm950, %v1943, 0.0
  %1984 = vadd.xlane.f32.xlu0 %v1983
  %v1985 = vpop.xlane.xlu0 %1984
  %v1986 = vsel %vm950, %v1945, 0.0
  %1987 = vadd.xlane.f32.xlu0 %v1986
  %v1988 = vpop.xlane.xlu0 %1987
  %v1989 = vsel %vm950, %v1947, 0.0
  %1990 = vadd.xlane.f32.xlu0 %v1989
  %v1991 = vpop.xlane.xlu0 %1990
  %v1992 = vsel %vm950, %v1949, 0.0
  %1993 = vadd.xlane.f32.xlu0 %v1992
  %v1994 = vpop.xlane.xlu0 %1993
  %v1995 = vsel %vm950, %v1951, 0.0
  %1996 = vadd.xlane.f32.xlu0 %v1995
  %v1997 = vpop.xlane.xlu0 %1996
  %v1998 = vsel %vm950, %v1953, 0.0
  %1999 = vadd.xlane.f32.xlu0 %v1998
  %v2000 = vpop.xlane.xlu0 %1999
  %v2001 = vsel %vm950, %v1955, 0.0
  %2002 = vadd.xlane.f32.xlu0 %v2001
  %v2003 = vpop.xlane.xlu0 %2002
  %v2004 = vrcp.pop %v1958
  %v2005 = vrcp.pop %v1961
  %v2006 = vrcp.pop %v1964
  %v2007 = vrcp.pop %v1967
  %v2008 = vrcp.pop %v1970
  %v2009 = vrcp.pop %v1973
  %v2010 = vrcp.pop %v1976
  %v2011 = vrcp.pop %v1979
  %v2012 = vrcp.pop %v1982
  %v2013 = vrcp.pop %v1985
  %v2014 = vrcp.pop %v1988
  %v2015 = vrcp.pop %v1991
  %v2016 = vrcp.pop %v1994
  %v2017 = vrcp.pop %v1997
  %v2018 = vrcp.pop %v2000
  %v2019 = vrcp.pop %v2003
  %v2020 = vmul.f32 %v1925, %v2004
  %v2021 = vmul.f32 %v1927, %v2005
  %v2022 = vmul.f32 %v1929, %v2006
  %v2023 = vmul.f32 %v1931, %v2007
  %v2024 = vmul.f32 %v1933, %v2008
  %v2025 = vmul.f32 %v1935, %v2009
  %v2026 = vmul.f32 %v1937, %v2010
  %v2027 = vmul.f32 %v1939, %v2011
  %v2028 = vmul.f32 %v1941, %v2012
  %v2029 = vmul.f32 %v1943, %v2013
  %v2030 = vmul.f32 %v1945, %v2014
  %v2031 = vmul.f32 %v1947, %v2015
  %v2032 = vmul.f32 %v1949, %v2016
  %v2033 = vmul.f32 %v1951, %v2017
  %v2034 = vmul.f32 %v1953, %v2018
  %v2035 = vmul.f32 %v1955, %v2019
  %v2036 = vpack.c.bf16 %v2021, %v2020
  %v2037 = vpack.c.bf16 %v2023, %v2022
  %v2038 = vpack.c.bf16 %v2025, %v2024
  %v2039 = vpack.c.bf16 %v2027, %v2026
  %v2040 = vpack.c.bf16 %v2029, %v2028
  %v2041 = vpack.c.bf16 %v2031, %v2030
  %v2042 = vpack.c.bf16 %v2033, %v2032
  %v2043 = vpack.c.bf16 %v2035, %v2034
  %2044 = vrot.lane.b32.xlu0 %v824, 80
  %v2045 = vpop.permute.xlu0 %2044
  %v2048 = vsel %vm950, %v2036, 0
  %v2051 = vsel %vm950, %v2037, 0
  %v2054 = vsel %vm950, %v2038, 0
  %v2057 = vsel %vm950, %v2039, 0
  %v2060 = vsel %vm950, %v2040, 0
  %v2063 = vsel %vm950, %v2041, 0
  %v2066 = vsel %vm950, %v2042, 0
  %v2069 = vsel %vm950, %v2043, 0
  %2071 = vmatprep.subr.bf16.mxu0 0
  %2072 = vmatpush1.bf16.msra.mxu0 0
  %2073 = vmatprep.subr.bf16.mxu0 0
  %2074 = vmatpush1.bf16.msra.mxu0 0
  %2075 = vmatprep.subr.bf16.mxu0 0
  %2076 = vmatpush1.bf16.msra.mxu0 0
  %2077 = vmatprep.subr.bf16.mxu0 0
  %2078 = vmatpush1.bf16.msra.mxu0 0
  %2079 = vmatprep.subr.bf16.mxu0 0
  %2080 = vmatpush1.bf16.msra.mxu0 0
  %2081 = vmatprep.subr.bf16.mxu0 0
  %2082 = vmatpush1.bf16.msra.mxu0 0
  %2083 = vmatprep.subr.bf16.mxu0 0
  %2084 = vmatpush1.bf16.msra.mxu0 0
  %2085 = vmatprep.subr.bf16.mxu0 0
  %2086 = vmatpush1.bf16.msra.mxu0 %v2045
  %2087 = vmatprep.subr.bf16.mxu0 0
  %2088 = vmatpush2.bf16.msra.mxu0 0
  %2089 = vmatprep.subr.bf16.mxu0 0
  %2090 = vmatpush2.bf16.msra.mxu0 0
  %2091 = vmatprep.subr.bf16.mxu0 0
  %2092 = vmatpush2.bf16.msra.mxu0 0
  %2093 = vmatprep.subr.bf16.mxu0 0
  %2094 = vmatpush2.bf16.msra.mxu0 0
  %2095 = vmatprep.subr.bf16.mxu0 0
  %2096 = vmatpush2.bf16.msra.mxu0 0
  %2097 = vmatprep.subr.bf16.mxu0 0
  %2098 = vmatpush2.bf16.msra.mxu0 0
  %2099 = vmatprep.subr.bf16.mxu0 0
  %2100 = vmatpush2.bf16.msra.mxu0 0
  %2101 = vmatprep.subr.bf16.mxu0 0
  %2102 = vmatpush2.bf16.msra.mxu0 0
  %2103 = vmatprep.mubr.bf16.mxu0 0
  %2104 = vmatmul.mubr.bf16.gmra.mxu0 %v2048
  %v2105 = vpop.f32.mrf.mxu0
  %v2106 = vadd.f32 0.0, %v2105
  %v2107 = vpop.f32.mrf.mxu0
  %v2108 = vpop.f32.mrf.mxu0
  %v2109 = vadd.f32 0.0, %v2108
  %v2110 = vpop.f32.mrf.mxu0
  %2111 = vmatprep.mubr.bf16.mxu0 0
  %2112 = vmatmul.mubr.bf16.gmra.mxu0 %v2051
  %v2113 = vpop.f32.mrf.mxu0
  %v2114 = vadd.f32 0.0, %v2113
  %v2115 = vpop.f32.mrf.mxu0
  %v2116 = vpop.f32.mrf.mxu0
  %v2117 = vadd.f32 0.0, %v2116
  %v2118 = vpop.f32.mrf.mxu0
  %2119 = vmatprep.mubr.bf16.mxu0 0
  %2120 = vmatmul.mubr.bf16.gmra.mxu0 %v2054
  %v2121 = vpop.f32.mrf.mxu0
  %v2122 = vadd.f32 0.0, %v2121
  %v2123 = vpop.f32.mrf.mxu0
  %v2124 = vpop.f32.mrf.mxu0
  %v2125 = vadd.f32 0.0, %v2124
  %v2126 = vpop.f32.mrf.mxu0
  %2127 = vmatprep.mubr.bf16.mxu0 0
  %2128 = vmatmul.mubr.bf16.gmra.mxu0 %v2057
  %v2129 = vpop.f32.mrf.mxu0
  %v2130 = vadd.f32 0.0, %v2129
  %v2131 = vpop.f32.mrf.mxu0
  %v2132 = vpop.f32.mrf.mxu0
  %v2133 = vadd.f32 0.0, %v2132
  %v2134 = vpop.f32.mrf.mxu0
  %2135 = vmatprep.mubr.bf16.mxu0 0
  %2136 = vmatmul.mubr.bf16.gmra.mxu0 %v2060
  %v2137 = vpop.f32.mrf.mxu0
  %v2138 = vadd.f32 0.0, %v2137
  %v2139 = vpop.f32.mrf.mxu0
  %v2140 = vpop.f32.mrf.mxu0
  %v2141 = vadd.f32 0.0, %v2140
  %v2142 = vpop.f32.mrf.mxu0
  %2143 = vmatprep.mubr.bf16.mxu0 0
  %2144 = vmatmul.mubr.bf16.gmra.mxu0 %v2063
  %v2145 = vpop.f32.mrf.mxu0
  %v2146 = vadd.f32 0.0, %v2145
  %v2147 = vpop.f32.mrf.mxu0
  %v2148 = vpop.f32.mrf.mxu0
  %v2149 = vadd.f32 0.0, %v2148
  %v2150 = vpop.f32.mrf.mxu0
  %2151 = vmatprep.mubr.bf16.mxu0 0
  %2152 = vmatmul.mubr.bf16.gmra.mxu0 %v2066
  %v2153 = vpop.f32.mrf.mxu0
  %v2154 = vadd.f32 0.0, %v2153
  %v2155 = vpop.f32.mrf.mxu0
  %v2156 = vpop.f32.mrf.mxu0
  %v2157 = vadd.f32 0.0, %v2156
  %v2158 = vpop.f32.mrf.mxu0
  %2159 = vmatprep.mubr.bf16.mxu0 0
  %2160 = vmatmul.mubr.bf16.gmra.mxu0 %v2069
  %v2161 = vpop.f32.mrf.mxu0
  %v2162 = vadd.f32 0.0, %v2161
  %v2163 = vpop.f32.mrf.mxu0
  %v2164 = vpop.f32.mrf.mxu0
  %v2165 = vadd.f32 0.0, %v2164
  %v2166 = vpop.f32.mrf.mxu0
  %2167 = vdwg.mxu0
  %2168 = vrot.lane.b32.xlu0 %v816, 104
  %v2169 = vpop.permute.xlu0 %2168
  %2170 = vrot.lane.b32.xlu0 %v817, 104
  %v2171 = vpop.permute.xlu0 %2170
  %2172 = vrot.lane.b32.xlu0 %v818, 104
  %v2173 = vpop.permute.xlu0 %2172
  %2174 = vrot.lane.b32.xlu0 %v819, 104
  %v2175 = vpop.permute.xlu0 %2174
  %2176 = vrot.lane.b32.xlu0 %v820, 104
  %v2177 = vpop.permute.xlu0 %2176
  %2178 = vrot.lane.b32.xlu0 %v821, 104
  %v2179 = vpop.permute.xlu0 %2178
  %2180 = vrot.lane.b32.xlu0 %v822, 104
  %v2181 = vpop.permute.xlu0 %2180
  %2182 = vrot.lane.b32.xlu0 %v823, 104
  %v2183 = vpop.permute.xlu0 %2182
  %2184 = vrot.lane.b32.xlu0 %v824, 104
  %v2185 = vpop.permute.xlu0 %2184
  %v2187 = vsel %vm825, %v2169, 0
  %v2190 = vsel %vm825, %v2171, 0
  %v2193 = vsel %vm825, %v2173, 0
  %v2196 = vsel %vm825, %v2175, 0
  %v2199 = vsel %vm825, %v2177, 0
  %v2202 = vsel %vm825, %v2179, 0
  %v2205 = vsel %vm825, %v2181, 0
  %v2208 = vsel %vm825, %v2183, 0
  %v2211 = vsel %vm825, %v2185, 0
  %2213 = vmatprep.subr.bf16.mxu0 0
  %2214 = vmatpush1.bf16.xpose.msra.mxu0 0
  %2215 = vmatprep.subr.bf16.mxu0 0
  %2216 = vmatpush1.bf16.xpose.msra.mxu0 0
  %2217 = vmatprep.subr.bf16.mxu0 0
  %2218 = vmatpush1.bf16.xpose.msra.mxu0 0
  %2219 = vmatprep.subr.bf16.mxu0 0
  %2220 = vmatpush1.bf16.xpose.msra.mxu0 0
  %2221 = vmatprep.subr.bf16.mxu0 0
  %2222 = vmatpush1.bf16.xpose.msra.mxu0 0
  %2223 = vmatprep.subr.bf16.mxu0 0
  %2224 = vmatpush1.bf16.xpose.msra.mxu0 0
  %2225 = vmatprep.subr.bf16.mxu0 0
  %2226 = vmatpush1.bf16.xpose.msra.mxu0 0
  %2227 = vmatprep.subr.bf16.mxu0 0
  %2228 = vmatpush1.bf16.xpose.msra.mxu0 %v2211
  %2229 = vmatprep.subr.bf16.mxu0 0
  %2230 = vmatpush2.bf16.xpose.msra.mxu0 0
  %2231 = vmatprep.subr.bf16.mxu0 0
  %2232 = vmatpush2.bf16.xpose.msra.mxu0 0
  %2233 = vmatprep.subr.bf16.mxu0 0
  %2234 = vmatpush2.bf16.xpose.msra.mxu0 0
  %2235 = vmatprep.subr.bf16.mxu0 0
  %2236 = vmatpush2.bf16.xpose.msra.mxu0 0
  %2237 = vmatprep.subr.bf16.mxu0 0
  %2238 = vmatpush2.bf16.xpose.msra.mxu0 0
  %2239 = vmatprep.subr.bf16.mxu0 0
  %2240 = vmatpush2.bf16.xpose.msra.mxu0 0
  %2241 = vmatprep.subr.bf16.mxu0 0
  %2242 = vmatpush2.bf16.xpose.msra.mxu0 0
  %2243 = vmatprep.subr.bf16.mxu0 0
  %2244 = vmatpush2.bf16.xpose.msra.mxu0 0
  %2245 = vmatprep.mubr.bf16.mxu0 0
  %2246 = vmatmul.mubr.bf16.gmra.mxu0 %v2187
  %v2247 = vpop.f32.mrf.mxu0
  %v2248 = vadd.f32 0.0, %v2247
  %v2249 = vpop.f32.mrf.mxu0
  %v2250 = vpop.f32.mrf.mxu0
  %v2251 = vadd.f32 0.0, %v2250
  %v2252 = vpop.f32.mrf.mxu0
  %2253 = vmatprep.mubr.bf16.mxu0 0
  %2254 = vmatmul.mubr.bf16.gmra.mxu0 %v2190
  %v2255 = vpop.f32.mrf.mxu0
  %v2256 = vadd.f32 0.0, %v2255
  %v2257 = vpop.f32.mrf.mxu0
  %v2258 = vpop.f32.mrf.mxu0
  %v2259 = vadd.f32 0.0, %v2258
  %v2260 = vpop.f32.mrf.mxu0
  %2261 = vmatprep.mubr.bf16.mxu0 0
  %2262 = vmatmul.mubr.bf16.gmra.mxu0 %v2193
  %v2263 = vpop.f32.mrf.mxu0
  %v2264 = vadd.f32 0.0, %v2263
  %v2265 = vpop.f32.mrf.mxu0
  %v2266 = vpop.f32.mrf.mxu0
  %v2267 = vadd.f32 0.0, %v2266
  %v2268 = vpop.f32.mrf.mxu0
  %2269 = vmatprep.mubr.bf16.mxu0 0
  %2270 = vmatmul.mubr.bf16.gmra.mxu0 %v2196
  %v2271 = vpop.f32.mrf.mxu0
  %v2272 = vadd.f32 0.0, %v2271
  %v2273 = vpop.f32.mrf.mxu0
  %v2274 = vpop.f32.mrf.mxu0
  %v2275 = vadd.f32 0.0, %v2274
  %v2276 = vpop.f32.mrf.mxu0
  %2277 = vmatprep.mubr.bf16.mxu0 0
  %2278 = vmatmul.mubr.bf16.gmra.mxu0 %v2199
  %v2279 = vpop.f32.mrf.mxu0
  %v2280 = vadd.f32 0.0, %v2279
  %v2281 = vpop.f32.mrf.mxu0
  %v2282 = vpop.f32.mrf.mxu0
  %v2283 = vadd.f32 0.0, %v2282
  %v2284 = vpop.f32.mrf.mxu0
  %2285 = vmatprep.mubr.bf16.mxu0 0
  %2286 = vmatmul.mubr.bf16.gmra.mxu0 %v2202
  %v2287 = vpop.f32.mrf.mxu0
  %v2288 = vadd.f32 0.0, %v2287
  %v2289 = vpop.f32.mrf.mxu0
  %v2290 = vpop.f32.mrf.mxu0
  %v2291 = vadd.f32 0.0, %v2290
  %v2292 = vpop.f32.mrf.mxu0
  %2293 = vmatprep.mubr.bf16.mxu0 0
  %2294 = vmatmul.mubr.bf16.gmra.mxu0 %v2205
  %v2295 = vpop.f32.mrf.mxu0
  %v2296 = vadd.f32 0.0, %v2295
  %v2297 = vpop.f32.mrf.mxu0
  %v2298 = vpop.f32.mrf.mxu0
  %v2299 = vadd.f32 0.0, %v2298
  %v2300 = vpop.f32.mrf.mxu0
  %2301 = vmatprep.mubr.bf16.mxu0 0
  %2302 = vmatmul.mubr.bf16.gmra.mxu0 %v2208
  %v2303 = vpop.f32.mrf.mxu0
  %v2304 = vadd.f32 0.0, %v2303
  %v2305 = vpop.f32.mrf.mxu0
  %v2306 = vpop.f32.mrf.mxu0
  %v2307 = vadd.f32 0.0, %v2306
  %v2308 = vpop.f32.mrf.mxu0
  %2309 = vdwg.mxu0
  %v2310 = vsel %vm950, %v2248, -inf
  %2311 = vmax.xlane.f32.xlu0 %v2310
  %v2312 = vpop.xlane.xlu0 %2311
  %v2313 = vsel %vm950, %v2251, -inf
  %2314 = vmax.xlane.f32.xlu0 %v2313
  %v2315 = vpop.xlane.xlu0 %2314
  %v2316 = vsel %vm950, %v2256, -inf
  %2317 = vmax.xlane.f32.xlu0 %v2316
  %v2318 = vpop.xlane.xlu0 %2317
  %v2319 = vsel %vm950, %v2259, -inf
  %2320 = vmax.xlane.f32.xlu0 %v2319
  %v2321 = vpop.xlane.xlu0 %2320
  %v2322 = vsel %vm950, %v2264, -inf
  %2323 = vmax.xlane.f32.xlu0 %v2322
  %v2324 = vpop.xlane.xlu0 %2323
  %v2325 = vsel %vm950, %v2267, -inf
  %2326 = vmax.xlane.f32.xlu0 %v2325
  %v2327 = vpop.xlane.xlu0 %2326
  %v2328 = vsel %vm950, %v2272, -inf
  %2329 = vmax.xlane.f32.xlu0 %v2328
  %v2330 = vpop.xlane.xlu0 %2329
  %v2331 = vsel %vm950, %v2275, -inf
  %2332 = vmax.xlane.f32.xlu0 %v2331
  %v2333 = vpop.xlane.xlu0 %2332
  %v2334 = vsel %vm950, %v2280, -inf
  %2335 = vmax.xlane.f32.xlu0 %v2334
  %v2336 = vpop.xlane.xlu0 %2335
  %v2337 = vsel %vm950, %v2283, -inf
  %2338 = vmax.xlane.f32.xlu0 %v2337
  %v2339 = vpop.xlane.xlu0 %2338
  %v2340 = vsel %vm950, %v2288, -inf
  %2341 = vmax.xlane.f32.xlu0 %v2340
  %v2342 = vpop.xlane.xlu0 %2341
  %v2343 = vsel %vm950, %v2291, -inf
  %2344 = vmax.xlane.f32.xlu0 %v2343
  %v2345 = vpop.xlane.xlu0 %2344
  %v2346 = vsel %vm950, %v2296, -inf
  %2347 = vmax.xlane.f32.xlu0 %v2346
  %v2348 = vpop.xlane.xlu0 %2347
  %v2349 = vsel %vm950, %v2299, -inf
  %2350 = vmax.xlane.f32.xlu0 %v2349
  %v2351 = vpop.xlane.xlu0 %2350
  %v2352 = vsel %vm950, %v2304, -inf
  %2353 = vmax.xlane.f32.xlu0 %v2352
  %v2354 = vpop.xlane.xlu0 %2353
  %v2355 = vsel %vm950, %v2307, -inf
  %2356 = vmax.xlane.f32.xlu0 %v2355
  %v2357 = vpop.xlane.xlu0 %2356
  %v2358 = vsub.f32 %v2248, %v2312
  %v2359 = vsub.f32 %v2251, %v2315
  %v2360 = vsub.f32 %v2256, %v2318
  %v2361 = vsub.f32 %v2259, %v2321
  %v2362 = vsub.f32 %v2264, %v2324
  %v2363 = vsub.f32 %v2267, %v2327
  %v2364 = vsub.f32 %v2272, %v2330
  %v2365 = vsub.f32 %v2275, %v2333
  %v2366 = vsub.f32 %v2280, %v2336
  %v2367 = vsub.f32 %v2283, %v2339
  %v2368 = vsub.f32 %v2288, %v2342
  %v2369 = vsub.f32 %v2291, %v2345
  %v2370 = vsub.f32 %v2296, %v2348
  %v2371 = vsub.f32 %v2299, %v2351
  %v2372 = vsub.f32 %v2304, %v2354
  %v2373 = vsub.f32 %v2307, %v2357
  %v2374 = vmul.f32 %v2358, 1.442695
  %v2375 = vpow.pop %v2374
  %v2376 = vmul.f32 %v2359, 1.442695
  %v2377 = vpow.pop %v2376
  %v2378 = vmul.f32 %v2360, 1.442695
  %v2379 = vpow.pop %v2378
  %v2380 = vmul.f32 %v2361, 1.442695
  %v2381 = vpow.pop %v2380
  %v2382 = vmul.f32 %v2362, 1.442695
  %v2383 = vpow.pop %v2382
  %v2384 = vmul.f32 %v2363, 1.442695
  %v2385 = vpow.pop %v2384
  %v2386 = vmul.f32 %v2364, 1.442695
  %v2387 = vpow.pop %v2386
  %v2388 = vmul.f32 %v2365, 1.442695
  %v2389 = vpow.pop %v2388
  %v2390 = vmul.f32 %v2366, 1.442695
  %v2391 = vpow.pop %v2390
  %v2392 = vmul.f32 %v2367, 1.442695
  %v2393 = vpow.pop %v2392
  %v2394 = vmul.f32 %v2368, 1.442695
  %v2395 = vpow.pop %v2394
  %v2396 = vmul.f32 %v2369, 1.442695
  %v2397 = vpow.pop %v2396
  %v2398 = vmul.f32 %v2370, 1.442695
  %v2399 = vpow.pop %v2398
  %v2400 = vmul.f32 %v2371, 1.442695
  %v2401 = vpow.pop %v2400
  %v2402 = vmul.f32 %v2372, 1.442695
  %v2403 = vpow.pop %v2402
  %v2404 = vmul.f32 %v2373, 1.442695
  %v2405 = vpow.pop %v2404
  %v2406 = vsel %vm950, %v2375, 0.0
  %2407 = vadd.xlane.f32.xlu0 %v2406
  %v2408 = vpop.xlane.xlu0 %2407
  %v2409 = vsel %vm950, %v2377, 0.0
  %2410 = vadd.xlane.f32.xlu0 %v2409
  %v2411 = vpop.xlane.xlu0 %2410
  %v2412 = vsel %vm950, %v2379, 0.0
  %2413 = vadd.xlane.f32.xlu0 %v2412
  %v2414 = vpop.xlane.xlu0 %2413
  %v2415 = vsel %vm950, %v2381, 0.0
  %2416 = vadd.xlane.f32.xlu0 %v2415
  %v2417 = vpop.xlane.xlu0 %2416
  %v2418 = vsel %vm950, %v2383, 0.0
  %2419 = vadd.xlane.f32.xlu0 %v2418
  %v2420 = vpop.xlane.xlu0 %2419
  %v2421 = vsel %vm950, %v2385, 0.0
  %2422 = vadd.xlane.f32.xlu0 %v2421
  %v2423 = vpop.xlane.xlu0 %2422
  %v2424 = vsel %vm950, %v2387, 0.0
  %2425 = vadd.xlane.f32.xlu0 %v2424
  %v2426 = vpop.xlane.xlu0 %2425
  %v2427 = vsel %vm950, %v2389, 0.0
  %2428 = vadd.xlane.f32.xlu0 %v2427
  %v2429 = vpop.xlane.xlu0 %2428
  %v2430 = vsel %vm950, %v2391, 0.0
  %2431 = vadd.xlane.f32.xlu0 %v2430
  %v2432 = vpop.xlane.xlu0 %2431
  %v2433 = vsel %vm950, %v2393, 0.0
  %2434 = vadd.xlane.f32.xlu0 %v2433
  %v2435 = vpop.xlane.xlu0 %2434
  %v2436 = vsel %vm950, %v2395, 0.0
  %2437 = vadd.xlane.f32.xlu0 %v2436
  %v2438 = vpop.xlane.xlu0 %2437
  %v2439 = vsel %vm950, %v2397, 0.0
  %2440 = vadd.xlane.f32.xlu0 %v2439
  %v2441 = vpop.xlane.xlu0 %2440
  %v2442 = vsel %vm950, %v2399, 0.0
  %2443 = vadd.xlane.f32.xlu0 %v2442
  %v2444 = vpop.xlane.xlu0 %2443
  %v2445 = vsel %vm950, %v2401, 0.0
  %2446 = vadd.xlane.f32.xlu0 %v2445
  %v2447 = vpop.xlane.xlu0 %2446
  %v2448 = vsel %vm950, %v2403, 0.0
  %2449 = vadd.xlane.f32.xlu0 %v2448
  %v2450 = vpop.xlane.xlu0 %2449
  %v2451 = vsel %vm950, %v2405, 0.0
  %2452 = vadd.xlane.f32.xlu0 %v2451
  %v2453 = vpop.xlane.xlu0 %2452
  %v2454 = vrcp.pop %v2408
  %v2455 = vrcp.pop %v2411
  %v2456 = vrcp.pop %v2414
  %v2457 = vrcp.pop %v2417
  %v2458 = vrcp.pop %v2420
  %v2459 = vrcp.pop %v2423
  %v2460 = vrcp.pop %v2426
  %v2461 = vrcp.pop %v2429
  %v2462 = vrcp.pop %v2432
  %v2463 = vrcp.pop %v2435
  %v2464 = vrcp.pop %v2438
  %v2465 = vrcp.pop %v2441
  %v2466 = vrcp.pop %v2444
  %v2467 = vrcp.pop %v2447
  %v2468 = vrcp.pop %v2450
  %v2469 = vrcp.pop %v2453
  %v2470 = vmul.f32 %v2375, %v2454
  %v2471 = vmul.f32 %v2377, %v2455
  %v2472 = vmul.f32 %v2379, %v2456
  %v2473 = vmul.f32 %v2381, %v2457
  %v2474 = vmul.f32 %v2383, %v2458
  %v2475 = vmul.f32 %v2385, %v2459
  %v2476 = vmul.f32 %v2387, %v2460
  %v2477 = vmul.f32 %v2389, %v2461
  %v2478 = vmul.f32 %v2391, %v2462
  %v2479 = vmul.f32 %v2393, %v2463
  %v2480 = vmul.f32 %v2395, %v2464
  %v2481 = vmul.f32 %v2397, %v2465
  %v2482 = vmul.f32 %v2399, %v2466
  %v2483 = vmul.f32 %v2401, %v2467
  %v2484 = vmul.f32 %v2403, %v2468
  %v2485 = vmul.f32 %v2405, %v2469
  %v2486 = vpack.c.bf16 %v2471, %v2470
  %v2487 = vpack.c.bf16 %v2473, %v2472
  %v2488 = vpack.c.bf16 %v2475, %v2474
  %v2489 = vpack.c.bf16 %v2477, %v2476
  %v2490 = vpack.c.bf16 %v2479, %v2478
  %v2491 = vpack.c.bf16 %v2481, %v2480
  %v2492 = vpack.c.bf16 %v2483, %v2482
  %v2493 = vpack.c.bf16 %v2485, %v2484
  %2494 = vrot.lane.b32.xlu0 %v824, 72
  %v2495 = vpop.permute.xlu0 %2494
  %v2498 = vsel %vm950, %v2486, 0
  %v2501 = vsel %vm950, %v2487, 0
  %v2504 = vsel %vm950, %v2488, 0
  %v2507 = vsel %vm950, %v2489, 0
  %v2510 = vsel %vm950, %v2490, 0
  %v2513 = vsel %vm950, %v2491, 0
  %v2516 = vsel %vm950, %v2492, 0
  %v2519 = vsel %vm950, %v2493, 0
  %2521 = vmatprep.subr.bf16.mxu0 0
  %2522 = vmatpush1.bf16.msra.mxu0 0
  %2523 = vmatprep.subr.bf16.mxu0 0
  %2524 = vmatpush1.bf16.msra.mxu0 0
  %2525 = vmatprep.subr.bf16.mxu0 0
  %2526 = vmatpush1.bf16.msra.mxu0 0
  %2527 = vmatprep.subr.bf16.mxu0 0
  %2528 = vmatpush1.bf16.msra.mxu0 0
  %2529 = vmatprep.subr.bf16.mxu0 0
  %2530 = vmatpush1.bf16.msra.mxu0 0
  %2531 = vmatprep.subr.bf16.mxu0 0
  %2532 = vmatpush1.bf16.msra.mxu0 0
  %2533 = vmatprep.subr.bf16.mxu0 0
  %2534 = vmatpush1.bf16.msra.mxu0 0
  %2535 = vmatprep.subr.bf16.mxu0 0
  %2536 = vmatpush1.bf16.msra.mxu0 %v2495
  %2537 = vmatprep.subr.bf16.mxu0 0
  %2538 = vmatpush2.bf16.msra.mxu0 0
  %2539 = vmatprep.subr.bf16.mxu0 0
  %2540 = vmatpush2.bf16.msra.mxu0 0
  %2541 = vmatprep.subr.bf16.mxu0 0
  %2542 = vmatpush2.bf16.msra.mxu0 0
  %2543 = vmatprep.subr.bf16.mxu0 0
  %2544 = vmatpush2.bf16.msra.mxu0 0
  %2545 = vmatprep.subr.bf16.mxu0 0
  %2546 = vmatpush2.bf16.msra.mxu0 0
  %2547 = vmatprep.subr.bf16.mxu0 0
  %2548 = vmatpush2.bf16.msra.mxu0 0
  %2549 = vmatprep.subr.bf16.mxu0 0
  %2550 = vmatpush2.bf16.msra.mxu0 0
  %2551 = vmatprep.subr.bf16.mxu0 0
  %2552 = vmatpush2.bf16.msra.mxu0 0
  %2553 = vmatprep.mubr.bf16.mxu0 0
  %2554 = vmatmul.mubr.bf16.gmra.mxu0 %v2498
  %v2555 = vpop.f32.mrf.mxu0
  %v2556 = vadd.f32 0.0, %v2555
  %v2557 = vpop.f32.mrf.mxu0
  %v2558 = vpop.f32.mrf.mxu0
  %v2559 = vadd.f32 0.0, %v2558
  %v2560 = vpop.f32.mrf.mxu0
  %2561 = vmatprep.mubr.bf16.mxu0 0
  %2562 = vmatmul.mubr.bf16.gmra.mxu0 %v2501
  %v2563 = vpop.f32.mrf.mxu0
  %v2564 = vadd.f32 0.0, %v2563
  %v2565 = vpop.f32.mrf.mxu0
  %v2566 = vpop.f32.mrf.mxu0
  %v2567 = vadd.f32 0.0, %v2566
  %v2568 = vpop.f32.mrf.mxu0
  %2569 = vmatprep.mubr.bf16.mxu0 0
  %2570 = vmatmul.mubr.bf16.gmra.mxu0 %v2504
  %v2571 = vpop.f32.mrf.mxu0
  %v2572 = vadd.f32 0.0, %v2571
  %v2573 = vpop.f32.mrf.mxu0
  %v2574 = vpop.f32.mrf.mxu0
  %v2575 = vadd.f32 0.0, %v2574
  %v2576 = vpop.f32.mrf.mxu0
  %2577 = vmatprep.mubr.bf16.mxu0 0
  %2578 = vmatmul.mubr.bf16.gmra.mxu0 %v2507
  %v2579 = vpop.f32.mrf.mxu0
  %v2580 = vadd.f32 0.0, %v2579
  %v2581 = vpop.f32.mrf.mxu0
  %v2582 = vpop.f32.mrf.mxu0
  %v2583 = vadd.f32 0.0, %v2582
  %v2584 = vpop.f32.mrf.mxu0
  %2585 = vmatprep.mubr.bf16.mxu0 0
  %2586 = vmatmul.mubr.bf16.gmra.mxu0 %v2510
  %v2587 = vpop.f32.mrf.mxu0
  %v2588 = vadd.f32 0.0, %v2587
  %v2589 = vpop.f32.mrf.mxu0
  %v2590 = vpop.f32.mrf.mxu0
  %v2591 = vadd.f32 0.0, %v2590
  %v2592 = vpop.f32.mrf.mxu0
  %2593 = vmatprep.mubr.bf16.mxu0 0
  %2594 = vmatmul.mubr.bf16.gmra.mxu0 %v2513
  %v2595 = vpop.f32.mrf.mxu0
  %v2596 = vadd.f32 0.0, %v2595
  %v2597 = vpop.f32.mrf.mxu0
  %v2598 = vpop.f32.mrf.mxu0
  %v2599 = vadd.f32 0.0, %v2598
  %v2600 = vpop.f32.mrf.mxu0
  %2601 = vmatprep.mubr.bf16.mxu0 0
  %2602 = vmatmul.mubr.bf16.gmra.mxu0 %v2516
  %v2603 = vpop.f32.mrf.mxu0
  %v2604 = vadd.f32 0.0, %v2603
  %v2605 = vpop.f32.mrf.mxu0
  %v2606 = vpop.f32.mrf.mxu0
  %v2607 = vadd.f32 0.0, %v2606
  %v2608 = vpop.f32.mrf.mxu0
  %2609 = vmatprep.mubr.bf16.mxu0 0
  %2610 = vmatmul.mubr.bf16.gmra.mxu0 %v2519
  %v2611 = vpop.f32.mrf.mxu0
  %v2612 = vadd.f32 0.0, %v2611
  %v2613 = vpop.f32.mrf.mxu0
  %v2614 = vpop.f32.mrf.mxu0
  %v2615 = vadd.f32 0.0, %v2614
  %v2616 = vpop.f32.mrf.mxu0
  %2617 = vdwg.mxu0
  %2634 = vrot.lane.b32.xlu0 %v1656, 8
  %v2635 = vpop.permute.xlu0 %2634
  %2636 = vrot.lane.b32.xlu0 %v1659, 8
  %v2637 = vpop.permute.xlu0 %2636
  %2638 = vrot.lane.b32.xlu0 %v1664, 8
  %v2639 = vpop.permute.xlu0 %2638
  %2640 = vrot.lane.b32.xlu0 %v1667, 8
  %v2641 = vpop.permute.xlu0 %2640
  %2642 = vrot.lane.b32.xlu0 %v1672, 8
  %v2643 = vpop.permute.xlu0 %2642
  %2644 = vrot.lane.b32.xlu0 %v1675, 8
  %v2645 = vpop.permute.xlu0 %2644
  %2646 = vrot.lane.b32.xlu0 %v1680, 8
  %v2647 = vpop.permute.xlu0 %2646
  %2648 = vrot.lane.b32.xlu0 %v1683, 8
  %v2649 = vpop.permute.xlu0 %2648
  %2650 = vrot.lane.b32.xlu0 %v1688, 8
  %v2651 = vpop.permute.xlu0 %2650
  %2652 = vrot.lane.b32.xlu0 %v1691, 8
  %v2653 = vpop.permute.xlu0 %2652
  %2654 = vrot.lane.b32.xlu0 %v1696, 8
  %v2655 = vpop.permute.xlu0 %2654
  %2656 = vrot.lane.b32.xlu0 %v1699, 8
  %v2657 = vpop.permute.xlu0 %2656
  %2658 = vrot.lane.b32.xlu0 %v1704, 8
  %v2659 = vpop.permute.xlu0 %2658
  %2660 = vrot.lane.b32.xlu0 %v1707, 8
  %v2661 = vpop.permute.xlu0 %2660
  %2662 = vrot.lane.b32.xlu0 %v1712, 8
  %v2663 = vpop.permute.xlu0 %2662
  %2664 = vrot.lane.b32.xlu0 %v1715, 8
  %v2665 = vpop.permute.xlu0 %2664
  %2698 = vrot.lane.b32.xlu0 %v2106, 16
  %v2699 = vpop.permute.xlu0 %2698
  %2700 = vrot.lane.b32.xlu0 %v2109, 16
  %v2701 = vpop.permute.xlu0 %2700
  %2702 = vrot.lane.b32.xlu0 %v2114, 16
  %v2703 = vpop.permute.xlu0 %2702
  %2704 = vrot.lane.b32.xlu0 %v2117, 16
  %v2705 = vpop.permute.xlu0 %2704
  %2706 = vrot.lane.b32.xlu0 %v2122, 16
  %v2707 = vpop.permute.xlu0 %2706
  %2708 = vrot.lane.b32.xlu0 %v2125, 16
  %v2709 = vpop.permute.xlu0 %2708
  %2710 = vrot.lane.b32.xlu0 %v2130, 16
  %v2711 = vpop.permute.xlu0 %2710
  %2712 = vrot.lane.b32.xlu0 %v2133, 16
  %v2713 = vpop.permute.xlu0 %2712
  %2714 = vrot.lane.b32.xlu0 %v2138, 16
  %v2715 = vpop.permute.xlu0 %2714
  %2716 = vrot.lane.b32.xlu0 %v2141, 16
  %v2717 = vpop.permute.xlu0 %2716
  %2718 = vrot.lane.b32.xlu0 %v2146, 16
  %v2719 = vpop.permute.xlu0 %2718
  %2720 = vrot.lane.b32.xlu0 %v2149, 16
  %v2721 = vpop.permute.xlu0 %2720
  %2722 = vrot.lane.b32.xlu0 %v2154, 16
  %v2723 = vpop.permute.xlu0 %2722
  %2724 = vrot.lane.b32.xlu0 %v2157, 16
  %v2725 = vpop.permute.xlu0 %2724
  %2726 = vrot.lane.b32.xlu0 %v2162, 16
  %v2727 = vpop.permute.xlu0 %2726
  %2728 = vrot.lane.b32.xlu0 %v2165, 16
  %v2729 = vpop.permute.xlu0 %2728
  %2762 = vrot.lane.b32.xlu0 %v2556, 24
  %v2763 = vpop.permute.xlu0 %2762
  %2764 = vrot.lane.b32.xlu0 %v2559, 24
  %v2765 = vpop.permute.xlu0 %2764
  %2766 = vrot.lane.b32.xlu0 %v2564, 24
  %v2767 = vpop.permute.xlu0 %2766
  %2768 = vrot.lane.b32.xlu0 %v2567, 24
  %v2769 = vpop.permute.xlu0 %2768
  %2770 = vrot.lane.b32.xlu0 %v2572, 24
  %v2771 = vpop.permute.xlu0 %2770
  %2772 = vrot.lane.b32.xlu0 %v2575, 24
  %v2773 = vpop.permute.xlu0 %2772
  %2774 = vrot.lane.b32.xlu0 %v2580, 24
  %v2775 = vpop.permute.xlu0 %2774
  %2776 = vrot.lane.b32.xlu0 %v2583, 24
  %v2777 = vpop.permute.xlu0 %2776
  %2778 = vrot.lane.b32.xlu0 %v2588, 24
  %v2779 = vpop.permute.xlu0 %2778
  %2780 = vrot.lane.b32.xlu0 %v2591, 24
  %v2781 = vpop.permute.xlu0 %2780
  %2782 = vrot.lane.b32.xlu0 %v2596, 24
  %v2783 = vpop.permute.xlu0 %2782
  %2784 = vrot.lane.b32.xlu0 %v2599, 24
  %v2785 = vpop.permute.xlu0 %2784
  %2786 = vrot.lane.b32.xlu0 %v2604, 24
  %v2787 = vpop.permute.xlu0 %2786
  %2788 = vrot.lane.b32.xlu0 %v2607, 24
  %v2789 = vpop.permute.xlu0 %2788
  %2790 = vrot.lane.b32.xlu0 %v2612, 24
  %v2791 = vpop.permute.xlu0 %2790
  %2792 = vrot.lane.b32.xlu0 %v2615, 24
  %v2793 = vpop.permute.xlu0 %2792
  %v2810 = vsel %vm825, %v1198, %v2635
  %v2811 = vsel %vm825, %v1201, %v2637
  %v2812 = vsel %vm825, %v1206, %v2639
  %v2813 = vsel %vm825, %v1209, %v2641
  %v2814 = vsel %vm825, %v1214, %v2643
  %v2815 = vsel %vm825, %v1217, %v2645
  %v2816 = vsel %vm825, %v1222, %v2647
  %v2817 = vsel %vm825, %v1225, %v2649
  %v2818 = vsel %vm825, %v1230, %v2651
  %v2819 = vsel %vm825, %v1233, %v2653
  %v2820 = vsel %vm825, %v1238, %v2655
  %v2821 = vsel %vm825, %v1241, %v2657
  %v2822 = vsel %vm825, %v1246, %v2659
  %v2823 = vsel %vm825, %v1249, %v2661
  %v2824 = vsel %vm825, %v1254, %v2663
  %v2825 = vsel %vm825, %v1257, %v2665
  %v2826 = vsel %vm950, %v2810, %v2699
  %v2827 = vsel %vm950, %v2811, %v2701
  %v2828 = vsel %vm950, %v2812, %v2703
  %v2829 = vsel %vm950, %v2813, %v2705
  %v2830 = vsel %vm950, %v2814, %v2707
  %v2831 = vsel %vm950, %v2815, %v2709
  %v2832 = vsel %vm950, %v2816, %v2711
  %v2833 = vsel %vm950, %v2817, %v2713
  %v2834 = vsel %vm950, %v2818, %v2715
  %v2835 = vsel %vm950, %v2819, %v2717
  %v2836 = vsel %vm950, %v2820, %v2719
  %v2837 = vsel %vm950, %v2821, %v2721
  %v2838 = vsel %vm950, %v2822, %v2723
  %v2839 = vsel %vm950, %v2823, %v2725
  %v2840 = vsel %vm950, %v2824, %v2727
  %v2841 = vsel %vm950, %v2825, %v2729
  %vm2842 = vcmask 195584
  %v2843 = vsel %vm2842, %v2826, %v2763
  %v2844 = vsel %vm2842, %v2827, %v2765
  %v2845 = vsel %vm2842, %v2828, %v2767
  %v2846 = vsel %vm2842, %v2829, %v2769
  %v2847 = vsel %vm2842, %v2830, %v2771
  %v2848 = vsel %vm2842, %v2831, %v2773
  %v2849 = vsel %vm2842, %v2832, %v2775
  %v2850 = vsel %vm2842, %v2833, %v2777
  %v2851 = vsel %vm2842, %v2834, %v2779
  %v2852 = vsel %vm2842, %v2835, %v2781
  %v2853 = vsel %vm2842, %v2836, %v2783
  %v2854 = vsel %vm2842, %v2837, %v2785
  %v2855 = vsel %vm2842, %v2838, %v2787
  %v2856 = vsel %vm2842, %v2839, %v2789
  %v2857 = vsel %vm2842, %v2840, %v2791
  %v2858 = vsel %vm2842, %v2841, %v2793
  %v2859 = vld [vmem:[%s11] sm:$0xf]
  %v2860 = vld [vmem:[%s11 + $0x4] sm:$0xf]
  %v2861 = vld [vmem:[%s11 + $0x8] sm:$0xf]
  %v2862 = vld [vmem:[%s11 + $0xc] sm:$0xf]
  %v2863 = vpack.c.bf16 %v2844, %v2843
  %v2864 = vpack.c.bf16 %v2846, %v2845
  %v2865 = vpack.c.bf16 %v2848, %v2847
  %v2866 = vpack.c.bf16 %v2850, %v2849
  %v2867 = vpack.c.bf16 %v2852, %v2851
  %v2868 = vpack.c.bf16 %v2854, %v2853
  %v2869 = vpack.c.bf16 %v2856, %v2855
  %v2870 = vpack.c.bf16 %v2858, %v2857
  %v2871 = vld [vmem:[%s12] sm:$0x1]
  %v2873 = vlaneseq
  %v2874 = vshrl.u32 %v2873, 7
  %v2875 = vsub.s32 0, %v2874
  %v2876 = vrot.slane %v2871, %v2875
  %v2882 = vunpack.c.l.b16 %v2859
  %v2883 = vunpack.c.l.b16 %v2860
  %v2884 = vunpack.c.l.b16 %v2861
  %v2885 = vunpack.c.l.b16 %v2862
  %v2886 = vpack.c.b16 %v2883, %v2882
  %v2887 = vpack.c.b16 %v2885, %v2884
  %v2891 = vsel %vm179, %v2863, 0
  %v2894 = vsel %vm179, %v2864, 0
  %v2897 = vsel %vm179, %v2865, 0
  %v2900 = vsel %vm179, %v2866, 0
  %v2903 = vsel %vm179, %v2867, 0
  %v2906 = vsel %vm179, %v2868, 0
  %v2909 = vsel %vm179, %v2869, 0
  %v2912 = vsel %vm179, %v2870, 0
  %2914 = vmatprep.subr.bf16.mxu0 0
  %2915 = vmatpush1.bf16.msra.mxu0 0
  %2916 = vmatprep.subr.bf16.mxu0 0
  %2917 = vmatpush1.bf16.msra.mxu0 0
  %2918 = vmatprep.subr.bf16.mxu0 0
  %2919 = vmatpush1.bf16.msra.mxu0 0
  %2920 = vmatprep.subr.bf16.mxu0 0
  %2921 = vmatpush1.bf16.msra.mxu0 0
  %2922 = vmatprep.subr.bf16.mxu0 0
  %2923 = vmatpush1.bf16.msra.mxu0 0
  %2924 = vmatprep.subr.bf16.mxu0 0
  %2925 = vmatpush1.bf16.msra.mxu0 0
  %2926 = vmatprep.subr.bf16.mxu0 0
  %2927 = vmatpush1.bf16.msra.mxu0 %v2887
  %2928 = vmatprep.subr.bf16.mxu0 0
  %2929 = vmatpush1.bf16.msra.mxu0 %v2886
  %2930 = vmatprep.subr.bf16.mxu0 0
  %2931 = vmatpush2.bf16.msra.mxu0 0
  %2932 = vmatprep.subr.bf16.mxu0 0
  %2933 = vmatpush2.bf16.msra.mxu0 0
  %2934 = vmatprep.subr.bf16.mxu0 0
  %2935 = vmatpush2.bf16.msra.mxu0 0
  %2936 = vmatprep.subr.bf16.mxu0 0
  %2937 = vmatpush2.bf16.msra.mxu0 0
  %2938 = vmatprep.subr.bf16.mxu0 0
  %2939 = vmatpush2.bf16.msra.mxu0 0
  %2940 = vmatprep.subr.bf16.mxu0 0
  %2941 = vmatpush2.bf16.msra.mxu0 0
  %2942 = vmatprep.subr.bf16.mxu0 0
  %2943 = vmatpush2.bf16.msra.mxu0 0
  %2944 = vmatprep.subr.bf16.mxu0 0
  %2945 = vmatpush2.bf16.msra.mxu0 0
  %2946 = vmatprep.mubr.bf16.mxu0 0
  %2947 = vmatmul.mubr.bf16.gmra.mxu0 %v2891
  %v2948 = vpop.f32.mrf.mxu0
  %v2949 = vadd.f32 %v2876, %v2948
  %v2950 = vpop.f32.mrf.mxu0
  %v2951 = vpop.f32.mrf.mxu0
  %v2952 = vadd.f32 %v2876, %v2951
  %v2953 = vpop.f32.mrf.mxu0
  %2954 = vmatprep.mubr.bf16.mxu0 0
  %2955 = vmatmul.mubr.bf16.gmra.mxu0 %v2894
  %v2956 = vpop.f32.mrf.mxu0
  %v2957 = vadd.f32 %v2876, %v2956
  %v2958 = vpop.f32.mrf.mxu0
  %v2959 = vpop.f32.mrf.mxu0
  %v2960 = vadd.f32 %v2876, %v2959
  %v2961 = vpop.f32.mrf.mxu0
  %2962 = vmatprep.mubr.bf16.mxu0 0
  %2963 = vmatmul.mubr.bf16.gmra.mxu0 %v2897
  %v2964 = vpop.f32.mrf.mxu0
  %v2965 = vadd.f32 %v2876, %v2964
  %v2966 = vpop.f32.mrf.mxu0
  %v2967 = vpop.f32.mrf.mxu0
  %v2968 = vadd.f32 %v2876, %v2967
  %v2969 = vpop.f32.mrf.mxu0
  %2970 = vmatprep.mubr.bf16.mxu0 0
  %2971 = vmatmul.mubr.bf16.gmra.mxu0 %v2900
  %v2972 = vpop.f32.mrf.mxu0
  %v2973 = vadd.f32 %v2876, %v2972
  %v2974 = vpop.f32.mrf.mxu0
  %v2975 = vpop.f32.mrf.mxu0
  %v2976 = vadd.f32 %v2876, %v2975
  %v2977 = vpop.f32.mrf.mxu0
  %2978 = vmatprep.mubr.bf16.mxu0 0
  %2979 = vmatmul.mubr.bf16.gmra.mxu0 %v2903
  %v2980 = vpop.f32.mrf.mxu0
  %v2981 = vadd.f32 %v2876, %v2980
  %v2982 = vpop.f32.mrf.mxu0
  %v2983 = vpop.f32.mrf.mxu0
  %v2984 = vadd.f32 %v2876, %v2983
  %v2985 = vpop.f32.mrf.mxu0
  %2986 = vmatprep.mubr.bf16.mxu0 0
  %2987 = vmatmul.mubr.bf16.gmra.mxu0 %v2906
  %v2988 = vpop.f32.mrf.mxu0
  %v2989 = vadd.f32 %v2876, %v2988
  %v2990 = vpop.f32.mrf.mxu0
  %v2991 = vpop.f32.mrf.mxu0
  %v2992 = vadd.f32 %v2876, %v2991
  %v2993 = vpop.f32.mrf.mxu0
  %2994 = vmatprep.mubr.bf16.mxu0 0
  %2995 = vmatmul.mubr.bf16.gmra.mxu0 %v2909
  %v2996 = vpop.f32.mrf.mxu0
  %v2997 = vadd.f32 %v2876, %v2996
  %v2998 = vpop.f32.mrf.mxu0
  %v2999 = vpop.f32.mrf.mxu0
  %v3000 = vadd.f32 %v2876, %v2999
  %v3001 = vpop.f32.mrf.mxu0
  %3002 = vmatprep.mubr.bf16.mxu0 0
  %3003 = vmatmul.mubr.bf16.gmra.mxu0 %v2912
  %v3004 = vpop.f32.mrf.mxu0
  %v3005 = vadd.f32 %v2876, %v3004
  %v3006 = vpop.f32.mrf.mxu0
  %v3007 = vpop.f32.mrf.mxu0
  %v3008 = vadd.f32 %v2876, %v3007
  %v3009 = vpop.f32.mrf.mxu0
  %3010 = vdwg.mxu0
  %3027 = vrot.lane.b32.xlu0 %v2949, 64
  %v3028 = vpop.permute.xlu0 %3027
  %3029 = vrot.lane.b32.xlu0 %v2952, 64
  %v3030 = vpop.permute.xlu0 %3029
  %3031 = vrot.lane.b32.xlu0 %v2957, 64
  %v3032 = vpop.permute.xlu0 %3031
  %3033 = vrot.lane.b32.xlu0 %v2960, 64
  %v3034 = vpop.permute.xlu0 %3033
  %3035 = vrot.lane.b32.xlu0 %v2965, 64
  %v3036 = vpop.permute.xlu0 %3035
  %3037 = vrot.lane.b32.xlu0 %v2968, 64
  %v3038 = vpop.permute.xlu0 %3037
  %3039 = vrot.lane.b32.xlu0 %v2973, 64
  %v3040 = vpop.permute.xlu0 %3039
  %3041 = vrot.lane.b32.xlu0 %v2976, 64
  %v3042 = vpop.permute.xlu0 %3041
  %3043 = vrot.lane.b32.xlu0 %v2981, 64
  %v3044 = vpop.permute.xlu0 %3043
  %3045 = vrot.lane.b32.xlu0 %v2984, 64
  %v3046 = vpop.permute.xlu0 %3045
  %3047 = vrot.lane.b32.xlu0 %v2989, 64
  %v3048 = vpop.permute.xlu0 %3047
  %3049 = vrot.lane.b32.xlu0 %v2992, 64
  %v3050 = vpop.permute.xlu0 %3049
  %3051 = vrot.lane.b32.xlu0 %v2997, 64
  %v3052 = vpop.permute.xlu0 %3051
  %3053 = vrot.lane.b32.xlu0 %v3000, 64
  %v3054 = vpop.permute.xlu0 %3053
  %3055 = vrot.lane.b32.xlu0 %v3005, 64
  %v3056 = vpop.permute.xlu0 %3055
  %3057 = vrot.lane.b32.xlu0 %v3008, 64
  %v3058 = vpop.permute.xlu0 %3057
  %v3075 = vmul.f32 %v629, %v3028
  %v3076 = vmul.f32 %v629, %v3030
  %v3077 = vmul.f32 %v629, %v3032
  %v3078 = vmul.f32 %v629, %v3034
  %v3079 = vmul.f32 %v629, %v3036
  %v3080 = vmul.f32 %v629, %v3038
  %v3081 = vmul.f32 %v629, %v3040
  %v3082 = vmul.f32 %v629, %v3042
  %v3083 = vmul.f32 %v629, %v3044
  %v3084 = vmul.f32 %v629, %v3046
  %v3085 = vmul.f32 %v629, %v3048
  %v3086 = vmul.f32 %v629, %v3050
  %v3087 = vmul.f32 %v629, %v3052
  %v3088 = vmul.f32 %v629, %v3054
  %v3089 = vmul.f32 %v629, %v3056
  %v3090 = vmul.f32 %v629, %v3058
  %3107 = vrot.lane.b32.xlu0 %v3075, 64
  %v3108 = vpop.permute.xlu0 %3107
  %3109 = vrot.lane.b32.xlu0 %v3076, 64
  %v3110 = vpop.permute.xlu0 %3109
  %3111 = vrot.lane.b32.xlu0 %v3077, 64
  %v3112 = vpop.permute.xlu0 %3111
  %3113 = vrot.lane.b32.xlu0 %v3078, 64
  %v3114 = vpop.permute.xlu0 %3113
  %3115 = vrot.lane.b32.xlu0 %v3079, 64
  %v3116 = vpop.permute.xlu0 %3115
  %3117 = vrot.lane.b32.xlu0 %v3080, 64
  %v3118 = vpop.permute.xlu0 %3117
  %3119 = vrot.lane.b32.xlu0 %v3081, 64
  %v3120 = vpop.permute.xlu0 %3119
  %3121 = vrot.lane.b32.xlu0 %v3082, 64
  %v3122 = vpop.permute.xlu0 %3121
  %3123 = vrot.lane.b32.xlu0 %v3083, 64
  %v3124 = vpop.permute.xlu0 %3123
  %3125 = vrot.lane.b32.xlu0 %v3084, 64
  %v3126 = vpop.permute.xlu0 %3125
  %3127 = vrot.lane.b32.xlu0 %v3085, 64
  %v3128 = vpop.permute.xlu0 %3127
  %3129 = vrot.lane.b32.xlu0 %v3086, 64
  %v3130 = vpop.permute.xlu0 %3129
  %3131 = vrot.lane.b32.xlu0 %v3087, 64
  %v3132 = vpop.permute.xlu0 %3131
  %3133 = vrot.lane.b32.xlu0 %v3088, 64
  %v3134 = vpop.permute.xlu0 %3133
  %3135 = vrot.lane.b32.xlu0 %v3089, 64
  %v3136 = vpop.permute.xlu0 %3135
  %3137 = vrot.lane.b32.xlu0 %v3090, 64
  %v3138 = vpop.permute.xlu0 %3137
  %v3155 = vadd.f32 %v330, %v3108
  %v3156 = vadd.f32 %v333, %v3110
  %v3157 = vadd.f32 %v338, %v3112
  %v3158 = vadd.f32 %v341, %v3114
  %v3159 = vadd.f32 %v346, %v3116
  %v3160 = vadd.f32 %v349, %v3118
  %v3161 = vadd.f32 %v354, %v3120
  %v3162 = vadd.f32 %v357, %v3122
  %v3163 = vadd.f32 %v362, %v3124
  %v3164 = vadd.f32 %v365, %v3126
  %v3165 = vadd.f32 %v370, %v3128
  %v3166 = vadd.f32 %v373, %v3130
  %v3167 = vadd.f32 %v378, %v3132
  %v3168 = vadd.f32 %v381, %v3134
  %v3169 = vadd.f32 %v386, %v3136
  %v3170 = vadd.f32 %v389, %v3138
  %v3171 = vsel %vm179, %v3155, 0.0
  %3172 = vadd.xlane.f32.xlu0 %v3171
  %v3173 = vpop.xlane.xlu0 %3172
  %v3174 = vsel %vm179, %v3156, 0.0
  %3175 = vadd.xlane.f32.xlu0 %v3174
  %v3176 = vpop.xlane.xlu0 %3175
  %v3177 = vsel %vm179, %v3157, 0.0
  %3178 = vadd.xlane.f32.xlu0 %v3177
  %v3179 = vpop.xlane.xlu0 %3178
  %v3180 = vsel %vm179, %v3158, 0.0
  %3181 = vadd.xlane.f32.xlu0 %v3180
  %v3182 = vpop.xlane.xlu0 %3181
  %v3183 = vsel %vm179, %v3159, 0.0
  %3184 = vadd.xlane.f32.xlu0 %v3183
  %v3185 = vpop.xlane.xlu0 %3184
  %v3186 = vsel %vm179, %v3160, 0.0
  %3187 = vadd.xlane.f32.xlu0 %v3186
  %v3188 = vpop.xlane.xlu0 %3187
  %v3189 = vsel %vm179, %v3161, 0.0
  %3190 = vadd.xlane.f32.xlu0 %v3189
  %v3191 = vpop.xlane.xlu0 %3190
  %v3192 = vsel %vm179, %v3162, 0.0
  %3193 = vadd.xlane.f32.xlu0 %v3192
  %v3194 = vpop.xlane.xlu0 %3193
  %v3195 = vsel %vm179, %v3163, 0.0
  %3196 = vadd.xlane.f32.xlu0 %v3195
  %v3197 = vpop.xlane.xlu0 %3196
  %v3198 = vsel %vm179, %v3164, 0.0
  %3199 = vadd.xlane.f32.xlu0 %v3198
  %v3200 = vpop.xlane.xlu0 %3199
  %v3201 = vsel %vm179, %v3165, 0.0
  %3202 = vadd.xlane.f32.xlu0 %v3201
  %v3203 = vpop.xlane.xlu0 %3202
  %v3204 = vsel %vm179, %v3166, 0.0
  %3205 = vadd.xlane.f32.xlu0 %v3204
  %v3206 = vpop.xlane.xlu0 %3205
  %v3207 = vsel %vm179, %v3167, 0.0
  %3208 = vadd.xlane.f32.xlu0 %v3207
  %v3209 = vpop.xlane.xlu0 %3208
  %v3210 = vsel %vm179, %v3168, 0.0
  %3211 = vadd.xlane.f32.xlu0 %v3210
  %v3212 = vpop.xlane.xlu0 %3211
  %v3213 = vsel %vm179, %v3169, 0.0
  %3214 = vadd.xlane.f32.xlu0 %v3213
  %v3215 = vpop.xlane.xlu0 %3214
  %v3216 = vsel %vm179, %v3170, 0.0
  %3217 = vadd.xlane.f32.xlu0 %v3216
  %v3218 = vpop.xlane.xlu0 %3217
  %v3219 = vmul.f32 %v3173, %v440
  %v3220 = vmul.f32 %v3176, %v440
  %v3221 = vmul.f32 %v3179, %v440
  %v3222 = vmul.f32 %v3182, %v440
  %v3223 = vmul.f32 %v3185, %v440
  %v3224 = vmul.f32 %v3188, %v440
  %v3225 = vmul.f32 %v3191, %v440
  %v3226 = vmul.f32 %v3194, %v440
  %v3227 = vmul.f32 %v3197, %v440
  %v3228 = vmul.f32 %v3200, %v440
  %v3229 = vmul.f32 %v3203, %v440
  %v3230 = vmul.f32 %v3206, %v440
  %v3231 = vmul.f32 %v3209, %v440
  %v3232 = vmul.f32 %v3212, %v440
  %v3233 = vmul.f32 %v3215, %v440
  %v3234 = vmul.f32 %v3218, %v440
  %v3235 = vsub.f32 %v3155, %v3219
  %v3236 = vsub.f32 %v3156, %v3220
  %v3237 = vsub.f32 %v3157, %v3221
  %v3238 = vsub.f32 %v3158, %v3222
  %v3239 = vsub.f32 %v3159, %v3223
  %v3240 = vsub.f32 %v3160, %v3224
  %v3241 = vsub.f32 %v3161, %v3225
  %v3242 = vsub.f32 %v3162, %v3226
  %v3243 = vsub.f32 %v3163, %v3227
  %v3244 = vsub.f32 %v3164, %v3228
  %v3245 = vsub.f32 %v3165, %v3229
  %v3246 = vsub.f32 %v3166, %v3230
  %v3247 = vsub.f32 %v3167, %v3231
  %v3248 = vsub.f32 %v3168, %v3232
  %v3249 = vsub.f32 %v3169, %v3233
  %v3250 = vsub.f32 %v3170, %v3234
  %v3251 = vmul.f32 %v3235, %v3235
  %v3252 = vmul.f32 %v3236, %v3236
  %v3253 = vmul.f32 %v3237, %v3237
  %v3254 = vmul.f32 %v3238, %v3238
  %v3255 = vmul.f32 %v3239, %v3239
  %v3256 = vmul.f32 %v3240, %v3240
  %v3257 = vmul.f32 %v3241, %v3241
  %v3258 = vmul.f32 %v3242, %v3242
  %v3259 = vmul.f32 %v3243, %v3243
  %v3260 = vmul.f32 %v3244, %v3244
  %v3261 = vmul.f32 %v3245, %v3245
  %v3262 = vmul.f32 %v3246, %v3246
  %v3263 = vmul.f32 %v3247, %v3247
  %v3264 = vmul.f32 %v3248, %v3248
  %v3265 = vmul.f32 %v3249, %v3249
  %v3266 = vmul.f32 %v3250, %v3250
  %v3267 = vsel %vm179, %v3251, 0.0
  %3268 = vadd.xlane.f32.xlu0 %v3267
  %v3269 = vpop.xlane.xlu0 %3268
  %v3270 = vsel %vm179, %v3252, 0.0
  %3271 = vadd.xlane.f32.xlu0 %v3270
  %v3272 = vpop.xlane.xlu0 %3271
  %v3273 = vsel %vm179, %v3253, 0.0
  %3274 = vadd.xlane.f32.xlu0 %v3273
  %v3275 = vpop.xlane.xlu0 %3274
  %v3276 = vsel %vm179, %v3254, 0.0
  %3277 = vadd.xlane.f32.xlu0 %v3276
  %v3278 = vpop.xlane.xlu0 %3277
  %v3279 = vsel %vm179, %v3255, 0.0
  %3280 = vadd.xlane.f32.xlu0 %v3279
  %v3281 = vpop.xlane.xlu0 %3280
  %v3282 = vsel %vm179, %v3256, 0.0
  %3283 = vadd.xlane.f32.xlu0 %v3282
  %v3284 = vpop.xlane.xlu0 %3283
  %v3285 = vsel %vm179, %v3257, 0.0
  %3286 = vadd.xlane.f32.xlu0 %v3285
  %v3287 = vpop.xlane.xlu0 %3286
  %v3288 = vsel %vm179, %v3258, 0.0
  %3289 = vadd.xlane.f32.xlu0 %v3288
  %v3290 = vpop.xlane.xlu0 %3289
  %v3291 = vsel %vm179, %v3259, 0.0
  %3292 = vadd.xlane.f32.xlu0 %v3291
  %v3293 = vpop.xlane.xlu0 %3292
  %v3294 = vsel %vm179, %v3260, 0.0
  %3295 = vadd.xlane.f32.xlu0 %v3294
  %v3296 = vpop.xlane.xlu0 %3295
  %v3297 = vsel %vm179, %v3261, 0.0
  %3298 = vadd.xlane.f32.xlu0 %v3297
  %v3299 = vpop.xlane.xlu0 %3298
  %v3300 = vsel %vm179, %v3262, 0.0
  %3301 = vadd.xlane.f32.xlu0 %v3300
  %v3302 = vpop.xlane.xlu0 %3301
  %v3303 = vsel %vm179, %v3263, 0.0
  %3304 = vadd.xlane.f32.xlu0 %v3303
  %v3305 = vpop.xlane.xlu0 %3304
  %v3306 = vsel %vm179, %v3264, 0.0
  %3307 = vadd.xlane.f32.xlu0 %v3306
  %v3308 = vpop.xlane.xlu0 %3307
  %v3309 = vsel %vm179, %v3265, 0.0
  %3310 = vadd.xlane.f32.xlu0 %v3309
  %v3311 = vpop.xlane.xlu0 %3310
  %v3312 = vsel %vm179, %v3266, 0.0
  %3313 = vadd.xlane.f32.xlu0 %v3312
  %v3314 = vpop.xlane.xlu0 %3313
  %v3315 = vmul.f32 %v3269, %v440
  %v3316 = vmul.f32 %v3272, %v440
  %v3317 = vmul.f32 %v3275, %v440
  %v3318 = vmul.f32 %v3278, %v440
  %v3319 = vmul.f32 %v3281, %v440
  %v3320 = vmul.f32 %v3284, %v440
  %v3321 = vmul.f32 %v3287, %v440
  %v3322 = vmul.f32 %v3290, %v440
  %v3323 = vmul.f32 %v3293, %v440
  %v3324 = vmul.f32 %v3296, %v440
  %v3325 = vmul.f32 %v3299, %v440
  %v3326 = vmul.f32 %v3302, %v440
  %v3327 = vmul.f32 %v3305, %v440
  %v3328 = vmul.f32 %v3308, %v440
  %v3329 = vmul.f32 %v3311, %v440
  %v3330 = vmul.f32 %v3314, %v440
  %v3331 = vadd.f32 %v3315, 1e-06
  %v3332 = vadd.f32 %v3316, 1e-06
  %v3333 = vadd.f32 %v3317, 1e-06
  %v3334 = vadd.f32 %v3318, 1e-06
  %v3335 = vadd.f32 %v3319, 1e-06
  %v3336 = vadd.f32 %v3320, 1e-06
  %v3337 = vadd.f32 %v3321, 1e-06
  %v3338 = vadd.f32 %v3322, 1e-06
  %v3339 = vadd.f32 %v3323, 1e-06
  %v3340 = vadd.f32 %v3324, 1e-06
  %v3341 = vadd.f32 %v3325, 1e-06
  %v3342 = vadd.f32 %v3326, 1e-06
  %v3343 = vadd.f32 %v3327, 1e-06
  %v3344 = vadd.f32 %v3328, 1e-06
  %v3345 = vadd.f32 %v3329, 1e-06
  %v3346 = vadd.f32 %v3330, 1e-06
  %v3347 = vrsqrt.pop %v3331
  %v3348 = vrsqrt.pop %v3332
  %v3349 = vrsqrt.pop %v3333
  %v3350 = vrsqrt.pop %v3334
  %v3351 = vrsqrt.pop %v3335
  %v3352 = vrsqrt.pop %v3336
  %v3353 = vrsqrt.pop %v3337
  %v3354 = vrsqrt.pop %v3338
  %v3355 = vrsqrt.pop %v3339
  %v3356 = vrsqrt.pop %v3340
  %v3357 = vrsqrt.pop %v3341
  %v3358 = vrsqrt.pop %v3342
  %v3359 = vrsqrt.pop %v3343
  %v3360 = vrsqrt.pop %v3344
  %v3361 = vrsqrt.pop %v3345
  %v3362 = vrsqrt.pop %v3346
  %v3363 = vmul.f32 %v3235, %v3347
  %v3364 = vmul.f32 %v3236, %v3348
  %v3365 = vmul.f32 %v3237, %v3349
  %v3366 = vmul.f32 %v3238, %v3350
  %v3367 = vmul.f32 %v3239, %v3351
  %v3368 = vmul.f32 %v3240, %v3352
  %v3369 = vmul.f32 %v3241, %v3353
  %v3370 = vmul.f32 %v3242, %v3354
  %v3371 = vmul.f32 %v3243, %v3355
  %v3372 = vmul.f32 %v3244, %v3356
  %v3373 = vmul.f32 %v3245, %v3357
  %v3374 = vmul.f32 %v3246, %v3358
  %v3375 = vmul.f32 %v3247, %v3359
  %v3376 = vmul.f32 %v3248, %v3360
  %v3377 = vmul.f32 %v3249, %v3361
  %v3378 = vmul.f32 %v3250, %v3362
  %v3379 = vadd.f32 %v220, 1.0
  %v3380 = vlaneseq
  %v3381 = vshrl.u32 %v3380, 7
  %v3382 = vsub.s32 0, %v3381
  %v3383 = vrot.slane %v3379, %v3382
  %v3384 = vmul.f32 %v3363, %v3383
  %v3385 = vmul.f32 %v3364, %v3383
  %v3386 = vmul.f32 %v3365, %v3383
  %v3387 = vmul.f32 %v3366, %v3383
  %v3388 = vmul.f32 %v3367, %v3383
  %v3389 = vmul.f32 %v3368, %v3383
  %v3390 = vmul.f32 %v3369, %v3383
  %v3391 = vmul.f32 %v3370, %v3383
  %v3392 = vmul.f32 %v3371, %v3383
  %v3393 = vmul.f32 %v3372, %v3383
  %v3394 = vmul.f32 %v3373, %v3383
  %v3395 = vmul.f32 %v3374, %v3383
  %v3396 = vmul.f32 %v3375, %v3383
  %v3397 = vmul.f32 %v3376, %v3383
  %v3398 = vmul.f32 %v3377, %v3383
  %v3399 = vmul.f32 %v3378, %v3383
  %3401 = vrot.lane.b32.xlu0 %v629, 32
  %v3402 = vpop.permute.xlu0 %3401
  %v3404 = vadd.f32 %v3384, %v3402
  %v3405 = vadd.f32 %v3385, %v3402
  %v3406 = vadd.f32 %v3386, %v3402
  %v3407 = vadd.f32 %v3387, %v3402
  %v3408 = vadd.f32 %v3388, %v3402
  %v3409 = vadd.f32 %v3389, %v3402
  %v3410 = vadd.f32 %v3390, %v3402
  %v3411 = vadd.f32 %v3391, %v3402
  %v3412 = vadd.f32 %v3392, %v3402
  %v3413 = vadd.f32 %v3393, %v3402
  %v3414 = vadd.f32 %v3394, %v3402
  %v3415 = vadd.f32 %v3395, %v3402
  %v3416 = vadd.f32 %v3396, %v3402
  %v3417 = vadd.f32 %v3397, %v3402
  %v3418 = vadd.f32 %v3398, %v3402
  %v3419 = vadd.f32 %v3399, %v3402
  %v3420 = vld [vmem:[%s13] sm:$0xf]
  %v3421 = vld [vmem:[%s13 + $0x4] sm:$0xf]
  %v3422 = vld [vmem:[%s13 + $0x8] sm:$0xf]
  %v3423 = vld [vmem:[%s13 + $0xc] sm:$0xf]
  %v3424 = vpack.c.bf16 %v3405, %v3404
  %v3425 = vpack.c.bf16 %v3407, %v3406
  %v3426 = vpack.c.bf16 %v3409, %v3408
  %v3427 = vpack.c.bf16 %v3411, %v3410
  %v3428 = vpack.c.bf16 %v3413, %v3412
  %v3429 = vpack.c.bf16 %v3415, %v3414
  %v3430 = vpack.c.bf16 %v3417, %v3416
  %v3431 = vpack.c.bf16 %v3419, %v3418
  %v3432 = vld [vmem:[%s14] sm:$0x1]
  %v3434 = vlaneseq
  %v3435 = vshrl.u32 %v3434, 7
  %v3436 = vsub.s32 0, %v3435
  %v3437 = vrot.slane %v3432, %v3436
  %v3443 = vunpack.c.l.b16 %v3420
  %v3444 = vunpack.c.l.b16 %v3421
  %v3445 = vunpack.c.l.b16 %v3422
  %v3446 = vunpack.c.l.b16 %v3423
  %v3447 = vpack.c.b16 %v3444, %v3443
  %v3448 = vpack.c.b16 %v3446, %v3445
  %v3452 = vsel %vm179, %v3424, 0
  %v3455 = vsel %vm179, %v3425, 0
  %v3458 = vsel %vm179, %v3426, 0
  %v3461 = vsel %vm179, %v3427, 0
  %v3464 = vsel %vm179, %v3428, 0
  %v3467 = vsel %vm179, %v3429, 0
  %v3470 = vsel %vm179, %v3430, 0
  %v3473 = vsel %vm179, %v3431, 0
  %3475 = vmatprep.subr.bf16.mxu0 0
  %3476 = vmatpush1.bf16.msra.mxu0 0
  %3477 = vmatprep.subr.bf16.mxu0 0
  %3478 = vmatpush1.bf16.msra.mxu0 0
  %3479 = vmatprep.subr.bf16.mxu0 0
  %3480 = vmatpush1.bf16.msra.mxu0 0
  %3481 = vmatprep.subr.bf16.mxu0 0
  %3482 = vmatpush1.bf16.msra.mxu0 0
  %3483 = vmatprep.subr.bf16.mxu0 0
  %3484 = vmatpush1.bf16.msra.mxu0 0
  %3485 = vmatprep.subr.bf16.mxu0 0
  %3486 = vmatpush1.bf16.msra.mxu0 0
  %3487 = vmatprep.subr.bf16.mxu0 0
  %3488 = vmatpush1.bf16.msra.mxu0 %v3448
  %3489 = vmatprep.subr.bf16.mxu0 0
  %3490 = vmatpush1.bf16.msra.mxu0 %v3447
  %3491 = vmatprep.subr.bf16.mxu0 0
  %3492 = vmatpush2.bf16.msra.mxu0 0
  %3493 = vmatprep.subr.bf16.mxu0 0
  %3494 = vmatpush2.bf16.msra.mxu0 0
  %3495 = vmatprep.subr.bf16.mxu0 0
  %3496 = vmatpush2.bf16.msra.mxu0 0
  %3497 = vmatprep.subr.bf16.mxu0 0
  %3498 = vmatpush2.bf16.msra.mxu0 0
  %3499 = vmatprep.subr.bf16.mxu0 0
  %3500 = vmatpush2.bf16.msra.mxu0 0
  %3501 = vmatprep.subr.bf16.mxu0 0
  %3502 = vmatpush2.bf16.msra.mxu0 0
  %3503 = vmatprep.subr.bf16.mxu0 0
  %3504 = vmatpush2.bf16.msra.mxu0 0
  %3505 = vmatprep.subr.bf16.mxu0 0
  %3506 = vmatpush2.bf16.msra.mxu0 0
  %3507 = vmatprep.mubr.bf16.mxu0 0
  %3508 = vmatmul.mubr.bf16.gmra.mxu0 %v3452
  %v3509 = vpop.f32.mrf.mxu0
  %v3510 = vadd.f32 %v3437, %v3509
  %v3511 = vpop.f32.mrf.mxu0
  %v3512 = vpop.f32.mrf.mxu0
  %v3513 = vadd.f32 %v3437, %v3512
  %v3514 = vpop.f32.mrf.mxu0
  %3515 = vmatprep.mubr.bf16.mxu0 0
  %3516 = vmatmul.mubr.bf16.gmra.mxu0 %v3455
  %v3517 = vpop.f32.mrf.mxu0
  %v3518 = vadd.f32 %v3437, %v3517
  %v3519 = vpop.f32.mrf.mxu0
  %v3520 = vpop.f32.mrf.mxu0
  %v3521 = vadd.f32 %v3437, %v3520
  %v3522 = vpop.f32.mrf.mxu0
  %3523 = vmatprep.mubr.bf16.mxu0 0
  %3524 = vmatmul.mubr.bf16.gmra.mxu0 %v3458
  %v3525 = vpop.f32.mrf.mxu0
  %v3526 = vadd.f32 %v3437, %v3525
  %v3527 = vpop.f32.mrf.mxu0
  %v3528 = vpop.f32.mrf.mxu0
  %v3529 = vadd.f32 %v3437, %v3528
  %v3530 = vpop.f32.mrf.mxu0
  %3531 = vmatprep.mubr.bf16.mxu0 0
  %3532 = vmatmul.mubr.bf16.gmra.mxu0 %v3461
  %v3533 = vpop.f32.mrf.mxu0
  %v3534 = vadd.f32 %v3437, %v3533
  %v3535 = vpop.f32.mrf.mxu0
  %v3536 = vpop.f32.mrf.mxu0
  %v3537 = vadd.f32 %v3437, %v3536
  %v3538 = vpop.f32.mrf.mxu0
  %3539 = vmatprep.mubr.bf16.mxu0 0
  %3540 = vmatmul.mubr.bf16.gmra.mxu0 %v3464
  %v3541 = vpop.f32.mrf.mxu0
  %v3542 = vadd.f32 %v3437, %v3541
  %v3543 = vpop.f32.mrf.mxu0
  %v3544 = vpop.f32.mrf.mxu0
  %v3545 = vadd.f32 %v3437, %v3544
  %v3546 = vpop.f32.mrf.mxu0
  %3547 = vmatprep.mubr.bf16.mxu0 0
  %3548 = vmatmul.mubr.bf16.gmra.mxu0 %v3467
  %v3549 = vpop.f32.mrf.mxu0
  %v3550 = vadd.f32 %v3437, %v3549
  %v3551 = vpop.f32.mrf.mxu0
  %v3552 = vpop.f32.mrf.mxu0
  %v3553 = vadd.f32 %v3437, %v3552
  %v3554 = vpop.f32.mrf.mxu0
  %3555 = vmatprep.mubr.bf16.mxu0 0
  %3556 = vmatmul.mubr.bf16.gmra.mxu0 %v3470
  %v3557 = vpop.f32.mrf.mxu0
  %v3558 = vadd.f32 %v3437, %v3557
  %v3559 = vpop.f32.mrf.mxu0
  %v3560 = vpop.f32.mrf.mxu0
  %v3561 = vadd.f32 %v3437, %v3560
  %v3562 = vpop.f32.mrf.mxu0
  %3563 = vmatprep.mubr.bf16.mxu0 0
  %3564 = vmatmul.mubr.bf16.gmra.mxu0 %v3473
  %v3565 = vpop.f32.mrf.mxu0
  %v3566 = vadd.f32 %v3437, %v3565
  %v3567 = vpop.f32.mrf.mxu0
  %v3568 = vpop.f32.mrf.mxu0
  %v3569 = vadd.f32 %v3437, %v3568
  %v3570 = vpop.f32.mrf.mxu0
  %3571 = vdwg.mxu0
  %v3572 = vmul.f32 %v3510, %v3510
  %v3573 = vmul.f32 %v3513, %v3513
  %v3574 = vmul.f32 %v3518, %v3518
  %v3575 = vmul.f32 %v3521, %v3521
  %v3576 = vmul.f32 %v3526, %v3526
  %v3577 = vmul.f32 %v3529, %v3529
  %v3578 = vmul.f32 %v3534, %v3534
  %v3579 = vmul.f32 %v3537, %v3537
  %v3580 = vmul.f32 %v3542, %v3542
  %v3581 = vmul.f32 %v3545, %v3545
  %v3582 = vmul.f32 %v3550, %v3550
  %v3583 = vmul.f32 %v3553, %v3553
  %v3584 = vmul.f32 %v3558, %v3558
  %v3585 = vmul.f32 %v3561, %v3561
  %v3586 = vmul.f32 %v3566, %v3566
  %v3587 = vmul.f32 %v3569, %v3569
  %v3588 = vmul.f32 %v3510, %v3572
  %v3589 = vmul.f32 %v3513, %v3573
  %v3590 = vmul.f32 %v3518, %v3574
  %v3591 = vmul.f32 %v3521, %v3575
  %v3592 = vmul.f32 %v3526, %v3576
  %v3593 = vmul.f32 %v3529, %v3577
  %v3594 = vmul.f32 %v3534, %v3578
  %v3595 = vmul.f32 %v3537, %v3579
  %v3596 = vmul.f32 %v3542, %v3580
  %v3597 = vmul.f32 %v3545, %v3581
  %v3598 = vmul.f32 %v3550, %v3582
  %v3599 = vmul.f32 %v3553, %v3583
  %v3600 = vmul.f32 %v3558, %v3584
  %v3601 = vmul.f32 %v3561, %v3585
  %v3602 = vmul.f32 %v3566, %v3586
  %v3603 = vmul.f32 %v3569, %v3587
  %v3604 = vmul.f32 %v3588, 0.044715
  %v3605 = vmul.f32 %v3589, 0.044715
  %v3606 = vmul.f32 %v3590, 0.044715
  %v3607 = vmul.f32 %v3591, 0.044715
  %v3608 = vmul.f32 %v3592, 0.044715
  %v3609 = vmul.f32 %v3593, 0.044715
  %v3610 = vmul.f32 %v3594, 0.044715
  %v3611 = vmul.f32 %v3595, 0.044715
  %v3612 = vmul.f32 %v3596, 0.044715
  %v3613 = vmul.f32 %v3597, 0.044715
  %v3614 = vmul.f32 %v3598, 0.044715
  %v3615 = vmul.f32 %v3599, 0.044715
  %v3616 = vmul.f32 %v3600, 0.044715
  %v3617 = vmul.f32 %v3601, 0.044715
  %v3618 = vmul.f32 %v3602, 0.044715
  %v3619 = vmul.f32 %v3603, 0.044715
  %v3620 = vadd.f32 %v3510, %v3604
  %v3621 = vadd.f32 %v3513, %v3605
  %v3622 = vadd.f32 %v3518, %v3606
  %v3623 = vadd.f32 %v3521, %v3607
  %v3624 = vadd.f32 %v3526, %v3608
  %v3625 = vadd.f32 %v3529, %v3609
  %v3626 = vadd.f32 %v3534, %v3610
  %v3627 = vadd.f32 %v3537, %v3611
  %v3628 = vadd.f32 %v3542, %v3612
  %v3629 = vadd.f32 %v3545, %v3613
  %v3630 = vadd.f32 %v3550, %v3614
  %v3631 = vadd.f32 %v3553, %v3615
  %v3632 = vadd.f32 %v3558, %v3616
  %v3633 = vadd.f32 %v3561, %v3617
  %v3634 = vadd.f32 %v3566, %v3618
  %v3635 = vadd.f32 %v3569, %v3619
  %v3636 = vmul.f32 %v3620, 0.7978846
  %v3637 = vmul.f32 %v3621, 0.7978846
  %v3638 = vmul.f32 %v3622, 0.7978846
  %v3639 = vmul.f32 %v3623, 0.7978846
  %v3640 = vmul.f32 %v3624, 0.7978846
  %v3641 = vmul.f32 %v3625, 0.7978846
  %v3642 = vmul.f32 %v3626, 0.7978846
  %v3643 = vmul.f32 %v3627, 0.7978846
  %v3644 = vmul.f32 %v3628, 0.7978846
  %v3645 = vmul.f32 %v3629, 0.7978846
  %v3646 = vmul.f32 %v3630, 0.7978846
  %v3647 = vmul.f32 %v3631, 0.7978846
  %v3648 = vmul.f32 %v3632, 0.7978846
  %v3649 = vmul.f32 %v3633, 0.7978846
  %v3650 = vmul.f32 %v3634, 0.7978846
  %v3651 = vmul.f32 %v3635, 0.7978846
  %v3652 = vtanh.pop %v3636
  %v3653 = vtanh.pop %v3637
  %v3654 = vtanh.pop %v3638
  %v3655 = vtanh.pop %v3639
  %v3656 = vtanh.pop %v3640
  %v3657 = vtanh.pop %v3641
  %v3658 = vtanh.pop %v3642
  %v3659 = vtanh.pop %v3643
  %v3660 = vtanh.pop %v3644
  %v3661 = vtanh.pop %v3645
  %v3662 = vtanh.pop %v3646
  %v3663 = vtanh.pop %v3647
  %v3664 = vtanh.pop %v3648
  %v3665 = vtanh.pop %v3649
  %v3666 = vtanh.pop %v3650
  %v3667 = vtanh.pop %v3651
  %v3668 = vadd.f32 %v3652, 1.0
  %v3669 = vadd.f32 %v3653, 1.0
  %v3670 = vadd.f32 %v3654, 1.0
  %v3671 = vadd.f32 %v3655, 1.0
  %v3672 = vadd.f32 %v3656, 1.0
  %v3673 = vadd.f32 %v3657, 1.0
  %v3674 = vadd.f32 %v3658, 1.0
  %v3675 = vadd.f32 %v3659, 1.0
  %v3676 = vadd.f32 %v3660, 1.0
  %v3677 = vadd.f32 %v3661, 1.0
  %v3678 = vadd.f32 %v3662, 1.0
  %v3679 = vadd.f32 %v3663, 1.0
  %v3680 = vadd.f32 %v3664, 1.0
  %v3681 = vadd.f32 %v3665, 1.0
  %v3682 = vadd.f32 %v3666, 1.0
  %v3683 = vadd.f32 %v3667, 1.0
  %v3684 = vmul.f32 %v3668, 0.5
  %v3685 = vmul.f32 %v3669, 0.5
  %v3686 = vmul.f32 %v3670, 0.5
  %v3687 = vmul.f32 %v3671, 0.5
  %v3688 = vmul.f32 %v3672, 0.5
  %v3689 = vmul.f32 %v3673, 0.5
  %v3690 = vmul.f32 %v3674, 0.5
  %v3691 = vmul.f32 %v3675, 0.5
  %v3692 = vmul.f32 %v3676, 0.5
  %v3693 = vmul.f32 %v3677, 0.5
  %v3694 = vmul.f32 %v3678, 0.5
  %v3695 = vmul.f32 %v3679, 0.5
  %v3696 = vmul.f32 %v3680, 0.5
  %v3697 = vmul.f32 %v3681, 0.5
  %v3698 = vmul.f32 %v3682, 0.5
  %v3699 = vmul.f32 %v3683, 0.5
  %v3700 = vmul.f32 %v3510, %v3684
  %v3701 = vmul.f32 %v3513, %v3685
  %v3702 = vmul.f32 %v3518, %v3686
  %v3703 = vmul.f32 %v3521, %v3687
  %v3704 = vmul.f32 %v3526, %v3688
  %v3705 = vmul.f32 %v3529, %v3689
  %v3706 = vmul.f32 %v3534, %v3690
  %v3707 = vmul.f32 %v3537, %v3691
  %v3708 = vmul.f32 %v3542, %v3692
  %v3709 = vmul.f32 %v3545, %v3693
  %v3710 = vmul.f32 %v3550, %v3694
  %v3711 = vmul.f32 %v3553, %v3695
  %v3712 = vmul.f32 %v3558, %v3696
  %v3713 = vmul.f32 %v3561, %v3697
  %v3714 = vmul.f32 %v3566, %v3698
  %v3715 = vmul.f32 %v3569, %v3699
  %v3716 = vld [vmem:[%s15] sm:$0xf]
  %v3717 = vld [vmem:[%s15 + $0x4] sm:$0xf]
  %v3718 = vld [vmem:[%s15 + $0x8] sm:$0xf]
  %v3719 = vld [vmem:[%s15 + $0xc] sm:$0xf]
  %v3720 = vld [vmem:[%s15 + $0x10] sm:$0xf]
  %v3721 = vld [vmem:[%s15 + $0x14] sm:$0xf]
  %v3722 = vld [vmem:[%s15 + $0x18] sm:$0xf]
  %v3723 = vld [vmem:[%s15 + $0x1c] sm:$0xf]
  %v3724 = vld [vmem:[%s15 + $0x20] sm:$0xf]
  %v3725 = vld [vmem:[%s15 + $0x24] sm:$0xf]
  %v3726 = vld [vmem:[%s15 + $0x28] sm:$0xf]
  %v3727 = vld [vmem:[%s15 + $0x2c] sm:$0xf]
  %v3728 = vld [vmem:[%s15 + $0x30] sm:$0xf]
  %v3729 = vld [vmem:[%s15 + $0x34] sm:$0xf]
  %v3730 = vld [vmem:[%s15 + $0x38] sm:$0xf]
  %v3731 = vld [vmem:[%s15 + $0x3c] sm:$0xf]
  %v3732 = vpack.c.bf16 %v3701, %v3700
  %v3733 = vpack.c.bf16 %v3703, %v3702
  %v3734 = vpack.c.bf16 %v3705, %v3704
  %v3735 = vpack.c.bf16 %v3707, %v3706
  %v3736 = vpack.c.bf16 %v3709, %v3708
  %v3737 = vpack.c.bf16 %v3711, %v3710
  %v3738 = vpack.c.bf16 %v3713, %v3712
  %v3739 = vpack.c.bf16 %v3715, %v3714
  %v3740 = vld [vmem:[%s16] sm:$0x1]
  %v3742 = vlaneseq
  %v3743 = vshrl.u32 %v3742, 7
  %v3744 = vsub.s32 0, %v3743
  %v3745 = vrot.slane %v3740, %v3744
  %v3763 = vunpack.c.l.b16 %v3716
  %v3764 = vunpack.c.l.b16 %v3717
  %v3765 = vunpack.c.l.b16 %v3718
  %v3766 = vunpack.c.l.b16 %v3719
  %v3767 = vunpack.c.l.b16 %v3720
  %v3768 = vunpack.c.l.b16 %v3721
  %v3769 = vunpack.c.l.b16 %v3722
  %v3770 = vunpack.c.l.b16 %v3723
  %v3771 = vunpack.c.l.b16 %v3724
  %v3772 = vunpack.c.l.b16 %v3725
  %v3773 = vunpack.c.l.b16 %v3726
  %v3774 = vunpack.c.l.b16 %v3727
  %v3775 = vunpack.c.l.b16 %v3728
  %v3776 = vunpack.c.l.b16 %v3729
  %v3777 = vunpack.c.l.b16 %v3730
  %v3778 = vunpack.c.l.b16 %v3731
  %v3779 = vpack.c.b16 %v3764, %v3763
  %v3780 = vpack.c.b16 %v3766, %v3765
  %v3781 = vpack.c.b16 %v3768, %v3767
  %v3782 = vpack.c.b16 %v3770, %v3769
  %v3783 = vpack.c.b16 %v3772, %v3771
  %v3784 = vpack.c.b16 %v3774, %v3773
  %v3785 = vpack.c.b16 %v3776, %v3775
  %v3786 = vpack.c.b16 %v3778, %v3777
  %3795 = vmatprep.subr.bf16.mxu0 0
  %3796 = vmatpush1.bf16.msra.mxu0 %v3786
  %3797 = vmatprep.subr.bf16.mxu0 0
  %3798 = vmatpush1.bf16.msra.mxu0 %v3785
  %3799 = vmatprep.subr.bf16.mxu0 0
  %3800 = vmatpush1.bf16.msra.mxu0 %v3784
  %3801 = vmatprep.subr.bf16.mxu0 0
  %3802 = vmatpush1.bf16.msra.mxu0 %v3783
  %3803 = vmatprep.subr.bf16.mxu0 0
  %3804 = vmatpush1.bf16.msra.mxu0 %v3782
  %3805 = vmatprep.subr.bf16.mxu0 0
  %3806 = vmatpush1.bf16.msra.mxu0 %v3781
  %3807 = vmatprep.subr.bf16.mxu0 0
  %3808 = vmatpush1.bf16.msra.mxu0 %v3780
  %3809 = vmatprep.subr.bf16.mxu0 0
  %3810 = vmatpush1.bf16.msra.mxu0 %v3779
  %3811 = vmatprep.subr.bf16.mxu0 0
  %3812 = vmatpush2.bf16.msra.mxu0 0
  %3813 = vmatprep.subr.bf16.mxu0 0
  %3814 = vmatpush2.bf16.msra.mxu0 0
  %3815 = vmatprep.subr.bf16.mxu0 0
  %3816 = vmatpush2.bf16.msra.mxu0 0
  %3817 = vmatprep.subr.bf16.mxu0 0
  %3818 = vmatpush2.bf16.msra.mxu0 0
  %3819 = vmatprep.subr.bf16.mxu0 0
  %3820 = vmatpush2.bf16.msra.mxu0 0
  %3821 = vmatprep.subr.bf16.mxu0 0
  %3822 = vmatpush2.bf16.msra.mxu0 0
  %3823 = vmatprep.subr.bf16.mxu0 0
  %3824 = vmatpush2.bf16.msra.mxu0 0
  %3825 = vmatprep.subr.bf16.mxu0 0
  %3826 = vmatpush2.bf16.msra.mxu0 0
  %3827 = vmatprep.mubr.bf16.mxu0 0
  %3828 = vmatmul.mubr.bf16.gmra.mxu0 %v3732
  %v3829 = vpop.f32.mrf.mxu0
  %v3830 = vadd.f32 %v3745, %v3829
  %v3831 = vpop.f32.mrf.mxu0
  %v3832 = vpop.f32.mrf.mxu0
  %v3833 = vadd.f32 %v3745, %v3832
  %v3834 = vpop.f32.mrf.mxu0
  %3835 = vmatprep.mubr.bf16.mxu0 0
  %3836 = vmatmul.mubr.bf16.gmra.mxu0 %v3733
  %v3837 = vpop.f32.mrf.mxu0
  %v3838 = vadd.f32 %v3745, %v3837
  %v3839 = vpop.f32.mrf.mxu0
  %v3840 = vpop.f32.mrf.mxu0
  %v3841 = vadd.f32 %v3745, %v3840
  %v3842 = vpop.f32.mrf.mxu0
  %3843 = vmatprep.mubr.bf16.mxu0 0
  %3844 = vmatmul.mubr.bf16.gmra.mxu0 %v3734
  %v3845 = vpop.f32.mrf.mxu0
  %v3846 = vadd.f32 %v3745, %v3845
  %v3847 = vpop.f32.mrf.mxu0
  %v3848 = vpop.f32.mrf.mxu0
  %v3849 = vadd.f32 %v3745, %v3848
  %v3850 = vpop.f32.mrf.mxu0
  %3851 = vmatprep.mubr.bf16.mxu0 0
  %3852 = vmatmul.mubr.bf16.gmra.mxu0 %v3735
  %v3853 = vpop.f32.mrf.mxu0
  %v3854 = vadd.f32 %v3745, %v3853
  %v3855 = vpop.f32.mrf.mxu0
  %v3856 = vpop.f32.mrf.mxu0
  %v3857 = vadd.f32 %v3745, %v3856
  %v3858 = vpop.f32.mrf.mxu0
  %3859 = vmatprep.mubr.bf16.mxu0 0
  %3860 = vmatmul.mubr.bf16.gmra.mxu0 %v3736
  %v3861 = vpop.f32.mrf.mxu0
  %v3862 = vadd.f32 %v3745, %v3861
  %v3863 = vpop.f32.mrf.mxu0
  %v3864 = vpop.f32.mrf.mxu0
  %v3865 = vadd.f32 %v3745, %v3864
  %v3866 = vpop.f32.mrf.mxu0
  %3867 = vmatprep.mubr.bf16.mxu0 0
  %3868 = vmatmul.mubr.bf16.gmra.mxu0 %v3737
  %v3869 = vpop.f32.mrf.mxu0
  %v3870 = vadd.f32 %v3745, %v3869
  %v3871 = vpop.f32.mrf.mxu0
  %v3872 = vpop.f32.mrf.mxu0
  %v3873 = vadd.f32 %v3745, %v3872
  %v3874 = vpop.f32.mrf.mxu0
  %3875 = vmatprep.mubr.bf16.mxu0 0
  %3876 = vmatmul.mubr.bf16.gmra.mxu0 %v3738
  %v3877 = vpop.f32.mrf.mxu0
  %v3878 = vadd.f32 %v3745, %v3877
  %v3879 = vpop.f32.mrf.mxu0
  %v3880 = vpop.f32.mrf.mxu0
  %v3881 = vadd.f32 %v3745, %v3880
  %v3882 = vpop.f32.mrf.mxu0
  %3883 = vmatprep.mubr.bf16.mxu0 0
  %3884 = vmatmul.mubr.bf16.gmra.mxu0 %v3739
  %v3885 = vpop.f32.mrf.mxu0
  %v3886 = vadd.f32 %v3745, %v3885
  %v3887 = vpop.f32.mrf.mxu0
  %v3888 = vpop.f32.mrf.mxu0
  %v3889 = vadd.f32 %v3745, %v3888
  %v3890 = vpop.f32.mrf.mxu0
  %3891 = vdwg.mxu0
  %v3892 = vlaneseq
  %v3893 = vshrl.u32 %v3892, 7
  %v3894 = vsub.s32 0, %v3893
  %v3895 = vrot.slane %v220, %v3894
  %3912 = vrot.lane.b32.xlu0 %v3830, 32
  %v3913 = vpop.permute.xlu0 %3912
  %3914 = vrot.lane.b32.xlu0 %v3833, 32
  %v3915 = vpop.permute.xlu0 %3914
  %3916 = vrot.lane.b32.xlu0 %v3838, 32
  %v3917 = vpop.permute.xlu0 %3916
  %3918 = vrot.lane.b32.xlu0 %v3841, 32
  %v3919 = vpop.permute.xlu0 %3918
  %3920 = vrot.lane.b32.xlu0 %v3846, 32
  %v3921 = vpop.permute.xlu0 %3920
  %3922 = vrot.lane.b32.xlu0 %v3849, 32
  %v3923 = vpop.permute.xlu0 %3922
  %3924 = vrot.lane.b32.xlu0 %v3854, 32
  %v3925 = vpop.permute.xlu0 %3924
  %3926 = vrot.lane.b32.xlu0 %v3857, 32
  %v3927 = vpop.permute.xlu0 %3926
  %3928 = vrot.lane.b32.xlu0 %v3862, 32
  %v3929 = vpop.permute.xlu0 %3928
  %3930 = vrot.lane.b32.xlu0 %v3865, 32
  %v3931 = vpop.permute.xlu0 %3930
  %3932 = vrot.lane.b32.xlu0 %v3870, 32
  %v3933 = vpop.permute.xlu0 %3932
  %3934 = vrot.lane.b32.xlu0 %v3873, 32
  %v3935 = vpop.permute.xlu0 %3934
  %3936 = vrot.lane.b32.xlu0 %v3878, 32
  %v3937 = vpop.permute.xlu0 %3936
  %3938 = vrot.lane.b32.xlu0 %v3881, 32
  %v3939 = vpop.permute.xlu0 %3938
  %3940 = vrot.lane.b32.xlu0 %v3886, 32
  %v3941 = vpop.permute.xlu0 %3940
  %3942 = vrot.lane.b32.xlu0 %v3889, 32
  %v3943 = vpop.permute.xlu0 %3942
  %v3960 = vmul.f32 %v3895, %v3913
  %v3961 = vmul.f32 %v3895, %v3915
  %v3962 = vmul.f32 %v3895, %v3917
  %v3963 = vmul.f32 %v3895, %v3919
  %v3964 = vmul.f32 %v3895, %v3921
  %v3965 = vmul.f32 %v3895, %v3923
  %v3966 = vmul.f32 %v3895, %v3925
  %v3967 = vmul.f32 %v3895, %v3927
  %v3968 = vmul.f32 %v3895, %v3929
  %v3969 = vmul.f32 %v3895, %v3931
  %v3970 = vmul.f32 %v3895, %v3933
  %v3971 = vmul.f32 %v3895, %v3935
  %v3972 = vmul.f32 %v3895, %v3937
  %v3973 = vmul.f32 %v3895, %v3939
  %v3974 = vmul.f32 %v3895, %v3941
  %v3975 = vmul.f32 %v3895, %v3943
  %3992 = vrot.lane.b32.xlu0 %v3960, 96
  %v3993 = vpop.permute.xlu0 %3992
  %3994 = vrot.lane.b32.xlu0 %v3961, 96
  %v3995 = vpop.permute.xlu0 %3994
  %3996 = vrot.lane.b32.xlu0 %v3962, 96
  %v3997 = vpop.permute.xlu0 %3996
  %3998 = vrot.lane.b32.xlu0 %v3963, 96
  %v3999 = vpop.permute.xlu0 %3998
  %4000 = vrot.lane.b32.xlu0 %v3964, 96
  %v4001 = vpop.permute.xlu0 %4000
  %4002 = vrot.lane.b32.xlu0 %v3965, 96
  %v4003 = vpop.permute.xlu0 %4002
  %4004 = vrot.lane.b32.xlu0 %v3966, 96
  %v4005 = vpop.permute.xlu0 %4004
  %4006 = vrot.lane.b32.xlu0 %v3967, 96
  %v4007 = vpop.permute.xlu0 %4006
  %4008 = vrot.lane.b32.xlu0 %v3968, 96
  %v4009 = vpop.permute.xlu0 %4008
  %4010 = vrot.lane.b32.xlu0 %v3969, 96
  %v4011 = vpop.permute.xlu0 %4010
  %4012 = vrot.lane.b32.xlu0 %v3970, 96
  %v4013 = vpop.permute.xlu0 %4012
  %4014 = vrot.lane.b32.xlu0 %v3971, 96
  %v4015 = vpop.permute.xlu0 %4014
  %4016 = vrot.lane.b32.xlu0 %v3972, 96
  %v4017 = vpop.permute.xlu0 %4016
  %4018 = vrot.lane.b32.xlu0 %v3973, 96
  %v4019 = vpop.permute.xlu0 %4018
  %4020 = vrot.lane.b32.xlu0 %v3974, 96
  %v4021 = vpop.permute.xlu0 %4020
  %4022 = vrot.lane.b32.xlu0 %v3975, 96
  %v4023 = vpop.permute.xlu0 %4022
  %v4040 = vadd.f32 %v3155, %v3993
  %v4041 = vadd.f32 %v3156, %v3995
  %v4042 = vadd.f32 %v3157, %v3997
  %v4043 = vadd.f32 %v3158, %v3999
  %v4044 = vadd.f32 %v3159, %v4001
  %v4045 = vadd.f32 %v3160, %v4003
  %v4046 = vadd.f32 %v3161, %v4005
  %v4047 = vadd.f32 %v3162, %v4007
  %v4048 = vadd.f32 %v3163, %v4009
  %v4049 = vadd.f32 %v3164, %v4011
  %v4050 = vadd.f32 %v3165, %v4013
  %v4051 = vadd.f32 %v3166, %v4015
  %v4052 = vadd.f32 %v3167, %v4017
  %v4053 = vadd.f32 %v3168, %v4019
  %v4054 = vadd.f32 %v3169, %v4021
  %v4055 = vadd.f32 %v3170, %v4023
  %v4056 = vsel %vm179, %v4040, 0.0
  %4057 = vadd.xlane.f32.xlu0 %v4056
  %v4058 = vpop.xlane.xlu0 %4057
  %v4059 = vsel %vm179, %v4041, 0.0
  %4060 = vadd.xlane.f32.xlu0 %v4059
  %v4061 = vpop.xlane.xlu0 %4060
  %v4062 = vsel %vm179, %v4042, 0.0
  %4063 = vadd.xlane.f32.xlu0 %v4062
  %v4064 = vpop.xlane.xlu0 %4063
  %v4065 = vsel %vm179, %v4043, 0.0
  %4066 = vadd.xlane.f32.xlu0 %v4065
  %v4067 = vpop.xlane.xlu0 %4066
  %v4068 = vsel %vm179, %v4044, 0.0
  %4069 = vadd.xlane.f32.xlu0 %v4068
  %v4070 = vpop.xlane.xlu0 %4069
  %v4071 = vsel %vm179, %v4045, 0.0
  %4072 = vadd.xlane.f32.xlu0 %v4071
  %v4073 = vpop.xlane.xlu0 %4072
  %v4074 = vsel %vm179, %v4046, 0.0
  %4075 = vadd.xlane.f32.xlu0 %v4074
  %v4076 = vpop.xlane.xlu0 %4075
  %v4077 = vsel %vm179, %v4047, 0.0
  %4078 = vadd.xlane.f32.xlu0 %v4077
  %v4079 = vpop.xlane.xlu0 %4078
  %v4080 = vsel %vm179, %v4048, 0.0
  %4081 = vadd.xlane.f32.xlu0 %v4080
  %v4082 = vpop.xlane.xlu0 %4081
  %v4083 = vsel %vm179, %v4049, 0.0
  %4084 = vadd.xlane.f32.xlu0 %v4083
  %v4085 = vpop.xlane.xlu0 %4084
  %v4086 = vsel %vm179, %v4050, 0.0
  %4087 = vadd.xlane.f32.xlu0 %v4086
  %v4088 = vpop.xlane.xlu0 %4087
  %v4089 = vsel %vm179, %v4051, 0.0
  %4090 = vadd.xlane.f32.xlu0 %v4089
  %v4091 = vpop.xlane.xlu0 %4090
  %v4092 = vsel %vm179, %v4052, 0.0
  %4093 = vadd.xlane.f32.xlu0 %v4092
  %v4094 = vpop.xlane.xlu0 %4093
  %v4095 = vsel %vm179, %v4053, 0.0
  %4096 = vadd.xlane.f32.xlu0 %v4095
  %v4097 = vpop.xlane.xlu0 %4096
  %v4098 = vsel %vm179, %v4054, 0.0
  %4099 = vadd.xlane.f32.xlu0 %v4098
  %v4100 = vpop.xlane.xlu0 %4099
  %v4101 = vsel %vm179, %v4055, 0.0
  %4102 = vadd.xlane.f32.xlu0 %v4101
  %v4103 = vpop.xlane.xlu0 %4102
  %v4104 = vmul.f32 %v4058, %v440
  %v4105 = vmul.f32 %v4061, %v440
  %v4106 = vmul.f32 %v4064, %v440
  %v4107 = vmul.f32 %v4067, %v440
  %v4108 = vmul.f32 %v4070, %v440
  %v4109 = vmul.f32 %v4073, %v440
  %v4110 = vmul.f32 %v4076, %v440
  %v4111 = vmul.f32 %v4079, %v440
  %v4112 = vmul.f32 %v4082, %v440
  %v4113 = vmul.f32 %v4085, %v440
  %v4114 = vmul.f32 %v4088, %v440
  %v4115 = vmul.f32 %v4091, %v440
  %v4116 = vmul.f32 %v4094, %v440
  %v4117 = vmul.f32 %v4097, %v440
  %v4118 = vmul.f32 %v4100, %v440
  %v4119 = vmul.f32 %v4103, %v440
  %v4120 = vsub.f32 %v4040, %v4104
  %v4121 = vsub.f32 %v4041, %v4105
  %v4122 = vsub.f32 %v4042, %v4106
  %v4123 = vsub.f32 %v4043, %v4107
  %v4124 = vsub.f32 %v4044, %v4108
  %v4125 = vsub.f32 %v4045, %v4109
  %v4126 = vsub.f32 %v4046, %v4110
  %v4127 = vsub.f32 %v4047, %v4111
  %v4128 = vsub.f32 %v4048, %v4112
  %v4129 = vsub.f32 %v4049, %v4113
  %v4130 = vsub.f32 %v4050, %v4114
  %v4131 = vsub.f32 %v4051, %v4115
  %v4132 = vsub.f32 %v4052, %v4116
  %v4133 = vsub.f32 %v4053, %v4117
  %v4134 = vsub.f32 %v4054, %v4118
  %v4135 = vsub.f32 %v4055, %v4119
  %v4136 = vmul.f32 %v4120, %v4120
  %v4137 = vmul.f32 %v4121, %v4121
  %v4138 = vmul.f32 %v4122, %v4122
  %v4139 = vmul.f32 %v4123, %v4123
  %v4140 = vmul.f32 %v4124, %v4124
  %v4141 = vmul.f32 %v4125, %v4125
  %v4142 = vmul.f32 %v4126, %v4126
  %v4143 = vmul.f32 %v4127, %v4127
  %v4144 = vmul.f32 %v4128, %v4128
  %v4145 = vmul.f32 %v4129, %v4129
  %v4146 = vmul.f32 %v4130, %v4130
  %v4147 = vmul.f32 %v4131, %v4131
  %v4148 = vmul.f32 %v4132, %v4132
  %v4149 = vmul.f32 %v4133, %v4133
  %v4150 = vmul.f32 %v4134, %v4134
  %v4151 = vmul.f32 %v4135, %v4135
  %v4152 = vsel %vm179, %v4136, 0.0
  %4153 = vadd.xlane.f32.xlu0 %v4152
  %v4154 = vpop.xlane.xlu0 %4153
  %v4155 = vsel %vm179, %v4137, 0.0
  %4156 = vadd.xlane.f32.xlu0 %v4155
  %v4157 = vpop.xlane.xlu0 %4156
  %v4158 = vsel %vm179, %v4138, 0.0
  %4159 = vadd.xlane.f32.xlu0 %v4158
  %v4160 = vpop.xlane.xlu0 %4159
  %v4161 = vsel %vm179, %v4139, 0.0
  %4162 = vadd.xlane.f32.xlu0 %v4161
  %v4163 = vpop.xlane.xlu0 %4162
  %v4164 = vsel %vm179, %v4140, 0.0
  %4165 = vadd.xlane.f32.xlu0 %v4164
  %v4166 = vpop.xlane.xlu0 %4165
  %v4167 = vsel %vm179, %v4141, 0.0
  %4168 = vadd.xlane.f32.xlu0 %v4167
  %v4169 = vpop.xlane.xlu0 %4168
  %v4170 = vsel %vm179, %v4142, 0.0
  %4171 = vadd.xlane.f32.xlu0 %v4170
  %v4172 = vpop.xlane.xlu0 %4171
  %v4173 = vsel %vm179, %v4143, 0.0
  %4174 = vadd.xlane.f32.xlu0 %v4173
  %v4175 = vpop.xlane.xlu0 %4174
  %v4176 = vsel %vm179, %v4144, 0.0
  %4177 = vadd.xlane.f32.xlu0 %v4176
  %v4178 = vpop.xlane.xlu0 %4177
  %v4179 = vsel %vm179, %v4145, 0.0
  %4180 = vadd.xlane.f32.xlu0 %v4179
  %v4181 = vpop.xlane.xlu0 %4180
  %v4182 = vsel %vm179, %v4146, 0.0
  %4183 = vadd.xlane.f32.xlu0 %v4182
  %v4184 = vpop.xlane.xlu0 %4183
  %v4185 = vsel %vm179, %v4147, 0.0
  %4186 = vadd.xlane.f32.xlu0 %v4185
  %v4187 = vpop.xlane.xlu0 %4186
  %v4188 = vsel %vm179, %v4148, 0.0
  %4189 = vadd.xlane.f32.xlu0 %v4188
  %v4190 = vpop.xlane.xlu0 %4189
  %v4191 = vsel %vm179, %v4149, 0.0
  %4192 = vadd.xlane.f32.xlu0 %v4191
  %v4193 = vpop.xlane.xlu0 %4192
  %v4194 = vsel %vm179, %v4150, 0.0
  %4195 = vadd.xlane.f32.xlu0 %v4194
  %v4196 = vpop.xlane.xlu0 %4195
  %v4197 = vsel %vm179, %v4151, 0.0
  %4198 = vadd.xlane.f32.xlu0 %v4197
  %v4199 = vpop.xlane.xlu0 %4198
  %v4200 = vmul.f32 %v4154, %v440
  %v4201 = vmul.f32 %v4157, %v440
  %v4202 = vmul.f32 %v4160, %v440
  %v4203 = vmul.f32 %v4163, %v440
  %v4204 = vmul.f32 %v4166, %v440
  %v4205 = vmul.f32 %v4169, %v440
  %v4206 = vmul.f32 %v4172, %v440
  %v4207 = vmul.f32 %v4175, %v440
  %v4208 = vmul.f32 %v4178, %v440
  %v4209 = vmul.f32 %v4181, %v440
  %v4210 = vmul.f32 %v4184, %v440
  %v4211 = vmul.f32 %v4187, %v440
  %v4212 = vmul.f32 %v4190, %v440
  %v4213 = vmul.f32 %v4193, %v440
  %v4214 = vmul.f32 %v4196, %v440
  %v4215 = vmul.f32 %v4199, %v440
  %v4216 = vadd.f32 %v4200, 1e-06
  %v4217 = vadd.f32 %v4201, 1e-06
  %v4218 = vadd.f32 %v4202, 1e-06
  %v4219 = vadd.f32 %v4203, 1e-06
  %v4220 = vadd.f32 %v4204, 1e-06
  %v4221 = vadd.f32 %v4205, 1e-06
  %v4222 = vadd.f32 %v4206, 1e-06
  %v4223 = vadd.f32 %v4207, 1e-06
  %v4224 = vadd.f32 %v4208, 1e-06
  %v4225 = vadd.f32 %v4209, 1e-06
  %v4226 = vadd.f32 %v4210, 1e-06
  %v4227 = vadd.f32 %v4211, 1e-06
  %v4228 = vadd.f32 %v4212, 1e-06
  %v4229 = vadd.f32 %v4213, 1e-06
  %v4230 = vadd.f32 %v4214, 1e-06
  %v4231 = vadd.f32 %v4215, 1e-06
  %v4232 = vrsqrt.pop %v4216
  %v4233 = vrsqrt.pop %v4217
  %v4234 = vrsqrt.pop %v4218
  %v4235 = vrsqrt.pop %v4219
  %v4236 = vrsqrt.pop %v4220
  %v4237 = vrsqrt.pop %v4221
  %v4238 = vrsqrt.pop %v4222
  %v4239 = vrsqrt.pop %v4223
  %v4240 = vrsqrt.pop %v4224
  %v4241 = vrsqrt.pop %v4225
  %v4242 = vrsqrt.pop %v4226
  %v4243 = vrsqrt.pop %v4227
  %v4244 = vrsqrt.pop %v4228
  %v4245 = vrsqrt.pop %v4229
  %v4246 = vrsqrt.pop %v4230
  %v4247 = vrsqrt.pop %v4231
  %v4248 = vmul.f32 %v4120, %v4232
  %v4249 = vmul.f32 %v4121, %v4233
  %v4250 = vmul.f32 %v4122, %v4234
  %v4251 = vmul.f32 %v4123, %v4235
  %v4252 = vmul.f32 %v4124, %v4236
  %v4253 = vmul.f32 %v4125, %v4237
  %v4254 = vmul.f32 %v4126, %v4238
  %v4255 = vmul.f32 %v4127, %v4239
  %v4256 = vmul.f32 %v4128, %v4240
  %v4257 = vmul.f32 %v4129, %v4241
  %v4258 = vmul.f32 %v4130, %v4242
  %v4259 = vmul.f32 %v4131, %v4243
  %v4260 = vmul.f32 %v4132, %v4244
  %v4261 = vmul.f32 %v4133, %v4245
  %v4262 = vmul.f32 %v4134, %v4246
  %v4263 = vmul.f32 %v4135, %v4247
  %v4264 = vld [vmem:[%s17] sm:$0xf]
  %v4265 = vld [vmem:[%s17 + $0x4] sm:$0xf]
  %v4266 = vld [vmem:[%s17 + $0x8] sm:$0xf]
  %v4267 = vld [vmem:[%s17 + $0xc] sm:$0xf]
  %v4268 = vpack.c.bf16 %v4249, %v4248
  %v4269 = vpack.c.bf16 %v4251, %v4250
  %v4270 = vpack.c.bf16 %v4253, %v4252
  %v4271 = vpack.c.bf16 %v4255, %v4254
  %v4272 = vpack.c.bf16 %v4257, %v4256
  %v4273 = vpack.c.bf16 %v4259, %v4258
  %v4274 = vpack.c.bf16 %v4261, %v4260
  %v4275 = vpack.c.bf16 %v4263, %v4262
  %v4276 = vld [vmem:[%s18] sm:$0x1]
  %v4278 = vlaneseq
  %v4279 = vshrl.u32 %v4278, 7
  %v4280 = vsub.s32 0, %v4279
  %v4281 = vrot.slane %v4276, %v4280
  %v4287 = vunpack.c.l.b16 %v4264
  %v4288 = vunpack.c.l.b16 %v4265
  %v4289 = vunpack.c.l.b16 %v4266
  %v4290 = vunpack.c.l.b16 %v4267
  %v4291 = vpack.c.b16 %v4288, %v4287
  %v4292 = vpack.c.b16 %v4290, %v4289
  %v4296 = vsel %vm179, %v4268, 0
  %v4299 = vsel %vm179, %v4269, 0
  %v4302 = vsel %vm179, %v4270, 0
  %v4305 = vsel %vm179, %v4271, 0
  %v4308 = vsel %vm179, %v4272, 0
  %v4311 = vsel %vm179, %v4273, 0
  %v4314 = vsel %vm179, %v4274, 0
  %v4317 = vsel %vm179, %v4275, 0
  %4319 = vmatprep.subr.bf16.mxu0 0
  %4320 = vmatpush1.bf16.msra.mxu0 0
  %4321 = vmatprep.subr.bf16.mxu0 0
  %4322 = vmatpush1.bf16.msra.mxu0 0
  %4323 = vmatprep.subr.bf16.mxu0 0
  %4324 = vmatpush1.bf16.msra.mxu0 0
  %4325 = vmatprep.subr.bf16.mxu0 0
  %4326 = vmatpush1.bf16.msra.mxu0 0
  %4327 = vmatprep.subr.bf16.mxu0 0
  %4328 = vmatpush1.bf16.msra.mxu0 0
  %4329 = vmatprep.subr.bf16.mxu0 0
  %4330 = vmatpush1.bf16.msra.mxu0 0
  %4331 = vmatprep.subr.bf16.mxu0 0
  %4332 = vmatpush1.bf16.msra.mxu0 %v4292
  %4333 = vmatprep.subr.bf16.mxu0 0
  %4334 = vmatpush1.bf16.msra.mxu0 %v4291
  %4335 = vmatprep.subr.bf16.mxu0 0
  %4336 = vmatpush2.bf16.msra.mxu0 0
  %4337 = vmatprep.subr.bf16.mxu0 0
  %4338 = vmatpush2.bf16.msra.mxu0 0
  %4339 = vmatprep.subr.bf16.mxu0 0
  %4340 = vmatpush2.bf16.msra.mxu0 0
  %4341 = vmatprep.subr.bf16.mxu0 0
  %4342 = vmatpush2.bf16.msra.mxu0 0
  %4343 = vmatprep.subr.bf16.mxu0 0
  %4344 = vmatpush2.bf16.msra.mxu0 0
  %4345 = vmatprep.subr.bf16.mxu0 0
  %4346 = vmatpush2.bf16.msra.mxu0 0
  %4347 = vmatprep.subr.bf16.mxu0 0
  %4348 = vmatpush2.bf16.msra.mxu0 0
  %4349 = vmatprep.subr.bf16.mxu0 0
  %4350 = vmatpush2.bf16.msra.mxu0 0
  %4351 = vmatprep.mubr.bf16.mxu0 0
  %4352 = vmatmul.mubr.bf16.gmra.mxu0 %v4296
  %v4353 = vpop.f32.mrf.mxu0
  %v4354 = vadd.f32 %v4281, %v4353
  %v4355 = vpop.f32.mrf.mxu0
  %v4356 = vpop.f32.mrf.mxu0
  %v4357 = vadd.f32 %v4281, %v4356
  %v4358 = vpop.f32.mrf.mxu0
  %4359 = vmatprep.mubr.bf16.mxu0 0
  %4360 = vmatmul.mubr.bf16.gmra.mxu0 %v4299
  %v4361 = vpop.f32.mrf.mxu0
  %v4362 = vadd.f32 %v4281, %v4361
  %v4363 = vpop.f32.mrf.mxu0
  %v4364 = vpop.f32.mrf.mxu0
  %v4365 = vadd.f32 %v4281, %v4364
  %v4366 = vpop.f32.mrf.mxu0
  %4367 = vmatprep.mubr.bf16.mxu0 0
  %4368 = vmatmul.mubr.bf16.gmra.mxu0 %v4302
  %v4369 = vpop.f32.mrf.mxu0
  %v4370 = vadd.f32 %v4281, %v4369
  %v4371 = vpop.f32.mrf.mxu0
  %v4372 = vpop.f32.mrf.mxu0
  %v4373 = vadd.f32 %v4281, %v4372
  %v4374 = vpop.f32.mrf.mxu0
  %4375 = vmatprep.mubr.bf16.mxu0 0
  %4376 = vmatmul.mubr.bf16.gmra.mxu0 %v4305
  %v4377 = vpop.f32.mrf.mxu0
  %v4378 = vadd.f32 %v4281, %v4377
  %v4379 = vpop.f32.mrf.mxu0
  %v4380 = vpop.f32.mrf.mxu0
  %v4381 = vadd.f32 %v4281, %v4380
  %v4382 = vpop.f32.mrf.mxu0
  %4383 = vmatprep.mubr.bf16.mxu0 0
  %4384 = vmatmul.mubr.bf16.gmra.mxu0 %v4308
  %v4385 = vpop.f32.mrf.mxu0
  %v4386 = vadd.f32 %v4281, %v4385
  %v4387 = vpop.f32.mrf.mxu0
  %v4388 = vpop.f32.mrf.mxu0
  %v4389 = vadd.f32 %v4281, %v4388
  %v4390 = vpop.f32.mrf.mxu0
  %4391 = vmatprep.mubr.bf16.mxu0 0
  %4392 = vmatmul.mubr.bf16.gmra.mxu0 %v4311
  %v4393 = vpop.f32.mrf.mxu0
  %v4394 = vadd.f32 %v4281, %v4393
  %v4395 = vpop.f32.mrf.mxu0
  %v4396 = vpop.f32.mrf.mxu0
  %v4397 = vadd.f32 %v4281, %v4396
  %v4398 = vpop.f32.mrf.mxu0
  %4399 = vmatprep.mubr.bf16.mxu0 0
  %4400 = vmatmul.mubr.bf16.gmra.mxu0 %v4314
  %v4401 = vpop.f32.mrf.mxu0
  %v4402 = vadd.f32 %v4281, %v4401
  %v4403 = vpop.f32.mrf.mxu0
  %v4404 = vpop.f32.mrf.mxu0
  %v4405 = vadd.f32 %v4281, %v4404
  %v4406 = vpop.f32.mrf.mxu0
  %4407 = vmatprep.mubr.bf16.mxu0 0
  %4408 = vmatmul.mubr.bf16.gmra.mxu0 %v4317
  %v4409 = vpop.f32.mrf.mxu0
  %v4410 = vadd.f32 %v4281, %v4409
  %v4411 = vpop.f32.mrf.mxu0
  %v4412 = vpop.f32.mrf.mxu0
  %v4413 = vadd.f32 %v4281, %v4412
  %v4414 = vpop.f32.mrf.mxu0
  %4415 = vdwg.mxu0
  %4416 = vst [vmem:[%s19] sm:$0xff] %v4354
  %4417 = vst [vmem:[%s19 + $0x8] sm:$0xff] %v4357
  %4418 = vst [vmem:[%s19 + $0x10] sm:$0xff] %v4362
  %4419 = vst [vmem:[%s19 + $0x18] sm:$0xff] %v4365
  %4420 = vst [vmem:[%s19 + $0x20] sm:$0xff] %v4370
  %4421 = vst [vmem:[%s19 + $0x28] sm:$0xff] %v4373
  %4422 = vst [vmem:[%s19 + $0x30] sm:$0xff] %v4378
  %4423 = vst [vmem:[%s19 + $0x38] sm:$0xff] %v4381
  %4424 = vst [vmem:[%s19 + $0x40] sm:$0xff] %v4386
  %4425 = vst [vmem:[%s19 + $0x48] sm:$0xff] %v4389
  %4426 = vst [vmem:[%s19 + $0x50] sm:$0xff] %v4394
  %4427 = vst [vmem:[%s19 + $0x58] sm:$0xff] %v4397
  %4428 = vst [vmem:[%s19 + $0x60] sm:$0xff] %v4402
  %4429 = vst [vmem:[%s19 + $0x68] sm:$0xff] %v4405
  %4430 = vst [vmem:[%s19 + $0x70] sm:$0xff] %v4410
  %4431 = vst [vmem:[%s19 + $0x78] sm:$0xff] %v4413
  // Predicated region
  $region82: #{fbed_forward.9} parent=0 // pred_check
    _
  $region83: #{fbed_forward.9} parent=0 // pred_check_branch
    %4433 = sbr.rel (0) target = $region85
  $region84: #{fbed_forward.9} parent=0 // pred_region
    _
  $region85: #{fbed_forward.9} parent=0 // pred_fallthru
    _
  // Predicated region
  $region86: #{fbed_forward.9} parent=0 // pred_check
    _
  $region87: #{fbed_forward.9} parent=0 // pred_check_branch
    %4435 = sbr.rel (0) target = $region89
  $region88: #{fbed_forward.9} parent=0 // pred_region
    _
  $region89: #{fbed_forward.9} parent=0 // pred_fallthru
    _

</llo_original>
